<compile_context>
chip_gen: v5e
topology: v5e:2x2
jax: 0.10.0
libtpu: 0.0.40
codegen_flags: <defaults>
</compile_context>

<pallas_src>
import functools

import jax
import jax.numpy as jnp
from jax import lax
from jax.experimental import pallas as pl
from jax.experimental.pallas import tpu as pltpu

EPS = 1e-5          # nn.BatchNorm2d default eps
NEG_SLOPE = 0.2     # nn.LeakyReLU negative_slope


# ----------------------------------------------------------------------------
# In-kernel post-matmul math (f32)
# ----------------------------------------------------------------------------
def _bn_act(y, g, be, *, use_bn, use_act, inv_m):
    if use_bn:
        # Train-mode BatchNorm, biased batch stats over (N, H, W) == lane axis.
        # Single pass: mean from sum, var from sum of squares.
        s = jnp.sum(y, axis=-1, keepdims=True)
        sq = jnp.sum(y * y, axis=-1, keepdims=True)
        mean = s * inv_m
        var = sq * inv_m - mean * mean
        scale = lax.rsqrt(var + EPS) * g          # per-channel scale (EUP rsqrt)
        y = (y - mean) * scale + be
    if use_act:
        y = jnp.maximum(y, NEG_SLOPE * y)         # LeakyReLU(0.2)
    return y


# ----------------------------------------------------------------------------
# Pallas kernels
# ----------------------------------------------------------------------------
def _layer_kernel(w_ref, p_ref, b_ref, g_ref, be_ref, o_ref, *,
                  use_bn, use_act, inv_m):
    # w_ref : (TOC, K)  bf16      p_ref : (K, TM)  bf16   (M = B*OH*OW = lanes)
    # b/g/be: (TOC, 1)  f32       o_ref : (TOC, TM) bf16/f32
    y = jnp.dot(w_ref[...], p_ref[...], preferred_element_type=jnp.float32)
    y = y + b_ref[...]
    y = _bn_act(y, g_ref[...], be_ref[...], use_bn=use_bn, use_act=use_act,
                inv_m=inv_m)
    o_ref[...] = y.astype(o_ref.dtype)


def _layer4_cls_kernel(w_ref, p_ref, b_ref, g_ref, be_ref, wc_ref, bc_ref,
                       o_ref, *, n_batch, s_spatial, inv_m):
    # Layer 4 (conv + BN + LeakyReLU) fused with the classifier conv.
    # w_ref : (OC4, K)   bf16     p_ref : (K, B*S) bf16   (S = OH4*OW4 = 16)
    # wc_ref: (OC4, S)   bf16     bc_ref: (1, 1)   f32    o_ref: (1, B) f32
    y = jnp.dot(w_ref[...], p_ref[...], preferred_element_type=jnp.float32)
    y = y + b_ref[...]
    y = _bn_act(y, g_ref[...], be_ref[...], use_bn=True, use_act=True,
                inv_m=inv_m)
    # Classifier: the 4x4/s1/p0 conv sees exactly layer 4's 4x4 map, so it is
    # a full-receptive-field dot per batch element.  Match the reference's
    # bf16-operand path by rounding through bf16 (products are exact in f32).
    y_bf = y.astype(jnp.bfloat16).astype(jnp.float32)
    wc = wc_ref[...].astype(jnp.float32)
    parts = []
    for b in range(n_batch):                      # static unroll (tiny B)
        blk = y_bf[:, b * s_spatial:(b + 1) * s_spatial] * wc
        v = jnp.sum(jnp.sum(blk, axis=0, keepdims=True), axis=1, keepdims=True)
        parts.append(v)                           # (1, 1)
    cls = jnp.concatenate(parts, axis=1) + bc_ref[...]
    o_ref[...] = cls


# ----------------------------------------------------------------------------
# Glue: im2col on a channels-first-outer bf16 tensor (no transposes, no casts)
# ----------------------------------------------------------------------------
def _im2col_cfirst(x, kh, kw, stride, pad):
    """x: (C, B, H, W) -> (patches (K, M), OH, OW) with K=(C,KH,KW), M=(B,OH,OW)."""
    C, B, H, W = x.shape
    xp = jnp.pad(x, ((0, 0), (0, 0), (pad, pad), (pad, pad)))
    OH = (H + 2 * pad - kh) // stride + 1
    OW = (W + 2 * pad - kw) // stride + 1
    taps = []
    for i in range(kh):
        for j in range(kw):
            taps.append(xp[:, :, i:i + stride * OH:stride, j:j + stride * OW:stride])
    p = jnp.stack(taps, axis=1)                     # (C, KH*KW, B, OH, OW)
    return p.reshape(C * kh * kw, B * OH * OW), OH, OW


def _pick_m_tile(M):
    # Lane-axis tile for the no-BN layer: big blocks (fewer grid steps), but
    # keep >= 2 steps at layer-0 sizes so v7x's second TensorCore has work.
    if M <= 4096 or M % 128 != 0:
        return M
    tm = 4096
    while M % tm != 0:
        tm //= 2
    return max(tm, 128)


def _compiler_params(semantics, est_block_bytes):
    kwargs = dict(dimension_semantics=semantics)
    # Only raise the scoped-VMEM limit when the per-step footprint actually
    # needs it (large batches); small blocks keep the safe defaults.
    if est_block_bytes > 24 * (1 << 20):
        kwargs["vmem_limit_bytes"] = min(int(est_block_bytes * 2), 100 * (1 << 20))
    return pltpu.CompilerParams(**kwargs)


def conv_block(x_cbhw, w, b, gamma, beta, *, stride, pad, use_bn, use_act,
               out_dtype):
    """x_cbhw: (C,B,H,W) bf16   w: (OC,C,KH,KW) OIHW  ->  (OC,B,OH,OW) out_dtype."""
    OC, C, KH, KW = w.shape
    _, B, H, W = x_cbhw.shape
    patches, OH, OW = _im2col_cfirst(x_cbhw, KH, KW, stride, pad)   # bf16 born
    K, M = patches.shape

    w_bf = w.reshape(OC, K).astype(jnp.bfloat16)    # K ordered (C,KH,KW) == im2col
    b2 = b.reshape(OC, 1).astype(jnp.float32)
    g2 = gamma.reshape(OC, 1).astype(jnp.float32)
    be2 = beta.reshape(OC, 1).astype(jnp.float32)

    if use_bn:
        # Batch statistics need the whole M axis in one block; split OC across
        # a parallel grid instead (TOC multiple of 16 keeps bf16 tiling legal).
        n_grid = 2 if (OC % 32 == 0) else 1
        toc, tm = OC // n_grid, M
        w_spec = pl.BlockSpec((toc, K), lambda i: (i, 0))
        p_spec = pl.BlockSpec((K, tm), lambda i: (0, 0))
        v_spec = pl.BlockSpec((toc, 1), lambda i: (i, 0))
        o_spec = pl.BlockSpec((toc, tm), lambda i: (i, 0))
    else:
        tm = _pick_m_tile(M)
        n_grid, toc = M // tm, OC
        w_spec = pl.BlockSpec((toc, K), lambda i: (0, 0))
        p_spec = pl.BlockSpec((K, tm), lambda i: (0, i))
        v_spec = pl.BlockSpec((toc, 1), lambda i: (0, 0))
        o_spec = pl.BlockSpec((toc, tm), lambda i: (0, i))

    est = (w_bf.size * 2 + 2 * K * tm * 2
           + 2 * toc * tm * jnp.dtype(out_dtype).itemsize
           + toc * tm * 4 + 3 * OC * 4)
    kernel = functools.partial(_layer_kernel, use_bn=use_bn, use_act=use_act,
                               inv_m=1.0 / float(tm))
    y = pl.pallas_call(
        kernel,
        out_shape=jax.ShapeDtypeStruct((OC, M), out_dtype),
        grid=(n_grid,),
        in_specs=[w_spec, p_spec, v_spec, v_spec, v_spec],
        out_specs=o_spec,
        compiler_params=_compiler_params(("parallel",), est),
    )(w_bf, patches, b2, g2, be2)

    # (OC, M) is already (OC, B, OH, OW) up to a free reshape.
    return y.reshape(OC, B, OH, OW)


def layer4_classifier(x_cbhw, p4, pc):
    """Fused layer4 (conv+BN+LeakyReLU) + classifier conv.  Returns (1, B) f32."""
    w, b, gamma, beta = p4['w'], p4['b'], p4['gamma'], p4['beta']
    OC, C, KH, KW = w.shape
    _, B, H, W = x_cbhw.shape
    patches, OH, OW = _im2col_cfirst(x_cbhw, KH, KW, 2, 1)
    K, M = patches.shape
    S = OH * OW                                      # spatial positions / batch

    w_bf = w.reshape(OC, K).astype(jnp.bfloat16)
    b2 = b.reshape(OC, 1).astype(jnp.float32)
    g2 = gamma.reshape(OC, 1).astype(jnp.float32)
    be2 = beta.reshape(OC, 1).astype(jnp.float32)
    wc = pc['w'].reshape(OC, S).astype(jnp.bfloat16)  # (C_cls, KH*KW) taps
    bc = pc['b'].reshape(1, 1).astype(jnp.float32)

    kernel = functools.partial(_layer4_cls_kernel, n_batch=B, s_spatial=S,
                               inv_m=1.0 / float(M))
    return pl.pallas_call(
        kernel,
        out_shape=jax.ShapeDtypeStruct((1, B), jnp.float32),
        grid=(1,),
        in_specs=[
            pl.BlockSpec((OC, K), lambda i: (0, 0)),
            pl.BlockSpec((K, M), lambda i: (0, 0)),
            pl.BlockSpec((OC, 1), lambda i: (0, 0)),
            pl.BlockSpec((OC, 1), lambda i: (0, 0)),
            pl.BlockSpec((OC, 1), lambda i: (0, 0)),
            pl.BlockSpec((OC, S), lambda i: (0, 0)),
            pl.BlockSpec((1, 1), lambda i: (0, 0)),
        ],
        out_specs=pl.BlockSpec((1, B), lambda i: (0, 0)),
        compiler_params=pltpu.CompilerParams(dimension_semantics=("arbitrary",)),
    )(w_bf, patches, b2, g2, be2, wc, bc)


# ----------------------------------------------------------------------------
# Discriminator
# ----------------------------------------------------------------------------
def init_params(key, nch=3, nch_d=8):
    chans = [(nch, nch_d), (nch_d, nch_d * 2), (nch_d * 2, nch_d * 4),
             (nch_d * 4, nch_d * 8), (nch_d * 8, nch_d * 16)]
    params = []
    for cin, cout in chans:
        key, k1, k2, k3, k4 = jax.random.split(key, 5)
        fan_in = cin * 4 * 4
        w = jax.random.uniform(k1, (cout, cin, 4, 4), jnp.float32, -1.0, 1.0) / jnp.sqrt(fan_in)
        b = jax.random.uniform(k2, (cout,), jnp.float32, -1.0, 1.0) / jnp.sqrt(fan_in)
        g = 1.0 + 0.1 * jax.random.normal(k3, (cout,), jnp.float32)
        be = 0.1 * jax.random.normal(k4, (cout,), jnp.float32)
        params.append(dict(w=w, b=b, gamma=g, beta=be))
    key, k1, k2 = jax.random.split(key, 3)
    cin = nch_d * 16
    fan_in = cin * 4 * 4
    wc = jax.random.uniform(k1, (1, cin, 4, 4), jnp.float32, -1.0, 1.0) / jnp.sqrt(fan_in)
    bc = jax.random.uniform(k2, (1,), jnp.float32, -1.0, 1.0) / jnp.sqrt(fan_in)
    params.append(dict(w=wc, b=bc, gamma=jnp.ones((1,), jnp.float32),
                       beta=jnp.zeros((1,), jnp.float32)))
    return params


def discriminator_forward(x, params):
    # One boundary transpose + one bf16 cast: activations stay (C,B,H,W) bf16,
    # so every layer's im2col patches are born bf16 and stores are bf16.
    h = jnp.transpose(x, (1, 0, 2, 3)).astype(jnp.bfloat16)
    # layer0: Conv + LeakyReLU (no BN)
    p = params[0]
    h = conv_block(h, p['w'], p['b'], p['gamma'], p['beta'],
                   stride=2, pad=1, use_bn=False, use_act=True,
                   out_dtype=jnp.bfloat16)
    # layer1..layer3: Conv + BN + LeakyReLU
    for i in range(1, 4):
        p = params[i]
        h = conv_block(h, p['w'], p['b'], p['gamma'], p['beta'],
                       stride=2, pad=1, use_bn=True, use_act=True,
                       out_dtype=jnp.bfloat16)
    # layer4 + classifier (fused when layer4's map == classifier receptive field)
    p4, pc = params[4], params[5]
    _, B, H, W = h.shape
    OH4 = (H + 2 - 4) // 2 + 1
    OW4 = (W + 2 - 4) // 2 + 1
    if OH4 == pc['w'].shape[2] and OW4 == pc['w'].shape[3]:
        out = layer4_classifier(h, p4, pc)           # (1, B)
        return jnp.squeeze(out)                      # matches x.squeeze()
    # Fallback for larger spatial inputs: unfused layer4 + classifier.
    h = conv_block(h, p4['w'], p4['b'], p4['gamma'], p4['beta'],
                   stride=2, pad=1, use_bn=True, use_act=True,
                   out_dtype=jnp.bfloat16)
    h = conv_block(h, pc['w'], pc['b'], pc['gamma'], pc['beta'],
                   stride=1, pad=0, use_bn=False, use_act=False,
                   out_dtype=jnp.float32)
    return jnp.squeeze(jnp.transpose(h, (1, 0, 2, 3)))


# ----------------------------------------------------------------------------
# Pure-JAX reference at matched (bf16-operand, f32-accum) precision
# ----------------------------------------------------------------------------
def ref_forward(x, params):
    def conv(h, w, b, stride, pad):
        y = lax.conv_general_dilated(
            h.astype(jnp.bfloat16), w.astype(jnp.bfloat16),
            (stride, stride), [(pad, pad), (pad, pad)],
            dimension_numbers=('NCHW', 'OIHW', 'NCHW'),
            preferred_element_type=jnp.float32)
        return y + b.reshape(1, -1, 1, 1)

    def bn(h, g, be):
        mean = jnp.mean(h, axis=(0, 2, 3), keepdims=True)
        var = jnp.mean((h - mean) ** 2, axis=(0, 2, 3), keepdims=True)
        return ((h - mean) * lax.rsqrt(var + EPS)
                * g.reshape(1, -1, 1, 1) + be.reshape(1, -1, 1, 1))

    def lrelu(h):
        return jnp.where(h >= 0, h, NEG_SLOPE * h)

    p = params[0]
    h = lrelu(conv(x, p['w'], p['b'], 2, 1))
    for i in range(1, 5):
        p = params[i]
        h = lrelu(bn(conv(h, p['w'], p['b'], 2, 1), p['gamma'], p['beta']))
    p = params[5]
    h = conv(h, p['w'], p['b'], 1, 0)
    return jnp.squeeze(h)


if __name__ == "__main__":
    key = jax.random.PRNGKey(0)
    kx, kp = jax.random.split(key)

    # Small shapes consistent with the module: nch=3, nch_d=8, 128x128 spatial
    # so the final 4x4/s1/p0 classifier sees a 4x4 map -> output shape (B,).
    B, NCH, NCH_D, H = 2, 3, 8, 128
    x = jax.random.normal(kx, (B, NCH, H, H), jnp.float32)
    params = init_params(kp, nch=NCH, nch_d=NCH_D)

    out = jax.block_until_ready(jax.jit(discriminator_forward)(x, params))
    ref = jax.block_until_ready(jax.jit(ref_forward)(x, params))

    assert out.shape == ref.shape == (B,), (out.shape, ref.shape)
    assert jnp.allclose(out, ref, rtol=1e-2, atol=1e-2), (out, ref)
    print("KERNEL_OK")
</pallas_src>

<mosaic_0001>
module attributes {stable_mosaic.version = 11 : i64} {
  func.func @_layer_kernel(%arg0: i32, %arg1: memref<8x48xbf16, #tpu.memory_space<vmem>>, %arg2: memref<48x4096xbf16, #tpu.memory_space<vmem>>, %arg3: memref<8x1xf32, #tpu.memory_space<vmem>>, %arg4: memref<8x1xf32, #tpu.memory_space<vmem>>, %arg5: memref<8x1xf32, #tpu.memory_space<vmem>>, %arg6: memref<8x4096xbf16, #tpu.memory_space<vmem>>) attributes {dimension_semantics = [#tpu.dimension_semantics<parallel>], iteration_bounds = array<i64: 2>, scalar_prefetch = 0 : i64, scratch_operands = 0 : i64, tpu.core_type = #tpu.core_type<tc>, window_params = [{pipeline_mode = #tpu.pipeline_mode<synchronous>, transform_indices = @transform_0, window_bounds = array<i64: 8, 48>}, {transform_indices = @transform_1, window_bounds = array<i64: 48, 4096>}, {pipeline_mode = #tpu.pipeline_mode<synchronous>, transform_indices = @transform_2, window_bounds = array<i64: 8, 1>}, {pipeline_mode = #tpu.pipeline_mode<synchronous>, transform_indices = @transform_3, window_bounds = array<i64: 8, 1>}, {pipeline_mode = #tpu.pipeline_mode<synchronous>, transform_indices = @transform_4, window_bounds = array<i64: 8, 1>}, {transform_indices = @transform_5, window_bounds = array<i64: 8, 4096>}]} {
    %c0 = arith.constant 0 : index
    %c0_0 = arith.constant 0 : index
    %0 = vector.load %arg1[%c0, %c0_0] : memref<8x48xbf16, #tpu.memory_space<vmem>>, vector<8x48xbf16>
    %c0_1 = arith.constant 0 : index
    %c0_2 = arith.constant 0 : index
    %1 = vector.load %arg2[%c0_1, %c0_2] : memref<48x4096xbf16, #tpu.memory_space<vmem>>, vector<48x4096xbf16>
    %cst = arith.constant dense<0.000000e+00> : vector<8x4096xf32>
    %2 = tpu.matmul %0, %1, %cst {dimension_numbers = #tpu.dot_dimension_numbers<[1], [0], [0], [1], [0, 0, 1, 1], [], []>} : vector<8x48xbf16>, vector<48x4096xbf16>, vector<8x4096xf32> -> vector<8x4096xf32>
    %c0_3 = arith.constant 0 : index
    %c0_4 = arith.constant 0 : index
    %3 = vector.load %arg3[%c0_3, %c0_4] : memref<8x1xf32, #tpu.memory_space<vmem>>, vector<8x1xf32>
    %4 = vector.broadcast %3 : vector<8x1xf32> to vector<8x4096xf32>
    %5 = arith.addf %2, %4 : vector<8x4096xf32>
    %cst_5 = arith.constant 2.000000e-01 : f32
    %6 = vector.broadcast %cst_5 : f32 to vector<8x4096xf32>
    %7 = arith.mulf %6, %5 : vector<8x4096xf32>
    %8 = arith.maximumf %5, %7 : vector<8x4096xf32>
    %9 = arith.truncf %8 : vector<8x4096xf32> to vector<8x4096xbf16>
    %c0_6 = arith.constant 0 : index
    %c0_7 = arith.constant 0 : index
    %10 = vector.load %arg6[%c0_6, %c0_7] : memref<8x4096xbf16, #tpu.memory_space<vmem>>, vector<8x4096xbf16>
    tpu.vector_store %arg6[%c0_6, %c0_7], %9 {strides = array<i32>} : memref<8x4096xbf16, #tpu.memory_space<vmem>>, vector<8x4096xbf16>,
    return
  }
  func.func @transform_0(%arg0: i32) -> (i32, i32) {
    %c0_i32 = arith.constant 0 : i32
    %c0_i32_0 = arith.constant 0 : i32
    %c0_i32_1 = arith.constant 0 : i32
    return %c0_i32, %c0_i32_0 : i32, i32
  }
  func.func @transform_1(%arg0: i32) -> (i32, i32) {
    %c0_i32 = arith.constant 0 : i32
    %c0_i32_0 = arith.constant 0 : i32
    return %c0_i32, %arg0 : i32, i32
  }
  func.func @transform_2(%arg0: i32) -> (i32, i32) {
    %c0_i32 = arith.constant 0 : i32
    %c0_i32_0 = arith.constant 0 : i32
    %c0_i32_1 = arith.constant 0 : i32
    return %c0_i32, %c0_i32_0 : i32, i32
  }
  func.func @transform_3(%arg0: i32) -> (i32, i32) {
    %c0_i32 = arith.constant 0 : i32
    %c0_i32_0 = arith.constant 0 : i32
    %c0_i32_1 = arith.constant 0 : i32
    return %c0_i32, %c0_i32_0 : i32, i32
  }
  func.func @transform_4(%arg0: i32) -> (i32, i32) {
    %c0_i32 = arith.constant 0 : i32
    %c0_i32_0 = arith.constant 0 : i32
    %c0_i32_1 = arith.constant 0 : i32
    return %c0_i32, %c0_i32_0 : i32, i32
  }
  func.func @transform_5(%arg0: i32) -> (i32, i32) {
    %c0_i32 = arith.constant 0 : i32
    %c0_i32_0 = arith.constant 0 : i32
    return %c0_i32, %arg0 : i32, i32
  }
}

module attributes {stable_mosaic.version = 11 : i64} {
  func.func @_layer_kernel(%arg0: i32, %arg1: memref<16x128xbf16, #tpu.memory_space<vmem>>, %arg2: memref<128x2048xbf16, #tpu.memory_space<vmem>>, %arg3: memref<16x1xf32, #tpu.memory_space<vmem>>, %arg4: memref<16x1xf32, #tpu.memory_space<vmem>>, %arg5: memref<16x1xf32, #tpu.memory_space<vmem>>, %arg6: memref<16x2048xbf16, #tpu.memory_space<vmem>>) attributes {dimension_semantics = [#tpu.dimension_semantics<parallel>], iteration_bounds = array<i64: 1>, scalar_prefetch = 0 : i64, scratch_operands = 0 : i64, tpu.core_type = #tpu.core_type<tc>, window_params = [{transform_indices = @transform_0, window_bounds = array<i64: 16, 128>}, {pipeline_mode = #tpu.pipeline_mode<synchronous>, transform_indices = @transform_1, window_bounds = array<i64: 128, 2048>}, {transform_indices = @transform_2, window_bounds = array<i64: 16, 1>}, {transform_indices = @transform_3, window_bounds = array<i64: 16, 1>}, {transform_indices = @transform_4, window_bounds = array<i64: 16, 1>}, {transform_indices = @transform_5, window_bounds = array<i64: 16, 2048>}]} {
    %c0 = arith.constant 0 : index
    %c0_0 = arith.constant 0 : index
    %0 = vector.load %arg1[%c0, %c0_0] : memref<16x128xbf16, #tpu.memory_space<vmem>>, vector<16x128xbf16>
    %c0_1 = arith.constant 0 : index
    %c0_2 = arith.constant 0 : index
    %1 = vector.load %arg2[%c0_1, %c0_2] : memref<128x2048xbf16, #tpu.memory_space<vmem>>, vector<128x2048xbf16>
    %cst = arith.constant dense<0.000000e+00> : vector<16x2048xf32>
    %2 = tpu.matmul %0, %1, %cst {dimension_numbers = #tpu.dot_dimension_numbers<[1], [0], [0], [1], [0, 0, 1, 1], [], []>} : vector<16x128xbf16>, vector<128x2048xbf16>, vector<16x2048xf32> -> vector<16x2048xf32>
    %c0_3 = arith.constant 0 : index
    %c0_4 = arith.constant 0 : index
    %3 = vector.load %arg3[%c0_3, %c0_4] : memref<16x1xf32, #tpu.memory_space<vmem>>, vector<16x1xf32>
    %4 = vector.broadcast %3 : vector<16x1xf32> to vector<16x2048xf32>
    %5 = arith.addf %2, %4 : vector<16x2048xf32>
    %c0_5 = arith.constant 0 : index
    %c0_6 = arith.constant 0 : index
    %6 = vector.load %arg4[%c0_5, %c0_6] : memref<16x1xf32, #tpu.memory_space<vmem>>, vector<16x1xf32>
    %c0_7 = arith.constant 0 : index
    %c0_8 = arith.constant 0 : index
    %7 = vector.load %arg5[%c0_7, %c0_8] : memref<16x1xf32, #tpu.memory_space<vmem>>, vector<16x1xf32>
    %cst_9 = arith.constant dense<0.000000e+00> : vector<16xf32>
    %8 = vector.multi_reduction <add>, %5, %cst_9 [1] : vector<16x2048xf32> to vector<16xf32>
    %9 = vector.shape_cast %8 : vector<16xf32> to vector<16x1xf32>
    %10 = arith.mulf %5, %5 : vector<16x2048xf32>
    %cst_10 = arith.constant dense<0.000000e+00> : vector<16xf32>
    %11 = vector.multi_reduction <add>, %10, %cst_10 [1] : vector<16x2048xf32> to vector<16xf32>
    %12 = vector.shape_cast %11 : vector<16xf32> to vector<16x1xf32>
    %cst_11 = arith.constant 4.8828125E-4 : f32
    %13 = vector.broadcast %cst_11 : f32 to vector<16x1xf32>
    %14 = arith.mulf %9, %13 : vector<16x1xf32>
    %cst_12 = arith.constant 4.8828125E-4 : f32
    %15 = vector.broadcast %cst_12 : f32 to vector<16x1xf32>
    %16 = arith.mulf %12, %15 : vector<16x1xf32>
    %17 = arith.mulf %14, %14 : vector<16x1xf32>
    %18 = arith.subf %16, %17 : vector<16x1xf32>
    %cst_13 = arith.constant 9.99999974E-6 : f32
    %19 = vector.broadcast %cst_13 : f32 to vector<16x1xf32>
    %20 = arith.addf %18, %19 : vector<16x1xf32>
    %21 = math.rsqrt %20 : vector<16x1xf32>
    %22 = arith.mulf %21, %6 : vector<16x1xf32>
    %23 = vector.broadcast %14 : vector<16x1xf32> to vector<16x2048xf32>
    %24 = arith.subf %5, %23 : vector<16x2048xf32>
    %25 = vector.broadcast %22 : vector<16x1xf32> to vector<16x2048xf32>
    %26 = arith.mulf %24, %25 : vector<16x2048xf32>
    %27 = vector.broadcast %7 : vector<16x1xf32> to vector<16x2048xf32>
    %28 = arith.addf %26, %27 : vector<16x2048xf32>
    %cst_14 = arith.constant 2.000000e-01 : f32
    %29 = vector.broadcast %cst_14 : f32 to vector<16x2048xf32>
    %30 = arith.mulf %29, %28 : vector<16x2048xf32>
    %31 = arith.maximumf %28, %30 : vector<16x2048xf32>
    %32 = arith.truncf %31 : vector<16x2048xf32> to vector<16x2048xbf16>
    %c0_15 = arith.constant 0 : index
    %c0_16 = arith.constant 0 : index
    %33 = vector.load %arg6[%c0_15, %c0_16] : memref<16x2048xbf16, #tpu.memory_space<vmem>>, vector<16x2048xbf16>
    tpu.vector_store %arg6[%c0_15, %c0_16], %32 {strides = array<i32>} : memref<16x2048xbf16, #tpu.memory_space<vmem>>, vector<16x2048xbf16>,
    return
  }
  func.func @transform_0(%arg0: i32) -> (i32, i32) {
    %c0_i32 = arith.constant 0 : i32
    %c0_i32_0 = arith.constant 0 : i32
    return %arg0, %c0_i32 : i32, i32
  }
  func.func @transform_1(%arg0: i32) -> (i32, i32) {
    %c0_i32 = arith.constant 0 : i32
    %c0_i32_0 = arith.constant 0 : i32
    %c0_i32_1 = arith.constant 0 : i32
    return %c0_i32, %c0_i32_0 : i32, i32
  }
  func.func @transform_2(%arg0: i32) -> (i32, i32) {
    %c0_i32 = arith.constant 0 : i32
    %c0_i32_0 = arith.constant 0 : i32
    return %arg0, %c0_i32 : i32, i32
  }
  func.func @transform_3(%arg0: i32) -> (i32, i32) {
    %c0_i32 = arith.constant 0 : i32
    %c0_i32_0 = arith.constant 0 : i32
    return %arg0, %c0_i32 : i32, i32
  }
  func.func @transform_4(%arg0: i32) -> (i32, i32) {
    %c0_i32 = arith.constant 0 : i32
    %c0_i32_0 = arith.constant 0 : i32
    return %arg0, %c0_i32 : i32, i32
  }
  func.func @transform_5(%arg0: i32) -> (i32, i32) {
    %c0_i32 = arith.constant 0 : i32
    %c0_i32_0 = arith.constant 0 : i32
    return %arg0, %c0_i32 : i32, i32
  }
}

module attributes {stable_mosaic.version = 11 : i64} {
  func.func @_layer_kernel(%arg0: i32, %arg1: memref<16x256xbf16, #tpu.memory_space<vmem>>, %arg2: memref<256x512xbf16, #tpu.memory_space<vmem>>, %arg3: memref<16x1xf32, #tpu.memory_space<vmem>>, %arg4: memref<16x1xf32, #tpu.memory_space<vmem>>, %arg5: memref<16x1xf32, #tpu.memory_space<vmem>>, %arg6: memref<16x512xbf16, #tpu.memory_space<vmem>>) attributes {dimension_semantics = [#tpu.dimension_semantics<parallel>], iteration_bounds = array<i64: 2>, scalar_prefetch = 0 : i64, scratch_operands = 0 : i64, tpu.core_type = #tpu.core_type<tc>, window_params = [{transform_indices = @transform_0, window_bounds = array<i64: 16, 256>}, {pipeline_mode = #tpu.pipeline_mode<synchronous>, transform_indices = @transform_1, window_bounds = array<i64: 256, 512>}, {transform_indices = @transform_2, window_bounds = array<i64: 16, 1>}, {transform_indices = @transform_3, window_bounds = array<i64: 16, 1>}, {transform_indices = @transform_4, window_bounds = array<i64: 16, 1>}, {transform_indices = @transform_5, window_bounds = array<i64: 16, 512>}]} {
    %c0 = arith.constant 0 : index
    %c0_0 = arith.constant 0 : index
    %0 = vector.load %arg1[%c0, %c0_0] : memref<16x256xbf16, #tpu.memory_space<vmem>>, vector<16x256xbf16>
    %c0_1 = arith.constant 0 : index
    %c0_2 = arith.constant 0 : index
    %1 = vector.load %arg2[%c0_1, %c0_2] : memref<256x512xbf16, #tpu.memory_space<vmem>>, vector<256x512xbf16>
    %cst = arith.constant dense<0.000000e+00> : vector<16x512xf32>
    %2 = tpu.matmul %0, %1, %cst {dimension_numbers = #tpu.dot_dimension_numbers<[1], [0], [0], [1], [0, 0, 1, 1], [], []>} : vector<16x256xbf16>, vector<256x512xbf16>, vector<16x512xf32> -> vector<16x512xf32>
    %c0_3 = arith.constant 0 : index
    %c0_4 = arith.constant 0 : index
    %3 = vector.load %arg3[%c0_3, %c0_4] : memref<16x1xf32, #tpu.memory_space<vmem>>, vector<16x1xf32>
    %4 = vector.broadcast %3 : vector<16x1xf32> to vector<16x512xf32>
    %5 = arith.addf %2, %4 : vector<16x512xf32>
    %c0_5 = arith.constant 0 : index
    %c0_6 = arith.constant 0 : index
    %6 = vector.load %arg4[%c0_5, %c0_6] : memref<16x1xf32, #tpu.memory_space<vmem>>, vector<16x1xf32>
    %c0_7 = arith.constant 0 : index
    %c0_8 = arith.constant 0 : index
    %7 = vector.load %arg5[%c0_7, %c0_8] : memref<16x1xf32, #tpu.memory_space<vmem>>, vector<16x1xf32>
    %cst_9 = arith.constant dense<0.000000e+00> : vector<16xf32>
    %8 = vector.multi_reduction <add>, %5, %cst_9 [1] : vector<16x512xf32> to vector<16xf32>
    %9 = vector.shape_cast %8 : vector<16xf32> to vector<16x1xf32>
    %10 = arith.mulf %5, %5 : vector<16x512xf32>
    %cst_10 = arith.constant dense<0.000000e+00> : vector<16xf32>
    %11 = vector.multi_reduction <add>, %10, %cst_10 [1] : vector<16x512xf32> to vector<16xf32>
    %12 = vector.shape_cast %11 : vector<16xf32> to vector<16x1xf32>
    %cst_11 = arith.constant 0.001953125 : f32
    %13 = vector.broadcast %cst_11 : f32 to vector<16x1xf32>
    %14 = arith.mulf %9, %13 : vector<16x1xf32>
    %cst_12 = arith.constant 0.001953125 : f32
    %15 = vector.broadcast %cst_12 : f32 to vector<16x1xf32>
    %16 = arith.mulf %12, %15 : vector<16x1xf32>
    %17 = arith.mulf %14, %14 : vector<16x1xf32>
    %18 = arith.subf %16, %17 : vector<16x1xf32>
    %cst_13 = arith.constant 9.99999974E-6 : f32
    %19 = vector.broadcast %cst_13 : f32 to vector<16x1xf32>
    %20 = arith.addf %18, %19 : vector<16x1xf32>
    %21 = math.rsqrt %20 : vector<16x1xf32>
    %22 = arith.mulf %21, %6 : vector<16x1xf32>
    %23 = vector.broadcast %14 : vector<16x1xf32> to vector<16x512xf32>
    %24 = arith.subf %5, %23 : vector<16x512xf32>
    %25 = vector.broadcast %22 : vector<16x1xf32> to vector<16x512xf32>
    %26 = arith.mulf %24, %25 : vector<16x512xf32>
    %27 = vector.broadcast %7 : vector<16x1xf32> to vector<16x512xf32>
    %28 = arith.addf %26, %27 : vector<16x512xf32>
    %cst_14 = arith.constant 2.000000e-01 : f32
    %29 = vector.broadcast %cst_14 : f32 to vector<16x512xf32>
    %30 = arith.mulf %29, %28 : vector<16x512xf32>
    %31 = arith.maximumf %28, %30 : vector<16x512xf32>
    %32 = arith.truncf %31 : vector<16x512xf32> to vector<16x512xbf16>
    %c0_15 = arith.constant 0 : index
    %c0_16 = arith.constant 0 : index
    %33 = vector.load %arg6[%c0_15, %c0_16] : memref<16x512xbf16, #tpu.memory_space<vmem>>, vector<16x512xbf16>
    tpu.vector_store %arg6[%c0_15, %c0_16], %32 {strides = array<i32>} : memref<16x512xbf16, #tpu.memory_space<vmem>>, vector<16x512xbf16>,
    return
  }
  func.func @transform_0(%arg0: i32) -> (i32, i32) {
    %c0_i32 = arith.constant 0 : i32
    %c0_i32_0 = arith.constant 0 : i32
    return %arg0, %c0_i32 : i32, i32
  }
  func.func @transform_1(%arg0: i32) -> (i32, i32) {
    %c0_i32 = arith.constant 0 : i32
    %c0_i32_0 = arith.constant 0 : i32
    %c0_i32_1 = arith.constant 0 : i32
    return %c0_i32, %c0_i32_0 : i32, i32
  }
  func.func @transform_2(%arg0: i32) -> (i32, i32) {
    %c0_i32 = arith.constant 0 : i32
    %c0_i32_0 = arith.constant 0 : i32
    return %arg0, %c0_i32 : i32, i32
  }
  func.func @transform_3(%arg0: i32) -> (i32, i32) {
    %c0_i32 = arith.constant 0 : i32
    %c0_i32_0 = arith.constant 0 : i32
    return %arg0, %c0_i32 : i32, i32
  }
  func.func @transform_4(%arg0: i32) -> (i32, i32) {
    %c0_i32 = arith.constant 0 : i32
    %c0_i32_0 = arith.constant 0 : i32
    return %arg0, %c0_i32 : i32, i32
  }
  func.func @transform_5(%arg0: i32) -> (i32, i32) {
    %c0_i32 = arith.constant 0 : i32
    %c0_i32_0 = arith.constant 0 : i32
    return %arg0, %c0_i32 : i32, i32
  }
}

module attributes {stable_mosaic.version = 11 : i64} {
  func.func @_layer_kernel(%arg0: i32, %arg1: memref<32x512xbf16, #tpu.memory_space<vmem>>, %arg2: memref<512x128xbf16, #tpu.memory_space<vmem>>, %arg3: memref<32x1xf32, #tpu.memory_space<vmem>>, %arg4: memref<32x1xf32, #tpu.memory_space<vmem>>, %arg5: memref<32x1xf32, #tpu.memory_space<vmem>>, %arg6: memref<32x128xbf16, #tpu.memory_space<vmem>>) attributes {dimension_semantics = [#tpu.dimension_semantics<parallel>], iteration_bounds = array<i64: 2>, scalar_prefetch = 0 : i64, scratch_operands = 0 : i64, tpu.core_type = #tpu.core_type<tc>, window_params = [{transform_indices = @transform_0, window_bounds = array<i64: 32, 512>}, {pipeline_mode = #tpu.pipeline_mode<synchronous>, transform_indices = @transform_1, window_bounds = array<i64: 512, 128>}, {transform_indices = @transform_2, window_bounds = array<i64: 32, 1>}, {transform_indices = @transform_3, window_bounds = array<i64: 32, 1>}, {transform_indices = @transform_4, window_bounds = array<i64: 32, 1>}, {transform_indices = @transform_5, window_bounds = array<i64: 32, 128>}]} {
    %c0 = arith.constant 0 : index
    %c0_0 = arith.constant 0 : index
    %0 = vector.load %arg1[%c0, %c0_0] : memref<32x512xbf16, #tpu.memory_space<vmem>>, vector<32x512xbf16>
    %c0_1 = arith.constant 0 : index
    %c0_2 = arith.constant 0 : index
    %1 = vector.load %arg2[%c0_1, %c0_2] : memref<512x128xbf16, #tpu.memory_space<vmem>>, vector<512x128xbf16>
    %cst = arith.constant dense<0.000000e+00> : vector<32x128xf32>
    %2 = tpu.matmul %0, %1, %cst {dimension_numbers = #tpu.dot_dimension_numbers<[1], [0], [0], [1], [0, 0, 1, 1], [], []>} : vector<32x512xbf16>, vector<512x128xbf16>, vector<32x128xf32> -> vector<32x128xf32>
    %c0_3 = arith.constant 0 : index
    %c0_4 = arith.constant 0 : index
    %3 = vector.load %arg3[%c0_3, %c0_4] : memref<32x1xf32, #tpu.memory_space<vmem>>, vector<32x1xf32>
    %4 = vector.broadcast %3 : vector<32x1xf32> to vector<32x128xf32>
    %5 = arith.addf %2, %4 : vector<32x128xf32>
    %c0_5 = arith.constant 0 : index
    %c0_6 = arith.constant 0 : index
    %6 = vector.load %arg4[%c0_5, %c0_6] : memref<32x1xf32, #tpu.memory_space<vmem>>, vector<32x1xf32>
    %c0_7 = arith.constant 0 : index
    %c0_8 = arith.constant 0 : index
    %7 = vector.load %arg5[%c0_7, %c0_8] : memref<32x1xf32, #tpu.memory_space<vmem>>, vector<32x1xf32>
    %cst_9 = arith.constant dense<0.000000e+00> : vector<32xf32>
    %8 = vector.multi_reduction <add>, %5, %cst_9 [1] : vector<32x128xf32> to vector<32xf32>
    %9 = vector.shape_cast %8 : vector<32xf32> to vector<32x1xf32>
    %10 = arith.mulf %5, %5 : vector<32x128xf32>
    %cst_10 = arith.constant dense<0.000000e+00> : vector<32xf32>
    %11 = vector.multi_reduction <add>, %10, %cst_10 [1] : vector<32x128xf32> to vector<32xf32>
    %12 = vector.shape_cast %11 : vector<32xf32> to vector<32x1xf32>
    %cst_11 = arith.constant 7.812500e-03 : f32
    %13 = vector.broadcast %cst_11 : f32 to vector<32x1xf32>
    %14 = arith.mulf %9, %13 : vector<32x1xf32>
    %cst_12 = arith.constant 7.812500e-03 : f32
    %15 = vector.broadcast %cst_12 : f32 to vector<32x1xf32>
    %16 = arith.mulf %12, %15 : vector<32x1xf32>
    %17 = arith.mulf %14, %14 : vector<32x1xf32>
    %18 = arith.subf %16, %17 : vector<32x1xf32>
    %cst_13 = arith.constant 9.99999974E-6 : f32
    %19 = vector.broadcast %cst_13 : f32 to vector<32x1xf32>
    %20 = arith.addf %18, %19 : vector<32x1xf32>
    %21 = math.rsqrt %20 : vector<32x1xf32>
    %22 = arith.mulf %21, %6 : vector<32x1xf32>
    %23 = vector.broadcast %14 : vector<32x1xf32> to vector<32x128xf32>
    %24 = arith.subf %5, %23 : vector<32x128xf32>
    %25 = vector.broadcast %22 : vector<32x1xf32> to vector<32x128xf32>
    %26 = arith.mulf %24, %25 : vector<32x128xf32>
    %27 = vector.broadcast %7 : vector<32x1xf32> to vector<32x128xf32>
    %28 = arith.addf %26, %27 : vector<32x128xf32>
    %cst_14 = arith.constant 2.000000e-01 : f32
    %29 = vector.broadcast %cst_14 : f32 to vector<32x128xf32>
    %30 = arith.mulf %29, %28 : vector<32x128xf32>
    %31 = arith.maximumf %28, %30 : vector<32x128xf32>
    %32 = arith.truncf %31 : vector<32x128xf32> to vector<32x128xbf16>
    %c0_15 = arith.constant 0 : index
    %c0_16 = arith.constant 0 : index
    %33 = vector.load %arg6[%c0_15, %c0_16] : memref<32x128xbf16, #tpu.memory_space<vmem>>, vector<32x128xbf16>
    tpu.vector_store %arg6[%c0_15, %c0_16], %32 {strides = array<i32>} : memref<32x128xbf16, #tpu.memory_space<vmem>>, vector<32x128xbf16>,
    return
  }
  func.func @transform_0(%arg0: i32) -> (i32, i32) {
    %c0_i32 = arith.constant 0 : i32
    %c0_i32_0 = arith.constant 0 : i32
    return %arg0, %c0_i32 : i32, i32
  }
  func.func @transform_1(%arg0: i32) -> (i32, i32) {
    %c0_i32 = arith.constant 0 : i32
    %c0_i32_0 = arith.constant 0 : i32
    %c0_i32_1 = arith.constant 0 : i32
    return %c0_i32, %c0_i32_0 : i32, i32
  }
  func.func @transform_2(%arg0: i32) -> (i32, i32) {
    %c0_i32 = arith.constant 0 : i32
    %c0_i32_0 = arith.constant 0 : i32
    return %arg0, %c0_i32 : i32, i32
  }
  func.func @transform_3(%arg0: i32) -> (i32, i32) {
    %c0_i32 = arith.constant 0 : i32
    %c0_i32_0 = arith.constant 0 : i32
    return %arg0, %c0_i32 : i32, i32
  }
  func.func @transform_4(%arg0: i32) -> (i32, i32) {
    %c0_i32 = arith.constant 0 : i32
    %c0_i32_0 = arith.constant 0 : i32
    return %arg0, %c0_i32 : i32, i32
  }
  func.func @transform_5(%arg0: i32) -> (i32, i32) {
    %c0_i32 = arith.constant 0 : i32
    %c0_i32_0 = arith.constant 0 : i32
    return %arg0, %c0_i32 : i32, i32
  }
}

module attributes {stable_mosaic.version = 11 : i64} {
  func.func @_layer4_cls_kernel(%arg0: i32, %arg1: memref<128x1024xbf16, #tpu.memory_space<vmem>>, %arg2: memref<1024x32xbf16, #tpu.memory_space<vmem>>, %arg3: memref<128x1xf32, #tpu.memory_space<vmem>>, %arg4: memref<128x1xf32, #tpu.memory_space<vmem>>, %arg5: memref<128x1xf32, #tpu.memory_space<vmem>>, %arg6: memref<128x16xbf16, #tpu.memory_space<vmem>>, %arg7: memref<1x1xf32, #tpu.memory_space<vmem>>, %arg8: memref<1x2xf32, #tpu.memory_space<vmem>>) attributes {dimension_semantics = [#tpu.dimension_semantics<arbitrary>], iteration_bounds = array<i64: 1>, scalar_prefetch = 0 : i64, scratch_operands = 0 : i64, tpu.core_type = #tpu.core_type<tc>, window_params = [{pipeline_mode = #tpu.pipeline_mode<synchronous>, transform_indices = @transform_0, window_bounds = array<i64: 128, 1024>}, {pipeline_mode = #tpu.pipeline_mode<synchronous>, transform_indices = @transform_1, window_bounds = array<i64: 1024, 32>}, {pipeline_mode = #tpu.pipeline_mode<synchronous>, transform_indices = @transform_2, window_bounds = array<i64: 128, 1>}, {pipeline_mode = #tpu.pipeline_mode<synchronous>, transform_indices = @transform_3, window_bounds = array<i64: 128, 1>}, {pipeline_mode = #tpu.pipeline_mode<synchronous>, transform_indices = @transform_4, window_bounds = array<i64: 128, 1>}, {pipeline_mode = #tpu.pipeline_mode<synchronous>, transform_indices = @transform_5, window_bounds = array<i64: 128, 16>}, {pipeline_mode = #tpu.pipeline_mode<synchronous>, transform_indices = @transform_6, window_bounds = array<i64: 1, 1>}, {pipeline_mode = #tpu.pipeline_mode<synchronous>, transform_indices = @transform_7, window_bounds = array<i64: 1, 2>}]} {
    %c0 = arith.constant 0 : index
    %c0_0 = arith.constant 0 : index
    %0 = vector.load %arg1[%c0, %c0_0] : memref<128x1024xbf16, #tpu.memory_space<vmem>>, vector<128x1024xbf16>
    %c0_1 = arith.constant 0 : index
    %c0_2 = arith.constant 0 : index
    %1 = vector.load %arg2[%c0_1, %c0_2] : memref<1024x32xbf16, #tpu.memory_space<vmem>>, vector<1024x32xbf16>
    %cst = arith.constant dense<0.000000e+00> : vector<128x32xf32>
    %2 = tpu.matmul %0, %1, %cst {dimension_numbers = #tpu.dot_dimension_numbers<[1], [0], [0], [1], [0, 0, 1, 1], [], []>} : vector<128x1024xbf16>, vector<1024x32xbf16>, vector<128x32xf32> -> vector<128x32xf32>
    %c0_3 = arith.constant 0 : index
    %c0_4 = arith.constant 0 : index
    %3 = vector.load %arg3[%c0_3, %c0_4] : memref<128x1xf32, #tpu.memory_space<vmem>>, vector<128x1xf32>
    %4 = vector.broadcast %3 : vector<128x1xf32> to vector<128x32xf32>
    %5 = arith.addf %2, %4 : vector<128x32xf32>
    %c0_5 = arith.constant 0 : index
    %c0_6 = arith.constant 0 : index
    %6 = vector.load %arg4[%c0_5, %c0_6] : memref<128x1xf32, #tpu.memory_space<vmem>>, vector<128x1xf32>
    %c0_7 = arith.constant 0 : index
    %c0_8 = arith.constant 0 : index
    %7 = vector.load %arg5[%c0_7, %c0_8] : memref<128x1xf32, #tpu.memory_space<vmem>>, vector<128x1xf32>
    %cst_9 = arith.constant dense<0.000000e+00> : vector<128xf32>
    %8 = vector.multi_reduction <add>, %5, %cst_9 [1] : vector<128x32xf32> to vector<128xf32>
    %9 = vector.shape_cast %8 : vector<128xf32> to vector<128x1xf32>
    %10 = arith.mulf %5, %5 : vector<128x32xf32>
    %cst_10 = arith.constant dense<0.000000e+00> : vector<128xf32>
    %11 = vector.multi_reduction <add>, %10, %cst_10 [1] : vector<128x32xf32> to vector<128xf32>
    %12 = vector.shape_cast %11 : vector<128xf32> to vector<128x1xf32>
    %cst_11 = arith.constant 3.125000e-02 : f32
    %13 = vector.broadcast %cst_11 : f32 to vector<128x1xf32>
    %14 = arith.mulf %9, %13 : vector<128x1xf32>
    %cst_12 = arith.constant 3.125000e-02 : f32
    %15 = vector.broadcast %cst_12 : f32 to vector<128x1xf32>
    %16 = arith.mulf %12, %15 : vector<128x1xf32>
    %17 = arith.mulf %14, %14 : vector<128x1xf32>
    %18 = arith.subf %16, %17 : vector<128x1xf32>
    %cst_13 = arith.constant 9.99999974E-6 : f32
    %19 = vector.broadcast %cst_13 : f32 to vector<128x1xf32>
    %20 = arith.addf %18, %19 : vector<128x1xf32>
    %21 = math.rsqrt %20 : vector<128x1xf32>
    %22 = arith.mulf %21, %6 : vector<128x1xf32>
    %23 = vector.broadcast %14 : vector<128x1xf32> to vector<128x32xf32>
    %24 = arith.subf %5, %23 : vector<128x32xf32>
    %25 = vector.broadcast %22 : vector<128x1xf32> to vector<128x32xf32>
    %26 = arith.mulf %24, %25 : vector<128x32xf32>
    %27 = vector.broadcast %7 : vector<128x1xf32> to vector<128x32xf32>
    %28 = arith.addf %26, %27 : vector<128x32xf32>
    %cst_14 = arith.constant 2.000000e-01 : f32
    %29 = vector.broadcast %cst_14 : f32 to vector<128x32xf32>
    %30 = arith.mulf %29, %28 : vector<128x32xf32>
    %31 = arith.maximumf %28, %30 : vector<128x32xf32>
    %32 = arith.truncf %31 : vector<128x32xf32> to vector<128x32xbf16>
    %33 = arith.extf %32 : vector<128x32xbf16> to vector<128x32xf32>
    %c0_15 = arith.constant 0 : index
    %c0_16 = arith.constant 0 : index
    %34 = vector.load %arg6[%c0_15, %c0_16] : memref<128x16xbf16, #tpu.memory_space<vmem>>, vector<128x16xbf16>
    %35 = arith.extf %34 : vector<128x16xbf16> to vector<128x16xf32>
    %36 = vector.extract_strided_slice %33 {offsets = [0, 0], sizes = [128, 16], strides = [1, 1]} : vector<128x32xf32> to vector<128x16xf32>
    %37 = arith.mulf %36, %35 : vector<128x16xf32>
    %cst_17 = arith.constant dense<0.000000e+00> : vector<16xf32>
    %38 = vector.multi_reduction <add>, %37, %cst_17 [0] : vector<128x16xf32> to vector<16xf32>
    %39 = vector.shape_cast %38 : vector<16xf32> to vector<1x16xf32>
    %cst_18 = arith.constant dense<0.000000e+00> : vector<1xf32>
    %40 = vector.multi_reduction <add>, %39, %cst_18 [1] : vector<1x16xf32> to vector<1xf32>
    %41 = vector.shape_cast %40 : vector<1xf32> to vector<1x1xf32>
    %42 = vector.extract_strided_slice %33 {offsets = [0, 16], sizes = [128, 16], strides = [1, 1]} : vector<128x32xf32> to vector<128x16xf32>
    %43 = arith.mulf %42, %35 : vector<128x16xf32>
    %cst_19 = arith.constant dense<0.000000e+00> : vector<16xf32>
    %44 = vector.multi_reduction <add>, %43, %cst_19 [0] : vector<128x16xf32> to vector<16xf32>
    %45 = vector.shape_cast %44 : vector<16xf32> to vector<1x16xf32>
    %cst_20 = arith.constant dense<0.000000e+00> : vector<1xf32>
    %46 = vector.multi_reduction <add>, %45, %cst_20 [1] : vector<1x16xf32> to vector<1xf32>
    %47 = vector.shape_cast %46 : vector<1xf32> to vector<1x1xf32>
    %48 = tpu.concatenate %41, %47 in 1 : vector<1x1xf32>, vector<1x1xf32> -> vector<1x2xf32>
    %c0_21 = arith.constant 0 : index
    %c0_22 = arith.constant 0 : index
    %49 = vector.load %arg7[%c0_21, %c0_22] : memref<1x1xf32, #tpu.memory_space<vmem>>, vector<1x1xf32>
    %50 = vector.broadcast %49 : vector<1x1xf32> to vector<1x2xf32>
    %51 = arith.addf %48, %50 : vector<1x2xf32>
    %c0_23 = arith.constant 0 : index
    %c0_24 = arith.constant 0 : index
    %52 = vector.load %arg8[%c0_23, %c0_24] : memref<1x2xf32, #tpu.memory_space<vmem>>, vector<1x2xf32>
    tpu.vector_store %arg8[%c0_23, %c0_24], %51 {strides = array<i32>} : memref<1x2xf32, #tpu.memory_space<vmem>>, vector<1x2xf32>,
    return
  }
  func.func @transform_0(%arg0: i32) -> (i32, i32) {
    %c0_i32 = arith.constant 0 : i32
    %c0_i32_0 = arith.constant 0 : i32
    %c0_i32_1 = arith.constant 0 : i32
    return %c0_i32, %c0_i32_0 : i32, i32
  }
  func.func @transform_1(%arg0: i32) -> (i32, i32) {
    %c0_i32 = arith.constant 0 : i32
    %c0_i32_0 = arith.constant 0 : i32
    %c0_i32_1 = arith.constant 0 : i32
    return %c0_i32, %c0_i32_0 : i32, i32
  }
  func.func @transform_2(%arg0: i32) -> (i32, i32) {
    %c0_i32 = arith.constant 0 : i32
    %c0_i32_0 = arith.constant 0 : i32
    %c0_i32_1 = arith.constant 0 : i32
    return %c0_i32, %c0_i32_0 : i32, i32
  }
  func.func @transform_3(%arg0: i32) -> (i32, i32) {
    %c0_i32 = arith.constant 0 : i32
    %c0_i32_0 = arith.constant 0 : i32
    %c0_i32_1 = arith.constant 0 : i32
    return %c0_i32, %c0_i32_0 : i32, i32
  }
  func.func @transform_4(%arg0: i32) -> (i32, i32) {
    %c0_i32 = arith.constant 0 : i32
    %c0_i32_0 = arith.constant 0 : i32
    %c0_i32_1 = arith.constant 0 : i32
    return %c0_i32, %c0_i32_0 : i32, i32
  }
  func.func @transform_5(%arg0: i32) -> (i32, i32) {
    %c0_i32 = arith.constant 0 : i32
    %c0_i32_0 = arith.constant 0 : i32
    %c0_i32_1 = arith.constant 0 : i32
    return %c0_i32, %c0_i32_0 : i32, i32
  }
  func.func @transform_6(%arg0: i32) -> (i32, i32) {
    %c0_i32 = arith.constant 0 : i32
    %c0_i32_0 = arith.constant 0 : i32
    %c0_i32_1 = arith.constant 0 : i32
    return %c0_i32, %c0_i32_0 : i32, i32
  }
  func.func @transform_7(%arg0: i32) -> (i32, i32) {
    %c0_i32 = arith.constant 0 : i32
    %c0_i32_0 = arith.constant 0 : i32
    %c0_i32_1 = arith.constant 0 : i32
    return %c0_i32, %c0_i32_0 : i32, i32
  }
}

</mosaic_0001>

<llo_original>
// kernel: discriminator_forward.5
$region0: #{discriminator_forward.5}
  #allocation0 [shape = 'u32[]', space=smem, size = 0x4, offset = 0x4, fixed_abs, tag = 'smem constant byte address 0x4 - core index']
  #allocation1 [shape = 'u32[72,128]{1,0:T(1,128)}', space=vmem, size = 0x9000, scoped, tag = 'internal scratch']
  %s0 = inlined_call_operand.vmem [shape: bf16[8,48], index: 0, kind: input, shape index: {}]
  %s1 = inlined_call_operand.vmem [shape: bf16[48,8192], index: 1, kind: input, shape index: {}]
  %s2 = inlined_call_operand.vmem [shape: f32[8,1], index: 2, kind: input, shape index: {}]
  %s3 = inlined_call_operand.vmem [shape: f32[8,1], index: 3, kind: input, shape index: {}]
  %s4 = inlined_call_operand.vmem [shape: f32[8,1], index: 4, kind: input, shape index: {}]
  %s5 = inlined_call_operand.vmem [shape: bf16[8,8192], index: 5, kind: output, shape index: {}]
  %s6 = sld [smem:[#allocation0]]
  $region76: #{discriminator_forward.5} parent=0
    _
  %s8 = ssub.s32 1, %s6
  %s9 = scalar_select 0, %s8, %s6
  $region1: #{discriminator_forward.5} parent=0
    #allocation2 [shape = 'u8[786432]{0}', space=vmem, size = 0xc0000, scoped, tag = 'input window, operand 1']
    loop: start=0, step=1, limit=4
    $region2: #{discriminator_forward.5} parent=1 // loop_pre_header
      _
    $region3: #{discriminator_forward.5} parent=1 // loop_header
      %s11 = sphi 0, %s15
      %p12 = scmp.ge.s32.totalorder %s11, 4
      %s19 = sphi 0, %s19
      %s21 = sphi 0, %s19
      %s22 = sphi 0, %s21
      %s36 = sphi 0, %s22
      %s42 = sphi 0, %s44
      %s45 = sphi 0, %s42
      %s46 = sphi 0, %s45
      %s62 = sphi 0, %s46
      %s66 = sphi 0, %s66
      %s68 = sphi 0, %s66
      %s69 = sphi 0, %s68
      %s83 = sphi 0, %s69
      %s87 = sphi 0, %s87
      %s89 = sphi 0, %s87
      %s90 = sphi 0, %s89
      %s104 = sphi 0, %s90
      %s108 = sphi 0, %s108
      %s110 = sphi 0, %s108
      %s111 = sphi 0, %s110
      %s125 = sphi 0, %s111
      %s131 = sphi 0, %s133
      %s134 = sphi 0, %s131
      %s135 = sphi 0, %s134
      %s151 = sphi 0, %s135
    $region4: #{discriminator_forward.5} parent=1 // loop_header_branch
      %14 = sbr.rel (%p12) target = $region8
    $region5: #{discriminator_forward.5} parent=1 // loop_body
      %s16 = ssub.s32 %s11, 1
      %s17 = ssub.s32 %s11, 2
      %s18 = sadd.s32 %s11, 1
      %s20 = sadd.s32 %s19, 1
      %p23 = scmp.eq.s32.totalorder %s11, 1
      %p24 = scmp.ne.s32.totalorder %s19, %s21
      %p25 = scmp.eq.s32.totalorder %s11, 0
      %p26 = por %p24, %p25
      %p27 = scmp.ne.s32.totalorder %s19, %s21
      %p28 = scmp.eq.s32.totalorder %s16, 1
      %p29 = por %p27, %p28
      %p30 = scmp.ne.s32.totalorder %s21, %s22
      %p31 = scmp.eq.s32.totalorder %s16, 0
      %p32 = por %p30, %p31
      %p33 = scmp.ne.s32.totalorder %s21, %s22
      %p34 = scmp.eq.s32.totalorder %s17, 1
      %p35 = por %p33, %p34
      %p37 = scmp.ne.s32.totalorder %s22, %s36
      %p38 = scmp.eq.s32.totalorder %s17, 0
      %p39 = por %p37, %p38
      %s40 = ssub.s32 %s11, %s18
      %p41 = scmp.eq.s32.totalorder %s40, 0
      %s43 = sadd.s32 %s42, 1
      %s44 = scalar_select %p41, %s42, %s43
      %p47 = pneg %p41
      %p48 = scmp.eq.s32.totalorder %s11, 1
      %p49 = por %p47, %p48
      %p50 = scmp.ne.s32.totalorder %s42, %s45
      %p51 = scmp.eq.s32.totalorder %s11, 0
      %p52 = por %p50, %p51
      %p53 = scmp.ne.s32.totalorder %s42, %s45
      %p54 = scmp.eq.s32.totalorder %s16, 1
      %p55 = por %p53, %p54
      %p56 = scmp.ne.s32.totalorder %s45, %s46
      %p57 = scmp.eq.s32.totalorder %s16, 0
      %p58 = por %p56, %p57
      %p59 = scmp.ne.s32.totalorder %s45, %s46
      %p60 = scmp.eq.s32.totalorder %s17, 1
      %p61 = por %p59, %p60
      %p63 = scmp.ne.s32.totalorder %s46, %s62
      %p64 = scmp.eq.s32.totalorder %s17, 0
      %p65 = por %p63, %p64
      %s67 = sadd.s32 %s66, 1
      %p70 = scmp.eq.s32.totalorder %s11, 1
      %p71 = scmp.ne.s32.totalorder %s66, %s68
      %p72 = scmp.eq.s32.totalorder %s11, 0
      %p73 = por %p71, %p72
      %p74 = scmp.ne.s32.totalorder %s66, %s68
      %p75 = scmp.eq.s32.totalorder %s16, 1
      %p76 = por %p74, %p75
      %p77 = scmp.ne.s32.totalorder %s68, %s69
      %p78 = scmp.eq.s32.totalorder %s16, 0
      %p79 = por %p77, %p78
      %p80 = scmp.ne.s32.totalorder %s68, %s69
      %p81 = scmp.eq.s32.totalorder %s17, 1
      %p82 = por %p80, %p81
      %p84 = scmp.ne.s32.totalorder %s69, %s83
      %p85 = scmp.eq.s32.totalorder %s17, 0
      %p86 = por %p84, %p85
      %s88 = sadd.s32 %s87, 1
      %p91 = scmp.eq.s32.totalorder %s11, 1
      %p92 = scmp.ne.s32.totalorder %s87, %s89
      %p93 = scmp.eq.s32.totalorder %s11, 0
      %p94 = por %p92, %p93
      %p95 = scmp.ne.s32.totalorder %s87, %s89
      %p96 = scmp.eq.s32.totalorder %s16, 1
      %p97 = por %p95, %p96
      %p98 = scmp.ne.s32.totalorder %s89, %s90
      %p99 = scmp.eq.s32.totalorder %s16, 0
      %p100 = por %p98, %p99
      %p101 = scmp.ne.s32.totalorder %s89, %s90
      %p102 = scmp.eq.s32.totalorder %s17, 1
      %p103 = por %p101, %p102
      %p105 = scmp.ne.s32.totalorder %s90, %s104
      %p106 = scmp.eq.s32.totalorder %s17, 0
      %p107 = por %p105, %p106
      %s109 = sadd.s32 %s108, 1
      %p112 = scmp.eq.s32.totalorder %s11, 1
      %p113 = scmp.ne.s32.totalorder %s108, %s110
      %p114 = scmp.eq.s32.totalorder %s11, 0
      %p115 = por %p113, %p114
      %p116 = scmp.ne.s32.totalorder %s108, %s110
      %p117 = scmp.eq.s32.totalorder %s16, 1
      %p118 = por %p116, %p117
      %p119 = scmp.ne.s32.totalorder %s110, %s111
      %p120 = scmp.eq.s32.totalorder %s16, 0
      %p121 = por %p119, %p120
      %p122 = scmp.ne.s32.totalorder %s110, %s111
      %p123 = scmp.eq.s32.totalorder %s17, 1
      %p124 = por %p122, %p123
      %p126 = scmp.ne.s32.totalorder %s111, %s125
      %p127 = scmp.eq.s32.totalorder %s17, 0
      %p128 = por %p126, %p127
      %s129 = ssub.s32 %s11, %s18
      %p130 = scmp.eq.s32.totalorder %s129, 0
      %s132 = sadd.s32 %s131, 1
      %s133 = scalar_select %p130, %s131, %s132
      %p136 = pneg %p130
      %p137 = scmp.eq.s32.totalorder %s11, 1
      %p138 = por %p136, %p137
      %p139 = scmp.ne.s32.totalorder %s131, %s134
      %p140 = scmp.eq.s32.totalorder %s11, 0
      %p141 = por %p139, %p140
      %p142 = scmp.ne.s32.totalorder %s131, %s134
      %p143 = scmp.eq.s32.totalorder %s16, 1
      %p144 = por %p142, %p143
      %p145 = scmp.ne.s32.totalorder %s134, %s135
      %p146 = scmp.eq.s32.totalorder %s16, 0
      %p147 = por %p145, %p146
      %p148 = scmp.ne.s32.totalorder %s134, %s135
      %p149 = scmp.eq.s32.totalorder %s17, 1
      %p150 = por %p148, %p149
      %p152 = scmp.ne.s32.totalorder %s135, %s151
      %p153 = scmp.eq.s32.totalorder %s17, 0
      %p154 = por %p152, %p153
      %p155 = scmp.le.s32.totalorder 1, %s11
      %p156 = scmp.lt.s32.totalorder %s11, 3
      %p157 = pnand %p155, %p156
      %p158 = pneg %p157
      // Predicated region
      $region9: #{discriminator_forward.5} parent=5 // pred_check
        _
      $region10: #{discriminator_forward.5} parent=5 // pred_check_branch
        %160 = sbr.rel (%p157) target = $region12
      $region11: #{discriminator_forward.5} parent=5 // pred_region
        %s161 = ssub.s32 %s11, 1
        // Predicated region
        $region13: #{discriminator_forward.5} parent=11 // pred_check
          %p162 = pneg %p32
        $region14: #{discriminator_forward.5} parent=11 // pred_check_branch
          %164 = sbr.rel (%p162) target = $region16
        $region15: #{discriminator_forward.5} parent=11 // pred_region
          _
        $region16: #{discriminator_forward.5} parent=11 // pred_fallthru
          _
        // Predicated region
        $region17: #{discriminator_forward.5} parent=11 // pred_check
          %p165 = pneg %p79
        $region18: #{discriminator_forward.5} parent=11 // pred_check_branch
          %167 = sbr.rel (%p165) target = $region20
        $region19: #{discriminator_forward.5} parent=11 // pred_region
          _
        $region20: #{discriminator_forward.5} parent=11 // pred_fallthru
          _
        // Predicated region
        $region21: #{discriminator_forward.5} parent=11 // pred_check
          %p168 = pneg %p100
        $region22: #{discriminator_forward.5} parent=11 // pred_check_branch
          %170 = sbr.rel (%p168) target = $region24
        $region23: #{discriminator_forward.5} parent=11 // pred_region
          _
        $region24: #{discriminator_forward.5} parent=11 // pred_fallthru
          _
        // Predicated region
        $region25: #{discriminator_forward.5} parent=11 // pred_check
          %p171 = pneg %p121
        $region26: #{discriminator_forward.5} parent=11 // pred_check_branch
          %173 = sbr.rel (%p171) target = $region28
        $region27: #{discriminator_forward.5} parent=11 // pred_region
          _
        $region28: #{discriminator_forward.5} parent=11 // pred_fallthru
          _
      $region12: #{discriminator_forward.5} parent=5 // pred_fallthru
        _
      %p174 = scmp.lt.s32.totalorder %s11, 2
      // Predicated region
      $region29: #{discriminator_forward.5} parent=5 // pred_check
        %p175 = pneg %p174
      $region30: #{discriminator_forward.5} parent=5 // pred_check_branch
        %177 = sbr.rel (%p175) target = $region32
      $region31: #{discriminator_forward.5} parent=5 // pred_region
        // Predicated region
        $region33: #{discriminator_forward.5} parent=31 // pred_check
          %p178 = pneg %p52
        $region34: #{discriminator_forward.5} parent=31 // pred_check_branch
          %180 = sbr.rel (%p178) target = $region36
        $region35: #{discriminator_forward.5} parent=31 // pred_region
          %s181 = sand.u32 %s42, 1
          %s182 = sand.u32 %s42, 1
          %s183 = smul.addr %s182, 768
          %s184 = scalar_lea.vmem [#allocation2], %s183
          %s185 = smul.u32 32, %s11
          %s186 = smul.addr %s185, 4
          %s187 = scalar_lea.vmem %s1, %s186
          // Predicated region
          $region37: #{discriminator_forward.5} parent=35 // pred_check
            _
          $region38: #{discriminator_forward.5} parent=35 // pred_check_branch
            %189 = sbr.rel (0) target = $region40
          $region39: #{discriminator_forward.5} parent=35 // pred_region
            // Predicated region
            $region41: #{discriminator_forward.5} parent=39 // pred_check
              _
            $region42: #{discriminator_forward.5} parent=39 // pred_check_branch
              %191 = sbr.rel (0) target = $region44
            $region43: #{discriminator_forward.5} parent=39 // pred_region
              loop: start=0, step=1, limit=1
              $region45: #{discriminator_forward.5} parent=43 // loop_pre_header
                _
              $region46: #{discriminator_forward.5} parent=43 // loop_header
                %s193 = sphi 0, %s197
                %p194 = scmp.ge.s32.totalorder %s193, 1
                %s198 = sphi %s187, %s187
                %s199 = sphi %s184, %s184
              $region47: #{discriminator_forward.5} parent=43 // loop_header_branch
                %196 = sbr.rel (%p194) target = $region51
              $region48: #{discriminator_forward.5} parent=43 // loop_body
                %v200 = vld [vmem:[%s198] sm:$0xff]
                %201 = vst [vmem:[%s199] sm:$0xff] %v200
                %v202 = vld [vmem:[%s198 + $0x8] sm:$0xff]
                %203 = vst [vmem:[%s199 + $0x8] sm:$0xff] %v202
                %v204 = vld [vmem:[%s198 + $0x10] sm:$0xff]
                %205 = vst [vmem:[%s199 + $0x10] sm:$0xff] %v204
                %v206 = vld [vmem:[%s198 + $0x18] sm:$0xff]
                %207 = vst [vmem:[%s199 + $0x18] sm:$0xff] %v206
                %v208 = vld [vmem:[%s198 + $0x20] sm:$0xff]
                %209 = vst [vmem:[%s199 + $0x20] sm:$0xff] %v208
                %v210 = vld [vmem:[%s198 + $0x28] sm:$0xff]
                %211 = vst [vmem:[%s199 + $0x28] sm:$0xff] %v210
                %v212 = vld [vmem:[%s198 + $0x30] sm:$0xff]
                %213 = vst [vmem:[%s199 + $0x30] sm:$0xff] %v212
                %v214 = vld [vmem:[%s198 + $0x38] sm:$0xff]
                %215 = vst [vmem:[%s199 + $0x38] sm:$0xff] %v214
                %v216 = vld [vmem:[%s198 + $0x40] sm:$0xff]
                %217 = vst [vmem:[%s199 + $0x40] sm:$0xff] %v216
                %v218 = vld [vmem:[%s198 + $0x48] sm:$0xff]
                %219 = vst [vmem:[%s199 + $0x48] sm:$0xff] %v218
                %v220 = vld [vmem:[%s198 + $0x50] sm:$0xff]
                %221 = vst [vmem:[%s199 + $0x50] sm:$0xff] %v220
                %v222 = vld [vmem:[%s198 + $0x58] sm:$0xff]
                %223 = vst [vmem:[%s199 + $0x58] sm:$0xff] %v222
                %v224 = vld [vmem:[%s198 + $0x60] sm:$0xff]
                %225 = vst [vmem:[%s199 + $0x60] sm:$0xff] %v224
                %v226 = vld [vmem:[%s198 + $0x68] sm:$0xff]
                %227 = vst [vmem:[%s199 + $0x68] sm:$0xff] %v226
                %v228 = vld [vmem:[%s198 + $0x70] sm:$0xff]
                %229 = vst [vmem:[%s199 + $0x70] sm:$0xff] %v228
                %v230 = vld [vmem:[%s198 + $0x78] sm:$0xff]
                %231 = vst [vmem:[%s199 + $0x78] sm:$0xff] %v230
                %v232 = vld [vmem:[%s198 + $0x100] sm:$0xff]
                %233 = vst [vmem:[%s199 + $0x80] sm:$0xff] %v232
                %v234 = vld [vmem:[%s198 + $0x108] sm:$0xff]
                %235 = vst [vmem:[%s199 + $0x88] sm:$0xff] %v234
                %v236 = vld [vmem:[%s198 + $0x110] sm:$0xff]
                %237 = vst [vmem:[%s199 + $0x90] sm:$0xff] %v236
                %v238 = vld [vmem:[%s198 + $0x118] sm:$0xff]
                %239 = vst [vmem:[%s199 + $0x98] sm:$0xff] %v238
                %v240 = vld [vmem:[%s198 + $0x120] sm:$0xff]
                %241 = vst [vmem:[%s199 + $0xa0] sm:$0xff] %v240
                %v242 = vld [vmem:[%s198 + $0x128] sm:$0xff]
                %243 = vst [vmem:[%s199 + $0xa8] sm:$0xff] %v242
                %v244 = vld [vmem:[%s198 + $0x130] sm:$0xff]
                %245 = vst [vmem:[%s199 + $0xb0] sm:$0xff] %v244
                %v246 = vld [vmem:[%s198 + $0x138] sm:$0xff]
                %247 = vst [vmem:[%s199 + $0xb8] sm:$0xff] %v246
                %v248 = vld [vmem:[%s198 + $0x140] sm:$0xff]
                %249 = vst [vmem:[%s199 + $0xc0] sm:$0xff] %v248
                %v250 = vld [vmem:[%s198 + $0x148] sm:$0xff]
                %251 = vst [vmem:[%s199 + $0xc8] sm:$0xff] %v250
                %v252 = vld [vmem:[%s198 + $0x150] sm:$0xff]
                %253 = vst [vmem:[%s199 + $0xd0] sm:$0xff] %v252
                %v254 = vld [vmem:[%s198 + $0x158] sm:$0xff]
                %255 = vst [vmem:[%s199 + $0xd8] sm:$0xff] %v254
                %v256 = vld [vmem:[%s198 + $0x160] sm:$0xff]
                %257 = vst [vmem:[%s199 + $0xe0] sm:$0xff] %v256
                %v258 = vld [vmem:[%s198 + $0x168] sm:$0xff]
                %259 = vst [vmem:[%s199 + $0xe8] sm:$0xff] %v258
                %v260 = vld [vmem:[%s198 + $0x170] sm:$0xff]
                %261 = vst [vmem:[%s199 + $0xf0] sm:$0xff] %v260
                %v262 = vld [vmem:[%s198 + $0x178] sm:$0xff]
                %263 = vst [vmem:[%s199 + $0xf8] sm:$0xff] %v262
                %v264 = vld [vmem:[%s198 + $0x200] sm:$0xff]
                %265 = vst [vmem:[%s199 + $0x100] sm:$0xff] %v264
                %v266 = vld [vmem:[%s198 + $0x208] sm:$0xff]
                %267 = vst [vmem:[%s199 + $0x108] sm:$0xff] %v266
                %v268 = vld [vmem:[%s198 + $0x210] sm:$0xff]
                %269 = vst [vmem:[%s199 + $0x110] sm:$0xff] %v268
                %v270 = vld [vmem:[%s198 + $0x218] sm:$0xff]
                %271 = vst [vmem:[%s199 + $0x118] sm:$0xff] %v270
                %v272 = vld [vmem:[%s198 + $0x220] sm:$0xff]
                %273 = vst [vmem:[%s199 + $0x120] sm:$0xff] %v272
                %v274 = vld [vmem:[%s198 + $0x228] sm:$0xff]
                %275 = vst [vmem:[%s199 + $0x128] sm:$0xff] %v274
                %v276 = vld [vmem:[%s198 + $0x230] sm:$0xff]
                %277 = vst [vmem:[%s199 + $0x130] sm:$0xff] %v276
                %v278 = vld [vmem:[%s198 + $0x238] sm:$0xff]
                %279 = vst [vmem:[%s199 + $0x138] sm:$0xff] %v278
                %v280 = vld [vmem:[%s198 + $0x240] sm:$0xff]
                %281 = vst [vmem:[%s199 + $0x140] sm:$0xff] %v280
                %v282 = vld [vmem:[%s198 + $0x248] sm:$0xff]
                %283 = vst [vmem:[%s199 + $0x148] sm:$0xff] %v282
                %v284 = vld [vmem:[%s198 + $0x250] sm:$0xff]
                %285 = vst [vmem:[%s199 + $0x150] sm:$0xff] %v284
                %v286 = vld [vmem:[%s198 + $0x258] sm:$0xff]
                %287 = vst [vmem:[%s199 + $0x158] sm:$0xff] %v286
                %v288 = vld [vmem:[%s198 + $0x260] sm:$0xff]
                %289 = vst [vmem:[%s199 + $0x160] sm:$0xff] %v288
                %v290 = vld [vmem:[%s198 + $0x268] sm:$0xff]
                %291 = vst [vmem:[%s199 + $0x168] sm:$0xff] %v290
                %v292 = vld [vmem:[%s198 + $0x270] sm:$0xff]
                %293 = vst [vmem:[%s199 + $0x170] sm:$0xff] %v292
                %v294 = vld [vmem:[%s198 + $0x278] sm:$0xff]
                %295 = vst [vmem:[%s199 + $0x178] sm:$0xff] %v294
                %v296 = vld [vmem:[%s198 + $0x300] sm:$0xff]
                %297 = vst [vmem:[%s199 + $0x180] sm:$0xff] %v296
                %v298 = vld [vmem:[%s198 + $0x308] sm:$0xff]
                %299 = vst [vmem:[%s199 + $0x188] sm:$0xff] %v298
                %v300 = vld [vmem:[%s198 + $0x310] sm:$0xff]
                %301 = vst [vmem:[%s199 + $0x190] sm:$0xff] %v300
                %v302 = vld [vmem:[%s198 + $0x318] sm:$0xff]
                %303 = vst [vmem:[%s199 + $0x198] sm:$0xff] %v302
                %v304 = vld [vmem:[%s198 + $0x320] sm:$0xff]
                %305 = vst [vmem:[%s199 + $0x1a0] sm:$0xff] %v304
                %v306 = vld [vmem:[%s198 + $0x328] sm:$0xff]
                %307 = vst [vmem:[%s199 + $0x1a8] sm:$0xff] %v306
                %v308 = vld [vmem:[%s198 + $0x330] sm:$0xff]
                %309 = vst [vmem:[%s199 + $0x1b0] sm:$0xff] %v308
                %v310 = vld [vmem:[%s198 + $0x338] sm:$0xff]
                %311 = vst [vmem:[%s199 + $0x1b8] sm:$0xff] %v310
                %v312 = vld [vmem:[%s198 + $0x340] sm:$0xff]
                %313 = vst [vmem:[%s199 + $0x1c0] sm:$0xff] %v312
                %v314 = vld [vmem:[%s198 + $0x348] sm:$0xff]
                %315 = vst [vmem:[%s199 + $0x1c8] sm:$0xff] %v314
                %v316 = vld [vmem:[%s198 + $0x350] sm:$0xff]
                %317 = vst [vmem:[%s199 + $0x1d0] sm:$0xff] %v316
                %v318 = vld [vmem:[%s198 + $0x358] sm:$0xff]
                %319 = vst [vmem:[%s199 + $0x1d8] sm:$0xff] %v318
                %v320 = vld [vmem:[%s198 + $0x360] sm:$0xff]
                %321 = vst [vmem:[%s199 + $0x1e0] sm:$0xff] %v320
                %v322 = vld [vmem:[%s198 + $0x368] sm:$0xff]
                %323 = vst [vmem:[%s199 + $0x1e8] sm:$0xff] %v322
                %v324 = vld [vmem:[%s198 + $0x370] sm:$0xff]
                %325 = vst [vmem:[%s199 + $0x1f0] sm:$0xff] %v324
                %v326 = vld [vmem:[%s198 + $0x378] sm:$0xff]
                %327 = vst [vmem:[%s199 + $0x1f8] sm:$0xff] %v326
                %v328 = vld [vmem:[%s198 + $0x400] sm:$0xff]
                %329 = vst [vmem:[%s199 + $0x200] sm:$0xff] %v328
                %v330 = vld [vmem:[%s198 + $0x408] sm:$0xff]
                %331 = vst [vmem:[%s199 + $0x208] sm:$0xff] %v330
                %v332 = vld [vmem:[%s198 + $0x410] sm:$0xff]
                %333 = vst [vmem:[%s199 + $0x210] sm:$0xff] %v332
                %v334 = vld [vmem:[%s198 + $0x418] sm:$0xff]
                %335 = vst [vmem:[%s199 + $0x218] sm:$0xff] %v334
                %v336 = vld [vmem:[%s198 + $0x420] sm:$0xff]
                %337 = vst [vmem:[%s199 + $0x220] sm:$0xff] %v336
                %v338 = vld [vmem:[%s198 + $0x428] sm:$0xff]
                %339 = vst [vmem:[%s199 + $0x228] sm:$0xff] %v338
                %v340 = vld [vmem:[%s198 + $0x430] sm:$0xff]
                %341 = vst [vmem:[%s199 + $0x230] sm:$0xff] %v340
                %v342 = vld [vmem:[%s198 + $0x438] sm:$0xff]
                %343 = vst [vmem:[%s199 + $0x238] sm:$0xff] %v342
                %v344 = vld [vmem:[%s198 + $0x440] sm:$0xff]
                %345 = vst [vmem:[%s199 + $0x240] sm:$0xff] %v344
                %v346 = vld [vmem:[%s198 + $0x448] sm:$0xff]
                %347 = vst [vmem:[%s199 + $0x248] sm:$0xff] %v346
                %v348 = vld [vmem:[%s198 + $0x450] sm:$0xff]
                %349 = vst [vmem:[%s199 + $0x250] sm:$0xff] %v348
                %v350 = vld [vmem:[%s198 + $0x458] sm:$0xff]
                %351 = vst [vmem:[%s199 + $0x258] sm:$0xff] %v350
                %v352 = vld [vmem:[%s198 + $0x460] sm:$0xff]
                %353 = vst [vmem:[%s199 + $0x260] sm:$0xff] %v352
                %v354 = vld [vmem:[%s198 + $0x468] sm:$0xff]
                %355 = vst [vmem:[%s199 + $0x268] sm:$0xff] %v354
                %v356 = vld [vmem:[%s198 + $0x470] sm:$0xff]
                %357 = vst [vmem:[%s199 + $0x270] sm:$0xff] %v356
                %v358 = vld [vmem:[%s198 + $0x478] sm:$0xff]
                %359 = vst [vmem:[%s199 + $0x278] sm:$0xff] %v358
                %v360 = vld [vmem:[%s198 + $0x500] sm:$0xff]
                %361 = vst [vmem:[%s199 + $0x280] sm:$0xff] %v360
                %v362 = vld [vmem:[%s198 + $0x508] sm:$0xff]
                %363 = vst [vmem:[%s199 + $0x288] sm:$0xff] %v362
                %v364 = vld [vmem:[%s198 + $0x510] sm:$0xff]
                %365 = vst [vmem:[%s199 + $0x290] sm:$0xff] %v364
                %v366 = vld [vmem:[%s198 + $0x518] sm:$0xff]
                %367 = vst [vmem:[%s199 + $0x298] sm:$0xff] %v366
                %v368 = vld [vmem:[%s198 + $0x520] sm:$0xff]
                %369 = vst [vmem:[%s199 + $0x2a0] sm:$0xff] %v368
                %v370 = vld [vmem:[%s198 + $0x528] sm:$0xff]
                %371 = vst [vmem:[%s199 + $0x2a8] sm:$0xff] %v370
                %v372 = vld [vmem:[%s198 + $0x530] sm:$0xff]
                %373 = vst [vmem:[%s199 + $0x2b0] sm:$0xff] %v372
                %v374 = vld [vmem:[%s198 + $0x538] sm:$0xff]
                %375 = vst [vmem:[%s199 + $0x2b8] sm:$0xff] %v374
                %v376 = vld [vmem:[%s198 + $0x540] sm:$0xff]
                %377 = vst [vmem:[%s199 + $0x2c0] sm:$0xff] %v376
                %v378 = vld [vmem:[%s198 + $0x548] sm:$0xff]
                %379 = vst [vmem:[%s199 + $0x2c8] sm:$0xff] %v378
                %v380 = vld [vmem:[%s198 + $0x550] sm:$0xff]
                %381 = vst [vmem:[%s199 + $0x2d0] sm:$0xff] %v380
                %v382 = vld [vmem:[%s198 + $0x558] sm:$0xff]
                %383 = vst [vmem:[%s199 + $0x2d8] sm:$0xff] %v382
                %v384 = vld [vmem:[%s198 + $0x560] sm:$0xff]
                %385 = vst [vmem:[%s199 + $0x2e0] sm:$0xff] %v384
                %v386 = vld [vmem:[%s198 + $0x568] sm:$0xff]
                %387 = vst [vmem:[%s199 + $0x2e8] sm:$0xff] %v386
                %v388 = vld [vmem:[%s198 + $0x570] sm:$0xff]
                %389 = vst [vmem:[%s199 + $0x2f0] sm:$0xff] %v388
                %v390 = vld [vmem:[%s198 + $0x578] sm:$0xff]
                %391 = vst [vmem:[%s199 + $0x2f8] sm:$0xff] %v390
              $region49: #{discriminator_forward.5} parent=43 // loop_footer
                %s197 = sadd.s32 1, %s193
              $region50: #{discriminator_forward.5} parent=43 // loop_footer_branch
                %192 = sbr.rel target = $region46
              $region51: #{discriminator_forward.5} parent=43 // loop_exit
                _
            $region44: #{discriminator_forward.5} parent=39 // pred_fallthru
              _
            // Predicated region
            $region52: #{discriminator_forward.5} parent=39 // pred_check
              _
            $region53: #{discriminator_forward.5} parent=39 // pred_check_branch
              %393 = sbr.rel target = $region55
            $region54: #{discriminator_forward.5} parent=39 // pred_region
              _
            $region55: #{discriminator_forward.5} parent=39 // pred_fallthru
              _
          $region40: #{discriminator_forward.5} parent=35 // pred_fallthru
            _
          %394 = vnop
        $region36: #{discriminator_forward.5} parent=31 // pred_fallthru
          _
      $region32: #{discriminator_forward.5} parent=5 // pred_fallthru
        _
      %p395 = scmp.le.s32.totalorder 1, %s11
      %p396 = scmp.lt.s32.totalorder %s11, 3
      %p397 = pnand %p395, %p396
      %p398 = pneg %p397
      // Predicated region
      $region56: #{discriminator_forward.5} parent=5 // pred_check
        _
      $region57: #{discriminator_forward.5} parent=5 // pred_check_branch
        %400 = sbr.rel (%p397) target = $region59
      $region58: #{discriminator_forward.5} parent=5 // pred_region
        %s401 = ssub.s32 %s11, 1
        %s402 = sand.u32 %s45, 1
        %s403 = sand.u32 %s45, 1
        %s404 = smul.addr %s403, 768
        %s405 = scalar_lea.vmem [#allocation2], %s404
        // Predicated region
        $region60: #{discriminator_forward.5} parent=58 // pred_check
          %p406 = pneg %p58
        $region61: #{discriminator_forward.5} parent=58 // pred_check_branch
          %408 = sbr.rel (%p406) target = $region63
        $region62: #{discriminator_forward.5} parent=58 // pred_region
          _
        $region63: #{discriminator_forward.5} parent=58 // pred_fallthru
          _
        %p409 = pneg %p32
        %p410 = pneg %p29
        %s411 = sand.u32 %s45, 1
        %s412 = sand.u32 %s45, 1
        %s413 = smul.addr %s412, 768
        %s414 = scalar_lea.vmem [#allocation2], %s413
        %p415 = pneg %p58
        %p416 = pneg %p55
        %p417 = pneg %p79
        %p418 = pneg %p76
        %p419 = pneg %p100
        %p420 = pneg %p97
        %p421 = pneg %p121
        %p422 = pneg %p118
        %p423 = pneg %p147
        %p424 = pneg %p144
        %s425 = smul.u32 32, %s16
        %p426 = scmp.lt.s32.totalorder %s425, 63
        %s427 = scalar_select %p426, %s425, 63
        %s428 = smul.addr %s427, 4
        %s429 = scalar_lea.vmem %s5, %s428
        %s430 = smul.u32 32, %s16
        %s431 = smul.u32 32, %s16
        %p432 = scmp.lt.s32.totalorder %s431, 63
        %s433 = scalar_select %p432, %s431, 63
        %s434 = smul.addr %s433, 4
        %s435 = scalar_lea.vmem %s5, %s434
        %s436 = smul.u32 32, %s16
        %v438 = vld [vmem:[%s0] sm:$0xf]
        %v439 = vld [vmem:[%s405] sm:$0xff]
        %v440 = vld [vmem:[%s405 + $0x8] sm:$0xff]
        %v441 = vld [vmem:[%s405 + $0x10] sm:$0xff]
        %v442 = vld [vmem:[%s405 + $0x18] sm:$0xff]
        %v443 = vld [vmem:[%s405 + $0x20] sm:$0xff]
        %v444 = vld [vmem:[%s405 + $0x28] sm:$0xff]
        %v445 = vld [vmem:[%s405 + $0x30] sm:$0xff]
        %v446 = vld [vmem:[%s405 + $0x38] sm:$0xff]
        %v447 = vld [vmem:[%s405 + $0x40] sm:$0xff]
        %v448 = vld [vmem:[%s405 + $0x48] sm:$0xff]
        %v449 = vld [vmem:[%s405 + $0x50] sm:$0xff]
        %v450 = vld [vmem:[%s405 + $0x58] sm:$0xff]
        %v451 = vld [vmem:[%s405 + $0x60] sm:$0xff]
        %v452 = vld [vmem:[%s405 + $0x68] sm:$0xff]
        %v453 = vld [vmem:[%s405 + $0x70] sm:$0xff]
        %v454 = vld [vmem:[%s405 + $0x78] sm:$0xff]
        %v455 = vld [vmem:[%s405 + $0x80] sm:$0xff]
        %v456 = vld [vmem:[%s405 + $0x88] sm:$0xff]
        %v457 = vld [vmem:[%s405 + $0x90] sm:$0xff]
        %v458 = vld [vmem:[%s405 + $0x98] sm:$0xff]
        %v459 = vld [vmem:[%s405 + $0xa0] sm:$0xff]
        %v460 = vld [vmem:[%s405 + $0xa8] sm:$0xff]
        %v461 = vld [vmem:[%s405 + $0xb0] sm:$0xff]
        %v462 = vld [vmem:[%s405 + $0xb8] sm:$0xff]
        %v463 = vld [vmem:[%s405 + $0xc0] sm:$0xff]
        %v464 = vld [vmem:[%s405 + $0xc8] sm:$0xff]
        %v465 = vld [vmem:[%s405 + $0xd0] sm:$0xff]
        %v466 = vld [vmem:[%s405 + $0xd8] sm:$0xff]
        %v467 = vld [vmem:[%s405 + $0xe0] sm:$0xff]
        %v468 = vld [vmem:[%s405 + $0xe8] sm:$0xff]
        %v469 = vld [vmem:[%s405 + $0xf0] sm:$0xff]
        %v470 = vld [vmem:[%s405 + $0xf8] sm:$0xff]
        %v471 = vld [vmem:[%s405 + $0x100] sm:$0xff]
        %v472 = vld [vmem:[%s405 + $0x108] sm:$0xff]
        %v473 = vld [vmem:[%s405 + $0x110] sm:$0xff]
        %v474 = vld [vmem:[%s405 + $0x118] sm:$0xff]
        %v475 = vld [vmem:[%s405 + $0x120] sm:$0xff]
        %v476 = vld [vmem:[%s405 + $0x128] sm:$0xff]
        %v477 = vld [vmem:[%s405 + $0x130] sm:$0xff]
        %v478 = vld [vmem:[%s405 + $0x138] sm:$0xff]
        %v479 = vld [vmem:[%s405 + $0x140] sm:$0xff]
        %v480 = vld [vmem:[%s405 + $0x148] sm:$0xff]
        %v481 = vld [vmem:[%s405 + $0x150] sm:$0xff]
        %v482 = vld [vmem:[%s405 + $0x158] sm:$0xff]
        %v483 = vld [vmem:[%s405 + $0x160] sm:$0xff]
        %v484 = vld [vmem:[%s405 + $0x168] sm:$0xff]
        %v485 = vld [vmem:[%s405 + $0x170] sm:$0xff]
        %v486 = vld [vmem:[%s405 + $0x178] sm:$0xff]
        %v487 = vld [vmem:[%s405 + $0x180] sm:$0xff]
        %v488 = vld [vmem:[%s405 + $0x188] sm:$0xff]
        %v489 = vld [vmem:[%s405 + $0x190] sm:$0xff]
        %v490 = vld [vmem:[%s405 + $0x198] sm:$0xff]
        %v491 = vld [vmem:[%s405 + $0x1a0] sm:$0xff]
        %v492 = vld [vmem:[%s405 + $0x1a8] sm:$0xff]
        %v493 = vld [vmem:[%s405 + $0x1b0] sm:$0xff]
        %v494 = vld [vmem:[%s405 + $0x1b8] sm:$0xff]
        %v495 = vld [vmem:[%s405 + $0x1c0] sm:$0xff]
        %v496 = vld [vmem:[%s405 + $0x1c8] sm:$0xff]
        %v497 = vld [vmem:[%s405 + $0x1d0] sm:$0xff]
        %v498 = vld [vmem:[%s405 + $0x1d8] sm:$0xff]
        %v499 = vld [vmem:[%s405 + $0x1e0] sm:$0xff]
        %v500 = vld [vmem:[%s405 + $0x1e8] sm:$0xff]
        %v501 = vld [vmem:[%s405 + $0x1f0] sm:$0xff]
        %v502 = vld [vmem:[%s405 + $0x1f8] sm:$0xff]
        %v503 = vld [vmem:[%s405 + $0x200] sm:$0xff]
        %v504 = vld [vmem:[%s405 + $0x208] sm:$0xff]
        %v505 = vld [vmem:[%s405 + $0x210] sm:$0xff]
        %v506 = vld [vmem:[%s405 + $0x218] sm:$0xff]
        %v507 = vld [vmem:[%s405 + $0x220] sm:$0xff]
        %v508 = vld [vmem:[%s405 + $0x228] sm:$0xff]
        %v509 = vld [vmem:[%s405 + $0x230] sm:$0xff]
        %v510 = vld [vmem:[%s405 + $0x238] sm:$0xff]
        %v511 = vld [vmem:[%s405 + $0x240] sm:$0xff]
        %v512 = vld [vmem:[%s405 + $0x248] sm:$0xff]
        %v513 = vld [vmem:[%s405 + $0x250] sm:$0xff]
        %v514 = vld [vmem:[%s405 + $0x258] sm:$0xff]
        %v515 = vld [vmem:[%s405 + $0x260] sm:$0xff]
        %v516 = vld [vmem:[%s405 + $0x268] sm:$0xff]
        %v517 = vld [vmem:[%s405 + $0x270] sm:$0xff]
        %v518 = vld [vmem:[%s405 + $0x278] sm:$0xff]
        %v519 = vld [vmem:[%s405 + $0x280] sm:$0xff]
        %v520 = vld [vmem:[%s405 + $0x288] sm:$0xff]
        %v521 = vld [vmem:[%s405 + $0x290] sm:$0xff]
        %v522 = vld [vmem:[%s405 + $0x298] sm:$0xff]
        %v523 = vld [vmem:[%s405 + $0x2a0] sm:$0xff]
        %v524 = vld [vmem:[%s405 + $0x2a8] sm:$0xff]
        %v525 = vld [vmem:[%s405 + $0x2b0] sm:$0xff]
        %v526 = vld [vmem:[%s405 + $0x2b8] sm:$0xff]
        %v527 = vld [vmem:[%s405 + $0x2c0] sm:$0xff]
        %v528 = vld [vmem:[%s405 + $0x2c8] sm:$0xff]
        %v529 = vld [vmem:[%s405 + $0x2d0] sm:$0xff]
        %v530 = vld [vmem:[%s405 + $0x2d8] sm:$0xff]
        %v531 = vld [vmem:[%s405 + $0x2e0] sm:$0xff]
        %v532 = vld [vmem:[%s405 + $0x2e8] sm:$0xff]
        %v533 = vld [vmem:[%s405 + $0x2f0] sm:$0xff]
        %v534 = vld [vmem:[%s405 + $0x2f8] sm:$0xff]
        %v535 = vld [vmem:[%s2] sm:$0xff]
        %537 = vset.pattern.permute.xlu0 0
        %538 = vperm.xlu0 %537, %v535
        %v539 = vpop.permute.xlu0 %538
        %v637 = vunpack.c.l.b16 %v439
        %v638 = vunpack.c.h.b16 %v439
        %v639 = vunpack.c.l.b16 %v440
        %v640 = vunpack.c.h.b16 %v440
        %v641 = vunpack.c.l.b16 %v441
        %v642 = vunpack.c.h.b16 %v441
        %v643 = vunpack.c.l.b16 %v442
        %v644 = vunpack.c.h.b16 %v442
        %v645 = vunpack.c.l.b16 %v443
        %v646 = vunpack.c.h.b16 %v443
        %v647 = vunpack.c.l.b16 %v444
        %v648 = vunpack.c.h.b16 %v444
        %v649 = vunpack.c.l.b16 %v445
        %v650 = vunpack.c.h.b16 %v445
        %v651 = vunpack.c.l.b16 %v446
        %v652 = vunpack.c.h.b16 %v446
        %v653 = vunpack.c.l.b16 %v447
        %v654 = vunpack.c.h.b16 %v447
        %v655 = vunpack.c.l.b16 %v448
        %v656 = vunpack.c.h.b16 %v448
        %v657 = vunpack.c.l.b16 %v449
        %v658 = vunpack.c.h.b16 %v449
        %v659 = vunpack.c.l.b16 %v450
        %v660 = vunpack.c.h.b16 %v450
        %v661 = vunpack.c.l.b16 %v451
        %v662 = vunpack.c.h.b16 %v451
        %v663 = vunpack.c.l.b16 %v452
        %v664 = vunpack.c.h.b16 %v452
        %v665 = vunpack.c.l.b16 %v453
        %v666 = vunpack.c.h.b16 %v453
        %v667 = vunpack.c.l.b16 %v454
        %v668 = vunpack.c.h.b16 %v454
        %v669 = vunpack.c.l.b16 %v455
        %v670 = vunpack.c.h.b16 %v455
        %v671 = vunpack.c.l.b16 %v456
        %v672 = vunpack.c.h.b16 %v456
        %v673 = vunpack.c.l.b16 %v457
        %v674 = vunpack.c.h.b16 %v457
        %v675 = vunpack.c.l.b16 %v458
        %v676 = vunpack.c.h.b16 %v458
        %v677 = vunpack.c.l.b16 %v459
        %v678 = vunpack.c.h.b16 %v459
        %v679 = vunpack.c.l.b16 %v460
        %v680 = vunpack.c.h.b16 %v460
        %v681 = vunpack.c.l.b16 %v461
        %v682 = vunpack.c.h.b16 %v461
        %v683 = vunpack.c.l.b16 %v462
        %v684 = vunpack.c.h.b16 %v462
        %v685 = vunpack.c.l.b16 %v463
        %v686 = vunpack.c.h.b16 %v463
        %v687 = vunpack.c.l.b16 %v464
        %v688 = vunpack.c.h.b16 %v464
        %v689 = vunpack.c.l.b16 %v465
        %v690 = vunpack.c.h.b16 %v465
        %v691 = vunpack.c.l.b16 %v466
        %v692 = vunpack.c.h.b16 %v466
        %v693 = vunpack.c.l.b16 %v467
        %v694 = vunpack.c.h.b16 %v467
        %v695 = vunpack.c.l.b16 %v468
        %v696 = vunpack.c.h.b16 %v468
        %v697 = vunpack.c.l.b16 %v469
        %v698 = vunpack.c.h.b16 %v469
        %v699 = vunpack.c.l.b16 %v470
        %v700 = vunpack.c.h.b16 %v470
        %v701 = vunpack.c.l.b16 %v471
        %v702 = vunpack.c.h.b16 %v471
        %v703 = vunpack.c.l.b16 %v472
        %v704 = vunpack.c.h.b16 %v472
        %v705 = vunpack.c.l.b16 %v473
        %v706 = vunpack.c.h.b16 %v473
        %v707 = vunpack.c.l.b16 %v474
        %v708 = vunpack.c.h.b16 %v474
        %v709 = vunpack.c.l.b16 %v475
        %v710 = vunpack.c.h.b16 %v475
        %v711 = vunpack.c.l.b16 %v476
        %v712 = vunpack.c.h.b16 %v476
        %v713 = vunpack.c.l.b16 %v477
        %v714 = vunpack.c.h.b16 %v477
        %v715 = vunpack.c.l.b16 %v478
        %v716 = vunpack.c.h.b16 %v478
        %v717 = vunpack.c.l.b16 %v479
        %v718 = vunpack.c.h.b16 %v479
        %v719 = vunpack.c.l.b16 %v480
        %v720 = vunpack.c.h.b16 %v480
        %v721 = vunpack.c.l.b16 %v481
        %v722 = vunpack.c.h.b16 %v481
        %v723 = vunpack.c.l.b16 %v482
        %v724 = vunpack.c.h.b16 %v482
        %v725 = vunpack.c.l.b16 %v483
        %v726 = vunpack.c.h.b16 %v483
        %v727 = vunpack.c.l.b16 %v484
        %v728 = vunpack.c.h.b16 %v484
        %v729 = vunpack.c.l.b16 %v485
        %v730 = vunpack.c.h.b16 %v485
        %v731 = vunpack.c.l.b16 %v486
        %v732 = vunpack.c.h.b16 %v486
        %v733 = vunpack.c.l.b16 %v487
        %v734 = vunpack.c.h.b16 %v487
        %v735 = vunpack.c.l.b16 %v488
        %v736 = vunpack.c.h.b16 %v488
        %v737 = vunpack.c.l.b16 %v489
        %v738 = vunpack.c.h.b16 %v489
        %v739 = vunpack.c.l.b16 %v490
        %v740 = vunpack.c.h.b16 %v490
        %v741 = vunpack.c.l.b16 %v491
        %v742 = vunpack.c.h.b16 %v491
        %v743 = vunpack.c.l.b16 %v492
        %v744 = vunpack.c.h.b16 %v492
        %v745 = vunpack.c.l.b16 %v493
        %v746 = vunpack.c.h.b16 %v493
        %v747 = vunpack.c.l.b16 %v494
        %v748 = vunpack.c.h.b16 %v494
        %v749 = vunpack.c.l.b16 %v495
        %v750 = vunpack.c.h.b16 %v495
        %v751 = vunpack.c.l.b16 %v496
        %v752 = vunpack.c.h.b16 %v496
        %v753 = vunpack.c.l.b16 %v497
        %v754 = vunpack.c.h.b16 %v497
        %v755 = vunpack.c.l.b16 %v498
        %v756 = vunpack.c.h.b16 %v498
        %v757 = vunpack.c.l.b16 %v499
        %v758 = vunpack.c.h.b16 %v499
        %v759 = vunpack.c.l.b16 %v500
        %v760 = vunpack.c.h.b16 %v500
        %v761 = vunpack.c.l.b16 %v501
        %v762 = vunpack.c.h.b16 %v501
        %v763 = vunpack.c.l.b16 %v502
        %v764 = vunpack.c.h.b16 %v502
        %v765 = vunpack.c.l.b16 %v503
        %v766 = vunpack.c.h.b16 %v503
        %v767 = vunpack.c.l.b16 %v504
        %v768 = vunpack.c.h.b16 %v504
        %v769 = vunpack.c.l.b16 %v505
        %v770 = vunpack.c.h.b16 %v505
        %v771 = vunpack.c.l.b16 %v506
        %v772 = vunpack.c.h.b16 %v506
        %v773 = vunpack.c.l.b16 %v507
        %v774 = vunpack.c.h.b16 %v507
        %v775 = vunpack.c.l.b16 %v508
        %v776 = vunpack.c.h.b16 %v508
        %v777 = vunpack.c.l.b16 %v509
        %v778 = vunpack.c.h.b16 %v509
        %v779 = vunpack.c.l.b16 %v510
        %v780 = vunpack.c.h.b16 %v510
        %v781 = vunpack.c.l.b16 %v511
        %v782 = vunpack.c.h.b16 %v511
        %v783 = vunpack.c.l.b16 %v512
        %v784 = vunpack.c.h.b16 %v512
        %v785 = vunpack.c.l.b16 %v513
        %v786 = vunpack.c.h.b16 %v513
        %v787 = vunpack.c.l.b16 %v514
        %v788 = vunpack.c.h.b16 %v514
        %v789 = vunpack.c.l.b16 %v515
        %v790 = vunpack.c.h.b16 %v515
        %v791 = vunpack.c.l.b16 %v516
        %v792 = vunpack.c.h.b16 %v516
        %v793 = vunpack.c.l.b16 %v517
        %v794 = vunpack.c.h.b16 %v517
        %v795 = vunpack.c.l.b16 %v518
        %v796 = vunpack.c.h.b16 %v518
        %v797 = vunpack.c.l.b16 %v519
        %v798 = vunpack.c.h.b16 %v519
        %v799 = vunpack.c.l.b16 %v520
        %v800 = vunpack.c.h.b16 %v520
        %v801 = vunpack.c.l.b16 %v521
        %v802 = vunpack.c.h.b16 %v521
        %v803 = vunpack.c.l.b16 %v522
        %v804 = vunpack.c.h.b16 %v522
        %v805 = vunpack.c.l.b16 %v523
        %v806 = vunpack.c.h.b16 %v523
        %v807 = vunpack.c.l.b16 %v524
        %v808 = vunpack.c.h.b16 %v524
        %v809 = vunpack.c.l.b16 %v525
        %v810 = vunpack.c.h.b16 %v525
        %v811 = vunpack.c.l.b16 %v526
        %v812 = vunpack.c.h.b16 %v526
        %v813 = vunpack.c.l.b16 %v527
        %v814 = vunpack.c.h.b16 %v527
        %v815 = vunpack.c.l.b16 %v528
        %v816 = vunpack.c.h.b16 %v528
        %v817 = vunpack.c.l.b16 %v529
        %v818 = vunpack.c.h.b16 %v529
        %v819 = vunpack.c.l.b16 %v530
        %v820 = vunpack.c.h.b16 %v530
        %v821 = vunpack.c.l.b16 %v531
        %v822 = vunpack.c.h.b16 %v531
        %v823 = vunpack.c.l.b16 %v532
        %v824 = vunpack.c.h.b16 %v532
        %v825 = vunpack.c.l.b16 %v533
        %v826 = vunpack.c.h.b16 %v533
        %v827 = vunpack.c.l.b16 %v534
        %v828 = vunpack.c.h.b16 %v534
        %v829 = vpack.c.b16 %v669, %v637
        %v830 = vpack.c.b16 %v670, %v638
        %v831 = vpack.c.b16 %v671, %v639
        %v832 = vpack.c.b16 %v672, %v640
        %v833 = vpack.c.b16 %v673, %v641
        %v834 = vpack.c.b16 %v674, %v642
        %v835 = vpack.c.b16 %v675, %v643
        %v836 = vpack.c.b16 %v676, %v644
        %v837 = vpack.c.b16 %v677, %v645
        %v838 = vpack.c.b16 %v678, %v646
        %v839 = vpack.c.b16 %v679, %v647
        %v840 = vpack.c.b16 %v680, %v648
        %v841 = vpack.c.b16 %v681, %v649
        %v842 = vpack.c.b16 %v682, %v650
        %v843 = vpack.c.b16 %v683, %v651
        %v844 = vpack.c.b16 %v684, %v652
        %v845 = vpack.c.b16 %v685, %v653
        %v846 = vpack.c.b16 %v686, %v654
        %v847 = vpack.c.b16 %v687, %v655
        %v848 = vpack.c.b16 %v688, %v656
        %v849 = vpack.c.b16 %v689, %v657
        %v850 = vpack.c.b16 %v690, %v658
        %v851 = vpack.c.b16 %v691, %v659
        %v852 = vpack.c.b16 %v692, %v660
        %v853 = vpack.c.b16 %v693, %v661
        %v854 = vpack.c.b16 %v694, %v662
        %v855 = vpack.c.b16 %v695, %v663
        %v856 = vpack.c.b16 %v696, %v664
        %v857 = vpack.c.b16 %v697, %v665
        %v858 = vpack.c.b16 %v698, %v666
        %v859 = vpack.c.b16 %v699, %v667
        %v860 = vpack.c.b16 %v700, %v668
        %v861 = vpack.c.b16 %v733, %v701
        %v862 = vpack.c.b16 %v734, %v702
        %v863 = vpack.c.b16 %v735, %v703
        %v864 = vpack.c.b16 %v736, %v704
        %v865 = vpack.c.b16 %v737, %v705
        %v866 = vpack.c.b16 %v738, %v706
        %v867 = vpack.c.b16 %v739, %v707
        %v868 = vpack.c.b16 %v740, %v708
        %v869 = vpack.c.b16 %v741, %v709
        %v870 = vpack.c.b16 %v742, %v710
        %v871 = vpack.c.b16 %v743, %v711
        %v872 = vpack.c.b16 %v744, %v712
        %v873 = vpack.c.b16 %v745, %v713
        %v874 = vpack.c.b16 %v746, %v714
        %v875 = vpack.c.b16 %v747, %v715
        %v876 = vpack.c.b16 %v748, %v716
        %v877 = vpack.c.b16 %v749, %v717
        %v878 = vpack.c.b16 %v750, %v718
        %v879 = vpack.c.b16 %v751, %v719
        %v880 = vpack.c.b16 %v752, %v720
        %v881 = vpack.c.b16 %v753, %v721
        %v882 = vpack.c.b16 %v754, %v722
        %v883 = vpack.c.b16 %v755, %v723
        %v884 = vpack.c.b16 %v756, %v724
        %v885 = vpack.c.b16 %v757, %v725
        %v886 = vpack.c.b16 %v758, %v726
        %v887 = vpack.c.b16 %v759, %v727
        %v888 = vpack.c.b16 %v760, %v728
        %v889 = vpack.c.b16 %v761, %v729
        %v890 = vpack.c.b16 %v762, %v730
        %v891 = vpack.c.b16 %v763, %v731
        %v892 = vpack.c.b16 %v764, %v732
        %v893 = vpack.c.b16 %v797, %v765
        %v894 = vpack.c.b16 %v798, %v766
        %v895 = vpack.c.b16 %v799, %v767
        %v896 = vpack.c.b16 %v800, %v768
        %v897 = vpack.c.b16 %v801, %v769
        %v898 = vpack.c.b16 %v802, %v770
        %v899 = vpack.c.b16 %v803, %v771
        %v900 = vpack.c.b16 %v804, %v772
        %v901 = vpack.c.b16 %v805, %v773
        %v902 = vpack.c.b16 %v806, %v774
        %v903 = vpack.c.b16 %v807, %v775
        %v904 = vpack.c.b16 %v808, %v776
        %v905 = vpack.c.b16 %v809, %v777
        %v906 = vpack.c.b16 %v810, %v778
        %v907 = vpack.c.b16 %v811, %v779
        %v908 = vpack.c.b16 %v812, %v780
        %v909 = vpack.c.b16 %v813, %v781
        %v910 = vpack.c.b16 %v814, %v782
        %v911 = vpack.c.b16 %v815, %v783
        %v912 = vpack.c.b16 %v816, %v784
        %v913 = vpack.c.b16 %v817, %v785
        %v914 = vpack.c.b16 %v818, %v786
        %v915 = vpack.c.b16 %v819, %v787
        %v916 = vpack.c.b16 %v820, %v788
        %v917 = vpack.c.b16 %v821, %v789
        %v918 = vpack.c.b16 %v822, %v790
        %v919 = vpack.c.b16 %v823, %v791
        %v920 = vpack.c.b16 %v824, %v792
        %v921 = vpack.c.b16 %v825, %v793
        %v922 = vpack.c.b16 %v826, %v794
        %v923 = vpack.c.b16 %v827, %v795
        %v924 = vpack.c.b16 %v828, %v796
        %vm1021 = vcmask 392192
        %v1023 = vsel %vm1021, %v438, 0
        %1025 = vmatpush.bf16.msra.mxu0 0
        %1026 = vmatpush.bf16.msra.mxu0 0
        %1027 = vmatpush.bf16.msra.mxu0 0
        %1028 = vmatpush.bf16.msra.mxu0 0
        %1029 = vmatpush.bf16.msra.mxu0 0
        %1030 = vmatpush.bf16.msra.mxu0 %v893
        %1031 = vmatpush.bf16.msra.mxu0 %v861
        %1032 = vmatpush.bf16.msra.mxu0 %v829
        %1033 = vmatmul.bf16.gmra.mxu0 %v1023
        %v1034 = vpop.f32.mrf.mxu0
        %v1035 = vadd.f32 %v539, %v1034
        %v1036 = vpop.f32.mrf.mxu0
        %1037 = vdwg.mxu0
        %1038 = vmatpush.bf16.msra.mxu0 0
        %1039 = vmatpush.bf16.msra.mxu0 0
        %1040 = vmatpush.bf16.msra.mxu0 0
        %1041 = vmatpush.bf16.msra.mxu0 0
        %1042 = vmatpush.bf16.msra.mxu0 0
        %1043 = vmatpush.bf16.msra.mxu0 %v894
        %1044 = vmatpush.bf16.msra.mxu0 %v862
        %1045 = vmatpush.bf16.msra.mxu0 %v830
        %1046 = vmatmul.bf16.gmra.mxu0 %v1023
        %v1047 = vpop.f32.mrf.mxu0
        %v1048 = vadd.f32 %v539, %v1047
        %v1049 = vpop.f32.mrf.mxu0
        %1050 = vdwg.mxu0
        %1051 = vmatpush.bf16.msra.mxu0 0
        %1052 = vmatpush.bf16.msra.mxu0 0
        %1053 = vmatpush.bf16.msra.mxu0 0
        %1054 = vmatpush.bf16.msra.mxu0 0
        %1055 = vmatpush.bf16.msra.mxu0 0
        %1056 = vmatpush.bf16.msra.mxu0 %v895
        %1057 = vmatpush.bf16.msra.mxu0 %v863
        %1058 = vmatpush.bf16.msra.mxu0 %v831
        %1059 = vmatmul.bf16.gmra.mxu0 %v1023
        %v1060 = vpop.f32.mrf.mxu0
        %v1061 = vadd.f32 %v539, %v1060
        %v1062 = vpop.f32.mrf.mxu0
        %1063 = vdwg.mxu0
        %1064 = vmatpush.bf16.msra.mxu0 0
        %1065 = vmatpush.bf16.msra.mxu0 0
        %1066 = vmatpush.bf16.msra.mxu0 0
        %1067 = vmatpush.bf16.msra.mxu0 0
        %1068 = vmatpush.bf16.msra.mxu0 0
        %1069 = vmatpush.bf16.msra.mxu0 %v896
        %1070 = vmatpush.bf16.msra.mxu0 %v864
        %1071 = vmatpush.bf16.msra.mxu0 %v832
        %1072 = vmatmul.bf16.gmra.mxu0 %v1023
        %v1073 = vpop.f32.mrf.mxu0
        %v1074 = vadd.f32 %v539, %v1073
        %v1075 = vpop.f32.mrf.mxu0
        %1076 = vdwg.mxu0
        %1077 = vmatpush.bf16.msra.mxu0 0
        %1078 = vmatpush.bf16.msra.mxu0 0
        %1079 = vmatpush.bf16.msra.mxu0 0
        %1080 = vmatpush.bf16.msra.mxu0 0
        %1081 = vmatpush.bf16.msra.mxu0 0
        %1082 = vmatpush.bf16.msra.mxu0 %v897
        %1083 = vmatpush.bf16.msra.mxu0 %v865
        %1084 = vmatpush.bf16.msra.mxu0 %v833
        %1085 = vmatmul.bf16.gmra.mxu0 %v1023
        %v1086 = vpop.f32.mrf.mxu0
        %v1087 = vadd.f32 %v539, %v1086
        %v1088 = vpop.f32.mrf.mxu0
        %1089 = vdwg.mxu0
        %1090 = vmatpush.bf16.msra.mxu0 0
        %1091 = vmatpush.bf16.msra.mxu0 0
        %1092 = vmatpush.bf16.msra.mxu0 0
        %1093 = vmatpush.bf16.msra.mxu0 0
        %1094 = vmatpush.bf16.msra.mxu0 0
        %1095 = vmatpush.bf16.msra.mxu0 %v898
        %1096 = vmatpush.bf16.msra.mxu0 %v866
        %1097 = vmatpush.bf16.msra.mxu0 %v834
        %1098 = vmatmul.bf16.gmra.mxu0 %v1023
        %v1099 = vpop.f32.mrf.mxu0
        %v1100 = vadd.f32 %v539, %v1099
        %v1101 = vpop.f32.mrf.mxu0
        %1102 = vdwg.mxu0
        %1103 = vmatpush.bf16.msra.mxu0 0
        %1104 = vmatpush.bf16.msra.mxu0 0
        %1105 = vmatpush.bf16.msra.mxu0 0
        %1106 = vmatpush.bf16.msra.mxu0 0
        %1107 = vmatpush.bf16.msra.mxu0 0
        %1108 = vmatpush.bf16.msra.mxu0 %v899
        %1109 = vmatpush.bf16.msra.mxu0 %v867
        %1110 = vmatpush.bf16.msra.mxu0 %v835
        %1111 = vmatmul.bf16.gmra.mxu0 %v1023
        %v1112 = vpop.f32.mrf.mxu0
        %v1113 = vadd.f32 %v539, %v1112
        %v1114 = vpop.f32.mrf.mxu0
        %1115 = vdwg.mxu0
        %1116 = vmatpush.bf16.msra.mxu0 0
        %1117 = vmatpush.bf16.msra.mxu0 0
        %1118 = vmatpush.bf16.msra.mxu0 0
        %1119 = vmatpush.bf16.msra.mxu0 0
        %1120 = vmatpush.bf16.msra.mxu0 0
        %1121 = vmatpush.bf16.msra.mxu0 %v900
        %1122 = vmatpush.bf16.msra.mxu0 %v868
        %1123 = vmatpush.bf16.msra.mxu0 %v836
        %1124 = vmatmul.bf16.gmra.mxu0 %v1023
        %v1125 = vpop.f32.mrf.mxu0
        %v1126 = vadd.f32 %v539, %v1125
        %v1127 = vpop.f32.mrf.mxu0
        %1128 = vdwg.mxu0
        %1129 = vmatpush.bf16.msra.mxu0 0
        %1130 = vmatpush.bf16.msra.mxu0 0
        %1131 = vmatpush.bf16.msra.mxu0 0
        %1132 = vmatpush.bf16.msra.mxu0 0
        %1133 = vmatpush.bf16.msra.mxu0 0
        %1134 = vmatpush.bf16.msra.mxu0 %v901
        %1135 = vmatpush.bf16.msra.mxu0 %v869
        %1136 = vmatpush.bf16.msra.mxu0 %v837
        %1137 = vmatmul.bf16.gmra.mxu0 %v1023
        %v1138 = vpop.f32.mrf.mxu0
        %v1139 = vadd.f32 %v539, %v1138
        %v1140 = vpop.f32.mrf.mxu0
        %1141 = vdwg.mxu0
        %1142 = vmatpush.bf16.msra.mxu0 0
        %1143 = vmatpush.bf16.msra.mxu0 0
        %1144 = vmatpush.bf16.msra.mxu0 0
        %1145 = vmatpush.bf16.msra.mxu0 0
        %1146 = vmatpush.bf16.msra.mxu0 0
        %1147 = vmatpush.bf16.msra.mxu0 %v902
        %1148 = vmatpush.bf16.msra.mxu0 %v870
        %1149 = vmatpush.bf16.msra.mxu0 %v838
        %1150 = vmatmul.bf16.gmra.mxu0 %v1023
        %v1151 = vpop.f32.mrf.mxu0
        %v1152 = vadd.f32 %v539, %v1151
        %v1153 = vpop.f32.mrf.mxu0
        %1154 = vdwg.mxu0
        %1155 = vmatpush.bf16.msra.mxu0 0
        %1156 = vmatpush.bf16.msra.mxu0 0
        %1157 = vmatpush.bf16.msra.mxu0 0
        %1158 = vmatpush.bf16.msra.mxu0 0
        %1159 = vmatpush.bf16.msra.mxu0 0
        %1160 = vmatpush.bf16.msra.mxu0 %v903
        %1161 = vmatpush.bf16.msra.mxu0 %v871
        %1162 = vmatpush.bf16.msra.mxu0 %v839
        %1163 = vmatmul.bf16.gmra.mxu0 %v1023
        %v1164 = vpop.f32.mrf.mxu0
        %v1165 = vadd.f32 %v539, %v1164
        %v1166 = vpop.f32.mrf.mxu0
        %1167 = vdwg.mxu0
        %1168 = vmatpush.bf16.msra.mxu0 0
        %1169 = vmatpush.bf16.msra.mxu0 0
        %1170 = vmatpush.bf16.msra.mxu0 0
        %1171 = vmatpush.bf16.msra.mxu0 0
        %1172 = vmatpush.bf16.msra.mxu0 0
        %1173 = vmatpush.bf16.msra.mxu0 %v904
        %1174 = vmatpush.bf16.msra.mxu0 %v872
        %1175 = vmatpush.bf16.msra.mxu0 %v840
        %1176 = vmatmul.bf16.gmra.mxu0 %v1023
        %v1177 = vpop.f32.mrf.mxu0
        %v1178 = vadd.f32 %v539, %v1177
        %v1179 = vpop.f32.mrf.mxu0
        %1180 = vdwg.mxu0
        %1181 = vmatpush.bf16.msra.mxu0 0
        %1182 = vmatpush.bf16.msra.mxu0 0
        %1183 = vmatpush.bf16.msra.mxu0 0
        %1184 = vmatpush.bf16.msra.mxu0 0
        %1185 = vmatpush.bf16.msra.mxu0 0
        %1186 = vmatpush.bf16.msra.mxu0 %v905
        %1187 = vmatpush.bf16.msra.mxu0 %v873
        %1188 = vmatpush.bf16.msra.mxu0 %v841
        %1189 = vmatmul.bf16.gmra.mxu0 %v1023
        %v1190 = vpop.f32.mrf.mxu0
        %v1191 = vadd.f32 %v539, %v1190
        %v1192 = vpop.f32.mrf.mxu0
        %1193 = vdwg.mxu0
        %1194 = vmatpush.bf16.msra.mxu0 0
        %1195 = vmatpush.bf16.msra.mxu0 0
        %1196 = vmatpush.bf16.msra.mxu0 0
        %1197 = vmatpush.bf16.msra.mxu0 0
        %1198 = vmatpush.bf16.msra.mxu0 0
        %1199 = vmatpush.bf16.msra.mxu0 %v906
        %1200 = vmatpush.bf16.msra.mxu0 %v874
        %1201 = vmatpush.bf16.msra.mxu0 %v842
        %1202 = vmatmul.bf16.gmra.mxu0 %v1023
        %v1203 = vpop.f32.mrf.mxu0
        %v1204 = vadd.f32 %v539, %v1203
        %v1205 = vpop.f32.mrf.mxu0
        %1206 = vdwg.mxu0
        %1207 = vmatpush.bf16.msra.mxu0 0
        %1208 = vmatpush.bf16.msra.mxu0 0
        %1209 = vmatpush.bf16.msra.mxu0 0
        %1210 = vmatpush.bf16.msra.mxu0 0
        %1211 = vmatpush.bf16.msra.mxu0 0
        %1212 = vmatpush.bf16.msra.mxu0 %v907
        %1213 = vmatpush.bf16.msra.mxu0 %v875
        %1214 = vmatpush.bf16.msra.mxu0 %v843
        %1215 = vmatmul.bf16.gmra.mxu0 %v1023
        %v1216 = vpop.f32.mrf.mxu0
        %v1217 = vadd.f32 %v539, %v1216
        %v1218 = vpop.f32.mrf.mxu0
        %1219 = vdwg.mxu0
        %1220 = vmatpush.bf16.msra.mxu0 0
        %1221 = vmatpush.bf16.msra.mxu0 0
        %1222 = vmatpush.bf16.msra.mxu0 0
        %1223 = vmatpush.bf16.msra.mxu0 0
        %1224 = vmatpush.bf16.msra.mxu0 0
        %1225 = vmatpush.bf16.msra.mxu0 %v908
        %1226 = vmatpush.bf16.msra.mxu0 %v876
        %1227 = vmatpush.bf16.msra.mxu0 %v844
        %1228 = vmatmul.bf16.gmra.mxu0 %v1023
        %v1229 = vpop.f32.mrf.mxu0
        %v1230 = vadd.f32 %v539, %v1229
        %v1231 = vpop.f32.mrf.mxu0
        %1232 = vdwg.mxu0
        %1233 = vmatpush.bf16.msra.mxu0 0
        %1234 = vmatpush.bf16.msra.mxu0 0
        %1235 = vmatpush.bf16.msra.mxu0 0
        %1236 = vmatpush.bf16.msra.mxu0 0
        %1237 = vmatpush.bf16.msra.mxu0 0
        %1238 = vmatpush.bf16.msra.mxu0 %v909
        %1239 = vmatpush.bf16.msra.mxu0 %v877
        %1240 = vmatpush.bf16.msra.mxu0 %v845
        %1241 = vmatmul.bf16.gmra.mxu0 %v1023
        %v1242 = vpop.f32.mrf.mxu0
        %v1243 = vadd.f32 %v539, %v1242
        %v1244 = vpop.f32.mrf.mxu0
        %1245 = vdwg.mxu0
        %1246 = vmatpush.bf16.msra.mxu0 0
        %1247 = vmatpush.bf16.msra.mxu0 0
        %1248 = vmatpush.bf16.msra.mxu0 0
        %1249 = vmatpush.bf16.msra.mxu0 0
        %1250 = vmatpush.bf16.msra.mxu0 0
        %1251 = vmatpush.bf16.msra.mxu0 %v910
        %1252 = vmatpush.bf16.msra.mxu0 %v878
        %1253 = vmatpush.bf16.msra.mxu0 %v846
        %1254 = vmatmul.bf16.gmra.mxu0 %v1023
        %v1255 = vpop.f32.mrf.mxu0
        %v1256 = vadd.f32 %v539, %v1255
        %v1257 = vpop.f32.mrf.mxu0
        %1258 = vdwg.mxu0
        %1259 = vmatpush.bf16.msra.mxu0 0
        %1260 = vmatpush.bf16.msra.mxu0 0
        %1261 = vmatpush.bf16.msra.mxu0 0
        %1262 = vmatpush.bf16.msra.mxu0 0
        %1263 = vmatpush.bf16.msra.mxu0 0
        %1264 = vmatpush.bf16.msra.mxu0 %v911
        %1265 = vmatpush.bf16.msra.mxu0 %v879
        %1266 = vmatpush.bf16.msra.mxu0 %v847
        %1267 = vmatmul.bf16.gmra.mxu0 %v1023
        %v1268 = vpop.f32.mrf.mxu0
        %v1269 = vadd.f32 %v539, %v1268
        %v1270 = vpop.f32.mrf.mxu0
        %1271 = vdwg.mxu0
        %1272 = vmatpush.bf16.msra.mxu0 0
        %1273 = vmatpush.bf16.msra.mxu0 0
        %1274 = vmatpush.bf16.msra.mxu0 0
        %1275 = vmatpush.bf16.msra.mxu0 0
        %1276 = vmatpush.bf16.msra.mxu0 0
        %1277 = vmatpush.bf16.msra.mxu0 %v912
        %1278 = vmatpush.bf16.msra.mxu0 %v880
        %1279 = vmatpush.bf16.msra.mxu0 %v848
        %1280 = vmatmul.bf16.gmra.mxu0 %v1023
        %v1281 = vpop.f32.mrf.mxu0
        %v1282 = vadd.f32 %v539, %v1281
        %v1283 = vpop.f32.mrf.mxu0
        %1284 = vdwg.mxu0
        %1285 = vmatpush.bf16.msra.mxu0 0
        %1286 = vmatpush.bf16.msra.mxu0 0
        %1287 = vmatpush.bf16.msra.mxu0 0
        %1288 = vmatpush.bf16.msra.mxu0 0
        %1289 = vmatpush.bf16.msra.mxu0 0
        %1290 = vmatpush.bf16.msra.mxu0 %v913
        %1291 = vmatpush.bf16.msra.mxu0 %v881
        %1292 = vmatpush.bf16.msra.mxu0 %v849
        %1293 = vmatmul.bf16.gmra.mxu0 %v1023
        %v1294 = vpop.f32.mrf.mxu0
        %v1295 = vadd.f32 %v539, %v1294
        %v1296 = vpop.f32.mrf.mxu0
        %1297 = vdwg.mxu0
        %1298 = vmatpush.bf16.msra.mxu0 0
        %1299 = vmatpush.bf16.msra.mxu0 0
        %1300 = vmatpush.bf16.msra.mxu0 0
        %1301 = vmatpush.bf16.msra.mxu0 0
        %1302 = vmatpush.bf16.msra.mxu0 0
        %1303 = vmatpush.bf16.msra.mxu0 %v914
        %1304 = vmatpush.bf16.msra.mxu0 %v882
        %1305 = vmatpush.bf16.msra.mxu0 %v850
        %1306 = vmatmul.bf16.gmra.mxu0 %v1023
        %v1307 = vpop.f32.mrf.mxu0
        %v1308 = vadd.f32 %v539, %v1307
        %v1309 = vpop.f32.mrf.mxu0
        %1310 = vdwg.mxu0
        %1311 = vmatpush.bf16.msra.mxu0 0
        %1312 = vmatpush.bf16.msra.mxu0 0
        %1313 = vmatpush.bf16.msra.mxu0 0
        %1314 = vmatpush.bf16.msra.mxu0 0
        %1315 = vmatpush.bf16.msra.mxu0 0
        %1316 = vmatpush.bf16.msra.mxu0 %v915
        %1317 = vmatpush.bf16.msra.mxu0 %v883
        %1318 = vmatpush.bf16.msra.mxu0 %v851
        %1319 = vmatmul.bf16.gmra.mxu0 %v1023
        %v1320 = vpop.f32.mrf.mxu0
        %v1321 = vadd.f32 %v539, %v1320
        %v1322 = vpop.f32.mrf.mxu0
        %1323 = vdwg.mxu0
        %1324 = vmatpush.bf16.msra.mxu0 0
        %1325 = vmatpush.bf16.msra.mxu0 0
        %1326 = vmatpush.bf16.msra.mxu0 0
        %1327 = vmatpush.bf16.msra.mxu0 0
        %1328 = vmatpush.bf16.msra.mxu0 0
        %1329 = vmatpush.bf16.msra.mxu0 %v916
        %1330 = vmatpush.bf16.msra.mxu0 %v884
        %1331 = vmatpush.bf16.msra.mxu0 %v852
        %1332 = vmatmul.bf16.gmra.mxu0 %v1023
        %v1333 = vpop.f32.mrf.mxu0
        %v1334 = vadd.f32 %v539, %v1333
        %v1335 = vpop.f32.mrf.mxu0
        %1336 = vdwg.mxu0
        %1337 = vmatpush.bf16.msra.mxu0 0
        %1338 = vmatpush.bf16.msra.mxu0 0
        %1339 = vmatpush.bf16.msra.mxu0 0
        %1340 = vmatpush.bf16.msra.mxu0 0
        %1341 = vmatpush.bf16.msra.mxu0 0
        %1342 = vmatpush.bf16.msra.mxu0 %v917
        %1343 = vmatpush.bf16.msra.mxu0 %v885
        %1344 = vmatpush.bf16.msra.mxu0 %v853
        %1345 = vmatmul.bf16.gmra.mxu0 %v1023
        %v1346 = vpop.f32.mrf.mxu0
        %v1347 = vadd.f32 %v539, %v1346
        %v1348 = vpop.f32.mrf.mxu0
        %1349 = vdwg.mxu0
        %1350 = vmatpush.bf16.msra.mxu0 0
        %1351 = vmatpush.bf16.msra.mxu0 0
        %1352 = vmatpush.bf16.msra.mxu0 0
        %1353 = vmatpush.bf16.msra.mxu0 0
        %1354 = vmatpush.bf16.msra.mxu0 0
        %1355 = vmatpush.bf16.msra.mxu0 %v918
        %1356 = vmatpush.bf16.msra.mxu0 %v886
        %1357 = vmatpush.bf16.msra.mxu0 %v854
        %1358 = vmatmul.bf16.gmra.mxu0 %v1023
        %v1359 = vpop.f32.mrf.mxu0
        %v1360 = vadd.f32 %v539, %v1359
        %v1361 = vpop.f32.mrf.mxu0
        %1362 = vdwg.mxu0
        %1363 = vmatpush.bf16.msra.mxu0 0
        %1364 = vmatpush.bf16.msra.mxu0 0
        %1365 = vmatpush.bf16.msra.mxu0 0
        %1366 = vmatpush.bf16.msra.mxu0 0
        %1367 = vmatpush.bf16.msra.mxu0 0
        %1368 = vmatpush.bf16.msra.mxu0 %v919
        %1369 = vmatpush.bf16.msra.mxu0 %v887
        %1370 = vmatpush.bf16.msra.mxu0 %v855
        %1371 = vmatmul.bf16.gmra.mxu0 %v1023
        %v1372 = vpop.f32.mrf.mxu0
        %v1373 = vadd.f32 %v539, %v1372
        %v1374 = vpop.f32.mrf.mxu0
        %1375 = vdwg.mxu0
        %1376 = vmatpush.bf16.msra.mxu0 0
        %1377 = vmatpush.bf16.msra.mxu0 0
        %1378 = vmatpush.bf16.msra.mxu0 0
        %1379 = vmatpush.bf16.msra.mxu0 0
        %1380 = vmatpush.bf16.msra.mxu0 0
        %1381 = vmatpush.bf16.msra.mxu0 %v920
        %1382 = vmatpush.bf16.msra.mxu0 %v888
        %1383 = vmatpush.bf16.msra.mxu0 %v856
        %1384 = vmatmul.bf16.gmra.mxu0 %v1023
        %v1385 = vpop.f32.mrf.mxu0
        %v1386 = vadd.f32 %v539, %v1385
        %v1387 = vpop.f32.mrf.mxu0
        %1388 = vdwg.mxu0
        %1389 = vmatpush.bf16.msra.mxu0 0
        %1390 = vmatpush.bf16.msra.mxu0 0
        %1391 = vmatpush.bf16.msra.mxu0 0
        %1392 = vmatpush.bf16.msra.mxu0 0
        %1393 = vmatpush.bf16.msra.mxu0 0
        %1394 = vmatpush.bf16.msra.mxu0 %v921
        %1395 = vmatpush.bf16.msra.mxu0 %v889
        %1396 = vmatpush.bf16.msra.mxu0 %v857
        %1397 = vmatmul.bf16.gmra.mxu0 %v1023
        %v1398 = vpop.f32.mrf.mxu0
        %v1399 = vadd.f32 %v539, %v1398
        %v1400 = vpop.f32.mrf.mxu0
        %1401 = vdwg.mxu0
        %1402 = vmatpush.bf16.msra.mxu0 0
        %1403 = vmatpush.bf16.msra.mxu0 0
        %1404 = vmatpush.bf16.msra.mxu0 0
        %1405 = vmatpush.bf16.msra.mxu0 0
        %1406 = vmatpush.bf16.msra.mxu0 0
        %1407 = vmatpush.bf16.msra.mxu0 %v922
        %1408 = vmatpush.bf16.msra.mxu0 %v890
        %1409 = vmatpush.bf16.msra.mxu0 %v858
        %1410 = vmatmul.bf16.gmra.mxu0 %v1023
        %v1411 = vpop.f32.mrf.mxu0
        %v1412 = vadd.f32 %v539, %v1411
        %v1413 = vpop.f32.mrf.mxu0
        %1414 = vdwg.mxu0
        %1415 = vmatpush.bf16.msra.mxu0 0
        %1416 = vmatpush.bf16.msra.mxu0 0
        %1417 = vmatpush.bf16.msra.mxu0 0
        %1418 = vmatpush.bf16.msra.mxu0 0
        %1419 = vmatpush.bf16.msra.mxu0 0
        %1420 = vmatpush.bf16.msra.mxu0 %v923
        %1421 = vmatpush.bf16.msra.mxu0 %v891
        %1422 = vmatpush.bf16.msra.mxu0 %v859
        %1423 = vmatmul.bf16.gmra.mxu0 %v1023
        %v1424 = vpop.f32.mrf.mxu0
        %v1425 = vadd.f32 %v539, %v1424
        %v1426 = vpop.f32.mrf.mxu0
        %1427 = vdwg.mxu0
        %1428 = vmatpush.bf16.msra.mxu0 0
        %1429 = vmatpush.bf16.msra.mxu0 0
        %1430 = vmatpush.bf16.msra.mxu0 0
        %1431 = vmatpush.bf16.msra.mxu0 0
        %1432 = vmatpush.bf16.msra.mxu0 0
        %1433 = vmatpush.bf16.msra.mxu0 %v924
        %1434 = vmatpush.bf16.msra.mxu0 %v892
        %1435 = vmatpush.bf16.msra.mxu0 %v860
        %1436 = vmatmul.bf16.gmra.mxu0 %v1023
        %v1437 = vpop.f32.mrf.mxu0
        %v1438 = vadd.f32 %v539, %v1437
        %v1439 = vpop.f32.mrf.mxu0
        %1440 = vdwg.mxu0
        %v1441 = vmul.f32 %v1035, 0.2
        %v1442 = vmul.f32 %v1048, 0.2
        %v1443 = vmul.f32 %v1061, 0.2
        %v1444 = vmul.f32 %v1074, 0.2
        %v1445 = vmul.f32 %v1087, 0.2
        %v1446 = vmul.f32 %v1100, 0.2
        %v1447 = vmul.f32 %v1113, 0.2
        %v1448 = vmul.f32 %v1126, 0.2
        %v1449 = vmul.f32 %v1139, 0.2
        %v1450 = vmul.f32 %v1152, 0.2
        %v1451 = vmul.f32 %v1165, 0.2
        %v1452 = vmul.f32 %v1178, 0.2
        %v1453 = vmul.f32 %v1191, 0.2
        %v1454 = vmul.f32 %v1204, 0.2
        %v1455 = vmul.f32 %v1217, 0.2
        %v1456 = vmul.f32 %v1230, 0.2
        %v1457 = vmul.f32 %v1243, 0.2
        %v1458 = vmul.f32 %v1256, 0.2
        %v1459 = vmul.f32 %v1269, 0.2
        %v1460 = vmul.f32 %v1282, 0.2
        %v1461 = vmul.f32 %v1295, 0.2
        %v1462 = vmul.f32 %v1308, 0.2
        %v1463 = vmul.f32 %v1321, 0.2
        %v1464 = vmul.f32 %v1334, 0.2
        %v1465 = vmul.f32 %v1347, 0.2
        %v1466 = vmul.f32 %v1360, 0.2
        %v1467 = vmul.f32 %v1373, 0.2
        %v1468 = vmul.f32 %v1386, 0.2
        %v1469 = vmul.f32 %v1399, 0.2
        %v1470 = vmul.f32 %v1412, 0.2
        %v1471 = vmul.f32 %v1425, 0.2
        %v1472 = vmul.f32 %v1438, 0.2
        %v1473 = vmax.f32 %v1035, %v1441
        %v1474 = vmax.f32 %v1048, %v1442
        %v1475 = vmax.f32 %v1061, %v1443
        %v1476 = vmax.f32 %v1074, %v1444
        %v1477 = vmax.f32 %v1087, %v1445
        %v1478 = vmax.f32 %v1100, %v1446
        %v1479 = vmax.f32 %v1113, %v1447
        %v1480 = vmax.f32 %v1126, %v1448
        %v1481 = vmax.f32 %v1139, %v1449
        %v1482 = vmax.f32 %v1152, %v1450
        %v1483 = vmax.f32 %v1165, %v1451
        %v1484 = vmax.f32 %v1178, %v1452
        %v1485 = vmax.f32 %v1191, %v1453
        %v1486 = vmax.f32 %v1204, %v1454
        %v1487 = vmax.f32 %v1217, %v1455
        %v1488 = vmax.f32 %v1230, %v1456
        %v1489 = vmax.f32 %v1243, %v1457
        %v1490 = vmax.f32 %v1256, %v1458
        %v1491 = vmax.f32 %v1269, %v1459
        %v1492 = vmax.f32 %v1282, %v1460
        %v1493 = vmax.f32 %v1295, %v1461
        %v1494 = vmax.f32 %v1308, %v1462
        %v1495 = vmax.f32 %v1321, %v1463
        %v1496 = vmax.f32 %v1334, %v1464
        %v1497 = vmax.f32 %v1347, %v1465
        %v1498 = vmax.f32 %v1360, %v1466
        %v1499 = vmax.f32 %v1373, %v1467
        %v1500 = vmax.f32 %v1386, %v1468
        %v1501 = vmax.f32 %v1399, %v1469
        %v1502 = vmax.f32 %v1412, %v1470
        %v1503 = vmax.f32 %v1425, %v1471
        %v1504 = vmax.f32 %v1438, %v1472
        %v1505 = vpack.c.bf16 %v1474, %v1473
        %v1506 = vpack.c.bf16 %v1476, %v1475
        %v1507 = vpack.c.bf16 %v1478, %v1477
        %v1508 = vpack.c.bf16 %v1480, %v1479
        %v1509 = vpack.c.bf16 %v1482, %v1481
        %v1510 = vpack.c.bf16 %v1484, %v1483
        %v1511 = vpack.c.bf16 %v1486, %v1485
        %v1512 = vpack.c.bf16 %v1488, %v1487
        %v1513 = vpack.c.bf16 %v1490, %v1489
        %v1514 = vpack.c.bf16 %v1492, %v1491
        %v1515 = vpack.c.bf16 %v1494, %v1493
        %v1516 = vpack.c.bf16 %v1496, %v1495
        %v1517 = vpack.c.bf16 %v1498, %v1497
        %v1518 = vpack.c.bf16 %v1500, %v1499
        %v1519 = vpack.c.bf16 %v1502, %v1501
        %v1520 = vpack.c.bf16 %v1504, %v1503
        %1521 = vst [vmem:[%s435] sm:$0xff] %v1505
        %1522 = vst [vmem:[%s435 + $0x8] sm:$0xff] %v1506
        %1523 = vst [vmem:[%s435 + $0x10] sm:$0xff] %v1507
        %1524 = vst [vmem:[%s435 + $0x18] sm:$0xff] %v1508
        %1525 = vst [vmem:[%s435 + $0x20] sm:$0xff] %v1509
        %1526 = vst [vmem:[%s435 + $0x28] sm:$0xff] %v1510
        %1527 = vst [vmem:[%s435 + $0x30] sm:$0xff] %v1511
        %1528 = vst [vmem:[%s435 + $0x38] sm:$0xff] %v1512
        %1529 = vst [vmem:[%s435 + $0x40] sm:$0xff] %v1513
        %1530 = vst [vmem:[%s435 + $0x48] sm:$0xff] %v1514
        %1531 = vst [vmem:[%s435 + $0x50] sm:$0xff] %v1515
        %1532 = vst [vmem:[%s435 + $0x58] sm:$0xff] %v1516
        %1533 = vst [vmem:[%s435 + $0x60] sm:$0xff] %v1517
        %1534 = vst [vmem:[%s435 + $0x68] sm:$0xff] %v1518
        %1535 = vst [vmem:[%s435 + $0x70] sm:$0xff] %v1519
        %1536 = vst [vmem:[%s435 + $0x78] sm:$0xff] %v1520
        %s1537 = smul.u32 32, %s16
        %p1538 = scmp.lt.s32.totalorder %s1537, 63
        %s1539 = scalar_select %p1538, %s1537, 63
        %s1540 = smul.addr %s1539, 4
        %s1541 = scalar_lea.vmem %s5, %s1540
        // Predicated region
        $region64: #{discriminator_forward.5} parent=58 // pred_check
          %p1542 = pneg %p144
        $region65: #{discriminator_forward.5} parent=58 // pred_check_branch
          %1544 = sbr.rel (%p1542) target = $region67
        $region66: #{discriminator_forward.5} parent=58 // pred_region
          %s1545 = smul.u32 32, %s16
        $region67: #{discriminator_forward.5} parent=58 // pred_fallthru
          _
      $region59: #{discriminator_forward.5} parent=5 // pred_fallthru
        _
      %p1546 = scmp.le.s32.totalorder 2, %s11
      // Predicated region
      $region68: #{discriminator_forward.5} parent=5 // pred_check
        %p1547 = pneg %p1546
      $region69: #{discriminator_forward.5} parent=5 // pred_check_branch
        %1549 = sbr.rel (%p1547) target = $region71
      $region70: #{discriminator_forward.5} parent=5 // pred_region
        %s1550 = ssub.s32 %s11, 2
        // Predicated region
        $region72: #{discriminator_forward.5} parent=70 // pred_check
          %p1551 = pneg %p150
        $region73: #{discriminator_forward.5} parent=70 // pred_check_branch
          %1553 = sbr.rel (%p1551) target = $region75
        $region74: #{discriminator_forward.5} parent=70 // pred_region
          %s1554 = smul.u32 32, %s17
          %p1555 = scmp.lt.s32.totalorder %s1554, 63
          %s1556 = scalar_select %p1555, %s1554, 63
          %s1557 = smul.addr %s1556, 4
          %s1558 = scalar_lea.vmem %s5, %s1557
        $region75: #{discriminator_forward.5} parent=70 // pred_fallthru
          _
      $region71: #{discriminator_forward.5} parent=5 // pred_fallthru
        _
    $region6: #{discriminator_forward.5} parent=1 // loop_footer
      %s15 = sadd.s32 1, %s11
    $region7: #{discriminator_forward.5} parent=1 // loop_footer_branch
      %10 = sbr.rel target = $region3
    $region8: #{discriminator_forward.5} parent=1 // loop_exit
      _

// kernel: discriminator_forward.6
$region0: #{discriminator_forward.6}
  #allocation0 [shape = 'u32[]', space=smem, size = 0x4, offset = 0x4, fixed_abs, tag = 'smem constant byte address 0x4 - core index']
  #allocation1 [shape = 'u32[72,128]{1,0:T(1,128)}', space=vmem, size = 0x9000, scoped, tag = 'internal scratch']
  %s0 = inlined_call_operand.vmem [shape: bf16[16,128], index: 0, kind: input, shape index: {}]
  %s1 = inlined_call_operand.vmem [shape: bf16[128,2048], index: 1, kind: input, shape index: {}]
  %s2 = inlined_call_operand.vmem [shape: f32[16,1], index: 2, kind: input, shape index: {}]
  %s3 = inlined_call_operand.vmem [shape: f32[16,1], index: 3, kind: input, shape index: {}]
  %s4 = inlined_call_operand.vmem [shape: f32[16,1], index: 4, kind: input, shape index: {}]
  %s5 = inlined_call_operand.vmem [shape: bf16[16,2048], index: 5, kind: output, shape index: {}]
  %s6 = sld [smem:[#allocation0]]
  $region30: #{discriminator_forward.6} parent=0
    _
  %s8 = ssub.s32 1, %s6
  %s9 = scalar_select 0, %s8, %s6
  // Predicated region
  $region2: #{discriminator_forward.6} parent=0 // pred_check
    _
  $region3: #{discriminator_forward.6} parent=0 // pred_check_branch
    %11 = sbr.rel (0) target = $region5
  $region4: #{discriminator_forward.6} parent=0 // pred_region
    _
  $region5: #{discriminator_forward.6} parent=0 // pred_fallthru
    _
  // Predicated region
  $region6: #{discriminator_forward.6} parent=0 // pred_check
    _
  $region7: #{discriminator_forward.6} parent=0 // pred_check_branch
    %13 = sbr.rel (0) target = $region9
  $region8: #{discriminator_forward.6} parent=0 // pred_region
    _
  $region9: #{discriminator_forward.6} parent=0 // pred_fallthru
    _
  // Predicated region
  $region10: #{discriminator_forward.6} parent=0 // pred_check
    _
  $region11: #{discriminator_forward.6} parent=0 // pred_check_branch
    %15 = sbr.rel (0) target = $region13
  $region12: #{discriminator_forward.6} parent=0 // pred_region
    _
  $region13: #{discriminator_forward.6} parent=0 // pred_fallthru
    _
  // Predicated region
  $region14: #{discriminator_forward.6} parent=0 // pred_check
    _
  $region15: #{discriminator_forward.6} parent=0 // pred_check_branch
    %17 = sbr.rel (0) target = $region17
  $region16: #{discriminator_forward.6} parent=0 // pred_region
    _
  $region17: #{discriminator_forward.6} parent=0 // pred_fallthru
    _
  // Predicated region
  $region18: #{discriminator_forward.6} parent=0 // pred_check
    _
  $region19: #{discriminator_forward.6} parent=0 // pred_check_branch
    %19 = sbr.rel (0) target = $region21
  $region20: #{discriminator_forward.6} parent=0 // pred_region
    _
  $region21: #{discriminator_forward.6} parent=0 // pred_fallthru
    _
  %v20 = vld [vmem:[%s0] sm:$0xf]
  %v21 = vld [vmem:[%s0 + $0x4] sm:$0xf]
  %v22 = vld [vmem:[%s1] sm:$0xff]
  %v23 = vld [vmem:[%s1 + $0x8] sm:$0xff]
  %v24 = vld [vmem:[%s1 + $0x10] sm:$0xff]
  %v25 = vld [vmem:[%s1 + $0x18] sm:$0xff]
  %v26 = vld [vmem:[%s1 + $0x20] sm:$0xff]
  %v27 = vld [vmem:[%s1 + $0x28] sm:$0xff]
  %v28 = vld [vmem:[%s1 + $0x30] sm:$0xff]
  %v29 = vld [vmem:[%s1 + $0x38] sm:$0xff]
  %v30 = vld [vmem:[%s1 + $0x40] sm:$0xff]
  %v31 = vld [vmem:[%s1 + $0x48] sm:$0xff]
  %v32 = vld [vmem:[%s1 + $0x50] sm:$0xff]
  %v33 = vld [vmem:[%s1 + $0x58] sm:$0xff]
  %v34 = vld [vmem:[%s1 + $0x60] sm:$0xff]
  %v35 = vld [vmem:[%s1 + $0x68] sm:$0xff]
  %v36 = vld [vmem:[%s1 + $0x70] sm:$0xff]
  %v37 = vld [vmem:[%s1 + $0x78] sm:$0xff]
  %v38 = vld [vmem:[%s1 + $0x80] sm:$0xff]
  %v39 = vld [vmem:[%s1 + $0x88] sm:$0xff]
  %v40 = vld [vmem:[%s1 + $0x90] sm:$0xff]
  %v41 = vld [vmem:[%s1 + $0x98] sm:$0xff]
  %v42 = vld [vmem:[%s1 + $0xa0] sm:$0xff]
  %v43 = vld [vmem:[%s1 + $0xa8] sm:$0xff]
  %v44 = vld [vmem:[%s1 + $0xb0] sm:$0xff]
  %v45 = vld [vmem:[%s1 + $0xb8] sm:$0xff]
  %v46 = vld [vmem:[%s1 + $0xc0] sm:$0xff]
  %v47 = vld [vmem:[%s1 + $0xc8] sm:$0xff]
  %v48 = vld [vmem:[%s1 + $0xd0] sm:$0xff]
  %v49 = vld [vmem:[%s1 + $0xd8] sm:$0xff]
  %v50 = vld [vmem:[%s1 + $0xe0] sm:$0xff]
  %v51 = vld [vmem:[%s1 + $0xe8] sm:$0xff]
  %v52 = vld [vmem:[%s1 + $0xf0] sm:$0xff]
  %v53 = vld [vmem:[%s1 + $0xf8] sm:$0xff]
  %v54 = vld [vmem:[%s1 + $0x100] sm:$0xff]
  %v55 = vld [vmem:[%s1 + $0x108] sm:$0xff]
  %v56 = vld [vmem:[%s1 + $0x110] sm:$0xff]
  %v57 = vld [vmem:[%s1 + $0x118] sm:$0xff]
  %v58 = vld [vmem:[%s1 + $0x120] sm:$0xff]
  %v59 = vld [vmem:[%s1 + $0x128] sm:$0xff]
  %v60 = vld [vmem:[%s1 + $0x130] sm:$0xff]
  %v61 = vld [vmem:[%s1 + $0x138] sm:$0xff]
  %v62 = vld [vmem:[%s1 + $0x140] sm:$0xff]
  %v63 = vld [vmem:[%s1 + $0x148] sm:$0xff]
  %v64 = vld [vmem:[%s1 + $0x150] sm:$0xff]
  %v65 = vld [vmem:[%s1 + $0x158] sm:$0xff]
  %v66 = vld [vmem:[%s1 + $0x160] sm:$0xff]
  %v67 = vld [vmem:[%s1 + $0x168] sm:$0xff]
  %v68 = vld [vmem:[%s1 + $0x170] sm:$0xff]
  %v69 = vld [vmem:[%s1 + $0x178] sm:$0xff]
  %v70 = vld [vmem:[%s1 + $0x180] sm:$0xff]
  %v71 = vld [vmem:[%s1 + $0x188] sm:$0xff]
  %v72 = vld [vmem:[%s1 + $0x190] sm:$0xff]
  %v73 = vld [vmem:[%s1 + $0x198] sm:$0xff]
  %v74 = vld [vmem:[%s1 + $0x1a0] sm:$0xff]
  %v75 = vld [vmem:[%s1 + $0x1a8] sm:$0xff]
  %v76 = vld [vmem:[%s1 + $0x1b0] sm:$0xff]
  %v77 = vld [vmem:[%s1 + $0x1b8] sm:$0xff]
  %v78 = vld [vmem:[%s1 + $0x1c0] sm:$0xff]
  %v79 = vld [vmem:[%s1 + $0x1c8] sm:$0xff]
  %v80 = vld [vmem:[%s1 + $0x1d0] sm:$0xff]
  %v81 = vld [vmem:[%s1 + $0x1d8] sm:$0xff]
  %v82 = vld [vmem:[%s1 + $0x1e0] sm:$0xff]
  %v83 = vld [vmem:[%s1 + $0x1e8] sm:$0xff]
  %v84 = vld [vmem:[%s1 + $0x1f0] sm:$0xff]
  %v85 = vld [vmem:[%s1 + $0x1f8] sm:$0xff]
  %v86 = vld [vmem:[%s1 + $0x200] sm:$0xff]
  %v87 = vld [vmem:[%s1 + $0x208] sm:$0xff]
  %v88 = vld [vmem:[%s1 + $0x210] sm:$0xff]
  %v89 = vld [vmem:[%s1 + $0x218] sm:$0xff]
  %v90 = vld [vmem:[%s1 + $0x220] sm:$0xff]
  %v91 = vld [vmem:[%s1 + $0x228] sm:$0xff]
  %v92 = vld [vmem:[%s1 + $0x230] sm:$0xff]
  %v93 = vld [vmem:[%s1 + $0x238] sm:$0xff]
  %v94 = vld [vmem:[%s1 + $0x240] sm:$0xff]
  %v95 = vld [vmem:[%s1 + $0x248] sm:$0xff]
  %v96 = vld [vmem:[%s1 + $0x250] sm:$0xff]
  %v97 = vld [vmem:[%s1 + $0x258] sm:$0xff]
  %v98 = vld [vmem:[%s1 + $0x260] sm:$0xff]
  %v99 = vld [vmem:[%s1 + $0x268] sm:$0xff]
  %v100 = vld [vmem:[%s1 + $0x270] sm:$0xff]
  %v101 = vld [vmem:[%s1 + $0x278] sm:$0xff]
  %v102 = vld [vmem:[%s1 + $0x280] sm:$0xff]
  %v103 = vld [vmem:[%s1 + $0x288] sm:$0xff]
  %v104 = vld [vmem:[%s1 + $0x290] sm:$0xff]
  %v105 = vld [vmem:[%s1 + $0x298] sm:$0xff]
  %v106 = vld [vmem:[%s1 + $0x2a0] sm:$0xff]
  %v107 = vld [vmem:[%s1 + $0x2a8] sm:$0xff]
  %v108 = vld [vmem:[%s1 + $0x2b0] sm:$0xff]
  %v109 = vld [vmem:[%s1 + $0x2b8] sm:$0xff]
  %v110 = vld [vmem:[%s1 + $0x2c0] sm:$0xff]
  %v111 = vld [vmem:[%s1 + $0x2c8] sm:$0xff]
  %v112 = vld [vmem:[%s1 + $0x2d0] sm:$0xff]
  %v113 = vld [vmem:[%s1 + $0x2d8] sm:$0xff]
  %v114 = vld [vmem:[%s1 + $0x2e0] sm:$0xff]
  %v115 = vld [vmem:[%s1 + $0x2e8] sm:$0xff]
  %v116 = vld [vmem:[%s1 + $0x2f0] sm:$0xff]
  %v117 = vld [vmem:[%s1 + $0x2f8] sm:$0xff]
  %v118 = vld [vmem:[%s1 + $0x300] sm:$0xff]
  %v119 = vld [vmem:[%s1 + $0x308] sm:$0xff]
  %v120 = vld [vmem:[%s1 + $0x310] sm:$0xff]
  %v121 = vld [vmem:[%s1 + $0x318] sm:$0xff]
  %v122 = vld [vmem:[%s1 + $0x320] sm:$0xff]
  %v123 = vld [vmem:[%s1 + $0x328] sm:$0xff]
  %v124 = vld [vmem:[%s1 + $0x330] sm:$0xff]
  %v125 = vld [vmem:[%s1 + $0x338] sm:$0xff]
  %v126 = vld [vmem:[%s1 + $0x340] sm:$0xff]
  %v127 = vld [vmem:[%s1 + $0x348] sm:$0xff]
  %v128 = vld [vmem:[%s1 + $0x350] sm:$0xff]
  %v129 = vld [vmem:[%s1 + $0x358] sm:$0xff]
  %v130 = vld [vmem:[%s1 + $0x360] sm:$0xff]
  %v131 = vld [vmem:[%s1 + $0x368] sm:$0xff]
  %v132 = vld [vmem:[%s1 + $0x370] sm:$0xff]
  %v133 = vld [vmem:[%s1 + $0x378] sm:$0xff]
  %v134 = vld [vmem:[%s1 + $0x380] sm:$0xff]
  %v135 = vld [vmem:[%s1 + $0x388] sm:$0xff]
  %v136 = vld [vmem:[%s1 + $0x390] sm:$0xff]
  %v137 = vld [vmem:[%s1 + $0x398] sm:$0xff]
  %v138 = vld [vmem:[%s1 + $0x3a0] sm:$0xff]
  %v139 = vld [vmem:[%s1 + $0x3a8] sm:$0xff]
  %v140 = vld [vmem:[%s1 + $0x3b0] sm:$0xff]
  %v141 = vld [vmem:[%s1 + $0x3b8] sm:$0xff]
  %v142 = vld [vmem:[%s1 + $0x3c0] sm:$0xff]
  %v143 = vld [vmem:[%s1 + $0x3c8] sm:$0xff]
  %v144 = vld [vmem:[%s1 + $0x3d0] sm:$0xff]
  %v145 = vld [vmem:[%s1 + $0x3d8] sm:$0xff]
  %v146 = vld [vmem:[%s1 + $0x3e0] sm:$0xff]
  %v147 = vld [vmem:[%s1 + $0x3e8] sm:$0xff]
  %v148 = vld [vmem:[%s1 + $0x3f0] sm:$0xff]
  %v149 = vld [vmem:[%s1 + $0x3f8] sm:$0xff]
  %v150 = vld [vmem:[%s2] sm:$0xff]
  %v151 = vld [vmem:[%s2 + $0x8] sm:$0xff]
  %153 = vset.pattern.permute.xlu0 0
  %154 = vperm.xlu0 %153, %v150
  %v155 = vpop.permute.xlu0 %154
  %158 = vset.pattern.permute.xlu0 0
  %159 = vperm.xlu0 %158, %v151
  %v160 = vpop.permute.xlu0 %159
  %v164 = vunpack.c.l.b16 %v20
  %v165 = vunpack.c.l.b16 %v21
  %v166 = vpack.c.b16 %v165, %v164
  %v296 = vunpack.c.l.b16 %v22
  %v297 = vunpack.c.h.b16 %v22
  %v298 = vunpack.c.l.b16 %v23
  %v299 = vunpack.c.h.b16 %v23
  %v300 = vunpack.c.l.b16 %v24
  %v301 = vunpack.c.h.b16 %v24
  %v302 = vunpack.c.l.b16 %v25
  %v303 = vunpack.c.h.b16 %v25
  %v304 = vunpack.c.l.b16 %v26
  %v305 = vunpack.c.h.b16 %v26
  %v306 = vunpack.c.l.b16 %v27
  %v307 = vunpack.c.h.b16 %v27
  %v308 = vunpack.c.l.b16 %v28
  %v309 = vunpack.c.h.b16 %v28
  %v310 = vunpack.c.l.b16 %v29
  %v311 = vunpack.c.h.b16 %v29
  %v312 = vunpack.c.l.b16 %v30
  %v313 = vunpack.c.h.b16 %v30
  %v314 = vunpack.c.l.b16 %v31
  %v315 = vunpack.c.h.b16 %v31
  %v316 = vunpack.c.l.b16 %v32
  %v317 = vunpack.c.h.b16 %v32
  %v318 = vunpack.c.l.b16 %v33
  %v319 = vunpack.c.h.b16 %v33
  %v320 = vunpack.c.l.b16 %v34
  %v321 = vunpack.c.h.b16 %v34
  %v322 = vunpack.c.l.b16 %v35
  %v323 = vunpack.c.h.b16 %v35
  %v324 = vunpack.c.l.b16 %v36
  %v325 = vunpack.c.h.b16 %v36
  %v326 = vunpack.c.l.b16 %v37
  %v327 = vunpack.c.h.b16 %v37
  %v328 = vunpack.c.l.b16 %v38
  %v329 = vunpack.c.h.b16 %v38
  %v330 = vunpack.c.l.b16 %v39
  %v331 = vunpack.c.h.b16 %v39
  %v332 = vunpack.c.l.b16 %v40
  %v333 = vunpack.c.h.b16 %v40
  %v334 = vunpack.c.l.b16 %v41
  %v335 = vunpack.c.h.b16 %v41
  %v336 = vunpack.c.l.b16 %v42
  %v337 = vunpack.c.h.b16 %v42
  %v338 = vunpack.c.l.b16 %v43
  %v339 = vunpack.c.h.b16 %v43
  %v340 = vunpack.c.l.b16 %v44
  %v341 = vunpack.c.h.b16 %v44
  %v342 = vunpack.c.l.b16 %v45
  %v343 = vunpack.c.h.b16 %v45
  %v344 = vunpack.c.l.b16 %v46
  %v345 = vunpack.c.h.b16 %v46
  %v346 = vunpack.c.l.b16 %v47
  %v347 = vunpack.c.h.b16 %v47
  %v348 = vunpack.c.l.b16 %v48
  %v349 = vunpack.c.h.b16 %v48
  %v350 = vunpack.c.l.b16 %v49
  %v351 = vunpack.c.h.b16 %v49
  %v352 = vunpack.c.l.b16 %v50
  %v353 = vunpack.c.h.b16 %v50
  %v354 = vunpack.c.l.b16 %v51
  %v355 = vunpack.c.h.b16 %v51
  %v356 = vunpack.c.l.b16 %v52
  %v357 = vunpack.c.h.b16 %v52
  %v358 = vunpack.c.l.b16 %v53
  %v359 = vunpack.c.h.b16 %v53
  %v360 = vunpack.c.l.b16 %v54
  %v361 = vunpack.c.h.b16 %v54
  %v362 = vunpack.c.l.b16 %v55
  %v363 = vunpack.c.h.b16 %v55
  %v364 = vunpack.c.l.b16 %v56
  %v365 = vunpack.c.h.b16 %v56
  %v366 = vunpack.c.l.b16 %v57
  %v367 = vunpack.c.h.b16 %v57
  %v368 = vunpack.c.l.b16 %v58
  %v369 = vunpack.c.h.b16 %v58
  %v370 = vunpack.c.l.b16 %v59
  %v371 = vunpack.c.h.b16 %v59
  %v372 = vunpack.c.l.b16 %v60
  %v373 = vunpack.c.h.b16 %v60
  %v374 = vunpack.c.l.b16 %v61
  %v375 = vunpack.c.h.b16 %v61
  %v376 = vunpack.c.l.b16 %v62
  %v377 = vunpack.c.h.b16 %v62
  %v378 = vunpack.c.l.b16 %v63
  %v379 = vunpack.c.h.b16 %v63
  %v380 = vunpack.c.l.b16 %v64
  %v381 = vunpack.c.h.b16 %v64
  %v382 = vunpack.c.l.b16 %v65
  %v383 = vunpack.c.h.b16 %v65
  %v384 = vunpack.c.l.b16 %v66
  %v385 = vunpack.c.h.b16 %v66
  %v386 = vunpack.c.l.b16 %v67
  %v387 = vunpack.c.h.b16 %v67
  %v388 = vunpack.c.l.b16 %v68
  %v389 = vunpack.c.h.b16 %v68
  %v390 = vunpack.c.l.b16 %v69
  %v391 = vunpack.c.h.b16 %v69
  %v392 = vunpack.c.l.b16 %v70
  %v393 = vunpack.c.h.b16 %v70
  %v394 = vunpack.c.l.b16 %v71
  %v395 = vunpack.c.h.b16 %v71
  %v396 = vunpack.c.l.b16 %v72
  %v397 = vunpack.c.h.b16 %v72
  %v398 = vunpack.c.l.b16 %v73
  %v399 = vunpack.c.h.b16 %v73
  %v400 = vunpack.c.l.b16 %v74
  %v401 = vunpack.c.h.b16 %v74
  %v402 = vunpack.c.l.b16 %v75
  %v403 = vunpack.c.h.b16 %v75
  %v404 = vunpack.c.l.b16 %v76
  %v405 = vunpack.c.h.b16 %v76
  %v406 = vunpack.c.l.b16 %v77
  %v407 = vunpack.c.h.b16 %v77
  %v408 = vunpack.c.l.b16 %v78
  %v409 = vunpack.c.h.b16 %v78
  %v410 = vunpack.c.l.b16 %v79
  %v411 = vunpack.c.h.b16 %v79
  %v412 = vunpack.c.l.b16 %v80
  %v413 = vunpack.c.h.b16 %v80
  %v414 = vunpack.c.l.b16 %v81
  %v415 = vunpack.c.h.b16 %v81
  %v416 = vunpack.c.l.b16 %v82
  %v417 = vunpack.c.h.b16 %v82
  %v418 = vunpack.c.l.b16 %v83
  %v419 = vunpack.c.h.b16 %v83
  %v420 = vunpack.c.l.b16 %v84
  %v421 = vunpack.c.h.b16 %v84
  %v422 = vunpack.c.l.b16 %v85
  %v423 = vunpack.c.h.b16 %v85
  %v424 = vunpack.c.l.b16 %v86
  %v425 = vunpack.c.h.b16 %v86
  %v426 = vunpack.c.l.b16 %v87
  %v427 = vunpack.c.h.b16 %v87
  %v428 = vunpack.c.l.b16 %v88
  %v429 = vunpack.c.h.b16 %v88
  %v430 = vunpack.c.l.b16 %v89
  %v431 = vunpack.c.h.b16 %v89
  %v432 = vunpack.c.l.b16 %v90
  %v433 = vunpack.c.h.b16 %v90
  %v434 = vunpack.c.l.b16 %v91
  %v435 = vunpack.c.h.b16 %v91
  %v436 = vunpack.c.l.b16 %v92
  %v437 = vunpack.c.h.b16 %v92
  %v438 = vunpack.c.l.b16 %v93
  %v439 = vunpack.c.h.b16 %v93
  %v440 = vunpack.c.l.b16 %v94
  %v441 = vunpack.c.h.b16 %v94
  %v442 = vunpack.c.l.b16 %v95
  %v443 = vunpack.c.h.b16 %v95
  %v444 = vunpack.c.l.b16 %v96
  %v445 = vunpack.c.h.b16 %v96
  %v446 = vunpack.c.l.b16 %v97
  %v447 = vunpack.c.h.b16 %v97
  %v448 = vunpack.c.l.b16 %v98
  %v449 = vunpack.c.h.b16 %v98
  %v450 = vunpack.c.l.b16 %v99
  %v451 = vunpack.c.h.b16 %v99
  %v452 = vunpack.c.l.b16 %v100
  %v453 = vunpack.c.h.b16 %v100
  %v454 = vunpack.c.l.b16 %v101
  %v455 = vunpack.c.h.b16 %v101
  %v456 = vunpack.c.l.b16 %v102
  %v457 = vunpack.c.h.b16 %v102
  %v458 = vunpack.c.l.b16 %v103
  %v459 = vunpack.c.h.b16 %v103
  %v460 = vunpack.c.l.b16 %v104
  %v461 = vunpack.c.h.b16 %v104
  %v462 = vunpack.c.l.b16 %v105
  %v463 = vunpack.c.h.b16 %v105
  %v464 = vunpack.c.l.b16 %v106
  %v465 = vunpack.c.h.b16 %v106
  %v466 = vunpack.c.l.b16 %v107
  %v467 = vunpack.c.h.b16 %v107
  %v468 = vunpack.c.l.b16 %v108
  %v469 = vunpack.c.h.b16 %v108
  %v470 = vunpack.c.l.b16 %v109
  %v471 = vunpack.c.h.b16 %v109
  %v472 = vunpack.c.l.b16 %v110
  %v473 = vunpack.c.h.b16 %v110
  %v474 = vunpack.c.l.b16 %v111
  %v475 = vunpack.c.h.b16 %v111
  %v476 = vunpack.c.l.b16 %v112
  %v477 = vunpack.c.h.b16 %v112
  %v478 = vunpack.c.l.b16 %v113
  %v479 = vunpack.c.h.b16 %v113
  %v480 = vunpack.c.l.b16 %v114
  %v481 = vunpack.c.h.b16 %v114
  %v482 = vunpack.c.l.b16 %v115
  %v483 = vunpack.c.h.b16 %v115
  %v484 = vunpack.c.l.b16 %v116
  %v485 = vunpack.c.h.b16 %v116
  %v486 = vunpack.c.l.b16 %v117
  %v487 = vunpack.c.h.b16 %v117
  %v488 = vunpack.c.l.b16 %v118
  %v489 = vunpack.c.h.b16 %v118
  %v490 = vunpack.c.l.b16 %v119
  %v491 = vunpack.c.h.b16 %v119
  %v492 = vunpack.c.l.b16 %v120
  %v493 = vunpack.c.h.b16 %v120
  %v494 = vunpack.c.l.b16 %v121
  %v495 = vunpack.c.h.b16 %v121
  %v496 = vunpack.c.l.b16 %v122
  %v497 = vunpack.c.h.b16 %v122
  %v498 = vunpack.c.l.b16 %v123
  %v499 = vunpack.c.h.b16 %v123
  %v500 = vunpack.c.l.b16 %v124
  %v501 = vunpack.c.h.b16 %v124
  %v502 = vunpack.c.l.b16 %v125
  %v503 = vunpack.c.h.b16 %v125
  %v504 = vunpack.c.l.b16 %v126
  %v505 = vunpack.c.h.b16 %v126
  %v506 = vunpack.c.l.b16 %v127
  %v507 = vunpack.c.h.b16 %v127
  %v508 = vunpack.c.l.b16 %v128
  %v509 = vunpack.c.h.b16 %v128
  %v510 = vunpack.c.l.b16 %v129
  %v511 = vunpack.c.h.b16 %v129
  %v512 = vunpack.c.l.b16 %v130
  %v513 = vunpack.c.h.b16 %v130
  %v514 = vunpack.c.l.b16 %v131
  %v515 = vunpack.c.h.b16 %v131
  %v516 = vunpack.c.l.b16 %v132
  %v517 = vunpack.c.h.b16 %v132
  %v518 = vunpack.c.l.b16 %v133
  %v519 = vunpack.c.h.b16 %v133
  %v520 = vunpack.c.l.b16 %v134
  %v521 = vunpack.c.h.b16 %v134
  %v522 = vunpack.c.l.b16 %v135
  %v523 = vunpack.c.h.b16 %v135
  %v524 = vunpack.c.l.b16 %v136
  %v525 = vunpack.c.h.b16 %v136
  %v526 = vunpack.c.l.b16 %v137
  %v527 = vunpack.c.h.b16 %v137
  %v528 = vunpack.c.l.b16 %v138
  %v529 = vunpack.c.h.b16 %v138
  %v530 = vunpack.c.l.b16 %v139
  %v531 = vunpack.c.h.b16 %v139
  %v532 = vunpack.c.l.b16 %v140
  %v533 = vunpack.c.h.b16 %v140
  %v534 = vunpack.c.l.b16 %v141
  %v535 = vunpack.c.h.b16 %v141
  %v536 = vunpack.c.l.b16 %v142
  %v537 = vunpack.c.h.b16 %v142
  %v538 = vunpack.c.l.b16 %v143
  %v539 = vunpack.c.h.b16 %v143
  %v540 = vunpack.c.l.b16 %v144
  %v541 = vunpack.c.h.b16 %v144
  %v542 = vunpack.c.l.b16 %v145
  %v543 = vunpack.c.h.b16 %v145
  %v544 = vunpack.c.l.b16 %v146
  %v545 = vunpack.c.h.b16 %v146
  %v546 = vunpack.c.l.b16 %v147
  %v547 = vunpack.c.h.b16 %v147
  %v548 = vunpack.c.l.b16 %v148
  %v549 = vunpack.c.h.b16 %v148
  %v550 = vunpack.c.l.b16 %v149
  %v551 = vunpack.c.h.b16 %v149
  %v552 = vpack.c.b16 %v312, %v296
  %v553 = vpack.c.b16 %v313, %v297
  %v554 = vpack.c.b16 %v314, %v298
  %v555 = vpack.c.b16 %v315, %v299
  %v556 = vpack.c.b16 %v316, %v300
  %v557 = vpack.c.b16 %v317, %v301
  %v558 = vpack.c.b16 %v318, %v302
  %v559 = vpack.c.b16 %v319, %v303
  %v560 = vpack.c.b16 %v320, %v304
  %v561 = vpack.c.b16 %v321, %v305
  %v562 = vpack.c.b16 %v322, %v306
  %v563 = vpack.c.b16 %v323, %v307
  %v564 = vpack.c.b16 %v324, %v308
  %v565 = vpack.c.b16 %v325, %v309
  %v566 = vpack.c.b16 %v326, %v310
  %v567 = vpack.c.b16 %v327, %v311
  %v568 = vpack.c.b16 %v344, %v328
  %v569 = vpack.c.b16 %v345, %v329
  %v570 = vpack.c.b16 %v346, %v330
  %v571 = vpack.c.b16 %v347, %v331
  %v572 = vpack.c.b16 %v348, %v332
  %v573 = vpack.c.b16 %v349, %v333
  %v574 = vpack.c.b16 %v350, %v334
  %v575 = vpack.c.b16 %v351, %v335
  %v576 = vpack.c.b16 %v352, %v336
  %v577 = vpack.c.b16 %v353, %v337
  %v578 = vpack.c.b16 %v354, %v338
  %v579 = vpack.c.b16 %v355, %v339
  %v580 = vpack.c.b16 %v356, %v340
  %v581 = vpack.c.b16 %v357, %v341
  %v582 = vpack.c.b16 %v358, %v342
  %v583 = vpack.c.b16 %v359, %v343
  %v584 = vpack.c.b16 %v376, %v360
  %v585 = vpack.c.b16 %v377, %v361
  %v586 = vpack.c.b16 %v378, %v362
  %v587 = vpack.c.b16 %v379, %v363
  %v588 = vpack.c.b16 %v380, %v364
  %v589 = vpack.c.b16 %v381, %v365
  %v590 = vpack.c.b16 %v382, %v366
  %v591 = vpack.c.b16 %v383, %v367
  %v592 = vpack.c.b16 %v384, %v368
  %v593 = vpack.c.b16 %v385, %v369
  %v594 = vpack.c.b16 %v386, %v370
  %v595 = vpack.c.b16 %v387, %v371
  %v596 = vpack.c.b16 %v388, %v372
  %v597 = vpack.c.b16 %v389, %v373
  %v598 = vpack.c.b16 %v390, %v374
  %v599 = vpack.c.b16 %v391, %v375
  %v600 = vpack.c.b16 %v408, %v392
  %v601 = vpack.c.b16 %v409, %v393
  %v602 = vpack.c.b16 %v410, %v394
  %v603 = vpack.c.b16 %v411, %v395
  %v604 = vpack.c.b16 %v412, %v396
  %v605 = vpack.c.b16 %v413, %v397
  %v606 = vpack.c.b16 %v414, %v398
  %v607 = vpack.c.b16 %v415, %v399
  %v608 = vpack.c.b16 %v416, %v400
  %v609 = vpack.c.b16 %v417, %v401
  %v610 = vpack.c.b16 %v418, %v402
  %v611 = vpack.c.b16 %v419, %v403
  %v612 = vpack.c.b16 %v420, %v404
  %v613 = vpack.c.b16 %v421, %v405
  %v614 = vpack.c.b16 %v422, %v406
  %v615 = vpack.c.b16 %v423, %v407
  %v616 = vpack.c.b16 %v440, %v424
  %v617 = vpack.c.b16 %v441, %v425
  %v618 = vpack.c.b16 %v442, %v426
  %v619 = vpack.c.b16 %v443, %v427
  %v620 = vpack.c.b16 %v444, %v428
  %v621 = vpack.c.b16 %v445, %v429
  %v622 = vpack.c.b16 %v446, %v430
  %v623 = vpack.c.b16 %v447, %v431
  %v624 = vpack.c.b16 %v448, %v432
  %v625 = vpack.c.b16 %v449, %v433
  %v626 = vpack.c.b16 %v450, %v434
  %v627 = vpack.c.b16 %v451, %v435
  %v628 = vpack.c.b16 %v452, %v436
  %v629 = vpack.c.b16 %v453, %v437
  %v630 = vpack.c.b16 %v454, %v438
  %v631 = vpack.c.b16 %v455, %v439
  %v632 = vpack.c.b16 %v472, %v456
  %v633 = vpack.c.b16 %v473, %v457
  %v634 = vpack.c.b16 %v474, %v458
  %v635 = vpack.c.b16 %v475, %v459
  %v636 = vpack.c.b16 %v476, %v460
  %v637 = vpack.c.b16 %v477, %v461
  %v638 = vpack.c.b16 %v478, %v462
  %v639 = vpack.c.b16 %v479, %v463
  %v640 = vpack.c.b16 %v480, %v464
  %v641 = vpack.c.b16 %v481, %v465
  %v642 = vpack.c.b16 %v482, %v466
  %v643 = vpack.c.b16 %v483, %v467
  %v644 = vpack.c.b16 %v484, %v468
  %v645 = vpack.c.b16 %v485, %v469
  %v646 = vpack.c.b16 %v486, %v470
  %v647 = vpack.c.b16 %v487, %v471
  %v648 = vpack.c.b16 %v504, %v488
  %v649 = vpack.c.b16 %v505, %v489
  %v650 = vpack.c.b16 %v506, %v490
  %v651 = vpack.c.b16 %v507, %v491
  %v652 = vpack.c.b16 %v508, %v492
  %v653 = vpack.c.b16 %v509, %v493
  %v654 = vpack.c.b16 %v510, %v494
  %v655 = vpack.c.b16 %v511, %v495
  %v656 = vpack.c.b16 %v512, %v496
  %v657 = vpack.c.b16 %v513, %v497
  %v658 = vpack.c.b16 %v514, %v498
  %v659 = vpack.c.b16 %v515, %v499
  %v660 = vpack.c.b16 %v516, %v500
  %v661 = vpack.c.b16 %v517, %v501
  %v662 = vpack.c.b16 %v518, %v502
  %v663 = vpack.c.b16 %v519, %v503
  %v664 = vpack.c.b16 %v536, %v520
  %v665 = vpack.c.b16 %v537, %v521
  %v666 = vpack.c.b16 %v538, %v522
  %v667 = vpack.c.b16 %v539, %v523
  %v668 = vpack.c.b16 %v540, %v524
  %v669 = vpack.c.b16 %v541, %v525
  %v670 = vpack.c.b16 %v542, %v526
  %v671 = vpack.c.b16 %v543, %v527
  %v672 = vpack.c.b16 %v544, %v528
  %v673 = vpack.c.b16 %v545, %v529
  %v674 = vpack.c.b16 %v546, %v530
  %v675 = vpack.c.b16 %v547, %v531
  %v676 = vpack.c.b16 %v548, %v532
  %v677 = vpack.c.b16 %v549, %v533
  %v678 = vpack.c.b16 %v550, %v534
  %v679 = vpack.c.b16 %v551, %v535
  %808 = vmatpush.bf16.msra.mxu0 %v664
  %809 = vmatpush.bf16.msra.mxu0 %v648
  %810 = vmatpush.bf16.msra.mxu0 %v632
  %811 = vmatpush.bf16.msra.mxu0 %v616
  %812 = vmatpush.bf16.msra.mxu0 %v600
  %813 = vmatpush.bf16.msra.mxu0 %v584
  %814 = vmatpush.bf16.msra.mxu0 %v568
  %815 = vmatpush.bf16.msra.mxu0 %v552
  %816 = vmatmul.bf16.gmra.mxu0 %v166
  %v817 = vpop.f32.mrf.mxu0
  %v818 = vadd.f32 %v155, %v817
  %v819 = vpop.f32.mrf.mxu0
  %v820 = vadd.f32 %v160, %v819
  %821 = vdwg.mxu0
  %822 = vmatpush.bf16.msra.mxu0 %v665
  %823 = vmatpush.bf16.msra.mxu0 %v649
  %824 = vmatpush.bf16.msra.mxu0 %v633
  %825 = vmatpush.bf16.msra.mxu0 %v617
  %826 = vmatpush.bf16.msra.mxu0 %v601
  %827 = vmatpush.bf16.msra.mxu0 %v585
  %828 = vmatpush.bf16.msra.mxu0 %v569
  %829 = vmatpush.bf16.msra.mxu0 %v553
  %830 = vmatmul.bf16.gmra.mxu0 %v166
  %v831 = vpop.f32.mrf.mxu0
  %v832 = vadd.f32 %v155, %v831
  %v833 = vpop.f32.mrf.mxu0
  %v834 = vadd.f32 %v160, %v833
  %835 = vdwg.mxu0
  %836 = vmatpush.bf16.msra.mxu0 %v666
  %837 = vmatpush.bf16.msra.mxu0 %v650
  %838 = vmatpush.bf16.msra.mxu0 %v634
  %839 = vmatpush.bf16.msra.mxu0 %v618
  %840 = vmatpush.bf16.msra.mxu0 %v602
  %841 = vmatpush.bf16.msra.mxu0 %v586
  %842 = vmatpush.bf16.msra.mxu0 %v570
  %843 = vmatpush.bf16.msra.mxu0 %v554
  %844 = vmatmul.bf16.gmra.mxu0 %v166
  %v845 = vpop.f32.mrf.mxu0
  %v846 = vadd.f32 %v155, %v845
  %v847 = vpop.f32.mrf.mxu0
  %v848 = vadd.f32 %v160, %v847
  %849 = vdwg.mxu0
  %850 = vmatpush.bf16.msra.mxu0 %v667
  %851 = vmatpush.bf16.msra.mxu0 %v651
  %852 = vmatpush.bf16.msra.mxu0 %v635
  %853 = vmatpush.bf16.msra.mxu0 %v619
  %854 = vmatpush.bf16.msra.mxu0 %v603
  %855 = vmatpush.bf16.msra.mxu0 %v587
  %856 = vmatpush.bf16.msra.mxu0 %v571
  %857 = vmatpush.bf16.msra.mxu0 %v555
  %858 = vmatmul.bf16.gmra.mxu0 %v166
  %v859 = vpop.f32.mrf.mxu0
  %v860 = vadd.f32 %v155, %v859
  %v861 = vpop.f32.mrf.mxu0
  %v862 = vadd.f32 %v160, %v861
  %863 = vdwg.mxu0
  %864 = vmatpush.bf16.msra.mxu0 %v668
  %865 = vmatpush.bf16.msra.mxu0 %v652
  %866 = vmatpush.bf16.msra.mxu0 %v636
  %867 = vmatpush.bf16.msra.mxu0 %v620
  %868 = vmatpush.bf16.msra.mxu0 %v604
  %869 = vmatpush.bf16.msra.mxu0 %v588
  %870 = vmatpush.bf16.msra.mxu0 %v572
  %871 = vmatpush.bf16.msra.mxu0 %v556
  %872 = vmatmul.bf16.gmra.mxu0 %v166
  %v873 = vpop.f32.mrf.mxu0
  %v874 = vadd.f32 %v155, %v873
  %v875 = vpop.f32.mrf.mxu0
  %v876 = vadd.f32 %v160, %v875
  %877 = vdwg.mxu0
  %878 = vmatpush.bf16.msra.mxu0 %v669
  %879 = vmatpush.bf16.msra.mxu0 %v653
  %880 = vmatpush.bf16.msra.mxu0 %v637
  %881 = vmatpush.bf16.msra.mxu0 %v621
  %882 = vmatpush.bf16.msra.mxu0 %v605
  %883 = vmatpush.bf16.msra.mxu0 %v589
  %884 = vmatpush.bf16.msra.mxu0 %v573
  %885 = vmatpush.bf16.msra.mxu0 %v557
  %886 = vmatmul.bf16.gmra.mxu0 %v166
  %v887 = vpop.f32.mrf.mxu0
  %v888 = vadd.f32 %v155, %v887
  %v889 = vpop.f32.mrf.mxu0
  %v890 = vadd.f32 %v160, %v889
  %891 = vdwg.mxu0
  %892 = vmatpush.bf16.msra.mxu0 %v670
  %893 = vmatpush.bf16.msra.mxu0 %v654
  %894 = vmatpush.bf16.msra.mxu0 %v638
  %895 = vmatpush.bf16.msra.mxu0 %v622
  %896 = vmatpush.bf16.msra.mxu0 %v606
  %897 = vmatpush.bf16.msra.mxu0 %v590
  %898 = vmatpush.bf16.msra.mxu0 %v574
  %899 = vmatpush.bf16.msra.mxu0 %v558
  %900 = vmatmul.bf16.gmra.mxu0 %v166
  %v901 = vpop.f32.mrf.mxu0
  %v902 = vadd.f32 %v155, %v901
  %v903 = vpop.f32.mrf.mxu0
  %v904 = vadd.f32 %v160, %v903
  %905 = vdwg.mxu0
  %906 = vmatpush.bf16.msra.mxu0 %v671
  %907 = vmatpush.bf16.msra.mxu0 %v655
  %908 = vmatpush.bf16.msra.mxu0 %v639
  %909 = vmatpush.bf16.msra.mxu0 %v623
  %910 = vmatpush.bf16.msra.mxu0 %v607
  %911 = vmatpush.bf16.msra.mxu0 %v591
  %912 = vmatpush.bf16.msra.mxu0 %v575
  %913 = vmatpush.bf16.msra.mxu0 %v559
  %914 = vmatmul.bf16.gmra.mxu0 %v166
  %v915 = vpop.f32.mrf.mxu0
  %v916 = vadd.f32 %v155, %v915
  %v917 = vpop.f32.mrf.mxu0
  %v918 = vadd.f32 %v160, %v917
  %919 = vdwg.mxu0
  %920 = vmatpush.bf16.msra.mxu0 %v672
  %921 = vmatpush.bf16.msra.mxu0 %v656
  %922 = vmatpush.bf16.msra.mxu0 %v640
  %923 = vmatpush.bf16.msra.mxu0 %v624
  %924 = vmatpush.bf16.msra.mxu0 %v608
  %925 = vmatpush.bf16.msra.mxu0 %v592
  %926 = vmatpush.bf16.msra.mxu0 %v576
  %927 = vmatpush.bf16.msra.mxu0 %v560
  %928 = vmatmul.bf16.gmra.mxu0 %v166
  %v929 = vpop.f32.mrf.mxu0
  %v930 = vadd.f32 %v155, %v929
  %v931 = vpop.f32.mrf.mxu0
  %v932 = vadd.f32 %v160, %v931
  %933 = vdwg.mxu0
  %934 = vmatpush.bf16.msra.mxu0 %v673
  %935 = vmatpush.bf16.msra.mxu0 %v657
  %936 = vmatpush.bf16.msra.mxu0 %v641
  %937 = vmatpush.bf16.msra.mxu0 %v625
  %938 = vmatpush.bf16.msra.mxu0 %v609
  %939 = vmatpush.bf16.msra.mxu0 %v593
  %940 = vmatpush.bf16.msra.mxu0 %v577
  %941 = vmatpush.bf16.msra.mxu0 %v561
  %942 = vmatmul.bf16.gmra.mxu0 %v166
  %v943 = vpop.f32.mrf.mxu0
  %v944 = vadd.f32 %v155, %v943
  %v945 = vpop.f32.mrf.mxu0
  %v946 = vadd.f32 %v160, %v945
  %947 = vdwg.mxu0
  %948 = vmatpush.bf16.msra.mxu0 %v674
  %949 = vmatpush.bf16.msra.mxu0 %v658
  %950 = vmatpush.bf16.msra.mxu0 %v642
  %951 = vmatpush.bf16.msra.mxu0 %v626
  %952 = vmatpush.bf16.msra.mxu0 %v610
  %953 = vmatpush.bf16.msra.mxu0 %v594
  %954 = vmatpush.bf16.msra.mxu0 %v578
  %955 = vmatpush.bf16.msra.mxu0 %v562
  %956 = vmatmul.bf16.gmra.mxu0 %v166
  %v957 = vpop.f32.mrf.mxu0
  %v958 = vadd.f32 %v155, %v957
  %v959 = vpop.f32.mrf.mxu0
  %v960 = vadd.f32 %v160, %v959
  %961 = vdwg.mxu0
  %962 = vmatpush.bf16.msra.mxu0 %v675
  %963 = vmatpush.bf16.msra.mxu0 %v659
  %964 = vmatpush.bf16.msra.mxu0 %v643
  %965 = vmatpush.bf16.msra.mxu0 %v627
  %966 = vmatpush.bf16.msra.mxu0 %v611
  %967 = vmatpush.bf16.msra.mxu0 %v595
  %968 = vmatpush.bf16.msra.mxu0 %v579
  %969 = vmatpush.bf16.msra.mxu0 %v563
  %970 = vmatmul.bf16.gmra.mxu0 %v166
  %v971 = vpop.f32.mrf.mxu0
  %v972 = vadd.f32 %v155, %v971
  %v973 = vpop.f32.mrf.mxu0
  %v974 = vadd.f32 %v160, %v973
  %975 = vdwg.mxu0
  %976 = vmatpush.bf16.msra.mxu0 %v676
  %977 = vmatpush.bf16.msra.mxu0 %v660
  %978 = vmatpush.bf16.msra.mxu0 %v644
  %979 = vmatpush.bf16.msra.mxu0 %v628
  %980 = vmatpush.bf16.msra.mxu0 %v612
  %981 = vmatpush.bf16.msra.mxu0 %v596
  %982 = vmatpush.bf16.msra.mxu0 %v580
  %983 = vmatpush.bf16.msra.mxu0 %v564
  %984 = vmatmul.bf16.gmra.mxu0 %v166
  %v985 = vpop.f32.mrf.mxu0
  %v986 = vadd.f32 %v155, %v985
  %v987 = vpop.f32.mrf.mxu0
  %v988 = vadd.f32 %v160, %v987
  %989 = vdwg.mxu0
  %990 = vmatpush.bf16.msra.mxu0 %v677
  %991 = vmatpush.bf16.msra.mxu0 %v661
  %992 = vmatpush.bf16.msra.mxu0 %v645
  %993 = vmatpush.bf16.msra.mxu0 %v629
  %994 = vmatpush.bf16.msra.mxu0 %v613
  %995 = vmatpush.bf16.msra.mxu0 %v597
  %996 = vmatpush.bf16.msra.mxu0 %v581
  %997 = vmatpush.bf16.msra.mxu0 %v565
  %998 = vmatmul.bf16.gmra.mxu0 %v166
  %v999 = vpop.f32.mrf.mxu0
  %v1000 = vadd.f32 %v155, %v999
  %v1001 = vpop.f32.mrf.mxu0
  %v1002 = vadd.f32 %v160, %v1001
  %1003 = vdwg.mxu0
  %1004 = vmatpush.bf16.msra.mxu0 %v678
  %1005 = vmatpush.bf16.msra.mxu0 %v662
  %1006 = vmatpush.bf16.msra.mxu0 %v646
  %1007 = vmatpush.bf16.msra.mxu0 %v630
  %1008 = vmatpush.bf16.msra.mxu0 %v614
  %1009 = vmatpush.bf16.msra.mxu0 %v598
  %1010 = vmatpush.bf16.msra.mxu0 %v582
  %1011 = vmatpush.bf16.msra.mxu0 %v566
  %1012 = vmatmul.bf16.gmra.mxu0 %v166
  %v1013 = vpop.f32.mrf.mxu0
  %v1014 = vadd.f32 %v155, %v1013
  %v1015 = vpop.f32.mrf.mxu0
  %v1016 = vadd.f32 %v160, %v1015
  %1017 = vdwg.mxu0
  %1018 = vmatpush.bf16.msra.mxu0 %v679
  %1019 = vmatpush.bf16.msra.mxu0 %v663
  %1020 = vmatpush.bf16.msra.mxu0 %v647
  %1021 = vmatpush.bf16.msra.mxu0 %v631
  %1022 = vmatpush.bf16.msra.mxu0 %v615
  %1023 = vmatpush.bf16.msra.mxu0 %v599
  %1024 = vmatpush.bf16.msra.mxu0 %v583
  %1025 = vmatpush.bf16.msra.mxu0 %v567
  %1026 = vmatmul.bf16.gmra.mxu0 %v166
  %v1027 = vpop.f32.mrf.mxu0
  %v1028 = vadd.f32 %v155, %v1027
  %v1029 = vpop.f32.mrf.mxu0
  %v1030 = vadd.f32 %v160, %v1029
  %1031 = vdwg.mxu0
  %v1032 = vld [vmem:[%s3] sm:$0xff]
  %v1033 = vld [vmem:[%s3 + $0x8] sm:$0xff]
  %v1034 = vld [vmem:[%s4] sm:$0xff]
  %v1035 = vld [vmem:[%s4 + $0x8] sm:$0xff]
  %v1036 = vadd.f32 %v818, %v832
  %v1037 = vadd.f32 %v1036, %v846
  %v1038 = vadd.f32 %v1037, %v860
  %v1039 = vadd.f32 %v1038, %v874
  %v1040 = vadd.f32 %v1039, %v888
  %v1041 = vadd.f32 %v1040, %v902
  %v1042 = vadd.f32 %v1041, %v916
  %v1043 = vadd.f32 %v1042, %v930
  %v1044 = vadd.f32 %v1043, %v944
  %v1045 = vadd.f32 %v1044, %v958
  %v1046 = vadd.f32 %v1045, %v972
  %v1047 = vadd.f32 %v1046, %v986
  %v1048 = vadd.f32 %v1047, %v1000
  %v1049 = vadd.f32 %v1048, %v1014
  %v1050 = vadd.f32 %v1049, %v1028
  %1051 = vadd.xlane.f32.xlu0 %v1050
  %v1052 = vpop.xlane.xlu0 %1051
  %v1053 = vadd.f32 %v820, %v834
  %v1054 = vadd.f32 %v1053, %v848
  %v1055 = vadd.f32 %v1054, %v862
  %v1056 = vadd.f32 %v1055, %v876
  %v1057 = vadd.f32 %v1056, %v890
  %v1058 = vadd.f32 %v1057, %v904
  %v1059 = vadd.f32 %v1058, %v918
  %v1060 = vadd.f32 %v1059, %v932
  %v1061 = vadd.f32 %v1060, %v946
  %v1062 = vadd.f32 %v1061, %v960
  %v1063 = vadd.f32 %v1062, %v974
  %v1064 = vadd.f32 %v1063, %v988
  %v1065 = vadd.f32 %v1064, %v1002
  %v1066 = vadd.f32 %v1065, %v1016
  %v1067 = vadd.f32 %v1066, %v1030
  %1068 = vadd.xlane.f32.xlu0 %v1067
  %v1069 = vpop.xlane.xlu0 %1068
  %v1070 = vmul.f32 %v818, %v818
  %v1071 = vmul.f32 %v832, %v832
  %v1072 = vmul.f32 %v846, %v846
  %v1073 = vmul.f32 %v860, %v860
  %v1074 = vmul.f32 %v874, %v874
  %v1075 = vmul.f32 %v888, %v888
  %v1076 = vmul.f32 %v902, %v902
  %v1077 = vmul.f32 %v916, %v916
  %v1078 = vmul.f32 %v930, %v930
  %v1079 = vmul.f32 %v944, %v944
  %v1080 = vmul.f32 %v958, %v958
  %v1081 = vmul.f32 %v972, %v972
  %v1082 = vmul.f32 %v986, %v986
  %v1083 = vmul.f32 %v1000, %v1000
  %v1084 = vmul.f32 %v1014, %v1014
  %v1085 = vmul.f32 %v1028, %v1028
  %v1086 = vmul.f32 %v820, %v820
  %v1087 = vmul.f32 %v834, %v834
  %v1088 = vmul.f32 %v848, %v848
  %v1089 = vmul.f32 %v862, %v862
  %v1090 = vmul.f32 %v876, %v876
  %v1091 = vmul.f32 %v890, %v890
  %v1092 = vmul.f32 %v904, %v904
  %v1093 = vmul.f32 %v918, %v918
  %v1094 = vmul.f32 %v932, %v932
  %v1095 = vmul.f32 %v946, %v946
  %v1096 = vmul.f32 %v960, %v960
  %v1097 = vmul.f32 %v974, %v974
  %v1098 = vmul.f32 %v988, %v988
  %v1099 = vmul.f32 %v1002, %v1002
  %v1100 = vmul.f32 %v1016, %v1016
  %v1101 = vmul.f32 %v1030, %v1030
  %v1102 = vadd.f32 %v1070, %v1071
  %v1103 = vadd.f32 %v1102, %v1072
  %v1104 = vadd.f32 %v1103, %v1073
  %v1105 = vadd.f32 %v1104, %v1074
  %v1106 = vadd.f32 %v1105, %v1075
  %v1107 = vadd.f32 %v1106, %v1076
  %v1108 = vadd.f32 %v1107, %v1077
  %v1109 = vadd.f32 %v1108, %v1078
  %v1110 = vadd.f32 %v1109, %v1079
  %v1111 = vadd.f32 %v1110, %v1080
  %v1112 = vadd.f32 %v1111, %v1081
  %v1113 = vadd.f32 %v1112, %v1082
  %v1114 = vadd.f32 %v1113, %v1083
  %v1115 = vadd.f32 %v1114, %v1084
  %v1116 = vadd.f32 %v1115, %v1085
  %1117 = vadd.xlane.f32.xlu0 %v1116
  %v1118 = vpop.xlane.xlu0 %1117
  %v1119 = vadd.f32 %v1086, %v1087
  %v1120 = vadd.f32 %v1119, %v1088
  %v1121 = vadd.f32 %v1120, %v1089
  %v1122 = vadd.f32 %v1121, %v1090
  %v1123 = vadd.f32 %v1122, %v1091
  %v1124 = vadd.f32 %v1123, %v1092
  %v1125 = vadd.f32 %v1124, %v1093
  %v1126 = vadd.f32 %v1125, %v1094
  %v1127 = vadd.f32 %v1126, %v1095
  %v1128 = vadd.f32 %v1127, %v1096
  %v1129 = vadd.f32 %v1128, %v1097
  %v1130 = vadd.f32 %v1129, %v1098
  %v1131 = vadd.f32 %v1130, %v1099
  %v1132 = vadd.f32 %v1131, %v1100
  %v1133 = vadd.f32 %v1132, %v1101
  %1134 = vadd.xlane.f32.xlu0 %v1133
  %v1135 = vpop.xlane.xlu0 %1134
  %v1136 = vmul.f32 %v1052, 0.00048828125
  %v1137 = vmul.f32 %v1069, 0.00048828125
  %v1138 = vmul.f32 %v1118, 0.00048828125
  %v1139 = vmul.f32 %v1135, 0.00048828125
  %v1140 = vmul.f32 %v1136, %v1136
  %v1141 = vmul.f32 %v1137, %v1137
  %v1142 = vsub.f32 %v1138, %v1140
  %v1143 = vsub.f32 %v1139, %v1141
  %v1144 = vadd.f32 %v1142, 1e-05
  %v1145 = vadd.f32 %v1143, 1e-05
  %v1146 = vrsqrt.pop %v1144
  %v1147 = vmul.f32 %v1146, %v1144
  %v1148 = vmul.f32 %v1147, %v1146
  %v1149 = vmul.f32 0.5, %v1148
  %v1150 = vsub.f32 1.5, %v1149
  %v1151 = vmul.f32 %v1146, %v1150
  %vm1152 = vweird.f32 %v1144
  %vm1153 = vweird.f32 %v1146
  %vm1154 = vmor %vm1152, %vm1153
  %v1155 = vsel %vm1154, %v1146, %v1151
  %v1156 = vrsqrt.pop %v1145
  %v1157 = vmul.f32 %v1156, %v1145
  %v1158 = vmul.f32 %v1157, %v1156
  %v1159 = vmul.f32 0.5, %v1158
  %v1160 = vsub.f32 1.5, %v1159
  %v1161 = vmul.f32 %v1156, %v1160
  %vm1162 = vweird.f32 %v1145
  %vm1163 = vweird.f32 %v1156
  %vm1164 = vmor %vm1162, %vm1163
  %v1165 = vsel %vm1164, %v1156, %v1161
  %v1166 = vmul.f32 %v1155, %v1032
  %v1167 = vmul.f32 %v1165, %v1033
  %v1168 = vsub.f32 %v818, %v1136
  %v1169 = vsub.f32 %v832, %v1136
  %v1170 = vsub.f32 %v846, %v1136
  %v1171 = vsub.f32 %v860, %v1136
  %v1172 = vsub.f32 %v874, %v1136
  %v1173 = vsub.f32 %v888, %v1136
  %v1174 = vsub.f32 %v902, %v1136
  %v1175 = vsub.f32 %v916, %v1136
  %v1176 = vsub.f32 %v930, %v1136
  %v1177 = vsub.f32 %v944, %v1136
  %v1178 = vsub.f32 %v958, %v1136
  %v1179 = vsub.f32 %v972, %v1136
  %v1180 = vsub.f32 %v986, %v1136
  %v1181 = vsub.f32 %v1000, %v1136
  %v1182 = vsub.f32 %v1014, %v1136
  %v1183 = vsub.f32 %v1028, %v1136
  %v1184 = vsub.f32 %v820, %v1137
  %v1185 = vsub.f32 %v834, %v1137
  %v1186 = vsub.f32 %v848, %v1137
  %v1187 = vsub.f32 %v862, %v1137
  %v1188 = vsub.f32 %v876, %v1137
  %v1189 = vsub.f32 %v890, %v1137
  %v1190 = vsub.f32 %v904, %v1137
  %v1191 = vsub.f32 %v918, %v1137
  %v1192 = vsub.f32 %v932, %v1137
  %v1193 = vsub.f32 %v946, %v1137
  %v1194 = vsub.f32 %v960, %v1137
  %v1195 = vsub.f32 %v974, %v1137
  %v1196 = vsub.f32 %v988, %v1137
  %v1197 = vsub.f32 %v1002, %v1137
  %v1198 = vsub.f32 %v1016, %v1137
  %v1199 = vsub.f32 %v1030, %v1137
  %1201 = vset.pattern.permute.xlu0 0
  %1202 = vperm.xlu0 %1201, %v1166
  %v1203 = vpop.permute.xlu0 %1202
  %1206 = vset.pattern.permute.xlu0 0
  %1207 = vperm.xlu0 %1206, %v1167
  %v1208 = vpop.permute.xlu0 %1207
  %v1210 = vmul.f32 %v1168, %v1203
  %v1211 = vmul.f32 %v1169, %v1203
  %v1212 = vmul.f32 %v1170, %v1203
  %v1213 = vmul.f32 %v1171, %v1203
  %v1214 = vmul.f32 %v1172, %v1203
  %v1215 = vmul.f32 %v1173, %v1203
  %v1216 = vmul.f32 %v1174, %v1203
  %v1217 = vmul.f32 %v1175, %v1203
  %v1218 = vmul.f32 %v1176, %v1203
  %v1219 = vmul.f32 %v1177, %v1203
  %v1220 = vmul.f32 %v1178, %v1203
  %v1221 = vmul.f32 %v1179, %v1203
  %v1222 = vmul.f32 %v1180, %v1203
  %v1223 = vmul.f32 %v1181, %v1203
  %v1224 = vmul.f32 %v1182, %v1203
  %v1225 = vmul.f32 %v1183, %v1203
  %v1226 = vmul.f32 %v1184, %v1208
  %v1227 = vmul.f32 %v1185, %v1208
  %v1228 = vmul.f32 %v1186, %v1208
  %v1229 = vmul.f32 %v1187, %v1208
  %v1230 = vmul.f32 %v1188, %v1208
  %v1231 = vmul.f32 %v1189, %v1208
  %v1232 = vmul.f32 %v1190, %v1208
  %v1233 = vmul.f32 %v1191, %v1208
  %v1234 = vmul.f32 %v1192, %v1208
  %v1235 = vmul.f32 %v1193, %v1208
  %v1236 = vmul.f32 %v1194, %v1208
  %v1237 = vmul.f32 %v1195, %v1208
  %v1238 = vmul.f32 %v1196, %v1208
  %v1239 = vmul.f32 %v1197, %v1208
  %v1240 = vmul.f32 %v1198, %v1208
  %v1241 = vmul.f32 %v1199, %v1208
  %1243 = vset.pattern.permute.xlu0 0
  %1244 = vperm.xlu0 %1243, %v1034
  %v1245 = vpop.permute.xlu0 %1244
  %1248 = vset.pattern.permute.xlu0 0
  %1249 = vperm.xlu0 %1248, %v1035
  %v1250 = vpop.permute.xlu0 %1249
  %v1252 = vadd.f32 %v1210, %v1245
  %v1253 = vadd.f32 %v1211, %v1245
  %v1254 = vadd.f32 %v1212, %v1245
  %v1255 = vadd.f32 %v1213, %v1245
  %v1256 = vadd.f32 %v1214, %v1245
  %v1257 = vadd.f32 %v1215, %v1245
  %v1258 = vadd.f32 %v1216, %v1245
  %v1259 = vadd.f32 %v1217, %v1245
  %v1260 = vadd.f32 %v1218, %v1245
  %v1261 = vadd.f32 %v1219, %v1245
  %v1262 = vadd.f32 %v1220, %v1245
  %v1263 = vadd.f32 %v1221, %v1245
  %v1264 = vadd.f32 %v1222, %v1245
  %v1265 = vadd.f32 %v1223, %v1245
  %v1266 = vadd.f32 %v1224, %v1245
  %v1267 = vadd.f32 %v1225, %v1245
  %v1268 = vadd.f32 %v1226, %v1250
  %v1269 = vadd.f32 %v1227, %v1250
  %v1270 = vadd.f32 %v1228, %v1250
  %v1271 = vadd.f32 %v1229, %v1250
  %v1272 = vadd.f32 %v1230, %v1250
  %v1273 = vadd.f32 %v1231, %v1250
  %v1274 = vadd.f32 %v1232, %v1250
  %v1275 = vadd.f32 %v1233, %v1250
  %v1276 = vadd.f32 %v1234, %v1250
  %v1277 = vadd.f32 %v1235, %v1250
  %v1278 = vadd.f32 %v1236, %v1250
  %v1279 = vadd.f32 %v1237, %v1250
  %v1280 = vadd.f32 %v1238, %v1250
  %v1281 = vadd.f32 %v1239, %v1250
  %v1282 = vadd.f32 %v1240, %v1250
  %v1283 = vadd.f32 %v1241, %v1250
  %v1284 = vmul.f32 %v1252, 0.2
  %v1285 = vmul.f32 %v1253, 0.2
  %v1286 = vmul.f32 %v1254, 0.2
  %v1287 = vmul.f32 %v1255, 0.2
  %v1288 = vmul.f32 %v1256, 0.2
  %v1289 = vmul.f32 %v1257, 0.2
  %v1290 = vmul.f32 %v1258, 0.2
  %v1291 = vmul.f32 %v1259, 0.2
  %v1292 = vmul.f32 %v1260, 0.2
  %v1293 = vmul.f32 %v1261, 0.2
  %v1294 = vmul.f32 %v1262, 0.2
  %v1295 = vmul.f32 %v1263, 0.2
  %v1296 = vmul.f32 %v1264, 0.2
  %v1297 = vmul.f32 %v1265, 0.2
  %v1298 = vmul.f32 %v1266, 0.2
  %v1299 = vmul.f32 %v1267, 0.2
  %v1300 = vmul.f32 %v1268, 0.2
  %v1301 = vmul.f32 %v1269, 0.2
  %v1302 = vmul.f32 %v1270, 0.2
  %v1303 = vmul.f32 %v1271, 0.2
  %v1304 = vmul.f32 %v1272, 0.2
  %v1305 = vmul.f32 %v1273, 0.2
  %v1306 = vmul.f32 %v1274, 0.2
  %v1307 = vmul.f32 %v1275, 0.2
  %v1308 = vmul.f32 %v1276, 0.2
  %v1309 = vmul.f32 %v1277, 0.2
  %v1310 = vmul.f32 %v1278, 0.2
  %v1311 = vmul.f32 %v1279, 0.2
  %v1312 = vmul.f32 %v1280, 0.2
  %v1313 = vmul.f32 %v1281, 0.2
  %v1314 = vmul.f32 %v1282, 0.2
  %v1315 = vmul.f32 %v1283, 0.2
  %v1316 = vmax.f32 %v1252, %v1284
  %v1317 = vmax.f32 %v1253, %v1285
  %v1318 = vmax.f32 %v1254, %v1286
  %v1319 = vmax.f32 %v1255, %v1287
  %v1320 = vmax.f32 %v1256, %v1288
  %v1321 = vmax.f32 %v1257, %v1289
  %v1322 = vmax.f32 %v1258, %v1290
  %v1323 = vmax.f32 %v1259, %v1291
  %v1324 = vmax.f32 %v1260, %v1292
  %v1325 = vmax.f32 %v1261, %v1293
  %v1326 = vmax.f32 %v1262, %v1294
  %v1327 = vmax.f32 %v1263, %v1295
  %v1328 = vmax.f32 %v1264, %v1296
  %v1329 = vmax.f32 %v1265, %v1297
  %v1330 = vmax.f32 %v1266, %v1298
  %v1331 = vmax.f32 %v1267, %v1299
  %v1332 = vmax.f32 %v1268, %v1300
  %v1333 = vmax.f32 %v1269, %v1301
  %v1334 = vmax.f32 %v1270, %v1302
  %v1335 = vmax.f32 %v1271, %v1303
  %v1336 = vmax.f32 %v1272, %v1304
  %v1337 = vmax.f32 %v1273, %v1305
  %v1338 = vmax.f32 %v1274, %v1306
  %v1339 = vmax.f32 %v1275, %v1307
  %v1340 = vmax.f32 %v1276, %v1308
  %v1341 = vmax.f32 %v1277, %v1309
  %v1342 = vmax.f32 %v1278, %v1310
  %v1343 = vmax.f32 %v1279, %v1311
  %v1344 = vmax.f32 %v1280, %v1312
  %v1345 = vmax.f32 %v1281, %v1313
  %v1346 = vmax.f32 %v1282, %v1314
  %v1347 = vmax.f32 %v1283, %v1315
  %v1348 = vpack.c.bf16 %v1317, %v1316
  %v1349 = vpack.c.bf16 %v1319, %v1318
  %v1350 = vpack.c.bf16 %v1321, %v1320
  %v1351 = vpack.c.bf16 %v1323, %v1322
  %v1352 = vpack.c.bf16 %v1325, %v1324
  %v1353 = vpack.c.bf16 %v1327, %v1326
  %v1354 = vpack.c.bf16 %v1329, %v1328
  %v1355 = vpack.c.bf16 %v1331, %v1330
  %v1356 = vpack.c.bf16 %v1333, %v1332
  %v1357 = vpack.c.bf16 %v1335, %v1334
  %v1358 = vpack.c.bf16 %v1337, %v1336
  %v1359 = vpack.c.bf16 %v1339, %v1338
  %v1360 = vpack.c.bf16 %v1341, %v1340
  %v1361 = vpack.c.bf16 %v1343, %v1342
  %v1362 = vpack.c.bf16 %v1345, %v1344
  %v1363 = vpack.c.bf16 %v1347, %v1346
  %1364 = vst [vmem:[%s5] sm:$0xff] %v1348
  %1365 = vst [vmem:[%s5 + $0x8] sm:$0xff] %v1349
  %1366 = vst [vmem:[%s5 + $0x10] sm:$0xff] %v1350
  %1367 = vst [vmem:[%s5 + $0x18] sm:$0xff] %v1351
  %1368 = vst [vmem:[%s5 + $0x20] sm:$0xff] %v1352
  %1369 = vst [vmem:[%s5 + $0x28] sm:$0xff] %v1353
  %1370 = vst [vmem:[%s5 + $0x30] sm:$0xff] %v1354
  %1371 = vst [vmem:[%s5 + $0x38] sm:$0xff] %v1355
  %1372 = vst [vmem:[%s5 + $0x40] sm:$0xff] %v1356
  %1373 = vst [vmem:[%s5 + $0x48] sm:$0xff] %v1357
  %1374 = vst [vmem:[%s5 + $0x50] sm:$0xff] %v1358
  %1375 = vst [vmem:[%s5 + $0x58] sm:$0xff] %v1359
  %1376 = vst [vmem:[%s5 + $0x60] sm:$0xff] %v1360
  %1377 = vst [vmem:[%s5 + $0x68] sm:$0xff] %v1361
  %1378 = vst [vmem:[%s5 + $0x70] sm:$0xff] %v1362
  %1379 = vst [vmem:[%s5 + $0x78] sm:$0xff] %v1363
  // Predicated region
  $region22: #{discriminator_forward.6} parent=0 // pred_check
    _
  $region23: #{discriminator_forward.6} parent=0 // pred_check_branch
    %1381 = sbr.rel (0) target = $region25
  $region24: #{discriminator_forward.6} parent=0 // pred_region
    _
  $region25: #{discriminator_forward.6} parent=0 // pred_fallthru
    _
  // Predicated region
  $region26: #{discriminator_forward.6} parent=0 // pred_check
    _
  $region27: #{discriminator_forward.6} parent=0 // pred_check_branch
    %1383 = sbr.rel (0) target = $region29
  $region28: #{discriminator_forward.6} parent=0 // pred_region
    _
  $region29: #{discriminator_forward.6} parent=0 // pred_fallthru
    _

// kernel: discriminator_forward.7
$region0: #{discriminator_forward.7}
  #allocation0 [shape = 'u32[]', space=smem, size = 0x4, offset = 0x4, fixed_abs, tag = 'smem constant byte address 0x4 - core index']
  #allocation1 [shape = 'u32[72,128]{1,0:T(1,128)}', space=vmem, size = 0x9000, scoped, tag = 'internal scratch']
  %s0 = inlined_call_operand.vmem [shape: bf16[32,256], index: 0, kind: input, shape index: {}]
  %s1 = inlined_call_operand.vmem [shape: bf16[256,512], index: 1, kind: input, shape index: {}]
  %s2 = inlined_call_operand.vmem [shape: f32[32,1], index: 2, kind: input, shape index: {}]
  %s3 = inlined_call_operand.vmem [shape: f32[32,1], index: 3, kind: input, shape index: {}]
  %s4 = inlined_call_operand.vmem [shape: f32[32,1], index: 4, kind: input, shape index: {}]
  %s5 = inlined_call_operand.vmem [shape: bf16[32,512], index: 5, kind: output, shape index: {}]
  %s6 = sld [smem:[#allocation0]]
  $region53: #{discriminator_forward.7} parent=0
    _
  %s8 = ssub.s32 1, %s6
  %s9 = scalar_select 0, %s8, %s6
  loop: start=0, step=1, limit=4
  $region2: #{discriminator_forward.7} parent=0 // loop_pre_header
    _
  $region3: #{discriminator_forward.7} parent=0 // loop_header
    %s11 = sphi 0, %s15
    %p12 = scmp.ge.s32.totalorder %s11, 4
    %s21 = sphi 0, %s23
    %s24 = sphi 0, %s21
    %s25 = sphi 0, %s24
    %s41 = sphi 0, %s25
    %s45 = sphi 0, %s45
    %s47 = sphi 0, %s45
    %s48 = sphi 0, %s47
    %s62 = sphi 0, %s48
    %s68 = sphi 0, %s70
    %s71 = sphi 0, %s68
    %s72 = sphi 0, %s71
    %s88 = sphi 0, %s72
    %s94 = sphi 0, %s96
    %s97 = sphi 0, %s94
    %s98 = sphi 0, %s97
    %s114 = sphi 0, %s98
    %s120 = sphi 0, %s122
    %s123 = sphi 0, %s120
    %s124 = sphi 0, %s123
    %s140 = sphi 0, %s124
    %s146 = sphi 0, %s148
    %s149 = sphi 0, %s146
    %s150 = sphi 0, %s149
    %s166 = sphi 0, %s150
  $region4: #{discriminator_forward.7} parent=0 // loop_header_branch
    %14 = sbr.rel (%p12) target = $region8
  $region5: #{discriminator_forward.7} parent=0 // loop_body
    %s16 = ssub.s32 %s11, 1
    %s17 = ssub.s32 %s11, 2
    %s18 = sadd.s32 %s11, 1
    %s19 = ssub.s32 %s11, %s18
    %p20 = scmp.eq.s32.totalorder %s19, 0
    %s22 = sadd.s32 %s21, 1
    %s23 = scalar_select %p20, %s21, %s22
    %p26 = pneg %p20
    %p27 = scmp.eq.s32.totalorder %s11, 1
    %p28 = por %p26, %p27
    %p29 = scmp.ne.s32.totalorder %s21, %s24
    %p30 = scmp.eq.s32.totalorder %s11, 0
    %p31 = por %p29, %p30
    %p32 = scmp.ne.s32.totalorder %s21, %s24
    %p33 = scmp.eq.s32.totalorder %s16, 1
    %p34 = por %p32, %p33
    %p35 = scmp.ne.s32.totalorder %s24, %s25
    %p36 = scmp.eq.s32.totalorder %s16, 0
    %p37 = por %p35, %p36
    %p38 = scmp.ne.s32.totalorder %s24, %s25
    %p39 = scmp.eq.s32.totalorder %s17, 1
    %p40 = por %p38, %p39
    %p42 = scmp.ne.s32.totalorder %s25, %s41
    %p43 = scmp.eq.s32.totalorder %s17, 0
    %p44 = por %p42, %p43
    %s46 = sadd.s32 %s45, 1
    %p49 = scmp.eq.s32.totalorder %s11, 1
    %p50 = scmp.ne.s32.totalorder %s45, %s47
    %p51 = scmp.eq.s32.totalorder %s11, 0
    %p52 = por %p50, %p51
    %p53 = scmp.ne.s32.totalorder %s45, %s47
    %p54 = scmp.eq.s32.totalorder %s16, 1
    %p55 = por %p53, %p54
    %p56 = scmp.ne.s32.totalorder %s47, %s48
    %p57 = scmp.eq.s32.totalorder %s16, 0
    %p58 = por %p56, %p57
    %p59 = scmp.ne.s32.totalorder %s47, %s48
    %p60 = scmp.eq.s32.totalorder %s17, 1
    %p61 = por %p59, %p60
    %p63 = scmp.ne.s32.totalorder %s48, %s62
    %p64 = scmp.eq.s32.totalorder %s17, 0
    %p65 = por %p63, %p64
    %s66 = ssub.s32 %s11, %s18
    %p67 = scmp.eq.s32.totalorder %s66, 0
    %s69 = sadd.s32 %s68, 1
    %s70 = scalar_select %p67, %s68, %s69
    %p73 = pneg %p67
    %p74 = scmp.eq.s32.totalorder %s11, 1
    %p75 = por %p73, %p74
    %p76 = scmp.ne.s32.totalorder %s68, %s71
    %p77 = scmp.eq.s32.totalorder %s11, 0
    %p78 = por %p76, %p77
    %p79 = scmp.ne.s32.totalorder %s68, %s71
    %p80 = scmp.eq.s32.totalorder %s16, 1
    %p81 = por %p79, %p80
    %p82 = scmp.ne.s32.totalorder %s71, %s72
    %p83 = scmp.eq.s32.totalorder %s16, 0
    %p84 = por %p82, %p83
    %p85 = scmp.ne.s32.totalorder %s71, %s72
    %p86 = scmp.eq.s32.totalorder %s17, 1
    %p87 = por %p85, %p86
    %p89 = scmp.ne.s32.totalorder %s72, %s88
    %p90 = scmp.eq.s32.totalorder %s17, 0
    %p91 = por %p89, %p90
    %s92 = ssub.s32 %s11, %s18
    %p93 = scmp.eq.s32.totalorder %s92, 0
    %s95 = sadd.s32 %s94, 1
    %s96 = scalar_select %p93, %s94, %s95
    %p99 = pneg %p93
    %p100 = scmp.eq.s32.totalorder %s11, 1
    %p101 = por %p99, %p100
    %p102 = scmp.ne.s32.totalorder %s94, %s97
    %p103 = scmp.eq.s32.totalorder %s11, 0
    %p104 = por %p102, %p103
    %p105 = scmp.ne.s32.totalorder %s94, %s97
    %p106 = scmp.eq.s32.totalorder %s16, 1
    %p107 = por %p105, %p106
    %p108 = scmp.ne.s32.totalorder %s97, %s98
    %p109 = scmp.eq.s32.totalorder %s16, 0
    %p110 = por %p108, %p109
    %p111 = scmp.ne.s32.totalorder %s97, %s98
    %p112 = scmp.eq.s32.totalorder %s17, 1
    %p113 = por %p111, %p112
    %p115 = scmp.ne.s32.totalorder %s98, %s114
    %p116 = scmp.eq.s32.totalorder %s17, 0
    %p117 = por %p115, %p116
    %s118 = ssub.s32 %s11, %s18
    %p119 = scmp.eq.s32.totalorder %s118, 0
    %s121 = sadd.s32 %s120, 1
    %s122 = scalar_select %p119, %s120, %s121
    %p125 = pneg %p119
    %p126 = scmp.eq.s32.totalorder %s11, 1
    %p127 = por %p125, %p126
    %p128 = scmp.ne.s32.totalorder %s120, %s123
    %p129 = scmp.eq.s32.totalorder %s11, 0
    %p130 = por %p128, %p129
    %p131 = scmp.ne.s32.totalorder %s120, %s123
    %p132 = scmp.eq.s32.totalorder %s16, 1
    %p133 = por %p131, %p132
    %p134 = scmp.ne.s32.totalorder %s123, %s124
    %p135 = scmp.eq.s32.totalorder %s16, 0
    %p136 = por %p134, %p135
    %p137 = scmp.ne.s32.totalorder %s123, %s124
    %p138 = scmp.eq.s32.totalorder %s17, 1
    %p139 = por %p137, %p138
    %p141 = scmp.ne.s32.totalorder %s124, %s140
    %p142 = scmp.eq.s32.totalorder %s17, 0
    %p143 = por %p141, %p142
    %s144 = ssub.s32 %s11, %s18
    %p145 = scmp.eq.s32.totalorder %s144, 0
    %s147 = sadd.s32 %s146, 1
    %s148 = scalar_select %p145, %s146, %s147
    %p151 = pneg %p145
    %p152 = scmp.eq.s32.totalorder %s11, 1
    %p153 = por %p151, %p152
    %p154 = scmp.ne.s32.totalorder %s146, %s149
    %p155 = scmp.eq.s32.totalorder %s11, 0
    %p156 = por %p154, %p155
    %p157 = scmp.ne.s32.totalorder %s146, %s149
    %p158 = scmp.eq.s32.totalorder %s16, 1
    %p159 = por %p157, %p158
    %p160 = scmp.ne.s32.totalorder %s149, %s150
    %p161 = scmp.eq.s32.totalorder %s16, 0
    %p162 = por %p160, %p161
    %p163 = scmp.ne.s32.totalorder %s149, %s150
    %p164 = scmp.eq.s32.totalorder %s17, 1
    %p165 = por %p163, %p164
    %p167 = scmp.ne.s32.totalorder %s150, %s166
    %p168 = scmp.eq.s32.totalorder %s17, 0
    %p169 = por %p167, %p168
    %p170 = scmp.le.s32.totalorder 1, %s11
    %p171 = scmp.lt.s32.totalorder %s11, 3
    %p172 = pnand %p170, %p171
    %p173 = pneg %p172
    // Predicated region
    $region9: #{discriminator_forward.7} parent=5 // pred_check
      _
    $region10: #{discriminator_forward.7} parent=5 // pred_check_branch
      %175 = sbr.rel (%p172) target = $region12
    $region11: #{discriminator_forward.7} parent=5 // pred_region
      %s176 = ssub.s32 %s11, 1
      // Predicated region
      $region13: #{discriminator_forward.7} parent=11 // pred_check
        %p177 = pneg %p58
      $region14: #{discriminator_forward.7} parent=11 // pred_check_branch
        %179 = sbr.rel (%p177) target = $region16
      $region15: #{discriminator_forward.7} parent=11 // pred_region
        _
      $region16: #{discriminator_forward.7} parent=11 // pred_fallthru
        _
    $region12: #{discriminator_forward.7} parent=5 // pred_fallthru
      _
    %p180 = scmp.lt.s32.totalorder %s11, 2
    // Predicated region
    $region17: #{discriminator_forward.7} parent=5 // pred_check
      %p181 = pneg %p180
    $region18: #{discriminator_forward.7} parent=5 // pred_check_branch
      %183 = sbr.rel (%p181) target = $region20
    $region19: #{discriminator_forward.7} parent=5 // pred_region
      // Predicated region
      $region21: #{discriminator_forward.7} parent=19 // pred_check
        %p184 = pneg %p31
      $region22: #{discriminator_forward.7} parent=19 // pred_check_branch
        %186 = sbr.rel (%p184) target = $region24
      $region23: #{discriminator_forward.7} parent=19 // pred_region
        %s187 = smul.u32 2, %s11
        %p188 = scmp.lt.s32.totalorder %s187, 3
        %s189 = scalar_select %p188, %s187, 3
        %s190 = smul.addr %s189, 2
        %s191 = smul.addr %s190, 4
        %s192 = scalar_lea.vmem %s0, %s191
        %s193 = smul.u32 2, %s11
      $region24: #{discriminator_forward.7} parent=19 // pred_fallthru
        _
      // Predicated region
      $region25: #{discriminator_forward.7} parent=19 // pred_check
        %p194 = pneg %p78
      $region26: #{discriminator_forward.7} parent=19 // pred_check_branch
        %196 = sbr.rel (%p194) target = $region28
      $region27: #{discriminator_forward.7} parent=19 // pred_region
        %s197 = smul.u32 2, %s11
        %p198 = scmp.lt.s32.totalorder %s197, 3
        %s199 = scalar_select %p198, %s197, 3
        %s200 = smul.addr %s199, 8
        %s201 = scalar_lea.vmem %s2, %s200
        %s202 = smul.u32 2, %s11
      $region28: #{discriminator_forward.7} parent=19 // pred_fallthru
        _
      // Predicated region
      $region29: #{discriminator_forward.7} parent=19 // pred_check
        %p203 = pneg %p104
      $region30: #{discriminator_forward.7} parent=19 // pred_check_branch
        %205 = sbr.rel (%p203) target = $region32
      $region31: #{discriminator_forward.7} parent=19 // pred_region
        %s206 = smul.u32 2, %s11
        %p207 = scmp.lt.s32.totalorder %s206, 3
        %s208 = scalar_select %p207, %s206, 3
        %s209 = smul.addr %s208, 8
        %s210 = scalar_lea.vmem %s3, %s209
        %s211 = smul.u32 2, %s11
      $region32: #{discriminator_forward.7} parent=19 // pred_fallthru
        _
      // Predicated region
      $region33: #{discriminator_forward.7} parent=19 // pred_check
        %p212 = pneg %p130
      $region34: #{discriminator_forward.7} parent=19 // pred_check_branch
        %214 = sbr.rel (%p212) target = $region36
      $region35: #{discriminator_forward.7} parent=19 // pred_region
        %s215 = smul.u32 2, %s11
        %p216 = scmp.lt.s32.totalorder %s215, 3
        %s217 = scalar_select %p216, %s215, 3
        %s218 = smul.addr %s217, 8
        %s219 = scalar_lea.vmem %s4, %s218
        %s220 = smul.u32 2, %s11
      $region36: #{discriminator_forward.7} parent=19 // pred_fallthru
        _
    $region20: #{discriminator_forward.7} parent=5 // pred_fallthru
      _
    %p221 = scmp.le.s32.totalorder 1, %s11
    %p222 = scmp.lt.s32.totalorder %s11, 3
    %p223 = pnand %p221, %p222
    %p224 = pneg %p223
    // Predicated region
    $region37: #{discriminator_forward.7} parent=5 // pred_check
      _
    $region38: #{discriminator_forward.7} parent=5 // pred_check_branch
      %226 = sbr.rel (%p223) target = $region40
    $region39: #{discriminator_forward.7} parent=5 // pred_region
      %s227 = ssub.s32 %s11, 1
      %s228 = smul.u32 2, %s16
      %p229 = scmp.lt.s32.totalorder %s228, 3
      %s230 = scalar_select %p229, %s228, 3
      %s231 = smul.addr %s230, 2
      %s232 = smul.addr %s231, 4
      %s233 = scalar_lea.vmem %s0, %s232
      %p234 = pneg %p37
      %p235 = pneg %p34
      %p236 = pneg %p58
      %p237 = pneg %p55
      %s238 = smul.u32 2, %s16
      %p239 = scmp.lt.s32.totalorder %s238, 3
      %s240 = scalar_select %p239, %s238, 3
      %s241 = smul.addr %s240, 8
      %s242 = scalar_lea.vmem %s2, %s241
      %p243 = pneg %p84
      %p244 = pneg %p81
      %s245 = smul.u32 2, %s16
      %p246 = scmp.lt.s32.totalorder %s245, 3
      %s247 = scalar_select %p246, %s245, 3
      %s248 = smul.addr %s247, 8
      %s249 = scalar_lea.vmem %s3, %s248
      %p250 = pneg %p110
      %p251 = pneg %p107
      %s252 = smul.u32 2, %s16
      %p253 = scmp.lt.s32.totalorder %s252, 3
      %s254 = scalar_select %p253, %s252, 3
      %s255 = smul.addr %s254, 8
      %s256 = scalar_lea.vmem %s4, %s255
      %p257 = pneg %p136
      %p258 = pneg %p133
      %p259 = pneg %p162
      %p260 = pneg %p159
      %s261 = smul.u32 2, %s16
      %p262 = scmp.lt.s32.totalorder %s261, 3
      %s263 = scalar_select %p262, %s261, 3
      %s264 = smul.addr %s263, 4
      %s265 = smul.addr %s264, 4
      %s266 = scalar_lea.vmem %s5, %s265
      %s267 = smul.u32 2, %s16
      %p268 = scmp.lt.s32.totalorder %s267, 3
      %s269 = scalar_select %p268, %s267, 3
      %s270 = smul.addr %s269, 2
      %s271 = smul.addr %s270, 4
      %s272 = scalar_lea.vmem %s0, %s271
      %s273 = smul.u32 2, %s16
      %s274 = smul.u32 2, %s16
      %p275 = scmp.lt.s32.totalorder %s274, 3
      %s276 = scalar_select %p275, %s274, 3
      %s277 = smul.addr %s276, 8
      %s278 = scalar_lea.vmem %s2, %s277
      %s279 = smul.u32 2, %s16
      %s280 = smul.u32 2, %s16
      %p281 = scmp.lt.s32.totalorder %s280, 3
      %s282 = scalar_select %p281, %s280, 3
      %s283 = smul.addr %s282, 8
      %s284 = scalar_lea.vmem %s3, %s283
      %s285 = smul.u32 2, %s16
      %s286 = smul.u32 2, %s16
      %p287 = scmp.lt.s32.totalorder %s286, 3
      %s288 = scalar_select %p287, %s286, 3
      %s289 = smul.addr %s288, 8
      %s290 = scalar_lea.vmem %s4, %s289
      %s291 = smul.u32 2, %s16
      %s292 = smul.u32 2, %s16
      %p293 = scmp.lt.s32.totalorder %s292, 3
      %s294 = scalar_select %p293, %s292, 3
      %s295 = smul.addr %s294, 4
      %s296 = smul.addr %s295, 4
      %s297 = scalar_lea.vmem %s5, %s296
      %s298 = smul.u32 2, %s16
      %v299 = vld [vmem:[%s272] sm:$0xff]
      %v300 = vld [vmem:[%s272 + $0x8] sm:$0xff]
      %v301 = vld [vmem:[%s1] sm:$0xff]
      %v302 = vld [vmem:[%s1 + $0x8] sm:$0xff]
      %v303 = vld [vmem:[%s1 + $0x10] sm:$0xff]
      %v304 = vld [vmem:[%s1 + $0x18] sm:$0xff]
      %v305 = vld [vmem:[%s1 + $0x20] sm:$0xff]
      %v306 = vld [vmem:[%s1 + $0x28] sm:$0xff]
      %v307 = vld [vmem:[%s1 + $0x30] sm:$0xff]
      %v308 = vld [vmem:[%s1 + $0x38] sm:$0xff]
      %v309 = vld [vmem:[%s1 + $0x40] sm:$0xff]
      %v310 = vld [vmem:[%s1 + $0x48] sm:$0xff]
      %v311 = vld [vmem:[%s1 + $0x50] sm:$0xff]
      %v312 = vld [vmem:[%s1 + $0x58] sm:$0xff]
      %v313 = vld [vmem:[%s1 + $0x60] sm:$0xff]
      %v314 = vld [vmem:[%s1 + $0x68] sm:$0xff]
      %v315 = vld [vmem:[%s1 + $0x70] sm:$0xff]
      %v316 = vld [vmem:[%s1 + $0x78] sm:$0xff]
      %v317 = vld [vmem:[%s1 + $0x80] sm:$0xff]
      %v318 = vld [vmem:[%s1 + $0x88] sm:$0xff]
      %v319 = vld [vmem:[%s1 + $0x90] sm:$0xff]
      %v320 = vld [vmem:[%s1 + $0x98] sm:$0xff]
      %v321 = vld [vmem:[%s1 + $0xa0] sm:$0xff]
      %v322 = vld [vmem:[%s1 + $0xa8] sm:$0xff]
      %v323 = vld [vmem:[%s1 + $0xb0] sm:$0xff]
      %v324 = vld [vmem:[%s1 + $0xb8] sm:$0xff]
      %v325 = vld [vmem:[%s1 + $0xc0] sm:$0xff]
      %v326 = vld [vmem:[%s1 + $0xc8] sm:$0xff]
      %v327 = vld [vmem:[%s1 + $0xd0] sm:$0xff]
      %v328 = vld [vmem:[%s1 + $0xd8] sm:$0xff]
      %v329 = vld [vmem:[%s1 + $0xe0] sm:$0xff]
      %v330 = vld [vmem:[%s1 + $0xe8] sm:$0xff]
      %v331 = vld [vmem:[%s1 + $0xf0] sm:$0xff]
      %v332 = vld [vmem:[%s1 + $0xf8] sm:$0xff]
      %v333 = vld [vmem:[%s1 + $0x100] sm:$0xff]
      %v334 = vld [vmem:[%s1 + $0x108] sm:$0xff]
      %v335 = vld [vmem:[%s1 + $0x110] sm:$0xff]
      %v336 = vld [vmem:[%s1 + $0x118] sm:$0xff]
      %v337 = vld [vmem:[%s1 + $0x120] sm:$0xff]
      %v338 = vld [vmem:[%s1 + $0x128] sm:$0xff]
      %v339 = vld [vmem:[%s1 + $0x130] sm:$0xff]
      %v340 = vld [vmem:[%s1 + $0x138] sm:$0xff]
      %v341 = vld [vmem:[%s1 + $0x140] sm:$0xff]
      %v342 = vld [vmem:[%s1 + $0x148] sm:$0xff]
      %v343 = vld [vmem:[%s1 + $0x150] sm:$0xff]
      %v344 = vld [vmem:[%s1 + $0x158] sm:$0xff]
      %v345 = vld [vmem:[%s1 + $0x160] sm:$0xff]
      %v346 = vld [vmem:[%s1 + $0x168] sm:$0xff]
      %v347 = vld [vmem:[%s1 + $0x170] sm:$0xff]
      %v348 = vld [vmem:[%s1 + $0x178] sm:$0xff]
      %v349 = vld [vmem:[%s1 + $0x180] sm:$0xff]
      %v350 = vld [vmem:[%s1 + $0x188] sm:$0xff]
      %v351 = vld [vmem:[%s1 + $0x190] sm:$0xff]
      %v352 = vld [vmem:[%s1 + $0x198] sm:$0xff]
      %v353 = vld [vmem:[%s1 + $0x1a0] sm:$0xff]
      %v354 = vld [vmem:[%s1 + $0x1a8] sm:$0xff]
      %v355 = vld [vmem:[%s1 + $0x1b0] sm:$0xff]
      %v356 = vld [vmem:[%s1 + $0x1b8] sm:$0xff]
      %v357 = vld [vmem:[%s1 + $0x1c0] sm:$0xff]
      %v358 = vld [vmem:[%s1 + $0x1c8] sm:$0xff]
      %v359 = vld [vmem:[%s1 + $0x1d0] sm:$0xff]
      %v360 = vld [vmem:[%s1 + $0x1d8] sm:$0xff]
      %v361 = vld [vmem:[%s1 + $0x1e0] sm:$0xff]
      %v362 = vld [vmem:[%s1 + $0x1e8] sm:$0xff]
      %v363 = vld [vmem:[%s1 + $0x1f0] sm:$0xff]
      %v364 = vld [vmem:[%s1 + $0x1f8] sm:$0xff]
      %v365 = vld [vmem:[%s278] sm:$0xff]
      %v366 = vld [vmem:[%s278 + $0x8] sm:$0xff]
      %368 = vset.pattern.permute.xlu0 0
      %369 = vperm.xlu0 %368, %v365
      %v370 = vpop.permute.xlu0 %369
      %373 = vset.pattern.permute.xlu0 0
      %374 = vperm.xlu0 %373, %v366
      %v375 = vpop.permute.xlu0 %374
      %v379 = vunpack.c.l.b16 %v299
      %v380 = vunpack.c.h.b16 %v299
      %v381 = vunpack.c.l.b16 %v300
      %v382 = vunpack.c.h.b16 %v300
      %v383 = vpack.c.b16 %v381, %v379
      %v384 = vpack.c.b16 %v382, %v380
      %v451 = vunpack.c.l.b16 %v301
      %v452 = vunpack.c.h.b16 %v301
      %v453 = vunpack.c.l.b16 %v302
      %v454 = vunpack.c.h.b16 %v302
      %v455 = vunpack.c.l.b16 %v303
      %v456 = vunpack.c.h.b16 %v303
      %v457 = vunpack.c.l.b16 %v304
      %v458 = vunpack.c.h.b16 %v304
      %v459 = vunpack.c.l.b16 %v305
      %v460 = vunpack.c.h.b16 %v305
      %v461 = vunpack.c.l.b16 %v306
      %v462 = vunpack.c.h.b16 %v306
      %v463 = vunpack.c.l.b16 %v307
      %v464 = vunpack.c.h.b16 %v307
      %v465 = vunpack.c.l.b16 %v308
      %v466 = vunpack.c.h.b16 %v308
      %v467 = vunpack.c.l.b16 %v309
      %v468 = vunpack.c.h.b16 %v309
      %v469 = vunpack.c.l.b16 %v310
      %v470 = vunpack.c.h.b16 %v310
      %v471 = vunpack.c.l.b16 %v311
      %v472 = vunpack.c.h.b16 %v311
      %v473 = vunpack.c.l.b16 %v312
      %v474 = vunpack.c.h.b16 %v312
      %v475 = vunpack.c.l.b16 %v313
      %v476 = vunpack.c.h.b16 %v313
      %v477 = vunpack.c.l.b16 %v314
      %v478 = vunpack.c.h.b16 %v314
      %v479 = vunpack.c.l.b16 %v315
      %v480 = vunpack.c.h.b16 %v315
      %v481 = vunpack.c.l.b16 %v316
      %v482 = vunpack.c.h.b16 %v316
      %v483 = vunpack.c.l.b16 %v317
      %v484 = vunpack.c.h.b16 %v317
      %v485 = vunpack.c.l.b16 %v318
      %v486 = vunpack.c.h.b16 %v318
      %v487 = vunpack.c.l.b16 %v319
      %v488 = vunpack.c.h.b16 %v319
      %v489 = vunpack.c.l.b16 %v320
      %v490 = vunpack.c.h.b16 %v320
      %v491 = vunpack.c.l.b16 %v321
      %v492 = vunpack.c.h.b16 %v321
      %v493 = vunpack.c.l.b16 %v322
      %v494 = vunpack.c.h.b16 %v322
      %v495 = vunpack.c.l.b16 %v323
      %v496 = vunpack.c.h.b16 %v323
      %v497 = vunpack.c.l.b16 %v324
      %v498 = vunpack.c.h.b16 %v324
      %v499 = vunpack.c.l.b16 %v325
      %v500 = vunpack.c.h.b16 %v325
      %v501 = vunpack.c.l.b16 %v326
      %v502 = vunpack.c.h.b16 %v326
      %v503 = vunpack.c.l.b16 %v327
      %v504 = vunpack.c.h.b16 %v327
      %v505 = vunpack.c.l.b16 %v328
      %v506 = vunpack.c.h.b16 %v328
      %v507 = vunpack.c.l.b16 %v329
      %v508 = vunpack.c.h.b16 %v329
      %v509 = vunpack.c.l.b16 %v330
      %v510 = vunpack.c.h.b16 %v330
      %v511 = vunpack.c.l.b16 %v331
      %v512 = vunpack.c.h.b16 %v331
      %v513 = vunpack.c.l.b16 %v332
      %v514 = vunpack.c.h.b16 %v332
      %v515 = vunpack.c.l.b16 %v333
      %v516 = vunpack.c.h.b16 %v333
      %v517 = vunpack.c.l.b16 %v334
      %v518 = vunpack.c.h.b16 %v334
      %v519 = vunpack.c.l.b16 %v335
      %v520 = vunpack.c.h.b16 %v335
      %v521 = vunpack.c.l.b16 %v336
      %v522 = vunpack.c.h.b16 %v336
      %v523 = vunpack.c.l.b16 %v337
      %v524 = vunpack.c.h.b16 %v337
      %v525 = vunpack.c.l.b16 %v338
      %v526 = vunpack.c.h.b16 %v338
      %v527 = vunpack.c.l.b16 %v339
      %v528 = vunpack.c.h.b16 %v339
      %v529 = vunpack.c.l.b16 %v340
      %v530 = vunpack.c.h.b16 %v340
      %v531 = vunpack.c.l.b16 %v341
      %v532 = vunpack.c.h.b16 %v341
      %v533 = vunpack.c.l.b16 %v342
      %v534 = vunpack.c.h.b16 %v342
      %v535 = vunpack.c.l.b16 %v343
      %v536 = vunpack.c.h.b16 %v343
      %v537 = vunpack.c.l.b16 %v344
      %v538 = vunpack.c.h.b16 %v344
      %v539 = vunpack.c.l.b16 %v345
      %v540 = vunpack.c.h.b16 %v345
      %v541 = vunpack.c.l.b16 %v346
      %v542 = vunpack.c.h.b16 %v346
      %v543 = vunpack.c.l.b16 %v347
      %v544 = vunpack.c.h.b16 %v347
      %v545 = vunpack.c.l.b16 %v348
      %v546 = vunpack.c.h.b16 %v348
      %v547 = vunpack.c.l.b16 %v349
      %v548 = vunpack.c.h.b16 %v349
      %v549 = vunpack.c.l.b16 %v350
      %v550 = vunpack.c.h.b16 %v350
      %v551 = vunpack.c.l.b16 %v351
      %v552 = vunpack.c.h.b16 %v351
      %v553 = vunpack.c.l.b16 %v352
      %v554 = vunpack.c.h.b16 %v352
      %v555 = vunpack.c.l.b16 %v353
      %v556 = vunpack.c.h.b16 %v353
      %v557 = vunpack.c.l.b16 %v354
      %v558 = vunpack.c.h.b16 %v354
      %v559 = vunpack.c.l.b16 %v355
      %v560 = vunpack.c.h.b16 %v355
      %v561 = vunpack.c.l.b16 %v356
      %v562 = vunpack.c.h.b16 %v356
      %v563 = vunpack.c.l.b16 %v357
      %v564 = vunpack.c.h.b16 %v357
      %v565 = vunpack.c.l.b16 %v358
      %v566 = vunpack.c.h.b16 %v358
      %v567 = vunpack.c.l.b16 %v359
      %v568 = vunpack.c.h.b16 %v359
      %v569 = vunpack.c.l.b16 %v360
      %v570 = vunpack.c.h.b16 %v360
      %v571 = vunpack.c.l.b16 %v361
      %v572 = vunpack.c.h.b16 %v361
      %v573 = vunpack.c.l.b16 %v362
      %v574 = vunpack.c.h.b16 %v362
      %v575 = vunpack.c.l.b16 %v363
      %v576 = vunpack.c.h.b16 %v363
      %v577 = vunpack.c.l.b16 %v364
      %v578 = vunpack.c.h.b16 %v364
      %v579 = vpack.c.b16 %v455, %v451
      %v580 = vpack.c.b16 %v456, %v452
      %v581 = vpack.c.b16 %v457, %v453
      %v582 = vpack.c.b16 %v458, %v454
      %v583 = vpack.c.b16 %v463, %v459
      %v584 = vpack.c.b16 %v464, %v460
      %v585 = vpack.c.b16 %v465, %v461
      %v586 = vpack.c.b16 %v466, %v462
      %v587 = vpack.c.b16 %v471, %v467
      %v588 = vpack.c.b16 %v472, %v468
      %v589 = vpack.c.b16 %v473, %v469
      %v590 = vpack.c.b16 %v474, %v470
      %v591 = vpack.c.b16 %v479, %v475
      %v592 = vpack.c.b16 %v480, %v476
      %v593 = vpack.c.b16 %v481, %v477
      %v594 = vpack.c.b16 %v482, %v478
      %v595 = vpack.c.b16 %v487, %v483
      %v596 = vpack.c.b16 %v488, %v484
      %v597 = vpack.c.b16 %v489, %v485
      %v598 = vpack.c.b16 %v490, %v486
      %v599 = vpack.c.b16 %v495, %v491
      %v600 = vpack.c.b16 %v496, %v492
      %v601 = vpack.c.b16 %v497, %v493
      %v602 = vpack.c.b16 %v498, %v494
      %v603 = vpack.c.b16 %v503, %v499
      %v604 = vpack.c.b16 %v504, %v500
      %v605 = vpack.c.b16 %v505, %v501
      %v606 = vpack.c.b16 %v506, %v502
      %v607 = vpack.c.b16 %v511, %v507
      %v608 = vpack.c.b16 %v512, %v508
      %v609 = vpack.c.b16 %v513, %v509
      %v610 = vpack.c.b16 %v514, %v510
      %v611 = vpack.c.b16 %v519, %v515
      %v612 = vpack.c.b16 %v520, %v516
      %v613 = vpack.c.b16 %v521, %v517
      %v614 = vpack.c.b16 %v522, %v518
      %v615 = vpack.c.b16 %v527, %v523
      %v616 = vpack.c.b16 %v528, %v524
      %v617 = vpack.c.b16 %v529, %v525
      %v618 = vpack.c.b16 %v530, %v526
      %v619 = vpack.c.b16 %v535, %v531
      %v620 = vpack.c.b16 %v536, %v532
      %v621 = vpack.c.b16 %v537, %v533
      %v622 = vpack.c.b16 %v538, %v534
      %v623 = vpack.c.b16 %v543, %v539
      %v624 = vpack.c.b16 %v544, %v540
      %v625 = vpack.c.b16 %v545, %v541
      %v626 = vpack.c.b16 %v546, %v542
      %v627 = vpack.c.b16 %v551, %v547
      %v628 = vpack.c.b16 %v552, %v548
      %v629 = vpack.c.b16 %v553, %v549
      %v630 = vpack.c.b16 %v554, %v550
      %v631 = vpack.c.b16 %v559, %v555
      %v632 = vpack.c.b16 %v560, %v556
      %v633 = vpack.c.b16 %v561, %v557
      %v634 = vpack.c.b16 %v562, %v558
      %v635 = vpack.c.b16 %v567, %v563
      %v636 = vpack.c.b16 %v568, %v564
      %v637 = vpack.c.b16 %v569, %v565
      %v638 = vpack.c.b16 %v570, %v566
      %v639 = vpack.c.b16 %v575, %v571
      %v640 = vpack.c.b16 %v576, %v572
      %v641 = vpack.c.b16 %v577, %v573
      %v642 = vpack.c.b16 %v578, %v574
      %707 = vmatpush.bf16.msra.mxu0 %v607
      %708 = vmatpush.bf16.msra.mxu0 %v603
      %709 = vmatpush.bf16.msra.mxu0 %v599
      %710 = vmatpush.bf16.msra.mxu0 %v595
      %711 = vmatpush.bf16.msra.mxu0 %v591
      %712 = vmatpush.bf16.msra.mxu0 %v587
      %713 = vmatpush.bf16.msra.mxu0 %v583
      %714 = vmatpush.bf16.msra.mxu0 %v579
      %715 = vmatmul.bf16.gmra.mxu0 %v383
      %v716 = vpop.f32.mrf.mxu0
      %v717 = vadd.f32 %v370, %v716
      %v718 = vpop.f32.mrf.mxu0
      %v719 = vadd.f32 %v375, %v718
      %720 = vdwg.mxu0
      %721 = vmatpush.bf16.msra.mxu0 %v639
      %722 = vmatpush.bf16.msra.mxu0 %v635
      %723 = vmatpush.bf16.msra.mxu0 %v631
      %724 = vmatpush.bf16.msra.mxu0 %v627
      %725 = vmatpush.bf16.msra.mxu0 %v623
      %726 = vmatpush.bf16.msra.mxu0 %v619
      %727 = vmatpush.bf16.msra.mxu0 %v615
      %728 = vmatpush.bf16.msra.mxu0 %v611
      %729 = vmatmul.bf16.gmra.mxu0 %v384
      %v730 = vpop.f32.mrf.mxu0
      %v731 = vadd.f32 %v717, %v730
      %v732 = vpop.f32.mrf.mxu0
      %v733 = vadd.f32 %v719, %v732
      %734 = vdwg.mxu0
      %735 = vmatpush.bf16.msra.mxu0 %v608
      %736 = vmatpush.bf16.msra.mxu0 %v604
      %737 = vmatpush.bf16.msra.mxu0 %v600
      %738 = vmatpush.bf16.msra.mxu0 %v596
      %739 = vmatpush.bf16.msra.mxu0 %v592
      %740 = vmatpush.bf16.msra.mxu0 %v588
      %741 = vmatpush.bf16.msra.mxu0 %v584
      %742 = vmatpush.bf16.msra.mxu0 %v580
      %743 = vmatmul.bf16.gmra.mxu0 %v383
      %v744 = vpop.f32.mrf.mxu0
      %v745 = vadd.f32 %v370, %v744
      %v746 = vpop.f32.mrf.mxu0
      %v747 = vadd.f32 %v375, %v746
      %748 = vdwg.mxu0
      %749 = vmatpush.bf16.msra.mxu0 %v640
      %750 = vmatpush.bf16.msra.mxu0 %v636
      %751 = vmatpush.bf16.msra.mxu0 %v632
      %752 = vmatpush.bf16.msra.mxu0 %v628
      %753 = vmatpush.bf16.msra.mxu0 %v624
      %754 = vmatpush.bf16.msra.mxu0 %v620
      %755 = vmatpush.bf16.msra.mxu0 %v616
      %756 = vmatpush.bf16.msra.mxu0 %v612
      %757 = vmatmul.bf16.gmra.mxu0 %v384
      %v758 = vpop.f32.mrf.mxu0
      %v759 = vadd.f32 %v745, %v758
      %v760 = vpop.f32.mrf.mxu0
      %v761 = vadd.f32 %v747, %v760
      %762 = vdwg.mxu0
      %763 = vmatpush.bf16.msra.mxu0 %v609
      %764 = vmatpush.bf16.msra.mxu0 %v605
      %765 = vmatpush.bf16.msra.mxu0 %v601
      %766 = vmatpush.bf16.msra.mxu0 %v597
      %767 = vmatpush.bf16.msra.mxu0 %v593
      %768 = vmatpush.bf16.msra.mxu0 %v589
      %769 = vmatpush.bf16.msra.mxu0 %v585
      %770 = vmatpush.bf16.msra.mxu0 %v581
      %771 = vmatmul.bf16.gmra.mxu0 %v383
      %v772 = vpop.f32.mrf.mxu0
      %v773 = vadd.f32 %v370, %v772
      %v774 = vpop.f32.mrf.mxu0
      %v775 = vadd.f32 %v375, %v774
      %776 = vdwg.mxu0
      %777 = vmatpush.bf16.msra.mxu0 %v641
      %778 = vmatpush.bf16.msra.mxu0 %v637
      %779 = vmatpush.bf16.msra.mxu0 %v633
      %780 = vmatpush.bf16.msra.mxu0 %v629
      %781 = vmatpush.bf16.msra.mxu0 %v625
      %782 = vmatpush.bf16.msra.mxu0 %v621
      %783 = vmatpush.bf16.msra.mxu0 %v617
      %784 = vmatpush.bf16.msra.mxu0 %v613
      %785 = vmatmul.bf16.gmra.mxu0 %v384
      %v786 = vpop.f32.mrf.mxu0
      %v787 = vadd.f32 %v773, %v786
      %v788 = vpop.f32.mrf.mxu0
      %v789 = vadd.f32 %v775, %v788
      %790 = vdwg.mxu0
      %791 = vmatpush.bf16.msra.mxu0 %v610
      %792 = vmatpush.bf16.msra.mxu0 %v606
      %793 = vmatpush.bf16.msra.mxu0 %v602
      %794 = vmatpush.bf16.msra.mxu0 %v598
      %795 = vmatpush.bf16.msra.mxu0 %v594
      %796 = vmatpush.bf16.msra.mxu0 %v590
      %797 = vmatpush.bf16.msra.mxu0 %v586
      %798 = vmatpush.bf16.msra.mxu0 %v582
      %799 = vmatmul.bf16.gmra.mxu0 %v383
      %v800 = vpop.f32.mrf.mxu0
      %v801 = vadd.f32 %v370, %v800
      %v802 = vpop.f32.mrf.mxu0
      %v803 = vadd.f32 %v375, %v802
      %804 = vdwg.mxu0
      %805 = vmatpush.bf16.msra.mxu0 %v642
      %806 = vmatpush.bf16.msra.mxu0 %v638
      %807 = vmatpush.bf16.msra.mxu0 %v634
      %808 = vmatpush.bf16.msra.mxu0 %v630
      %809 = vmatpush.bf16.msra.mxu0 %v626
      %810 = vmatpush.bf16.msra.mxu0 %v622
      %811 = vmatpush.bf16.msra.mxu0 %v618
      %812 = vmatpush.bf16.msra.mxu0 %v614
      %813 = vmatmul.bf16.gmra.mxu0 %v384
      %v814 = vpop.f32.mrf.mxu0
      %v815 = vadd.f32 %v801, %v814
      %v816 = vpop.f32.mrf.mxu0
      %v817 = vadd.f32 %v803, %v816
      %818 = vdwg.mxu0
      %v819 = vld [vmem:[%s284] sm:$0xff]
      %v820 = vld [vmem:[%s284 + $0x8] sm:$0xff]
      %v821 = vld [vmem:[%s290] sm:$0xff]
      %v822 = vld [vmem:[%s290 + $0x8] sm:$0xff]
      %v823 = vadd.f32 %v731, %v759
      %v824 = vadd.f32 %v823, %v787
      %v825 = vadd.f32 %v824, %v815
      %826 = vadd.xlane.f32.xlu0 %v825
      %v827 = vpop.xlane.xlu0 %826
      %v828 = vadd.f32 %v733, %v761
      %v829 = vadd.f32 %v828, %v789
      %v830 = vadd.f32 %v829, %v817
      %831 = vadd.xlane.f32.xlu0 %v830
      %v832 = vpop.xlane.xlu0 %831
      %v833 = vmul.f32 %v731, %v731
      %v834 = vmul.f32 %v759, %v759
      %v835 = vmul.f32 %v787, %v787
      %v836 = vmul.f32 %v815, %v815
      %v837 = vmul.f32 %v733, %v733
      %v838 = vmul.f32 %v761, %v761
      %v839 = vmul.f32 %v789, %v789
      %v840 = vmul.f32 %v817, %v817
      %v841 = vadd.f32 %v833, %v834
      %v842 = vadd.f32 %v841, %v835
      %v843 = vadd.f32 %v842, %v836
      %844 = vadd.xlane.f32.xlu0 %v843
      %v845 = vpop.xlane.xlu0 %844
      %v846 = vadd.f32 %v837, %v838
      %v847 = vadd.f32 %v846, %v839
      %v848 = vadd.f32 %v847, %v840
      %849 = vadd.xlane.f32.xlu0 %v848
      %v850 = vpop.xlane.xlu0 %849
      %v851 = vmul.f32 %v827, 0.001953125
      %v852 = vmul.f32 %v832, 0.001953125
      %v853 = vmul.f32 %v845, 0.001953125
      %v854 = vmul.f32 %v850, 0.001953125
      %v855 = vmul.f32 %v851, %v851
      %v856 = vmul.f32 %v852, %v852
      %v857 = vsub.f32 %v853, %v855
      %v858 = vsub.f32 %v854, %v856
      %v859 = vadd.f32 %v857, 1e-05
      %v860 = vadd.f32 %v858, 1e-05
      %v861 = vrsqrt.pop %v859
      %v862 = vmul.f32 %v861, %v859
      %v863 = vmul.f32 %v862, %v861
      %v864 = vmul.f32 0.5, %v863
      %v865 = vsub.f32 1.5, %v864
      %v866 = vmul.f32 %v861, %v865
      %vm867 = vweird.f32 %v859
      %vm868 = vweird.f32 %v861
      %vm869 = vmor %vm867, %vm868
      %v870 = vsel %vm869, %v861, %v866
      %v871 = vrsqrt.pop %v860
      %v872 = vmul.f32 %v871, %v860
      %v873 = vmul.f32 %v872, %v871
      %v874 = vmul.f32 0.5, %v873
      %v875 = vsub.f32 1.5, %v874
      %v876 = vmul.f32 %v871, %v875
      %vm877 = vweird.f32 %v860
      %vm878 = vweird.f32 %v871
      %vm879 = vmor %vm877, %vm878
      %v880 = vsel %vm879, %v871, %v876
      %v881 = vmul.f32 %v870, %v819
      %v882 = vmul.f32 %v880, %v820
      %v883 = vsub.f32 %v731, %v851
      %v884 = vsub.f32 %v759, %v851
      %v885 = vsub.f32 %v787, %v851
      %v886 = vsub.f32 %v815, %v851
      %v887 = vsub.f32 %v733, %v852
      %v888 = vsub.f32 %v761, %v852
      %v889 = vsub.f32 %v789, %v852
      %v890 = vsub.f32 %v817, %v852
      %892 = vset.pattern.permute.xlu0 0
      %893 = vperm.xlu0 %892, %v881
      %v894 = vpop.permute.xlu0 %893
      %897 = vset.pattern.permute.xlu0 0
      %898 = vperm.xlu0 %897, %v882
      %v899 = vpop.permute.xlu0 %898
      %v901 = vmul.f32 %v883, %v894
      %v902 = vmul.f32 %v884, %v894
      %v903 = vmul.f32 %v885, %v894
      %v904 = vmul.f32 %v886, %v894
      %v905 = vmul.f32 %v887, %v899
      %v906 = vmul.f32 %v888, %v899
      %v907 = vmul.f32 %v889, %v899
      %v908 = vmul.f32 %v890, %v899
      %910 = vset.pattern.permute.xlu0 0
      %911 = vperm.xlu0 %910, %v821
      %v912 = vpop.permute.xlu0 %911
      %915 = vset.pattern.permute.xlu0 0
      %916 = vperm.xlu0 %915, %v822
      %v917 = vpop.permute.xlu0 %916
      %v919 = vadd.f32 %v901, %v912
      %v920 = vadd.f32 %v902, %v912
      %v921 = vadd.f32 %v903, %v912
      %v922 = vadd.f32 %v904, %v912
      %v923 = vadd.f32 %v905, %v917
      %v924 = vadd.f32 %v906, %v917
      %v925 = vadd.f32 %v907, %v917
      %v926 = vadd.f32 %v908, %v917
      %v927 = vmul.f32 %v919, 0.2
      %v928 = vmul.f32 %v920, 0.2
      %v929 = vmul.f32 %v921, 0.2
      %v930 = vmul.f32 %v922, 0.2
      %v931 = vmul.f32 %v923, 0.2
      %v932 = vmul.f32 %v924, 0.2
      %v933 = vmul.f32 %v925, 0.2
      %v934 = vmul.f32 %v926, 0.2
      %v935 = vmax.f32 %v919, %v927
      %v936 = vmax.f32 %v920, %v928
      %v937 = vmax.f32 %v921, %v929
      %v938 = vmax.f32 %v922, %v930
      %v939 = vmax.f32 %v923, %v931
      %v940 = vmax.f32 %v924, %v932
      %v941 = vmax.f32 %v925, %v933
      %v942 = vmax.f32 %v926, %v934
      %v943 = vpack.c.bf16 %v936, %v935
      %v944 = vpack.c.bf16 %v938, %v937
      %v945 = vpack.c.bf16 %v940, %v939
      %v946 = vpack.c.bf16 %v942, %v941
      %947 = vst [vmem:[%s297] sm:$0xff] %v943
      %948 = vst [vmem:[%s297 + $0x8] sm:$0xff] %v944
      %949 = vst [vmem:[%s297 + $0x10] sm:$0xff] %v945
      %950 = vst [vmem:[%s297 + $0x18] sm:$0xff] %v946
      %s951 = smul.u32 2, %s16
      %p952 = scmp.lt.s32.totalorder %s951, 3
      %s953 = scalar_select %p952, %s951, 3
      %s954 = smul.addr %s953, 4
      %s955 = smul.addr %s954, 4
      %s956 = scalar_lea.vmem %s5, %s955
      // Predicated region
      $region41: #{discriminator_forward.7} parent=39 // pred_check
        %p957 = pneg %p159
      $region42: #{discriminator_forward.7} parent=39 // pred_check_branch
        %959 = sbr.rel (%p957) target = $region44
      $region43: #{discriminator_forward.7} parent=39 // pred_region
        %s960 = smul.u32 2, %s16
      $region44: #{discriminator_forward.7} parent=39 // pred_fallthru
        _
    $region40: #{discriminator_forward.7} parent=5 // pred_fallthru
      _
    %p961 = scmp.le.s32.totalorder 2, %s11
    // Predicated region
    $region45: #{discriminator_forward.7} parent=5 // pred_check
      %p962 = pneg %p961
    $region46: #{discriminator_forward.7} parent=5 // pred_check_branch
      %964 = sbr.rel (%p962) target = $region48
    $region47: #{discriminator_forward.7} parent=5 // pred_region
      %s965 = ssub.s32 %s11, 2
      // Predicated region
      $region49: #{discriminator_forward.7} parent=47 // pred_check
        %p966 = pneg %p165
      $region50: #{discriminator_forward.7} parent=47 // pred_check_branch
        %968 = sbr.rel (%p966) target = $region52
      $region51: #{discriminator_forward.7} parent=47 // pred_region
        %s969 = smul.u32 2, %s17
        %p970 = scmp.lt.s32.totalorder %s969, 3
        %s971 = scalar_select %p970, %s969, 3
        %s972 = smul.addr %s971, 4
        %s973 = smul.addr %s972, 4
        %s974 = scalar_lea.vmem %s5, %s973
      $region52: #{discriminator_forward.7} parent=47 // pred_fallthru
        _
    $region48: #{discriminator_forward.7} parent=5 // pred_fallthru
      _
  $region6: #{discriminator_forward.7} parent=0 // loop_footer
    %s15 = sadd.s32 1, %s11
  $region7: #{discriminator_forward.7} parent=0 // loop_footer_branch
    %10 = sbr.rel target = $region3
  $region8: #{discriminator_forward.7} parent=0 // loop_exit
    _

// kernel: discriminator_forward.8
$region0: #{discriminator_forward.8}
  #allocation0 [shape = 'u32[]', space=smem, size = 0x4, offset = 0x4, fixed_abs, tag = 'smem constant byte address 0x4 - core index']
  #allocation1 [shape = 'u32[72,128]{1,0:T(1,128)}', space=vmem, size = 0x9000, scoped, tag = 'internal scratch']
  %s0 = inlined_call_operand.vmem [shape: bf16[64,512], index: 0, kind: input, shape index: {}]
  %s1 = inlined_call_operand.vmem [shape: bf16[512,128], index: 1, kind: input, shape index: {}]
  %s2 = inlined_call_operand.vmem [shape: f32[64,1], index: 2, kind: input, shape index: {}]
  %s3 = inlined_call_operand.vmem [shape: f32[64,1], index: 3, kind: input, shape index: {}]
  %s4 = inlined_call_operand.vmem [shape: f32[64,1], index: 4, kind: input, shape index: {}]
  %s5 = inlined_call_operand.vmem [shape: bf16[64,128], index: 5, kind: output, shape index: {}]
  %s6 = sld [smem:[#allocation0]]
  $region53: #{discriminator_forward.8} parent=0
    _
  %s8 = ssub.s32 1, %s6
  %s9 = scalar_select 0, %s8, %s6
  loop: start=0, step=1, limit=4
  $region2: #{discriminator_forward.8} parent=0 // loop_pre_header
    _
  $region3: #{discriminator_forward.8} parent=0 // loop_header
    %s11 = sphi 0, %s15
    %p12 = scmp.ge.s32.totalorder %s11, 4
    %s21 = sphi 0, %s23
    %s24 = sphi 0, %s21
    %s25 = sphi 0, %s24
    %s41 = sphi 0, %s25
    %s45 = sphi 0, %s45
    %s47 = sphi 0, %s45
    %s48 = sphi 0, %s47
    %s62 = sphi 0, %s48
    %s68 = sphi 0, %s70
    %s71 = sphi 0, %s68
    %s72 = sphi 0, %s71
    %s88 = sphi 0, %s72
    %s94 = sphi 0, %s96
    %s97 = sphi 0, %s94
    %s98 = sphi 0, %s97
    %s114 = sphi 0, %s98
    %s120 = sphi 0, %s122
    %s123 = sphi 0, %s120
    %s124 = sphi 0, %s123
    %s140 = sphi 0, %s124
    %s146 = sphi 0, %s148
    %s149 = sphi 0, %s146
    %s150 = sphi 0, %s149
    %s166 = sphi 0, %s150
  $region4: #{discriminator_forward.8} parent=0 // loop_header_branch
    %14 = sbr.rel (%p12) target = $region8
  $region5: #{discriminator_forward.8} parent=0 // loop_body
    %s16 = ssub.s32 %s11, 1
    %s17 = ssub.s32 %s11, 2
    %s18 = sadd.s32 %s11, 1
    %s19 = ssub.s32 %s11, %s18
    %p20 = scmp.eq.s32.totalorder %s19, 0
    %s22 = sadd.s32 %s21, 1
    %s23 = scalar_select %p20, %s21, %s22
    %p26 = pneg %p20
    %p27 = scmp.eq.s32.totalorder %s11, 1
    %p28 = por %p26, %p27
    %p29 = scmp.ne.s32.totalorder %s21, %s24
    %p30 = scmp.eq.s32.totalorder %s11, 0
    %p31 = por %p29, %p30
    %p32 = scmp.ne.s32.totalorder %s21, %s24
    %p33 = scmp.eq.s32.totalorder %s16, 1
    %p34 = por %p32, %p33
    %p35 = scmp.ne.s32.totalorder %s24, %s25
    %p36 = scmp.eq.s32.totalorder %s16, 0
    %p37 = por %p35, %p36
    %p38 = scmp.ne.s32.totalorder %s24, %s25
    %p39 = scmp.eq.s32.totalorder %s17, 1
    %p40 = por %p38, %p39
    %p42 = scmp.ne.s32.totalorder %s25, %s41
    %p43 = scmp.eq.s32.totalorder %s17, 0
    %p44 = por %p42, %p43
    %s46 = sadd.s32 %s45, 1
    %p49 = scmp.eq.s32.totalorder %s11, 1
    %p50 = scmp.ne.s32.totalorder %s45, %s47
    %p51 = scmp.eq.s32.totalorder %s11, 0
    %p52 = por %p50, %p51
    %p53 = scmp.ne.s32.totalorder %s45, %s47
    %p54 = scmp.eq.s32.totalorder %s16, 1
    %p55 = por %p53, %p54
    %p56 = scmp.ne.s32.totalorder %s47, %s48
    %p57 = scmp.eq.s32.totalorder %s16, 0
    %p58 = por %p56, %p57
    %p59 = scmp.ne.s32.totalorder %s47, %s48
    %p60 = scmp.eq.s32.totalorder %s17, 1
    %p61 = por %p59, %p60
    %p63 = scmp.ne.s32.totalorder %s48, %s62
    %p64 = scmp.eq.s32.totalorder %s17, 0
    %p65 = por %p63, %p64
    %s66 = ssub.s32 %s11, %s18
    %p67 = scmp.eq.s32.totalorder %s66, 0
    %s69 = sadd.s32 %s68, 1
    %s70 = scalar_select %p67, %s68, %s69
    %p73 = pneg %p67
    %p74 = scmp.eq.s32.totalorder %s11, 1
    %p75 = por %p73, %p74
    %p76 = scmp.ne.s32.totalorder %s68, %s71
    %p77 = scmp.eq.s32.totalorder %s11, 0
    %p78 = por %p76, %p77
    %p79 = scmp.ne.s32.totalorder %s68, %s71
    %p80 = scmp.eq.s32.totalorder %s16, 1
    %p81 = por %p79, %p80
    %p82 = scmp.ne.s32.totalorder %s71, %s72
    %p83 = scmp.eq.s32.totalorder %s16, 0
    %p84 = por %p82, %p83
    %p85 = scmp.ne.s32.totalorder %s71, %s72
    %p86 = scmp.eq.s32.totalorder %s17, 1
    %p87 = por %p85, %p86
    %p89 = scmp.ne.s32.totalorder %s72, %s88
    %p90 = scmp.eq.s32.totalorder %s17, 0
    %p91 = por %p89, %p90
    %s92 = ssub.s32 %s11, %s18
    %p93 = scmp.eq.s32.totalorder %s92, 0
    %s95 = sadd.s32 %s94, 1
    %s96 = scalar_select %p93, %s94, %s95
    %p99 = pneg %p93
    %p100 = scmp.eq.s32.totalorder %s11, 1
    %p101 = por %p99, %p100
    %p102 = scmp.ne.s32.totalorder %s94, %s97
    %p103 = scmp.eq.s32.totalorder %s11, 0
    %p104 = por %p102, %p103
    %p105 = scmp.ne.s32.totalorder %s94, %s97
    %p106 = scmp.eq.s32.totalorder %s16, 1
    %p107 = por %p105, %p106
    %p108 = scmp.ne.s32.totalorder %s97, %s98
    %p109 = scmp.eq.s32.totalorder %s16, 0
    %p110 = por %p108, %p109
    %p111 = scmp.ne.s32.totalorder %s97, %s98
    %p112 = scmp.eq.s32.totalorder %s17, 1
    %p113 = por %p111, %p112
    %p115 = scmp.ne.s32.totalorder %s98, %s114
    %p116 = scmp.eq.s32.totalorder %s17, 0
    %p117 = por %p115, %p116
    %s118 = ssub.s32 %s11, %s18
    %p119 = scmp.eq.s32.totalorder %s118, 0
    %s121 = sadd.s32 %s120, 1
    %s122 = scalar_select %p119, %s120, %s121
    %p125 = pneg %p119
    %p126 = scmp.eq.s32.totalorder %s11, 1
    %p127 = por %p125, %p126
    %p128 = scmp.ne.s32.totalorder %s120, %s123
    %p129 = scmp.eq.s32.totalorder %s11, 0
    %p130 = por %p128, %p129
    %p131 = scmp.ne.s32.totalorder %s120, %s123
    %p132 = scmp.eq.s32.totalorder %s16, 1
    %p133 = por %p131, %p132
    %p134 = scmp.ne.s32.totalorder %s123, %s124
    %p135 = scmp.eq.s32.totalorder %s16, 0
    %p136 = por %p134, %p135
    %p137 = scmp.ne.s32.totalorder %s123, %s124
    %p138 = scmp.eq.s32.totalorder %s17, 1
    %p139 = por %p137, %p138
    %p141 = scmp.ne.s32.totalorder %s124, %s140
    %p142 = scmp.eq.s32.totalorder %s17, 0
    %p143 = por %p141, %p142
    %s144 = ssub.s32 %s11, %s18
    %p145 = scmp.eq.s32.totalorder %s144, 0
    %s147 = sadd.s32 %s146, 1
    %s148 = scalar_select %p145, %s146, %s147
    %p151 = pneg %p145
    %p152 = scmp.eq.s32.totalorder %s11, 1
    %p153 = por %p151, %p152
    %p154 = scmp.ne.s32.totalorder %s146, %s149
    %p155 = scmp.eq.s32.totalorder %s11, 0
    %p156 = por %p154, %p155
    %p157 = scmp.ne.s32.totalorder %s146, %s149
    %p158 = scmp.eq.s32.totalorder %s16, 1
    %p159 = por %p157, %p158
    %p160 = scmp.ne.s32.totalorder %s149, %s150
    %p161 = scmp.eq.s32.totalorder %s16, 0
    %p162 = por %p160, %p161
    %p163 = scmp.ne.s32.totalorder %s149, %s150
    %p164 = scmp.eq.s32.totalorder %s17, 1
    %p165 = por %p163, %p164
    %p167 = scmp.ne.s32.totalorder %s150, %s166
    %p168 = scmp.eq.s32.totalorder %s17, 0
    %p169 = por %p167, %p168
    %p170 = scmp.le.s32.totalorder 1, %s11
    %p171 = scmp.lt.s32.totalorder %s11, 3
    %p172 = pnand %p170, %p171
    %p173 = pneg %p172
    // Predicated region
    $region9: #{discriminator_forward.8} parent=5 // pred_check
      _
    $region10: #{discriminator_forward.8} parent=5 // pred_check_branch
      %175 = sbr.rel (%p172) target = $region12
    $region11: #{discriminator_forward.8} parent=5 // pred_region
      %s176 = ssub.s32 %s11, 1
      // Predicated region
      $region13: #{discriminator_forward.8} parent=11 // pred_check
        %p177 = pneg %p58
      $region14: #{discriminator_forward.8} parent=11 // pred_check_branch
        %179 = sbr.rel (%p177) target = $region16
      $region15: #{discriminator_forward.8} parent=11 // pred_region
        _
      $region16: #{discriminator_forward.8} parent=11 // pred_fallthru
        _
    $region12: #{discriminator_forward.8} parent=5 // pred_fallthru
      _
    %p180 = scmp.lt.s32.totalorder %s11, 2
    // Predicated region
    $region17: #{discriminator_forward.8} parent=5 // pred_check
      %p181 = pneg %p180
    $region18: #{discriminator_forward.8} parent=5 // pred_check_branch
      %183 = sbr.rel (%p181) target = $region20
    $region19: #{discriminator_forward.8} parent=5 // pred_region
      // Predicated region
      $region21: #{discriminator_forward.8} parent=19 // pred_check
        %p184 = pneg %p31
      $region22: #{discriminator_forward.8} parent=19 // pred_check_branch
        %186 = sbr.rel (%p184) target = $region24
      $region23: #{discriminator_forward.8} parent=19 // pred_region
        %s187 = smul.u32 4, %s11
        %p188 = scmp.lt.s32.totalorder %s187, 7
        %s189 = scalar_select %p188, %s187, 7
        %s190 = smul.addr %s189, 4
        %s191 = smul.addr %s190, 4
        %s192 = scalar_lea.vmem %s0, %s191
        %s193 = smul.u32 4, %s11
      $region24: #{discriminator_forward.8} parent=19 // pred_fallthru
        _
      // Predicated region
      $region25: #{discriminator_forward.8} parent=19 // pred_check
        %p194 = pneg %p78
      $region26: #{discriminator_forward.8} parent=19 // pred_check_branch
        %196 = sbr.rel (%p194) target = $region28
      $region27: #{discriminator_forward.8} parent=19 // pred_region
        %s197 = smul.u32 4, %s11
        %p198 = scmp.lt.s32.totalorder %s197, 7
        %s199 = scalar_select %p198, %s197, 7
        %s200 = smul.addr %s199, 8
        %s201 = scalar_lea.vmem %s2, %s200
        %s202 = smul.u32 4, %s11
      $region28: #{discriminator_forward.8} parent=19 // pred_fallthru
        _
      // Predicated region
      $region29: #{discriminator_forward.8} parent=19 // pred_check
        %p203 = pneg %p104
      $region30: #{discriminator_forward.8} parent=19 // pred_check_branch
        %205 = sbr.rel (%p203) target = $region32
      $region31: #{discriminator_forward.8} parent=19 // pred_region
        %s206 = smul.u32 4, %s11
        %p207 = scmp.lt.s32.totalorder %s206, 7
        %s208 = scalar_select %p207, %s206, 7
        %s209 = smul.addr %s208, 8
        %s210 = scalar_lea.vmem %s3, %s209
        %s211 = smul.u32 4, %s11
      $region32: #{discriminator_forward.8} parent=19 // pred_fallthru
        _
      // Predicated region
      $region33: #{discriminator_forward.8} parent=19 // pred_check
        %p212 = pneg %p130
      $region34: #{discriminator_forward.8} parent=19 // pred_check_branch
        %214 = sbr.rel (%p212) target = $region36
      $region35: #{discriminator_forward.8} parent=19 // pred_region
        %s215 = smul.u32 4, %s11
        %p216 = scmp.lt.s32.totalorder %s215, 7
        %s217 = scalar_select %p216, %s215, 7
        %s218 = smul.addr %s217, 8
        %s219 = scalar_lea.vmem %s4, %s218
        %s220 = smul.u32 4, %s11
      $region36: #{discriminator_forward.8} parent=19 // pred_fallthru
        _
    $region20: #{discriminator_forward.8} parent=5 // pred_fallthru
      _
    %p221 = scmp.le.s32.totalorder 1, %s11
    %p222 = scmp.lt.s32.totalorder %s11, 3
    %p223 = pnand %p221, %p222
    %p224 = pneg %p223
    // Predicated region
    $region37: #{discriminator_forward.8} parent=5 // pred_check
      _
    $region38: #{discriminator_forward.8} parent=5 // pred_check_branch
      %226 = sbr.rel (%p223) target = $region40
    $region39: #{discriminator_forward.8} parent=5 // pred_region
      %s227 = ssub.s32 %s11, 1
      %s228 = smul.u32 4, %s16
      %p229 = scmp.lt.s32.totalorder %s228, 7
      %s230 = scalar_select %p229, %s228, 7
      %s231 = smul.addr %s230, 4
      %s232 = smul.addr %s231, 4
      %s233 = scalar_lea.vmem %s0, %s232
      %p234 = pneg %p37
      %p235 = pneg %p34
      %p236 = pneg %p58
      %p237 = pneg %p55
      %s238 = smul.u32 4, %s16
      %p239 = scmp.lt.s32.totalorder %s238, 7
      %s240 = scalar_select %p239, %s238, 7
      %s241 = smul.addr %s240, 8
      %s242 = scalar_lea.vmem %s2, %s241
      %p243 = pneg %p84
      %p244 = pneg %p81
      %s245 = smul.u32 4, %s16
      %p246 = scmp.lt.s32.totalorder %s245, 7
      %s247 = scalar_select %p246, %s245, 7
      %s248 = smul.addr %s247, 8
      %s249 = scalar_lea.vmem %s3, %s248
      %p250 = pneg %p110
      %p251 = pneg %p107
      %s252 = smul.u32 4, %s16
      %p253 = scmp.lt.s32.totalorder %s252, 7
      %s254 = scalar_select %p253, %s252, 7
      %s255 = smul.addr %s254, 8
      %s256 = scalar_lea.vmem %s4, %s255
      %p257 = pneg %p136
      %p258 = pneg %p133
      %p259 = pneg %p162
      %p260 = pneg %p159
      %s261 = smul.u32 4, %s16
      %p262 = scmp.lt.s32.totalorder %s261, 7
      %s263 = scalar_select %p262, %s261, 7
      %s264 = smul.addr %s263, 4
      %s265 = scalar_lea.vmem %s5, %s264
      %s266 = smul.u32 4, %s16
      %p267 = scmp.lt.s32.totalorder %s266, 7
      %s268 = scalar_select %p267, %s266, 7
      %s269 = smul.addr %s268, 4
      %s270 = smul.addr %s269, 4
      %s271 = scalar_lea.vmem %s0, %s270
      %s272 = smul.u32 4, %s16
      %s273 = smul.u32 4, %s16
      %p274 = scmp.lt.s32.totalorder %s273, 7
      %s275 = scalar_select %p274, %s273, 7
      %s276 = smul.addr %s275, 8
      %s277 = scalar_lea.vmem %s2, %s276
      %s278 = smul.u32 4, %s16
      %s279 = smul.u32 4, %s16
      %p280 = scmp.lt.s32.totalorder %s279, 7
      %s281 = scalar_select %p280, %s279, 7
      %s282 = smul.addr %s281, 8
      %s283 = scalar_lea.vmem %s3, %s282
      %s284 = smul.u32 4, %s16
      %s285 = smul.u32 4, %s16
      %p286 = scmp.lt.s32.totalorder %s285, 7
      %s287 = scalar_select %p286, %s285, 7
      %s288 = smul.addr %s287, 8
      %s289 = scalar_lea.vmem %s4, %s288
      %s290 = smul.u32 4, %s16
      %s291 = smul.u32 4, %s16
      %p292 = scmp.lt.s32.totalorder %s291, 7
      %s293 = scalar_select %p292, %s291, 7
      %s294 = smul.addr %s293, 4
      %s295 = scalar_lea.vmem %s5, %s294
      %s296 = smul.u32 4, %s16
      %v297 = vld [vmem:[%s271] sm:$0xff]
      %v298 = vld [vmem:[%s271 + $0x8] sm:$0xff]
      %v299 = vld [vmem:[%s271 + $0x10] sm:$0xff]
      %v300 = vld [vmem:[%s271 + $0x18] sm:$0xff]
      %v301 = vld [vmem:[%s271 + $0x20] sm:$0xff]
      %v302 = vld [vmem:[%s271 + $0x28] sm:$0xff]
      %v303 = vld [vmem:[%s271 + $0x30] sm:$0xff]
      %v304 = vld [vmem:[%s271 + $0x38] sm:$0xff]
      %v305 = vld [vmem:[%s1] sm:$0xf]
      %v306 = vld [vmem:[%s1 + $0x4] sm:$0xf]
      %v307 = vld [vmem:[%s1 + $0x8] sm:$0xf]
      %v308 = vld [vmem:[%s1 + $0xc] sm:$0xf]
      %v309 = vld [vmem:[%s1 + $0x10] sm:$0xf]
      %v310 = vld [vmem:[%s1 + $0x14] sm:$0xf]
      %v311 = vld [vmem:[%s1 + $0x18] sm:$0xf]
      %v312 = vld [vmem:[%s1 + $0x1c] sm:$0xf]
      %v313 = vld [vmem:[%s1 + $0x20] sm:$0xf]
      %v314 = vld [vmem:[%s1 + $0x24] sm:$0xf]
      %v315 = vld [vmem:[%s1 + $0x28] sm:$0xf]
      %v316 = vld [vmem:[%s1 + $0x2c] sm:$0xf]
      %v317 = vld [vmem:[%s1 + $0x30] sm:$0xf]
      %v318 = vld [vmem:[%s1 + $0x34] sm:$0xf]
      %v319 = vld [vmem:[%s1 + $0x38] sm:$0xf]
      %v320 = vld [vmem:[%s1 + $0x3c] sm:$0xf]
      %v321 = vld [vmem:[%s1 + $0x40] sm:$0xf]
      %v322 = vld [vmem:[%s1 + $0x44] sm:$0xf]
      %v323 = vld [vmem:[%s1 + $0x48] sm:$0xf]
      %v324 = vld [vmem:[%s1 + $0x4c] sm:$0xf]
      %v325 = vld [vmem:[%s1 + $0x50] sm:$0xf]
      %v326 = vld [vmem:[%s1 + $0x54] sm:$0xf]
      %v327 = vld [vmem:[%s1 + $0x58] sm:$0xf]
      %v328 = vld [vmem:[%s1 + $0x5c] sm:$0xf]
      %v329 = vld [vmem:[%s1 + $0x60] sm:$0xf]
      %v330 = vld [vmem:[%s1 + $0x64] sm:$0xf]
      %v331 = vld [vmem:[%s1 + $0x68] sm:$0xf]
      %v332 = vld [vmem:[%s1 + $0x6c] sm:$0xf]
      %v333 = vld [vmem:[%s1 + $0x70] sm:$0xf]
      %v334 = vld [vmem:[%s1 + $0x74] sm:$0xf]
      %v335 = vld [vmem:[%s1 + $0x78] sm:$0xf]
      %v336 = vld [vmem:[%s1 + $0x7c] sm:$0xf]
      %v337 = vld [vmem:[%s1 + $0x80] sm:$0xf]
      %v338 = vld [vmem:[%s1 + $0x84] sm:$0xf]
      %v339 = vld [vmem:[%s1 + $0x88] sm:$0xf]
      %v340 = vld [vmem:[%s1 + $0x8c] sm:$0xf]
      %v341 = vld [vmem:[%s1 + $0x90] sm:$0xf]
      %v342 = vld [vmem:[%s1 + $0x94] sm:$0xf]
      %v343 = vld [vmem:[%s1 + $0x98] sm:$0xf]
      %v344 = vld [vmem:[%s1 + $0x9c] sm:$0xf]
      %v345 = vld [vmem:[%s1 + $0xa0] sm:$0xf]
      %v346 = vld [vmem:[%s1 + $0xa4] sm:$0xf]
      %v347 = vld [vmem:[%s1 + $0xa8] sm:$0xf]
      %v348 = vld [vmem:[%s1 + $0xac] sm:$0xf]
      %v349 = vld [vmem:[%s1 + $0xb0] sm:$0xf]
      %v350 = vld [vmem:[%s1 + $0xb4] sm:$0xf]
      %v351 = vld [vmem:[%s1 + $0xb8] sm:$0xf]
      %v352 = vld [vmem:[%s1 + $0xbc] sm:$0xf]
      %v353 = vld [vmem:[%s1 + $0xc0] sm:$0xf]
      %v354 = vld [vmem:[%s1 + $0xc4] sm:$0xf]
      %v355 = vld [vmem:[%s1 + $0xc8] sm:$0xf]
      %v356 = vld [vmem:[%s1 + $0xcc] sm:$0xf]
      %v357 = vld [vmem:[%s1 + $0xd0] sm:$0xf]
      %v358 = vld [vmem:[%s1 + $0xd4] sm:$0xf]
      %v359 = vld [vmem:[%s1 + $0xd8] sm:$0xf]
      %v360 = vld [vmem:[%s1 + $0xdc] sm:$0xf]
      %v361 = vld [vmem:[%s1 + $0xe0] sm:$0xf]
      %v362 = vld [vmem:[%s1 + $0xe4] sm:$0xf]
      %v363 = vld [vmem:[%s1 + $0xe8] sm:$0xf]
      %v364 = vld [vmem:[%s1 + $0xec] sm:$0xf]
      %v365 = vld [vmem:[%s1 + $0xf0] sm:$0xf]
      %v366 = vld [vmem:[%s1 + $0xf4] sm:$0xf]
      %v367 = vld [vmem:[%s1 + $0xf8] sm:$0xf]
      %v368 = vld [vmem:[%s1 + $0xfc] sm:$0xf]
      %v369 = vld [vmem:[%s277] sm:$0xff]
      %v370 = vld [vmem:[%s277 + $0x8] sm:$0xff]
      %v371 = vld [vmem:[%s277 + $0x10] sm:$0xff]
      %v372 = vld [vmem:[%s277 + $0x18] sm:$0xff]
      %374 = vset.pattern.permute.xlu0 0
      %375 = vperm.xlu0 %374, %v369
      %v376 = vpop.permute.xlu0 %375
      %379 = vset.pattern.permute.xlu0 0
      %380 = vperm.xlu0 %379, %v370
      %v381 = vpop.permute.xlu0 %380
      %384 = vset.pattern.permute.xlu0 0
      %385 = vperm.xlu0 %384, %v371
      %v386 = vpop.permute.xlu0 %385
      %389 = vset.pattern.permute.xlu0 0
      %390 = vperm.xlu0 %389, %v372
      %v391 = vpop.permute.xlu0 %390
      %v401 = vunpack.c.l.b16 %v297
      %v402 = vunpack.c.h.b16 %v297
      %v403 = vunpack.c.l.b16 %v298
      %v404 = vunpack.c.h.b16 %v298
      %v405 = vunpack.c.l.b16 %v299
      %v406 = vunpack.c.h.b16 %v299
      %v407 = vunpack.c.l.b16 %v300
      %v408 = vunpack.c.h.b16 %v300
      %v409 = vunpack.c.l.b16 %v301
      %v410 = vunpack.c.h.b16 %v301
      %v411 = vunpack.c.l.b16 %v302
      %v412 = vunpack.c.h.b16 %v302
      %v413 = vunpack.c.l.b16 %v303
      %v414 = vunpack.c.h.b16 %v303
      %v415 = vunpack.c.l.b16 %v304
      %v416 = vunpack.c.h.b16 %v304
      %v417 = vpack.c.b16 %v405, %v401
      %v418 = vpack.c.b16 %v406, %v402
      %v419 = vpack.c.b16 %v407, %v403
      %v420 = vpack.c.b16 %v408, %v404
      %v421 = vpack.c.b16 %v413, %v409
      %v422 = vpack.c.b16 %v414, %v410
      %v423 = vpack.c.b16 %v415, %v411
      %v424 = vpack.c.b16 %v416, %v412
      %v497 = vunpack.c.l.b16 %v305
      %v498 = vunpack.c.l.b16 %v306
      %v499 = vunpack.c.l.b16 %v307
      %v500 = vunpack.c.l.b16 %v308
      %v501 = vunpack.c.l.b16 %v309
      %v502 = vunpack.c.l.b16 %v310
      %v503 = vunpack.c.l.b16 %v311
      %v504 = vunpack.c.l.b16 %v312
      %v505 = vunpack.c.l.b16 %v313
      %v506 = vunpack.c.l.b16 %v314
      %v507 = vunpack.c.l.b16 %v315
      %v508 = vunpack.c.l.b16 %v316
      %v509 = vunpack.c.l.b16 %v317
      %v510 = vunpack.c.l.b16 %v318
      %v511 = vunpack.c.l.b16 %v319
      %v512 = vunpack.c.l.b16 %v320
      %v513 = vunpack.c.l.b16 %v321
      %v514 = vunpack.c.l.b16 %v322
      %v515 = vunpack.c.l.b16 %v323
      %v516 = vunpack.c.l.b16 %v324
      %v517 = vunpack.c.l.b16 %v325
      %v518 = vunpack.c.l.b16 %v326
      %v519 = vunpack.c.l.b16 %v327
      %v520 = vunpack.c.l.b16 %v328
      %v521 = vunpack.c.l.b16 %v329
      %v522 = vunpack.c.l.b16 %v330
      %v523 = vunpack.c.l.b16 %v331
      %v524 = vunpack.c.l.b16 %v332
      %v525 = vunpack.c.l.b16 %v333
      %v526 = vunpack.c.l.b16 %v334
      %v527 = vunpack.c.l.b16 %v335
      %v528 = vunpack.c.l.b16 %v336
      %v529 = vunpack.c.l.b16 %v337
      %v530 = vunpack.c.l.b16 %v338
      %v531 = vunpack.c.l.b16 %v339
      %v532 = vunpack.c.l.b16 %v340
      %v533 = vunpack.c.l.b16 %v341
      %v534 = vunpack.c.l.b16 %v342
      %v535 = vunpack.c.l.b16 %v343
      %v536 = vunpack.c.l.b16 %v344
      %v537 = vunpack.c.l.b16 %v345
      %v538 = vunpack.c.l.b16 %v346
      %v539 = vunpack.c.l.b16 %v347
      %v540 = vunpack.c.l.b16 %v348
      %v541 = vunpack.c.l.b16 %v349
      %v542 = vunpack.c.l.b16 %v350
      %v543 = vunpack.c.l.b16 %v351
      %v544 = vunpack.c.l.b16 %v352
      %v545 = vunpack.c.l.b16 %v353
      %v546 = vunpack.c.l.b16 %v354
      %v547 = vunpack.c.l.b16 %v355
      %v548 = vunpack.c.l.b16 %v356
      %v549 = vunpack.c.l.b16 %v357
      %v550 = vunpack.c.l.b16 %v358
      %v551 = vunpack.c.l.b16 %v359
      %v552 = vunpack.c.l.b16 %v360
      %v553 = vunpack.c.l.b16 %v361
      %v554 = vunpack.c.l.b16 %v362
      %v555 = vunpack.c.l.b16 %v363
      %v556 = vunpack.c.l.b16 %v364
      %v557 = vunpack.c.l.b16 %v365
      %v558 = vunpack.c.l.b16 %v366
      %v559 = vunpack.c.l.b16 %v367
      %v560 = vunpack.c.l.b16 %v368
      %v561 = vpack.c.b16 %v498, %v497
      %v562 = vpack.c.b16 %v500, %v499
      %v563 = vpack.c.b16 %v502, %v501
      %v564 = vpack.c.b16 %v504, %v503
      %v565 = vpack.c.b16 %v506, %v505
      %v566 = vpack.c.b16 %v508, %v507
      %v567 = vpack.c.b16 %v510, %v509
      %v568 = vpack.c.b16 %v512, %v511
      %v569 = vpack.c.b16 %v514, %v513
      %v570 = vpack.c.b16 %v516, %v515
      %v571 = vpack.c.b16 %v518, %v517
      %v572 = vpack.c.b16 %v520, %v519
      %v573 = vpack.c.b16 %v522, %v521
      %v574 = vpack.c.b16 %v524, %v523
      %v575 = vpack.c.b16 %v526, %v525
      %v576 = vpack.c.b16 %v528, %v527
      %v577 = vpack.c.b16 %v530, %v529
      %v578 = vpack.c.b16 %v532, %v531
      %v579 = vpack.c.b16 %v534, %v533
      %v580 = vpack.c.b16 %v536, %v535
      %v581 = vpack.c.b16 %v538, %v537
      %v582 = vpack.c.b16 %v540, %v539
      %v583 = vpack.c.b16 %v542, %v541
      %v584 = vpack.c.b16 %v544, %v543
      %v585 = vpack.c.b16 %v546, %v545
      %v586 = vpack.c.b16 %v548, %v547
      %v587 = vpack.c.b16 %v550, %v549
      %v588 = vpack.c.b16 %v552, %v551
      %v589 = vpack.c.b16 %v554, %v553
      %v590 = vpack.c.b16 %v556, %v555
      %v591 = vpack.c.b16 %v558, %v557
      %v592 = vpack.c.b16 %v560, %v559
      %625 = vmatpush.bf16.msra.mxu0 %v568
      %626 = vmatpush.bf16.msra.mxu0 %v567
      %627 = vmatpush.bf16.msra.mxu0 %v566
      %628 = vmatpush.bf16.msra.mxu0 %v565
      %629 = vmatpush.bf16.msra.mxu0 %v564
      %630 = vmatpush.bf16.msra.mxu0 %v563
      %631 = vmatpush.bf16.msra.mxu0 %v562
      %632 = vmatpush.bf16.msra.mxu0 %v561
      %633 = vmatmul.bf16.gmra.mxu0 %v417
      %v634 = vpop.f32.mrf.mxu0
      %v635 = vadd.f32 %v376, %v634
      %v636 = vpop.f32.mrf.mxu0
      %v637 = vadd.f32 %v381, %v636
      %638 = vmatmul.bf16.gmra.mxu0 %v421
      %v639 = vpop.f32.mrf.mxu0
      %v640 = vadd.f32 %v386, %v639
      %v641 = vpop.f32.mrf.mxu0
      %v642 = vadd.f32 %v391, %v641
      %643 = vdwg.mxu0
      %644 = vmatpush.bf16.msra.mxu0 %v576
      %645 = vmatpush.bf16.msra.mxu0 %v575
      %646 = vmatpush.bf16.msra.mxu0 %v574
      %647 = vmatpush.bf16.msra.mxu0 %v573
      %648 = vmatpush.bf16.msra.mxu0 %v572
      %649 = vmatpush.bf16.msra.mxu0 %v571
      %650 = vmatpush.bf16.msra.mxu0 %v570
      %651 = vmatpush.bf16.msra.mxu0 %v569
      %652 = vmatmul.bf16.gmra.mxu0 %v418
      %v653 = vpop.f32.mrf.mxu0
      %v654 = vadd.f32 %v635, %v653
      %v655 = vpop.f32.mrf.mxu0
      %v656 = vadd.f32 %v637, %v655
      %657 = vmatmul.bf16.gmra.mxu0 %v422
      %v658 = vpop.f32.mrf.mxu0
      %v659 = vadd.f32 %v640, %v658
      %v660 = vpop.f32.mrf.mxu0
      %v661 = vadd.f32 %v642, %v660
      %662 = vdwg.mxu0
      %663 = vmatpush.bf16.msra.mxu0 %v584
      %664 = vmatpush.bf16.msra.mxu0 %v583
      %665 = vmatpush.bf16.msra.mxu0 %v582
      %666 = vmatpush.bf16.msra.mxu0 %v581
      %667 = vmatpush.bf16.msra.mxu0 %v580
      %668 = vmatpush.bf16.msra.mxu0 %v579
      %669 = vmatpush.bf16.msra.mxu0 %v578
      %670 = vmatpush.bf16.msra.mxu0 %v577
      %671 = vmatmul.bf16.gmra.mxu0 %v419
      %v672 = vpop.f32.mrf.mxu0
      %v673 = vadd.f32 %v654, %v672
      %v674 = vpop.f32.mrf.mxu0
      %v675 = vadd.f32 %v656, %v674
      %676 = vmatmul.bf16.gmra.mxu0 %v423
      %v677 = vpop.f32.mrf.mxu0
      %v678 = vadd.f32 %v659, %v677
      %v679 = vpop.f32.mrf.mxu0
      %v680 = vadd.f32 %v661, %v679
      %681 = vdwg.mxu0
      %682 = vmatpush.bf16.msra.mxu0 %v592
      %683 = vmatpush.bf16.msra.mxu0 %v591
      %684 = vmatpush.bf16.msra.mxu0 %v590
      %685 = vmatpush.bf16.msra.mxu0 %v589
      %686 = vmatpush.bf16.msra.mxu0 %v588
      %687 = vmatpush.bf16.msra.mxu0 %v587
      %688 = vmatpush.bf16.msra.mxu0 %v586
      %689 = vmatpush.bf16.msra.mxu0 %v585
      %690 = vmatmul.bf16.gmra.mxu0 %v420
      %v691 = vpop.f32.mrf.mxu0
      %v692 = vadd.f32 %v673, %v691
      %v693 = vpop.f32.mrf.mxu0
      %v694 = vadd.f32 %v675, %v693
      %695 = vmatmul.bf16.gmra.mxu0 %v424
      %v696 = vpop.f32.mrf.mxu0
      %v697 = vadd.f32 %v678, %v696
      %v698 = vpop.f32.mrf.mxu0
      %v699 = vadd.f32 %v680, %v698
      %700 = vdwg.mxu0
      %v701 = vld [vmem:[%s283] sm:$0xff]
      %v702 = vld [vmem:[%s283 + $0x8] sm:$0xff]
      %v703 = vld [vmem:[%s283 + $0x10] sm:$0xff]
      %v704 = vld [vmem:[%s283 + $0x18] sm:$0xff]
      %v705 = vld [vmem:[%s289] sm:$0xff]
      %v706 = vld [vmem:[%s289 + $0x8] sm:$0xff]
      %v707 = vld [vmem:[%s289 + $0x10] sm:$0xff]
      %v708 = vld [vmem:[%s289 + $0x18] sm:$0xff]
      %709 = vadd.xlane.f32.xlu0 %v692
      %v710 = vpop.xlane.xlu0 %709
      %711 = vadd.xlane.f32.xlu0 %v694
      %v712 = vpop.xlane.xlu0 %711
      %713 = vadd.xlane.f32.xlu0 %v697
      %v714 = vpop.xlane.xlu0 %713
      %715 = vadd.xlane.f32.xlu0 %v699
      %v716 = vpop.xlane.xlu0 %715
      %v717 = vmul.f32 %v692, %v692
      %v718 = vmul.f32 %v694, %v694
      %v719 = vmul.f32 %v697, %v697
      %v720 = vmul.f32 %v699, %v699
      %721 = vadd.xlane.f32.xlu0 %v717
      %v722 = vpop.xlane.xlu0 %721
      %723 = vadd.xlane.f32.xlu0 %v718
      %v724 = vpop.xlane.xlu0 %723
      %725 = vadd.xlane.f32.xlu0 %v719
      %v726 = vpop.xlane.xlu0 %725
      %727 = vadd.xlane.f32.xlu0 %v720
      %v728 = vpop.xlane.xlu0 %727
      %v729 = vmul.f32 %v710, 0.0078125
      %v730 = vmul.f32 %v712, 0.0078125
      %v731 = vmul.f32 %v714, 0.0078125
      %v732 = vmul.f32 %v716, 0.0078125
      %v733 = vmul.f32 %v722, 0.0078125
      %v734 = vmul.f32 %v724, 0.0078125
      %v735 = vmul.f32 %v726, 0.0078125
      %v736 = vmul.f32 %v728, 0.0078125
      %v737 = vmul.f32 %v729, %v729
      %v738 = vmul.f32 %v730, %v730
      %v739 = vmul.f32 %v731, %v731
      %v740 = vmul.f32 %v732, %v732
      %v741 = vsub.f32 %v733, %v737
      %v742 = vsub.f32 %v734, %v738
      %v743 = vsub.f32 %v735, %v739
      %v744 = vsub.f32 %v736, %v740
      %v745 = vadd.f32 %v741, 1e-05
      %v746 = vadd.f32 %v742, 1e-05
      %v747 = vadd.f32 %v743, 1e-05
      %v748 = vadd.f32 %v744, 1e-05
      %v749 = vrsqrt.pop %v745
      %v750 = vmul.f32 %v749, %v745
      %v751 = vmul.f32 %v750, %v749
      %v752 = vmul.f32 0.5, %v751
      %v753 = vsub.f32 1.5, %v752
      %v754 = vmul.f32 %v749, %v753
      %vm755 = vweird.f32 %v745
      %vm756 = vweird.f32 %v749
      %vm757 = vmor %vm755, %vm756
      %v758 = vsel %vm757, %v749, %v754
      %v759 = vrsqrt.pop %v746
      %v760 = vmul.f32 %v759, %v746
      %v761 = vmul.f32 %v760, %v759
      %v762 = vmul.f32 0.5, %v761
      %v763 = vsub.f32 1.5, %v762
      %v764 = vmul.f32 %v759, %v763
      %vm765 = vweird.f32 %v746
      %vm766 = vweird.f32 %v759
      %vm767 = vmor %vm765, %vm766
      %v768 = vsel %vm767, %v759, %v764
      %v769 = vrsqrt.pop %v747
      %v770 = vmul.f32 %v769, %v747
      %v771 = vmul.f32 %v770, %v769
      %v772 = vmul.f32 0.5, %v771
      %v773 = vsub.f32 1.5, %v772
      %v774 = vmul.f32 %v769, %v773
      %vm775 = vweird.f32 %v747
      %vm776 = vweird.f32 %v769
      %vm777 = vmor %vm775, %vm776
      %v778 = vsel %vm777, %v769, %v774
      %v779 = vrsqrt.pop %v748
      %v780 = vmul.f32 %v779, %v748
      %v781 = vmul.f32 %v780, %v779
      %v782 = vmul.f32 0.5, %v781
      %v783 = vsub.f32 1.5, %v782
      %v784 = vmul.f32 %v779, %v783
      %vm785 = vweird.f32 %v748
      %vm786 = vweird.f32 %v779
      %vm787 = vmor %vm785, %vm786
      %v788 = vsel %vm787, %v779, %v784
      %v789 = vmul.f32 %v758, %v701
      %v790 = vmul.f32 %v768, %v702
      %v791 = vmul.f32 %v778, %v703
      %v792 = vmul.f32 %v788, %v704
      %v793 = vsub.f32 %v692, %v729
      %v794 = vsub.f32 %v694, %v730
      %v795 = vsub.f32 %v697, %v731
      %v796 = vsub.f32 %v699, %v732
      %798 = vset.pattern.permute.xlu0 0
      %799 = vperm.xlu0 %798, %v789
      %v800 = vpop.permute.xlu0 %799
      %803 = vset.pattern.permute.xlu0 0
      %804 = vperm.xlu0 %803, %v790
      %v805 = vpop.permute.xlu0 %804
      %808 = vset.pattern.permute.xlu0 0
      %809 = vperm.xlu0 %808, %v791
      %v810 = vpop.permute.xlu0 %809
      %813 = vset.pattern.permute.xlu0 0
      %814 = vperm.xlu0 %813, %v792
      %v815 = vpop.permute.xlu0 %814
      %v817 = vmul.f32 %v793, %v800
      %v818 = vmul.f32 %v794, %v805
      %v819 = vmul.f32 %v795, %v810
      %v820 = vmul.f32 %v796, %v815
      %822 = vset.pattern.permute.xlu0 0
      %823 = vperm.xlu0 %822, %v705
      %v824 = vpop.permute.xlu0 %823
      %827 = vset.pattern.permute.xlu0 0
      %828 = vperm.xlu0 %827, %v706
      %v829 = vpop.permute.xlu0 %828
      %832 = vset.pattern.permute.xlu0 0
      %833 = vperm.xlu0 %832, %v707
      %v834 = vpop.permute.xlu0 %833
      %837 = vset.pattern.permute.xlu0 0
      %838 = vperm.xlu0 %837, %v708
      %v839 = vpop.permute.xlu0 %838
      %v841 = vadd.f32 %v817, %v824
      %v842 = vadd.f32 %v818, %v829
      %v843 = vadd.f32 %v819, %v834
      %v844 = vadd.f32 %v820, %v839
      %v845 = vmul.f32 %v841, 0.2
      %v846 = vmul.f32 %v842, 0.2
      %v847 = vmul.f32 %v843, 0.2
      %v848 = vmul.f32 %v844, 0.2
      %v849 = vmax.f32 %v841, %v845
      %v850 = vmax.f32 %v842, %v846
      %v851 = vmax.f32 %v843, %v847
      %v852 = vmax.f32 %v844, %v848
      %v853 = vpack.c.bf16 %v849, %v849
      %v854 = vpack.c.bf16 %v850, %v850
      %v855 = vpack.c.bf16 %v851, %v851
      %v856 = vpack.c.bf16 %v852, %v852
      %857 = vst [vmem:[%s295] sm:$0xf] %v853
      %858 = vst [vmem:[%s295 + $0x4] sm:$0xf] %v854
      %859 = vst [vmem:[%s295 + $0x8] sm:$0xf] %v855
      %860 = vst [vmem:[%s295 + $0xc] sm:$0xf] %v856
      %s861 = smul.u32 4, %s16
      %p862 = scmp.lt.s32.totalorder %s861, 7
      %s863 = scalar_select %p862, %s861, 7
      %s864 = smul.addr %s863, 4
      %s865 = scalar_lea.vmem %s5, %s864
      // Predicated region
      $region41: #{discriminator_forward.8} parent=39 // pred_check
        %p866 = pneg %p159
      $region42: #{discriminator_forward.8} parent=39 // pred_check_branch
        %868 = sbr.rel (%p866) target = $region44
      $region43: #{discriminator_forward.8} parent=39 // pred_region
        %s869 = smul.u32 4, %s16
      $region44: #{discriminator_forward.8} parent=39 // pred_fallthru
        _
    $region40: #{discriminator_forward.8} parent=5 // pred_fallthru
      _
    %p870 = scmp.le.s32.totalorder 2, %s11
    // Predicated region
    $region45: #{discriminator_forward.8} parent=5 // pred_check
      %p871 = pneg %p870
    $region46: #{discriminator_forward.8} parent=5 // pred_check_branch
      %873 = sbr.rel (%p871) target = $region48
    $region47: #{discriminator_forward.8} parent=5 // pred_region
      %s874 = ssub.s32 %s11, 2
      // Predicated region
      $region49: #{discriminator_forward.8} parent=47 // pred_check
        %p875 = pneg %p165
      $region50: #{discriminator_forward.8} parent=47 // pred_check_branch
        %877 = sbr.rel (%p875) target = $region52
      $region51: #{discriminator_forward.8} parent=47 // pred_region
        %s878 = smul.u32 4, %s17
        %p879 = scmp.lt.s32.totalorder %s878, 7
        %s880 = scalar_select %p879, %s878, 7
        %s881 = smul.addr %s880, 4
        %s882 = scalar_lea.vmem %s5, %s881
      $region52: #{discriminator_forward.8} parent=47 // pred_fallthru
        _
    $region48: #{discriminator_forward.8} parent=5 // pred_fallthru
      _
  $region6: #{discriminator_forward.8} parent=0 // loop_footer
    %s15 = sadd.s32 1, %s11
  $region7: #{discriminator_forward.8} parent=0 // loop_footer_branch
    %10 = sbr.rel target = $region3
  $region8: #{discriminator_forward.8} parent=0 // loop_exit
    _

// kernel: discriminator_forward.9
$region0: #{discriminator_forward.9}
  #allocation0 [shape = 'u32[]', space=smem, size = 0x4, offset = 0x4, fixed_abs, tag = 'smem constant byte address 0x4 - core index']
  #allocation1 [shape = 'u32[72,128]{1,0:T(1,128)}', space=vmem, size = 0x9000, scoped, tag = 'internal scratch']
  #allocation2 [shape = 'f32[1,1]{1,0:T(1,128)S(1)}', space=vmem, size = 0x200, scoped, tag = 'scoped memory for discriminator_forward.9']
  %s0 = inlined_call_operand.vmem [shape: bf16[128,1024], index: 0, kind: input, shape index: {}]
  %s1 = inlined_call_operand.vmem [shape: bf16[1024,32], index: 1, kind: input, shape index: {}]
  %s2 = inlined_call_operand.vmem [shape: f32[128,1], index: 2, kind: input, shape index: {}]
  %s3 = inlined_call_operand.vmem [shape: f32[128,1], index: 3, kind: input, shape index: {}]
  %s4 = inlined_call_operand.vmem [shape: f32[128,1], index: 4, kind: input, shape index: {}]
  %s5 = inlined_call_operand.vmem [shape: bf16[128,16], index: 5, kind: input, shape index: {}]
  %s6 = inlined_call_operand.<no memory space> [shape: f32[1,1], index: 6, kind: input, shape index: {}]
  %s7 = inlined_call_operand.hbm [shape: f32[1,2], index: 7, kind: output, shape index: {}]
  %s8 = sld [smem:[#allocation0]]
  $region38: #{discriminator_forward.9} parent=0
    _
  %s10 = ssub.s32 1, %s8
  %s11 = scalar_select 0, %s10, %s8
  %v12 = vstv %s6
  %13 = vst [vmem:[#allocation2] sm:$0x1] %v12
  $region1: #{discriminator_forward.9} parent=0
    #allocation3 [shape = 'u8[512]{0}', space=vmem, size = 0x400, scoped, tag = 'output window, operand 0, single buffered']
    #allocation4 [shape = 's32[1]{0}', space=sflag, size = 0x4, scoped, tag = 'scoped memory for discriminator_forward.9']
    %14 = vsyncpa [#allocation4], 0
    // Predicated region
    $region2: #{discriminator_forward.9} parent=1 // pred_check
      _
    $region3: #{discriminator_forward.9} parent=1 // pred_check_branch
      %16 = sbr.rel (0) target = $region5
    $region4: #{discriminator_forward.9} parent=1 // pred_region
      _
    $region5: #{discriminator_forward.9} parent=1 // pred_fallthru
      _
    // Predicated region
    $region6: #{discriminator_forward.9} parent=1 // pred_check
      _
    $region7: #{discriminator_forward.9} parent=1 // pred_check_branch
      %18 = sbr.rel (0) target = $region9
    $region8: #{discriminator_forward.9} parent=1 // pred_region
      _
    $region9: #{discriminator_forward.9} parent=1 // pred_fallthru
      _
    // Predicated region
    $region10: #{discriminator_forward.9} parent=1 // pred_check
      _
    $region11: #{discriminator_forward.9} parent=1 // pred_check_branch
      %20 = sbr.rel (0) target = $region13
    $region12: #{discriminator_forward.9} parent=1 // pred_region
      _
    $region13: #{discriminator_forward.9} parent=1 // pred_fallthru
      _
    // Predicated region
    $region14: #{discriminator_forward.9} parent=1 // pred_check
      _
    $region15: #{discriminator_forward.9} parent=1 // pred_check_branch
      %22 = sbr.rel (0) target = $region17
    $region16: #{discriminator_forward.9} parent=1 // pred_region
      _
    $region17: #{discriminator_forward.9} parent=1 // pred_fallthru
      _
    // Predicated region
    $region18: #{discriminator_forward.9} parent=1 // pred_check
      _
    $region19: #{discriminator_forward.9} parent=1 // pred_check_branch
      %24 = sbr.rel (0) target = $region21
    $region20: #{discriminator_forward.9} parent=1 // pred_region
      _
    $region21: #{discriminator_forward.9} parent=1 // pred_fallthru
      _
    // Predicated region
    $region22: #{discriminator_forward.9} parent=1 // pred_check
      _
    $region23: #{discriminator_forward.9} parent=1 // pred_check_branch
      %26 = sbr.rel (0) target = $region25
    $region24: #{discriminator_forward.9} parent=1 // pred_region
      _
    $region25: #{discriminator_forward.9} parent=1 // pred_fallthru
      _
    // Predicated region
    $region26: #{discriminator_forward.9} parent=1 // pred_check
      _
    $region27: #{discriminator_forward.9} parent=1 // pred_check_branch
      %28 = sbr.rel (0) target = $region29
    $region28: #{discriminator_forward.9} parent=1 // pred_region
      _
    $region29: #{discriminator_forward.9} parent=1 // pred_fallthru
      _
    %v29 = vld [vmem:[%s0] sm:$0xff]
    %v30 = vld [vmem:[%s0 + $0x8] sm:$0xff]
    %v31 = vld [vmem:[%s0 + $0x10] sm:$0xff]
    %v32 = vld [vmem:[%s0 + $0x18] sm:$0xff]
    %v33 = vld [vmem:[%s0 + $0x20] sm:$0xff]
    %v34 = vld [vmem:[%s0 + $0x28] sm:$0xff]
    %v35 = vld [vmem:[%s0 + $0x30] sm:$0xff]
    %v36 = vld [vmem:[%s0 + $0x38] sm:$0xff]
    %v37 = vld [vmem:[%s0 + $0x40] sm:$0xff]
    %v38 = vld [vmem:[%s0 + $0x48] sm:$0xff]
    %v39 = vld [vmem:[%s0 + $0x50] sm:$0xff]
    %v40 = vld [vmem:[%s0 + $0x58] sm:$0xff]
    %v41 = vld [vmem:[%s0 + $0x60] sm:$0xff]
    %v42 = vld [vmem:[%s0 + $0x68] sm:$0xff]
    %v43 = vld [vmem:[%s0 + $0x70] sm:$0xff]
    %v44 = vld [vmem:[%s0 + $0x78] sm:$0xff]
    %v45 = vld [vmem:[%s0 + $0x80] sm:$0xff]
    %v46 = vld [vmem:[%s0 + $0x88] sm:$0xff]
    %v47 = vld [vmem:[%s0 + $0x90] sm:$0xff]
    %v48 = vld [vmem:[%s0 + $0x98] sm:$0xff]
    %v49 = vld [vmem:[%s0 + $0xa0] sm:$0xff]
    %v50 = vld [vmem:[%s0 + $0xa8] sm:$0xff]
    %v51 = vld [vmem:[%s0 + $0xb0] sm:$0xff]
    %v52 = vld [vmem:[%s0 + $0xb8] sm:$0xff]
    %v53 = vld [vmem:[%s0 + $0xc0] sm:$0xff]
    %v54 = vld [vmem:[%s0 + $0xc8] sm:$0xff]
    %v55 = vld [vmem:[%s0 + $0xd0] sm:$0xff]
    %v56 = vld [vmem:[%s0 + $0xd8] sm:$0xff]
    %v57 = vld [vmem:[%s0 + $0xe0] sm:$0xff]
    %v58 = vld [vmem:[%s0 + $0xe8] sm:$0xff]
    %v59 = vld [vmem:[%s0 + $0xf0] sm:$0xff]
    %v60 = vld [vmem:[%s0 + $0xf8] sm:$0xff]
    %v61 = vld [vmem:[%s0 + $0x100] sm:$0xff]
    %v62 = vld [vmem:[%s0 + $0x108] sm:$0xff]
    %v63 = vld [vmem:[%s0 + $0x110] sm:$0xff]
    %v64 = vld [vmem:[%s0 + $0x118] sm:$0xff]
    %v65 = vld [vmem:[%s0 + $0x120] sm:$0xff]
    %v66 = vld [vmem:[%s0 + $0x128] sm:$0xff]
    %v67 = vld [vmem:[%s0 + $0x130] sm:$0xff]
    %v68 = vld [vmem:[%s0 + $0x138] sm:$0xff]
    %v69 = vld [vmem:[%s0 + $0x140] sm:$0xff]
    %v70 = vld [vmem:[%s0 + $0x148] sm:$0xff]
    %v71 = vld [vmem:[%s0 + $0x150] sm:$0xff]
    %v72 = vld [vmem:[%s0 + $0x158] sm:$0xff]
    %v73 = vld [vmem:[%s0 + $0x160] sm:$0xff]
    %v74 = vld [vmem:[%s0 + $0x168] sm:$0xff]
    %v75 = vld [vmem:[%s0 + $0x170] sm:$0xff]
    %v76 = vld [vmem:[%s0 + $0x178] sm:$0xff]
    %v77 = vld [vmem:[%s0 + $0x180] sm:$0xff]
    %v78 = vld [vmem:[%s0 + $0x188] sm:$0xff]
    %v79 = vld [vmem:[%s0 + $0x190] sm:$0xff]
    %v80 = vld [vmem:[%s0 + $0x198] sm:$0xff]
    %v81 = vld [vmem:[%s0 + $0x1a0] sm:$0xff]
    %v82 = vld [vmem:[%s0 + $0x1a8] sm:$0xff]
    %v83 = vld [vmem:[%s0 + $0x1b0] sm:$0xff]
    %v84 = vld [vmem:[%s0 + $0x1b8] sm:$0xff]
    %v85 = vld [vmem:[%s0 + $0x1c0] sm:$0xff]
    %v86 = vld [vmem:[%s0 + $0x1c8] sm:$0xff]
    %v87 = vld [vmem:[%s0 + $0x1d0] sm:$0xff]
    %v88 = vld [vmem:[%s0 + $0x1d8] sm:$0xff]
    %v89 = vld [vmem:[%s0 + $0x1e0] sm:$0xff]
    %v90 = vld [vmem:[%s0 + $0x1e8] sm:$0xff]
    %v91 = vld [vmem:[%s0 + $0x1f0] sm:$0xff]
    %v92 = vld [vmem:[%s0 + $0x1f8] sm:$0xff]
    %v93 = vld [vmem:[%s1] sm:$0xf]
    %v94 = vld [vmem:[%s1 + $0x4] sm:$0xf]
    %v95 = vld [vmem:[%s1 + $0x8] sm:$0xf]
    %v96 = vld [vmem:[%s1 + $0xc] sm:$0xf]
    %v97 = vld [vmem:[%s1 + $0x10] sm:$0xf]
    %v98 = vld [vmem:[%s1 + $0x14] sm:$0xf]
    %v99 = vld [vmem:[%s1 + $0x18] sm:$0xf]
    %v100 = vld [vmem:[%s1 + $0x1c] sm:$0xf]
    %v101 = vld [vmem:[%s1 + $0x20] sm:$0xf]
    %v102 = vld [vmem:[%s1 + $0x24] sm:$0xf]
    %v103 = vld [vmem:[%s1 + $0x28] sm:$0xf]
    %v104 = vld [vmem:[%s1 + $0x2c] sm:$0xf]
    %v105 = vld [vmem:[%s1 + $0x30] sm:$0xf]
    %v106 = vld [vmem:[%s1 + $0x34] sm:$0xf]
    %v107 = vld [vmem:[%s1 + $0x38] sm:$0xf]
    %v108 = vld [vmem:[%s1 + $0x3c] sm:$0xf]
    %v109 = vld [vmem:[%s1 + $0x40] sm:$0xf]
    %v110 = vld [vmem:[%s1 + $0x44] sm:$0xf]
    %v111 = vld [vmem:[%s1 + $0x48] sm:$0xf]
    %v112 = vld [vmem:[%s1 + $0x4c] sm:$0xf]
    %v113 = vld [vmem:[%s1 + $0x50] sm:$0xf]
    %v114 = vld [vmem:[%s1 + $0x54] sm:$0xf]
    %v115 = vld [vmem:[%s1 + $0x58] sm:$0xf]
    %v116 = vld [vmem:[%s1 + $0x5c] sm:$0xf]
    %v117 = vld [vmem:[%s1 + $0x60] sm:$0xf]
    %v118 = vld [vmem:[%s1 + $0x64] sm:$0xf]
    %v119 = vld [vmem:[%s1 + $0x68] sm:$0xf]
    %v120 = vld [vmem:[%s1 + $0x6c] sm:$0xf]
    %v121 = vld [vmem:[%s1 + $0x70] sm:$0xf]
    %v122 = vld [vmem:[%s1 + $0x74] sm:$0xf]
    %v123 = vld [vmem:[%s1 + $0x78] sm:$0xf]
    %v124 = vld [vmem:[%s1 + $0x7c] sm:$0xf]
    %v125 = vld [vmem:[%s1 + $0x80] sm:$0xf]
    %v126 = vld [vmem:[%s1 + $0x84] sm:$0xf]
    %v127 = vld [vmem:[%s1 + $0x88] sm:$0xf]
    %v128 = vld [vmem:[%s1 + $0x8c] sm:$0xf]
    %v129 = vld [vmem:[%s1 + $0x90] sm:$0xf]
    %v130 = vld [vmem:[%s1 + $0x94] sm:$0xf]
    %v131 = vld [vmem:[%s1 + $0x98] sm:$0xf]
    %v132 = vld [vmem:[%s1 + $0x9c] sm:$0xf]
    %v133 = vld [vmem:[%s1 + $0xa0] sm:$0xf]
    %v134 = vld [vmem:[%s1 + $0xa4] sm:$0xf]
    %v135 = vld [vmem:[%s1 + $0xa8] sm:$0xf]
    %v136 = vld [vmem:[%s1 + $0xac] sm:$0xf]
    %v137 = vld [vmem:[%s1 + $0xb0] sm:$0xf]
    %v138 = vld [vmem:[%s1 + $0xb4] sm:$0xf]
    %v139 = vld [vmem:[%s1 + $0xb8] sm:$0xf]
    %v140 = vld [vmem:[%s1 + $0xbc] sm:$0xf]
    %v141 = vld [vmem:[%s1 + $0xc0] sm:$0xf]
    %v142 = vld [vmem:[%s1 + $0xc4] sm:$0xf]
    %v143 = vld [vmem:[%s1 + $0xc8] sm:$0xf]
    %v144 = vld [vmem:[%s1 + $0xcc] sm:$0xf]
    %v145 = vld [vmem:[%s1 + $0xd0] sm:$0xf]
    %v146 = vld [vmem:[%s1 + $0xd4] sm:$0xf]
    %v147 = vld [vmem:[%s1 + $0xd8] sm:$0xf]
    %v148 = vld [vmem:[%s1 + $0xdc] sm:$0xf]
    %v149 = vld [vmem:[%s1 + $0xe0] sm:$0xf]
    %v150 = vld [vmem:[%s1 + $0xe4] sm:$0xf]
    %v151 = vld [vmem:[%s1 + $0xe8] sm:$0xf]
    %v152 = vld [vmem:[%s1 + $0xec] sm:$0xf]
    %v153 = vld [vmem:[%s1 + $0xf0] sm:$0xf]
    %v154 = vld [vmem:[%s1 + $0xf4] sm:$0xf]
    %v155 = vld [vmem:[%s1 + $0xf8] sm:$0xf]
    %v156 = vld [vmem:[%s1 + $0xfc] sm:$0xf]
    %v157 = vld [vmem:[%s1 + $0x100] sm:$0xf]
    %v158 = vld [vmem:[%s1 + $0x104] sm:$0xf]
    %v159 = vld [vmem:[%s1 + $0x108] sm:$0xf]
    %v160 = vld [vmem:[%s1 + $0x10c] sm:$0xf]
    %v161 = vld [vmem:[%s1 + $0x110] sm:$0xf]
    %v162 = vld [vmem:[%s1 + $0x114] sm:$0xf]
    %v163 = vld [vmem:[%s1 + $0x118] sm:$0xf]
    %v164 = vld [vmem:[%s1 + $0x11c] sm:$0xf]
    %v165 = vld [vmem:[%s1 + $0x120] sm:$0xf]
    %v166 = vld [vmem:[%s1 + $0x124] sm:$0xf]
    %v167 = vld [vmem:[%s1 + $0x128] sm:$0xf]
    %v168 = vld [vmem:[%s1 + $0x12c] sm:$0xf]
    %v169 = vld [vmem:[%s1 + $0x130] sm:$0xf]
    %v170 = vld [vmem:[%s1 + $0x134] sm:$0xf]
    %v171 = vld [vmem:[%s1 + $0x138] sm:$0xf]
    %v172 = vld [vmem:[%s1 + $0x13c] sm:$0xf]
    %v173 = vld [vmem:[%s1 + $0x140] sm:$0xf]
    %v174 = vld [vmem:[%s1 + $0x144] sm:$0xf]
    %v175 = vld [vmem:[%s1 + $0x148] sm:$0xf]
    %v176 = vld [vmem:[%s1 + $0x14c] sm:$0xf]
    %v177 = vld [vmem:[%s1 + $0x150] sm:$0xf]
    %v178 = vld [vmem:[%s1 + $0x154] sm:$0xf]
    %v179 = vld [vmem:[%s1 + $0x158] sm:$0xf]
    %v180 = vld [vmem:[%s1 + $0x15c] sm:$0xf]
    %v181 = vld [vmem:[%s1 + $0x160] sm:$0xf]
    %v182 = vld [vmem:[%s1 + $0x164] sm:$0xf]
    %v183 = vld [vmem:[%s1 + $0x168] sm:$0xf]
    %v184 = vld [vmem:[%s1 + $0x16c] sm:$0xf]
    %v185 = vld [vmem:[%s1 + $0x170] sm:$0xf]
    %v186 = vld [vmem:[%s1 + $0x174] sm:$0xf]
    %v187 = vld [vmem:[%s1 + $0x178] sm:$0xf]
    %v188 = vld [vmem:[%s1 + $0x17c] sm:$0xf]
    %v189 = vld [vmem:[%s1 + $0x180] sm:$0xf]
    %v190 = vld [vmem:[%s1 + $0x184] sm:$0xf]
    %v191 = vld [vmem:[%s1 + $0x188] sm:$0xf]
    %v192 = vld [vmem:[%s1 + $0x18c] sm:$0xf]
    %v193 = vld [vmem:[%s1 + $0x190] sm:$0xf]
    %v194 = vld [vmem:[%s1 + $0x194] sm:$0xf]
    %v195 = vld [vmem:[%s1 + $0x198] sm:$0xf]
    %v196 = vld [vmem:[%s1 + $0x19c] sm:$0xf]
    %v197 = vld [vmem:[%s1 + $0x1a0] sm:$0xf]
    %v198 = vld [vmem:[%s1 + $0x1a4] sm:$0xf]
    %v199 = vld [vmem:[%s1 + $0x1a8] sm:$0xf]
    %v200 = vld [vmem:[%s1 + $0x1ac] sm:$0xf]
    %v201 = vld [vmem:[%s1 + $0x1b0] sm:$0xf]
    %v202 = vld [vmem:[%s1 + $0x1b4] sm:$0xf]
    %v203 = vld [vmem:[%s1 + $0x1b8] sm:$0xf]
    %v204 = vld [vmem:[%s1 + $0x1bc] sm:$0xf]
    %v205 = vld [vmem:[%s1 + $0x1c0] sm:$0xf]
    %v206 = vld [vmem:[%s1 + $0x1c4] sm:$0xf]
    %v207 = vld [vmem:[%s1 + $0x1c8] sm:$0xf]
    %v208 = vld [vmem:[%s1 + $0x1cc] sm:$0xf]
    %v209 = vld [vmem:[%s1 + $0x1d0] sm:$0xf]
    %v210 = vld [vmem:[%s1 + $0x1d4] sm:$0xf]
    %v211 = vld [vmem:[%s1 + $0x1d8] sm:$0xf]
    %v212 = vld [vmem:[%s1 + $0x1dc] sm:$0xf]
    %v213 = vld [vmem:[%s1 + $0x1e0] sm:$0xf]
    %v214 = vld [vmem:[%s1 + $0x1e4] sm:$0xf]
    %v215 = vld [vmem:[%s1 + $0x1e8] sm:$0xf]
    %v216 = vld [vmem:[%s1 + $0x1ec] sm:$0xf]
    %v217 = vld [vmem:[%s1 + $0x1f0] sm:$0xf]
    %v218 = vld [vmem:[%s1 + $0x1f4] sm:$0xf]
    %v219 = vld [vmem:[%s1 + $0x1f8] sm:$0xf]
    %v220 = vld [vmem:[%s1 + $0x1fc] sm:$0xf]
    %v221 = vld [vmem:[%s2] sm:$0xff]
    %v222 = vld [vmem:[%s2 + $0x8] sm:$0xff]
    %v223 = vld [vmem:[%s2 + $0x10] sm:$0xff]
    %v224 = vld [vmem:[%s2 + $0x18] sm:$0xff]
    %v225 = vld [vmem:[%s2 + $0x20] sm:$0xff]
    %v226 = vld [vmem:[%s2 + $0x28] sm:$0xff]
    %v227 = vld [vmem:[%s2 + $0x30] sm:$0xff]
    %v228 = vld [vmem:[%s2 + $0x38] sm:$0xff]
    %v229 = vld [vmem:[%s2 + $0x40] sm:$0xff]
    %v230 = vld [vmem:[%s2 + $0x48] sm:$0xff]
    %v231 = vld [vmem:[%s2 + $0x50] sm:$0xff]
    %v232 = vld [vmem:[%s2 + $0x58] sm:$0xff]
    %v233 = vld [vmem:[%s2 + $0x60] sm:$0xff]
    %v234 = vld [vmem:[%s2 + $0x68] sm:$0xff]
    %v235 = vld [vmem:[%s2 + $0x70] sm:$0xff]
    %v236 = vld [vmem:[%s2 + $0x78] sm:$0xff]
    %238 = vset.pattern.permute.xlu0 0
    %239 = vperm.xlu0 %238, %v221
    %v240 = vpop.permute.xlu0 %239
    %243 = vset.pattern.permute.xlu0 0
    %244 = vperm.xlu0 %243, %v222
    %v245 = vpop.permute.xlu0 %244
    %248 = vset.pattern.permute.xlu0 0
    %249 = vperm.xlu0 %248, %v223
    %v250 = vpop.permute.xlu0 %249
    %253 = vset.pattern.permute.xlu0 0
    %254 = vperm.xlu0 %253, %v224
    %v255 = vpop.permute.xlu0 %254
    %258 = vset.pattern.permute.xlu0 0
    %259 = vperm.xlu0 %258, %v225
    %v260 = vpop.permute.xlu0 %259
    %263 = vset.pattern.permute.xlu0 0
    %264 = vperm.xlu0 %263, %v226
    %v265 = vpop.permute.xlu0 %264
    %268 = vset.pattern.permute.xlu0 0
    %269 = vperm.xlu0 %268, %v227
    %v270 = vpop.permute.xlu0 %269
    %273 = vset.pattern.permute.xlu0 0
    %274 = vperm.xlu0 %273, %v228
    %v275 = vpop.permute.xlu0 %274
    %278 = vset.pattern.permute.xlu0 0
    %279 = vperm.xlu0 %278, %v229
    %v280 = vpop.permute.xlu0 %279
    %283 = vset.pattern.permute.xlu0 0
    %284 = vperm.xlu0 %283, %v230
    %v285 = vpop.permute.xlu0 %284
    %288 = vset.pattern.permute.xlu0 0
    %289 = vperm.xlu0 %288, %v231
    %v290 = vpop.permute.xlu0 %289
    %293 = vset.pattern.permute.xlu0 0
    %294 = vperm.xlu0 %293, %v232
    %v295 = vpop.permute.xlu0 %294
    %298 = vset.pattern.permute.xlu0 0
    %299 = vperm.xlu0 %298, %v233
    %v300 = vpop.permute.xlu0 %299
    %303 = vset.pattern.permute.xlu0 0
    %304 = vperm.xlu0 %303, %v234
    %v305 = vpop.permute.xlu0 %304
    %308 = vset.pattern.permute.xlu0 0
    %309 = vperm.xlu0 %308, %v235
    %v310 = vpop.permute.xlu0 %309
    %313 = vset.pattern.permute.xlu0 0
    %314 = vperm.xlu0 %313, %v236
    %v315 = vpop.permute.xlu0 %314
    %v381 = vunpack.c.l.b16 %v29
    %v382 = vunpack.c.h.b16 %v29
    %v383 = vunpack.c.l.b16 %v30
    %v384 = vunpack.c.h.b16 %v30
    %v385 = vunpack.c.l.b16 %v31
    %v386 = vunpack.c.h.b16 %v31
    %v387 = vunpack.c.l.b16 %v32
    %v388 = vunpack.c.h.b16 %v32
    %v389 = vunpack.c.l.b16 %v33
    %v390 = vunpack.c.h.b16 %v33
    %v391 = vunpack.c.l.b16 %v34
    %v392 = vunpack.c.h.b16 %v34
    %v393 = vunpack.c.l.b16 %v35
    %v394 = vunpack.c.h.b16 %v35
    %v395 = vunpack.c.l.b16 %v36
    %v396 = vunpack.c.h.b16 %v36
    %v397 = vunpack.c.l.b16 %v37
    %v398 = vunpack.c.h.b16 %v37
    %v399 = vunpack.c.l.b16 %v38
    %v400 = vunpack.c.h.b16 %v38
    %v401 = vunpack.c.l.b16 %v39
    %v402 = vunpack.c.h.b16 %v39
    %v403 = vunpack.c.l.b16 %v40
    %v404 = vunpack.c.h.b16 %v40
    %v405 = vunpack.c.l.b16 %v41
    %v406 = vunpack.c.h.b16 %v41
    %v407 = vunpack.c.l.b16 %v42
    %v408 = vunpack.c.h.b16 %v42
    %v409 = vunpack.c.l.b16 %v43
    %v410 = vunpack.c.h.b16 %v43
    %v411 = vunpack.c.l.b16 %v44
    %v412 = vunpack.c.h.b16 %v44
    %v413 = vunpack.c.l.b16 %v45
    %v414 = vunpack.c.h.b16 %v45
    %v415 = vunpack.c.l.b16 %v46
    %v416 = vunpack.c.h.b16 %v46
    %v417 = vunpack.c.l.b16 %v47
    %v418 = vunpack.c.h.b16 %v47
    %v419 = vunpack.c.l.b16 %v48
    %v420 = vunpack.c.h.b16 %v48
    %v421 = vunpack.c.l.b16 %v49
    %v422 = vunpack.c.h.b16 %v49
    %v423 = vunpack.c.l.b16 %v50
    %v424 = vunpack.c.h.b16 %v50
    %v425 = vunpack.c.l.b16 %v51
    %v426 = vunpack.c.h.b16 %v51
    %v427 = vunpack.c.l.b16 %v52
    %v428 = vunpack.c.h.b16 %v52
    %v429 = vunpack.c.l.b16 %v53
    %v430 = vunpack.c.h.b16 %v53
    %v431 = vunpack.c.l.b16 %v54
    %v432 = vunpack.c.h.b16 %v54
    %v433 = vunpack.c.l.b16 %v55
    %v434 = vunpack.c.h.b16 %v55
    %v435 = vunpack.c.l.b16 %v56
    %v436 = vunpack.c.h.b16 %v56
    %v437 = vunpack.c.l.b16 %v57
    %v438 = vunpack.c.h.b16 %v57
    %v439 = vunpack.c.l.b16 %v58
    %v440 = vunpack.c.h.b16 %v58
    %v441 = vunpack.c.l.b16 %v59
    %v442 = vunpack.c.h.b16 %v59
    %v443 = vunpack.c.l.b16 %v60
    %v444 = vunpack.c.h.b16 %v60
    %v445 = vunpack.c.l.b16 %v61
    %v446 = vunpack.c.h.b16 %v61
    %v447 = vunpack.c.l.b16 %v62
    %v448 = vunpack.c.h.b16 %v62
    %v449 = vunpack.c.l.b16 %v63
    %v450 = vunpack.c.h.b16 %v63
    %v451 = vunpack.c.l.b16 %v64
    %v452 = vunpack.c.h.b16 %v64
    %v453 = vunpack.c.l.b16 %v65
    %v454 = vunpack.c.h.b16 %v65
    %v455 = vunpack.c.l.b16 %v66
    %v456 = vunpack.c.h.b16 %v66
    %v457 = vunpack.c.l.b16 %v67
    %v458 = vunpack.c.h.b16 %v67
    %v459 = vunpack.c.l.b16 %v68
    %v460 = vunpack.c.h.b16 %v68
    %v461 = vunpack.c.l.b16 %v69
    %v462 = vunpack.c.h.b16 %v69
    %v463 = vunpack.c.l.b16 %v70
    %v464 = vunpack.c.h.b16 %v70
    %v465 = vunpack.c.l.b16 %v71
    %v466 = vunpack.c.h.b16 %v71
    %v467 = vunpack.c.l.b16 %v72
    %v468 = vunpack.c.h.b16 %v72
    %v469 = vunpack.c.l.b16 %v73
    %v470 = vunpack.c.h.b16 %v73
    %v471 = vunpack.c.l.b16 %v74
    %v472 = vunpack.c.h.b16 %v74
    %v473 = vunpack.c.l.b16 %v75
    %v474 = vunpack.c.h.b16 %v75
    %v475 = vunpack.c.l.b16 %v76
    %v476 = vunpack.c.h.b16 %v76
    %v477 = vunpack.c.l.b16 %v77
    %v478 = vunpack.c.h.b16 %v77
    %v479 = vunpack.c.l.b16 %v78
    %v480 = vunpack.c.h.b16 %v78
    %v481 = vunpack.c.l.b16 %v79
    %v482 = vunpack.c.h.b16 %v79
    %v483 = vunpack.c.l.b16 %v80
    %v484 = vunpack.c.h.b16 %v80
    %v485 = vunpack.c.l.b16 %v81
    %v486 = vunpack.c.h.b16 %v81
    %v487 = vunpack.c.l.b16 %v82
    %v488 = vunpack.c.h.b16 %v82
    %v489 = vunpack.c.l.b16 %v83
    %v490 = vunpack.c.h.b16 %v83
    %v491 = vunpack.c.l.b16 %v84
    %v492 = vunpack.c.h.b16 %v84
    %v493 = vunpack.c.l.b16 %v85
    %v494 = vunpack.c.h.b16 %v85
    %v495 = vunpack.c.l.b16 %v86
    %v496 = vunpack.c.h.b16 %v86
    %v497 = vunpack.c.l.b16 %v87
    %v498 = vunpack.c.h.b16 %v87
    %v499 = vunpack.c.l.b16 %v88
    %v500 = vunpack.c.h.b16 %v88
    %v501 = vunpack.c.l.b16 %v89
    %v502 = vunpack.c.h.b16 %v89
    %v503 = vunpack.c.l.b16 %v90
    %v504 = vunpack.c.h.b16 %v90
    %v505 = vunpack.c.l.b16 %v91
    %v506 = vunpack.c.h.b16 %v91
    %v507 = vunpack.c.l.b16 %v92
    %v508 = vunpack.c.h.b16 %v92
    %v509 = vpack.c.b16 %v389, %v381
    %v510 = vpack.c.b16 %v390, %v382
    %v511 = vpack.c.b16 %v391, %v383
    %v512 = vpack.c.b16 %v392, %v384
    %v513 = vpack.c.b16 %v393, %v385
    %v514 = vpack.c.b16 %v394, %v386
    %v515 = vpack.c.b16 %v395, %v387
    %v516 = vpack.c.b16 %v396, %v388
    %v517 = vpack.c.b16 %v405, %v397
    %v518 = vpack.c.b16 %v406, %v398
    %v519 = vpack.c.b16 %v407, %v399
    %v520 = vpack.c.b16 %v408, %v400
    %v521 = vpack.c.b16 %v409, %v401
    %v522 = vpack.c.b16 %v410, %v402
    %v523 = vpack.c.b16 %v411, %v403
    %v524 = vpack.c.b16 %v412, %v404
    %v525 = vpack.c.b16 %v421, %v413
    %v526 = vpack.c.b16 %v422, %v414
    %v527 = vpack.c.b16 %v423, %v415
    %v528 = vpack.c.b16 %v424, %v416
    %v529 = vpack.c.b16 %v425, %v417
    %v530 = vpack.c.b16 %v426, %v418
    %v531 = vpack.c.b16 %v427, %v419
    %v532 = vpack.c.b16 %v428, %v420
    %v533 = vpack.c.b16 %v437, %v429
    %v534 = vpack.c.b16 %v438, %v430
    %v535 = vpack.c.b16 %v439, %v431
    %v536 = vpack.c.b16 %v440, %v432
    %v537 = vpack.c.b16 %v441, %v433
    %v538 = vpack.c.b16 %v442, %v434
    %v539 = vpack.c.b16 %v443, %v435
    %v540 = vpack.c.b16 %v444, %v436
    %v541 = vpack.c.b16 %v453, %v445
    %v542 = vpack.c.b16 %v454, %v446
    %v543 = vpack.c.b16 %v455, %v447
    %v544 = vpack.c.b16 %v456, %v448
    %v545 = vpack.c.b16 %v457, %v449
    %v546 = vpack.c.b16 %v458, %v450
    %v547 = vpack.c.b16 %v459, %v451
    %v548 = vpack.c.b16 %v460, %v452
    %v549 = vpack.c.b16 %v469, %v461
    %v550 = vpack.c.b16 %v470, %v462
    %v551 = vpack.c.b16 %v471, %v463
    %v552 = vpack.c.b16 %v472, %v464
    %v553 = vpack.c.b16 %v473, %v465
    %v554 = vpack.c.b16 %v474, %v466
    %v555 = vpack.c.b16 %v475, %v467
    %v556 = vpack.c.b16 %v476, %v468
    %v557 = vpack.c.b16 %v485, %v477
    %v558 = vpack.c.b16 %v486, %v478
    %v559 = vpack.c.b16 %v487, %v479
    %v560 = vpack.c.b16 %v488, %v480
    %v561 = vpack.c.b16 %v489, %v481
    %v562 = vpack.c.b16 %v490, %v482
    %v563 = vpack.c.b16 %v491, %v483
    %v564 = vpack.c.b16 %v492, %v484
    %v565 = vpack.c.b16 %v501, %v493
    %v566 = vpack.c.b16 %v502, %v494
    %v567 = vpack.c.b16 %v503, %v495
    %v568 = vpack.c.b16 %v504, %v496
    %v569 = vpack.c.b16 %v505, %v497
    %v570 = vpack.c.b16 %v506, %v498
    %v571 = vpack.c.b16 %v507, %v499
    %v572 = vpack.c.b16 %v508, %v500
    %v765 = vunpack.c.l.b16 %v93
    %v766 = vunpack.c.l.b16 %v94
    %v767 = vunpack.c.l.b16 %v95
    %v768 = vunpack.c.l.b16 %v96
    %v769 = vunpack.c.l.b16 %v97
    %v770 = vunpack.c.l.b16 %v98
    %v771 = vunpack.c.l.b16 %v99
    %v772 = vunpack.c.l.b16 %v100
    %v773 = vunpack.c.l.b16 %v101
    %v774 = vunpack.c.l.b16 %v102
    %v775 = vunpack.c.l.b16 %v103
    %v776 = vunpack.c.l.b16 %v104
    %v777 = vunpack.c.l.b16 %v105
    %v778 = vunpack.c.l.b16 %v106
    %v779 = vunpack.c.l.b16 %v107
    %v780 = vunpack.c.l.b16 %v108
    %v781 = vunpack.c.l.b16 %v109
    %v782 = vunpack.c.l.b16 %v110
    %v783 = vunpack.c.l.b16 %v111
    %v784 = vunpack.c.l.b16 %v112
    %v785 = vunpack.c.l.b16 %v113
    %v786 = vunpack.c.l.b16 %v114
    %v787 = vunpack.c.l.b16 %v115
    %v788 = vunpack.c.l.b16 %v116
    %v789 = vunpack.c.l.b16 %v117
    %v790 = vunpack.c.l.b16 %v118
    %v791 = vunpack.c.l.b16 %v119
    %v792 = vunpack.c.l.b16 %v120
    %v793 = vunpack.c.l.b16 %v121
    %v794 = vunpack.c.l.b16 %v122
    %v795 = vunpack.c.l.b16 %v123
    %v796 = vunpack.c.l.b16 %v124
    %v797 = vunpack.c.l.b16 %v125
    %v798 = vunpack.c.l.b16 %v126
    %v799 = vunpack.c.l.b16 %v127
    %v800 = vunpack.c.l.b16 %v128
    %v801 = vunpack.c.l.b16 %v129
    %v802 = vunpack.c.l.b16 %v130
    %v803 = vunpack.c.l.b16 %v131
    %v804 = vunpack.c.l.b16 %v132
    %v805 = vunpack.c.l.b16 %v133
    %v806 = vunpack.c.l.b16 %v134
    %v807 = vunpack.c.l.b16 %v135
    %v808 = vunpack.c.l.b16 %v136
    %v809 = vunpack.c.l.b16 %v137
    %v810 = vunpack.c.l.b16 %v138
    %v811 = vunpack.c.l.b16 %v139
    %v812 = vunpack.c.l.b16 %v140
    %v813 = vunpack.c.l.b16 %v141
    %v814 = vunpack.c.l.b16 %v142
    %v815 = vunpack.c.l.b16 %v143
    %v816 = vunpack.c.l.b16 %v144
    %v817 = vunpack.c.l.b16 %v145
    %v818 = vunpack.c.l.b16 %v146
    %v819 = vunpack.c.l.b16 %v147
    %v820 = vunpack.c.l.b16 %v148
    %v821 = vunpack.c.l.b16 %v149
    %v822 = vunpack.c.l.b16 %v150
    %v823 = vunpack.c.l.b16 %v151
    %v824 = vunpack.c.l.b16 %v152
    %v825 = vunpack.c.l.b16 %v153
    %v826 = vunpack.c.l.b16 %v154
    %v827 = vunpack.c.l.b16 %v155
    %v828 = vunpack.c.l.b16 %v156
    %v829 = vunpack.c.l.b16 %v157
    %v830 = vunpack.c.l.b16 %v158
    %v831 = vunpack.c.l.b16 %v159
    %v832 = vunpack.c.l.b16 %v160
    %v833 = vunpack.c.l.b16 %v161
    %v834 = vunpack.c.l.b16 %v162
    %v835 = vunpack.c.l.b16 %v163
    %v836 = vunpack.c.l.b16 %v164
    %v837 = vunpack.c.l.b16 %v165
    %v838 = vunpack.c.l.b16 %v166
    %v839 = vunpack.c.l.b16 %v167
    %v840 = vunpack.c.l.b16 %v168
    %v841 = vunpack.c.l.b16 %v169
    %v842 = vunpack.c.l.b16 %v170
    %v843 = vunpack.c.l.b16 %v171
    %v844 = vunpack.c.l.b16 %v172
    %v845 = vunpack.c.l.b16 %v173
    %v846 = vunpack.c.l.b16 %v174
    %v847 = vunpack.c.l.b16 %v175
    %v848 = vunpack.c.l.b16 %v176
    %v849 = vunpack.c.l.b16 %v177
    %v850 = vunpack.c.l.b16 %v178
    %v851 = vunpack.c.l.b16 %v179
    %v852 = vunpack.c.l.b16 %v180
    %v853 = vunpack.c.l.b16 %v181
    %v854 = vunpack.c.l.b16 %v182
    %v855 = vunpack.c.l.b16 %v183
    %v856 = vunpack.c.l.b16 %v184
    %v857 = vunpack.c.l.b16 %v185
    %v858 = vunpack.c.l.b16 %v186
    %v859 = vunpack.c.l.b16 %v187
    %v860 = vunpack.c.l.b16 %v188
    %v861 = vunpack.c.l.b16 %v189
    %v862 = vunpack.c.l.b16 %v190
    %v863 = vunpack.c.l.b16 %v191
    %v864 = vunpack.c.l.b16 %v192
    %v865 = vunpack.c.l.b16 %v193
    %v866 = vunpack.c.l.b16 %v194
    %v867 = vunpack.c.l.b16 %v195
    %v868 = vunpack.c.l.b16 %v196
    %v869 = vunpack.c.l.b16 %v197
    %v870 = vunpack.c.l.b16 %v198
    %v871 = vunpack.c.l.b16 %v199
    %v872 = vunpack.c.l.b16 %v200
    %v873 = vunpack.c.l.b16 %v201
    %v874 = vunpack.c.l.b16 %v202
    %v875 = vunpack.c.l.b16 %v203
    %v876 = vunpack.c.l.b16 %v204
    %v877 = vunpack.c.l.b16 %v205
    %v878 = vunpack.c.l.b16 %v206
    %v879 = vunpack.c.l.b16 %v207
    %v880 = vunpack.c.l.b16 %v208
    %v881 = vunpack.c.l.b16 %v209
    %v882 = vunpack.c.l.b16 %v210
    %v883 = vunpack.c.l.b16 %v211
    %v884 = vunpack.c.l.b16 %v212
    %v885 = vunpack.c.l.b16 %v213
    %v886 = vunpack.c.l.b16 %v214
    %v887 = vunpack.c.l.b16 %v215
    %v888 = vunpack.c.l.b16 %v216
    %v889 = vunpack.c.l.b16 %v217
    %v890 = vunpack.c.l.b16 %v218
    %v891 = vunpack.c.l.b16 %v219
    %v892 = vunpack.c.l.b16 %v220
    %v893 = vpack.c.b16 %v766, %v765
    %v894 = vpack.c.b16 %v768, %v767
    %v895 = vpack.c.b16 %v770, %v769
    %v896 = vpack.c.b16 %v772, %v771
    %v897 = vpack.c.b16 %v774, %v773
    %v898 = vpack.c.b16 %v776, %v775
    %v899 = vpack.c.b16 %v778, %v777
    %v900 = vpack.c.b16 %v780, %v779
    %v901 = vpack.c.b16 %v782, %v781
    %v902 = vpack.c.b16 %v784, %v783
    %v903 = vpack.c.b16 %v786, %v785
    %v904 = vpack.c.b16 %v788, %v787
    %v905 = vpack.c.b16 %v790, %v789
    %v906 = vpack.c.b16 %v792, %v791
    %v907 = vpack.c.b16 %v794, %v793
    %v908 = vpack.c.b16 %v796, %v795
    %v909 = vpack.c.b16 %v798, %v797
    %v910 = vpack.c.b16 %v800, %v799
    %v911 = vpack.c.b16 %v802, %v801
    %v912 = vpack.c.b16 %v804, %v803
    %v913 = vpack.c.b16 %v806, %v805
    %v914 = vpack.c.b16 %v808, %v807
    %v915 = vpack.c.b16 %v810, %v809
    %v916 = vpack.c.b16 %v812, %v811
    %v917 = vpack.c.b16 %v814, %v813
    %v918 = vpack.c.b16 %v816, %v815
    %v919 = vpack.c.b16 %v818, %v817
    %v920 = vpack.c.b16 %v820, %v819
    %v921 = vpack.c.b16 %v822, %v821
    %v922 = vpack.c.b16 %v824, %v823
    %v923 = vpack.c.b16 %v826, %v825
    %v924 = vpack.c.b16 %v828, %v827
    %v925 = vpack.c.b16 %v830, %v829
    %v926 = vpack.c.b16 %v832, %v831
    %v927 = vpack.c.b16 %v834, %v833
    %v928 = vpack.c.b16 %v836, %v835
    %v929 = vpack.c.b16 %v838, %v837
    %v930 = vpack.c.b16 %v840, %v839
    %v931 = vpack.c.b16 %v842, %v841
    %v932 = vpack.c.b16 %v844, %v843
    %v933 = vpack.c.b16 %v846, %v845
    %v934 = vpack.c.b16 %v848, %v847
    %v935 = vpack.c.b16 %v850, %v849
    %v936 = vpack.c.b16 %v852, %v851
    %v937 = vpack.c.b16 %v854, %v853
    %v938 = vpack.c.b16 %v856, %v855
    %v939 = vpack.c.b16 %v858, %v857
    %v940 = vpack.c.b16 %v860, %v859
    %v941 = vpack.c.b16 %v862, %v861
    %v942 = vpack.c.b16 %v864, %v863
    %v943 = vpack.c.b16 %v866, %v865
    %v944 = vpack.c.b16 %v868, %v867
    %v945 = vpack.c.b16 %v870, %v869
    %v946 = vpack.c.b16 %v872, %v871
    %v947 = vpack.c.b16 %v874, %v873
    %v948 = vpack.c.b16 %v876, %v875
    %v949 = vpack.c.b16 %v878, %v877
    %v950 = vpack.c.b16 %v880, %v879
    %v951 = vpack.c.b16 %v882, %v881
    %v952 = vpack.c.b16 %v884, %v883
    %v953 = vpack.c.b16 %v886, %v885
    %v954 = vpack.c.b16 %v888, %v887
    %v955 = vpack.c.b16 %v890, %v889
    %v956 = vpack.c.b16 %v892, %v891
    %1021 = vmatpush.bf16.msra.mxu0 %v900
    %1022 = vmatpush.bf16.msra.mxu0 %v899
    %1023 = vmatpush.bf16.msra.mxu0 %v898
    %1024 = vmatpush.bf16.msra.mxu0 %v897
    %1025 = vmatpush.bf16.msra.mxu0 %v896
    %1026 = vmatpush.bf16.msra.mxu0 %v895
    %1027 = vmatpush.bf16.msra.mxu0 %v894
    %1028 = vmatpush.bf16.msra.mxu0 %v893
    %1029 = vmatmul.bf16.gmra.mxu0 %v509
    %v1030 = vpop.f32.mrf.mxu0
    %v1031 = vadd.f32 %v240, %v1030
    %v1032 = vpop.f32.mrf.mxu0
    %v1033 = vadd.f32 %v245, %v1032
    %1034 = vmatmul.bf16.gmra.mxu0 %v517
    %v1035 = vpop.f32.mrf.mxu0
    %v1036 = vadd.f32 %v250, %v1035
    %v1037 = vpop.f32.mrf.mxu0
    %v1038 = vadd.f32 %v255, %v1037
    %1039 = vmatmul.bf16.gmra.mxu0 %v525
    %v1040 = vpop.f32.mrf.mxu0
    %v1041 = vadd.f32 %v260, %v1040
    %v1042 = vpop.f32.mrf.mxu0
    %v1043 = vadd.f32 %v265, %v1042
    %1044 = vmatmul.bf16.gmra.mxu0 %v533
    %v1045 = vpop.f32.mrf.mxu0
    %v1046 = vadd.f32 %v270, %v1045
    %v1047 = vpop.f32.mrf.mxu0
    %v1048 = vadd.f32 %v275, %v1047
    %1049 = vmatmul.bf16.gmra.mxu0 %v541
    %v1050 = vpop.f32.mrf.mxu0
    %v1051 = vadd.f32 %v280, %v1050
    %v1052 = vpop.f32.mrf.mxu0
    %v1053 = vadd.f32 %v285, %v1052
    %1054 = vmatmul.bf16.gmra.mxu0 %v549
    %v1055 = vpop.f32.mrf.mxu0
    %v1056 = vadd.f32 %v290, %v1055
    %v1057 = vpop.f32.mrf.mxu0
    %v1058 = vadd.f32 %v295, %v1057
    %1059 = vmatmul.bf16.gmra.mxu0 %v557
    %v1060 = vpop.f32.mrf.mxu0
    %v1061 = vadd.f32 %v300, %v1060
    %v1062 = vpop.f32.mrf.mxu0
    %v1063 = vadd.f32 %v305, %v1062
    %1064 = vmatmul.bf16.gmra.mxu0 %v565
    %v1065 = vpop.f32.mrf.mxu0
    %v1066 = vadd.f32 %v310, %v1065
    %v1067 = vpop.f32.mrf.mxu0
    %v1068 = vadd.f32 %v315, %v1067
    %1069 = vdwg.mxu0
    %1070 = vmatpush.bf16.msra.mxu0 %v908
    %1071 = vmatpush.bf16.msra.mxu0 %v907
    %1072 = vmatpush.bf16.msra.mxu0 %v906
    %1073 = vmatpush.bf16.msra.mxu0 %v905
    %1074 = vmatpush.bf16.msra.mxu0 %v904
    %1075 = vmatpush.bf16.msra.mxu0 %v903
    %1076 = vmatpush.bf16.msra.mxu0 %v902
    %1077 = vmatpush.bf16.msra.mxu0 %v901
    %1078 = vmatmul.bf16.gmra.mxu0 %v510
    %v1079 = vpop.f32.mrf.mxu0
    %v1080 = vadd.f32 %v1031, %v1079
    %v1081 = vpop.f32.mrf.mxu0
    %v1082 = vadd.f32 %v1033, %v1081
    %1083 = vmatmul.bf16.gmra.mxu0 %v518
    %v1084 = vpop.f32.mrf.mxu0
    %v1085 = vadd.f32 %v1036, %v1084
    %v1086 = vpop.f32.mrf.mxu0
    %v1087 = vadd.f32 %v1038, %v1086
    %1088 = vmatmul.bf16.gmra.mxu0 %v526
    %v1089 = vpop.f32.mrf.mxu0
    %v1090 = vadd.f32 %v1041, %v1089
    %v1091 = vpop.f32.mrf.mxu0
    %v1092 = vadd.f32 %v1043, %v1091
    %1093 = vmatmul.bf16.gmra.mxu0 %v534
    %v1094 = vpop.f32.mrf.mxu0
    %v1095 = vadd.f32 %v1046, %v1094
    %v1096 = vpop.f32.mrf.mxu0
    %v1097 = vadd.f32 %v1048, %v1096
    %1098 = vmatmul.bf16.gmra.mxu0 %v542
    %v1099 = vpop.f32.mrf.mxu0
    %v1100 = vadd.f32 %v1051, %v1099
    %v1101 = vpop.f32.mrf.mxu0
    %v1102 = vadd.f32 %v1053, %v1101
    %1103 = vmatmul.bf16.gmra.mxu0 %v550
    %v1104 = vpop.f32.mrf.mxu0
    %v1105 = vadd.f32 %v1056, %v1104
    %v1106 = vpop.f32.mrf.mxu0
    %v1107 = vadd.f32 %v1058, %v1106
    %1108 = vmatmul.bf16.gmra.mxu0 %v558
    %v1109 = vpop.f32.mrf.mxu0
    %v1110 = vadd.f32 %v1061, %v1109
    %v1111 = vpop.f32.mrf.mxu0
    %v1112 = vadd.f32 %v1063, %v1111
    %1113 = vmatmul.bf16.gmra.mxu0 %v566
    %v1114 = vpop.f32.mrf.mxu0
    %v1115 = vadd.f32 %v1066, %v1114
    %v1116 = vpop.f32.mrf.mxu0
    %v1117 = vadd.f32 %v1068, %v1116
    %1118 = vdwg.mxu0
    %1119 = vmatpush.bf16.msra.mxu0 %v916
    %1120 = vmatpush.bf16.msra.mxu0 %v915
    %1121 = vmatpush.bf16.msra.mxu0 %v914
    %1122 = vmatpush.bf16.msra.mxu0 %v913
    %1123 = vmatpush.bf16.msra.mxu0 %v912
    %1124 = vmatpush.bf16.msra.mxu0 %v911
    %1125 = vmatpush.bf16.msra.mxu0 %v910
    %1126 = vmatpush.bf16.msra.mxu0 %v909
    %1127 = vmatmul.bf16.gmra.mxu0 %v511
    %v1128 = vpop.f32.mrf.mxu0
    %v1129 = vadd.f32 %v1080, %v1128
    %v1130 = vpop.f32.mrf.mxu0
    %v1131 = vadd.f32 %v1082, %v1130
    %1132 = vmatmul.bf16.gmra.mxu0 %v519
    %v1133 = vpop.f32.mrf.mxu0
    %v1134 = vadd.f32 %v1085, %v1133
    %v1135 = vpop.f32.mrf.mxu0
    %v1136 = vadd.f32 %v1087, %v1135
    %1137 = vmatmul.bf16.gmra.mxu0 %v527
    %v1138 = vpop.f32.mrf.mxu0
    %v1139 = vadd.f32 %v1090, %v1138
    %v1140 = vpop.f32.mrf.mxu0
    %v1141 = vadd.f32 %v1092, %v1140
    %1142 = vmatmul.bf16.gmra.mxu0 %v535
    %v1143 = vpop.f32.mrf.mxu0
    %v1144 = vadd.f32 %v1095, %v1143
    %v1145 = vpop.f32.mrf.mxu0
    %v1146 = vadd.f32 %v1097, %v1145
    %1147 = vmatmul.bf16.gmra.mxu0 %v543
    %v1148 = vpop.f32.mrf.mxu0
    %v1149 = vadd.f32 %v1100, %v1148
    %v1150 = vpop.f32.mrf.mxu0
    %v1151 = vadd.f32 %v1102, %v1150
    %1152 = vmatmul.bf16.gmra.mxu0 %v551
    %v1153 = vpop.f32.mrf.mxu0
    %v1154 = vadd.f32 %v1105, %v1153
    %v1155 = vpop.f32.mrf.mxu0
    %v1156 = vadd.f32 %v1107, %v1155
    %1157 = vmatmul.bf16.gmra.mxu0 %v559
    %v1158 = vpop.f32.mrf.mxu0
    %v1159 = vadd.f32 %v1110, %v1158
    %v1160 = vpop.f32.mrf.mxu0
    %v1161 = vadd.f32 %v1112, %v1160
    %1162 = vmatmul.bf16.gmra.mxu0 %v567
    %v1163 = vpop.f32.mrf.mxu0
    %v1164 = vadd.f32 %v1115, %v1163
    %v1165 = vpop.f32.mrf.mxu0
    %v1166 = vadd.f32 %v1117, %v1165
    %1167 = vdwg.mxu0
    %1168 = vmatpush.bf16.msra.mxu0 %v924
    %1169 = vmatpush.bf16.msra.mxu0 %v923
    %1170 = vmatpush.bf16.msra.mxu0 %v922
    %1171 = vmatpush.bf16.msra.mxu0 %v921
    %1172 = vmatpush.bf16.msra.mxu0 %v920
    %1173 = vmatpush.bf16.msra.mxu0 %v919
    %1174 = vmatpush.bf16.msra.mxu0 %v918
    %1175 = vmatpush.bf16.msra.mxu0 %v917
    %1176 = vmatmul.bf16.gmra.mxu0 %v512
    %v1177 = vpop.f32.mrf.mxu0
    %v1178 = vadd.f32 %v1129, %v1177
    %v1179 = vpop.f32.mrf.mxu0
    %v1180 = vadd.f32 %v1131, %v1179
    %1181 = vmatmul.bf16.gmra.mxu0 %v520
    %v1182 = vpop.f32.mrf.mxu0
    %v1183 = vadd.f32 %v1134, %v1182
    %v1184 = vpop.f32.mrf.mxu0
    %v1185 = vadd.f32 %v1136, %v1184
    %1186 = vmatmul.bf16.gmra.mxu0 %v528
    %v1187 = vpop.f32.mrf.mxu0
    %v1188 = vadd.f32 %v1139, %v1187
    %v1189 = vpop.f32.mrf.mxu0
    %v1190 = vadd.f32 %v1141, %v1189
    %1191 = vmatmul.bf16.gmra.mxu0 %v536
    %v1192 = vpop.f32.mrf.mxu0
    %v1193 = vadd.f32 %v1144, %v1192
    %v1194 = vpop.f32.mrf.mxu0
    %v1195 = vadd.f32 %v1146, %v1194
    %1196 = vmatmul.bf16.gmra.mxu0 %v544
    %v1197 = vpop.f32.mrf.mxu0
    %v1198 = vadd.f32 %v1149, %v1197
    %v1199 = vpop.f32.mrf.mxu0
    %v1200 = vadd.f32 %v1151, %v1199
    %1201 = vmatmul.bf16.gmra.mxu0 %v552
    %v1202 = vpop.f32.mrf.mxu0
    %v1203 = vadd.f32 %v1154, %v1202
    %v1204 = vpop.f32.mrf.mxu0
    %v1205 = vadd.f32 %v1156, %v1204
    %1206 = vmatmul.bf16.gmra.mxu0 %v560
    %v1207 = vpop.f32.mrf.mxu0
    %v1208 = vadd.f32 %v1159, %v1207
    %v1209 = vpop.f32.mrf.mxu0
    %v1210 = vadd.f32 %v1161, %v1209
    %1211 = vmatmul.bf16.gmra.mxu0 %v568
    %v1212 = vpop.f32.mrf.mxu0
    %v1213 = vadd.f32 %v1164, %v1212
    %v1214 = vpop.f32.mrf.mxu0
    %v1215 = vadd.f32 %v1166, %v1214
    %1216 = vdwg.mxu0
    %1217 = vmatpush.bf16.msra.mxu0 %v932
    %1218 = vmatpush.bf16.msra.mxu0 %v931
    %1219 = vmatpush.bf16.msra.mxu0 %v930
    %1220 = vmatpush.bf16.msra.mxu0 %v929
    %1221 = vmatpush.bf16.msra.mxu0 %v928
    %1222 = vmatpush.bf16.msra.mxu0 %v927
    %1223 = vmatpush.bf16.msra.mxu0 %v926
    %1224 = vmatpush.bf16.msra.mxu0 %v925
    %1225 = vmatmul.bf16.gmra.mxu0 %v513
    %v1226 = vpop.f32.mrf.mxu0
    %v1227 = vadd.f32 %v1178, %v1226
    %v1228 = vpop.f32.mrf.mxu0
    %v1229 = vadd.f32 %v1180, %v1228
    %1230 = vmatmul.bf16.gmra.mxu0 %v521
    %v1231 = vpop.f32.mrf.mxu0
    %v1232 = vadd.f32 %v1183, %v1231
    %v1233 = vpop.f32.mrf.mxu0
    %v1234 = vadd.f32 %v1185, %v1233
    %1235 = vmatmul.bf16.gmra.mxu0 %v529
    %v1236 = vpop.f32.mrf.mxu0
    %v1237 = vadd.f32 %v1188, %v1236
    %v1238 = vpop.f32.mrf.mxu0
    %v1239 = vadd.f32 %v1190, %v1238
    %1240 = vmatmul.bf16.gmra.mxu0 %v537
    %v1241 = vpop.f32.mrf.mxu0
    %v1242 = vadd.f32 %v1193, %v1241
    %v1243 = vpop.f32.mrf.mxu0
    %v1244 = vadd.f32 %v1195, %v1243
    %1245 = vmatmul.bf16.gmra.mxu0 %v545
    %v1246 = vpop.f32.mrf.mxu0
    %v1247 = vadd.f32 %v1198, %v1246
    %v1248 = vpop.f32.mrf.mxu0
    %v1249 = vadd.f32 %v1200, %v1248
    %1250 = vmatmul.bf16.gmra.mxu0 %v553
    %v1251 = vpop.f32.mrf.mxu0
    %v1252 = vadd.f32 %v1203, %v1251
    %v1253 = vpop.f32.mrf.mxu0
    %v1254 = vadd.f32 %v1205, %v1253
    %1255 = vmatmul.bf16.gmra.mxu0 %v561
    %v1256 = vpop.f32.mrf.mxu0
    %v1257 = vadd.f32 %v1208, %v1256
    %v1258 = vpop.f32.mrf.mxu0
    %v1259 = vadd.f32 %v1210, %v1258
    %1260 = vmatmul.bf16.gmra.mxu0 %v569
    %v1261 = vpop.f32.mrf.mxu0
    %v1262 = vadd.f32 %v1213, %v1261
    %v1263 = vpop.f32.mrf.mxu0
    %v1264 = vadd.f32 %v1215, %v1263
    %1265 = vdwg.mxu0
    %1266 = vmatpush.bf16.msra.mxu0 %v940
    %1267 = vmatpush.bf16.msra.mxu0 %v939
    %1268 = vmatpush.bf16.msra.mxu0 %v938
    %1269 = vmatpush.bf16.msra.mxu0 %v937
    %1270 = vmatpush.bf16.msra.mxu0 %v936
    %1271 = vmatpush.bf16.msra.mxu0 %v935
    %1272 = vmatpush.bf16.msra.mxu0 %v934
    %1273 = vmatpush.bf16.msra.mxu0 %v933
    %1274 = vmatmul.bf16.gmra.mxu0 %v514
    %v1275 = vpop.f32.mrf.mxu0
    %v1276 = vadd.f32 %v1227, %v1275
    %v1277 = vpop.f32.mrf.mxu0
    %v1278 = vadd.f32 %v1229, %v1277
    %1279 = vmatmul.bf16.gmra.mxu0 %v522
    %v1280 = vpop.f32.mrf.mxu0
    %v1281 = vadd.f32 %v1232, %v1280
    %v1282 = vpop.f32.mrf.mxu0
    %v1283 = vadd.f32 %v1234, %v1282
    %1284 = vmatmul.bf16.gmra.mxu0 %v530
    %v1285 = vpop.f32.mrf.mxu0
    %v1286 = vadd.f32 %v1237, %v1285
    %v1287 = vpop.f32.mrf.mxu0
    %v1288 = vadd.f32 %v1239, %v1287
    %1289 = vmatmul.bf16.gmra.mxu0 %v538
    %v1290 = vpop.f32.mrf.mxu0
    %v1291 = vadd.f32 %v1242, %v1290
    %v1292 = vpop.f32.mrf.mxu0
    %v1293 = vadd.f32 %v1244, %v1292
    %1294 = vmatmul.bf16.gmra.mxu0 %v546
    %v1295 = vpop.f32.mrf.mxu0
    %v1296 = vadd.f32 %v1247, %v1295
    %v1297 = vpop.f32.mrf.mxu0
    %v1298 = vadd.f32 %v1249, %v1297
    %1299 = vmatmul.bf16.gmra.mxu0 %v554
    %v1300 = vpop.f32.mrf.mxu0
    %v1301 = vadd.f32 %v1252, %v1300
    %v1302 = vpop.f32.mrf.mxu0
    %v1303 = vadd.f32 %v1254, %v1302
    %1304 = vmatmul.bf16.gmra.mxu0 %v562
    %v1305 = vpop.f32.mrf.mxu0
    %v1306 = vadd.f32 %v1257, %v1305
    %v1307 = vpop.f32.mrf.mxu0
    %v1308 = vadd.f32 %v1259, %v1307
    %1309 = vmatmul.bf16.gmra.mxu0 %v570
    %v1310 = vpop.f32.mrf.mxu0
    %v1311 = vadd.f32 %v1262, %v1310
    %v1312 = vpop.f32.mrf.mxu0
    %v1313 = vadd.f32 %v1264, %v1312
    %1314 = vdwg.mxu0
    %1315 = vmatpush.bf16.msra.mxu0 %v948
    %1316 = vmatpush.bf16.msra.mxu0 %v947
    %1317 = vmatpush.bf16.msra.mxu0 %v946
    %1318 = vmatpush.bf16.msra.mxu0 %v945
    %1319 = vmatpush.bf16.msra.mxu0 %v944
    %1320 = vmatpush.bf16.msra.mxu0 %v943
    %1321 = vmatpush.bf16.msra.mxu0 %v942
    %1322 = vmatpush.bf16.msra.mxu0 %v941
    %1323 = vmatmul.bf16.gmra.mxu0 %v515
    %v1324 = vpop.f32.mrf.mxu0
    %v1325 = vadd.f32 %v1276, %v1324
    %v1326 = vpop.f32.mrf.mxu0
    %v1327 = vadd.f32 %v1278, %v1326
    %1328 = vmatmul.bf16.gmra.mxu0 %v523
    %v1329 = vpop.f32.mrf.mxu0
    %v1330 = vadd.f32 %v1281, %v1329
    %v1331 = vpop.f32.mrf.mxu0
    %v1332 = vadd.f32 %v1283, %v1331
    %1333 = vmatmul.bf16.gmra.mxu0 %v531
    %v1334 = vpop.f32.mrf.mxu0
    %v1335 = vadd.f32 %v1286, %v1334
    %v1336 = vpop.f32.mrf.mxu0
    %v1337 = vadd.f32 %v1288, %v1336
    %1338 = vmatmul.bf16.gmra.mxu0 %v539
    %v1339 = vpop.f32.mrf.mxu0
    %v1340 = vadd.f32 %v1291, %v1339
    %v1341 = vpop.f32.mrf.mxu0
    %v1342 = vadd.f32 %v1293, %v1341
    %1343 = vmatmul.bf16.gmra.mxu0 %v547
    %v1344 = vpop.f32.mrf.mxu0
    %v1345 = vadd.f32 %v1296, %v1344
    %v1346 = vpop.f32.mrf.mxu0
    %v1347 = vadd.f32 %v1298, %v1346
    %1348 = vmatmul.bf16.gmra.mxu0 %v555
    %v1349 = vpop.f32.mrf.mxu0
    %v1350 = vadd.f32 %v1301, %v1349
    %v1351 = vpop.f32.mrf.mxu0
    %v1352 = vadd.f32 %v1303, %v1351
    %1353 = vmatmul.bf16.gmra.mxu0 %v563
    %v1354 = vpop.f32.mrf.mxu0
    %v1355 = vadd.f32 %v1306, %v1354
    %v1356 = vpop.f32.mrf.mxu0
    %v1357 = vadd.f32 %v1308, %v1356
    %1358 = vmatmul.bf16.gmra.mxu0 %v571
    %v1359 = vpop.f32.mrf.mxu0
    %v1360 = vadd.f32 %v1311, %v1359
    %v1361 = vpop.f32.mrf.mxu0
    %v1362 = vadd.f32 %v1313, %v1361
    %1363 = vdwg.mxu0
    %1364 = vmatpush.bf16.msra.mxu0 %v956
    %1365 = vmatpush.bf16.msra.mxu0 %v955
    %1366 = vmatpush.bf16.msra.mxu0 %v954
    %1367 = vmatpush.bf16.msra.mxu0 %v953
    %1368 = vmatpush.bf16.msra.mxu0 %v952
    %1369 = vmatpush.bf16.msra.mxu0 %v951
    %1370 = vmatpush.bf16.msra.mxu0 %v950
    %1371 = vmatpush.bf16.msra.mxu0 %v949
    %1372 = vmatmul.bf16.gmra.mxu0 %v516
    %v1373 = vpop.f32.mrf.mxu0
    %v1374 = vadd.f32 %v1325, %v1373
    %v1375 = vpop.f32.mrf.mxu0
    %v1376 = vadd.f32 %v1327, %v1375
    %1377 = vmatmul.bf16.gmra.mxu0 %v524
    %v1378 = vpop.f32.mrf.mxu0
    %v1379 = vadd.f32 %v1330, %v1378
    %v1380 = vpop.f32.mrf.mxu0
    %v1381 = vadd.f32 %v1332, %v1380
    %1382 = vmatmul.bf16.gmra.mxu0 %v532
    %v1383 = vpop.f32.mrf.mxu0
    %v1384 = vadd.f32 %v1335, %v1383
    %v1385 = vpop.f32.mrf.mxu0
    %v1386 = vadd.f32 %v1337, %v1385
    %1387 = vmatmul.bf16.gmra.mxu0 %v540
    %v1388 = vpop.f32.mrf.mxu0
    %v1389 = vadd.f32 %v1340, %v1388
    %v1390 = vpop.f32.mrf.mxu0
    %v1391 = vadd.f32 %v1342, %v1390
    %1392 = vmatmul.bf16.gmra.mxu0 %v548
    %v1393 = vpop.f32.mrf.mxu0
    %v1394 = vadd.f32 %v1345, %v1393
    %v1395 = vpop.f32.mrf.mxu0
    %v1396 = vadd.f32 %v1347, %v1395
    %1397 = vmatmul.bf16.gmra.mxu0 %v556
    %v1398 = vpop.f32.mrf.mxu0
    %v1399 = vadd.f32 %v1350, %v1398
    %v1400 = vpop.f32.mrf.mxu0
    %v1401 = vadd.f32 %v1352, %v1400
    %1402 = vmatmul.bf16.gmra.mxu0 %v564
    %v1403 = vpop.f32.mrf.mxu0
    %v1404 = vadd.f32 %v1355, %v1403
    %v1405 = vpop.f32.mrf.mxu0
    %v1406 = vadd.f32 %v1357, %v1405
    %1407 = vmatmul.bf16.gmra.mxu0 %v572
    %v1408 = vpop.f32.mrf.mxu0
    %v1409 = vadd.f32 %v1360, %v1408
    %v1410 = vpop.f32.mrf.mxu0
    %v1411 = vadd.f32 %v1362, %v1410
    %1412 = vdwg.mxu0
    %v1413 = vld [vmem:[%s3] sm:$0xff]
    %v1414 = vld [vmem:[%s3 + $0x8] sm:$0xff]
    %v1415 = vld [vmem:[%s3 + $0x10] sm:$0xff]
    %v1416 = vld [vmem:[%s3 + $0x18] sm:$0xff]
    %v1417 = vld [vmem:[%s3 + $0x20] sm:$0xff]
    %v1418 = vld [vmem:[%s3 + $0x28] sm:$0xff]
    %v1419 = vld [vmem:[%s3 + $0x30] sm:$0xff]
    %v1420 = vld [vmem:[%s3 + $0x38] sm:$0xff]
    %v1421 = vld [vmem:[%s3 + $0x40] sm:$0xff]
    %v1422 = vld [vmem:[%s3 + $0x48] sm:$0xff]
    %v1423 = vld [vmem:[%s3 + $0x50] sm:$0xff]
    %v1424 = vld [vmem:[%s3 + $0x58] sm:$0xff]
    %v1425 = vld [vmem:[%s3 + $0x60] sm:$0xff]
    %v1426 = vld [vmem:[%s3 + $0x68] sm:$0xff]
    %v1427 = vld [vmem:[%s3 + $0x70] sm:$0xff]
    %v1428 = vld [vmem:[%s3 + $0x78] sm:$0xff]
    %v1429 = vld [vmem:[%s4] sm:$0xff]
    %v1430 = vld [vmem:[%s4 + $0x8] sm:$0xff]
    %v1431 = vld [vmem:[%s4 + $0x10] sm:$0xff]
    %v1432 = vld [vmem:[%s4 + $0x18] sm:$0xff]
    %v1433 = vld [vmem:[%s4 + $0x20] sm:$0xff]
    %v1434 = vld [vmem:[%s4 + $0x28] sm:$0xff]
    %v1435 = vld [vmem:[%s4 + $0x30] sm:$0xff]
    %v1436 = vld [vmem:[%s4 + $0x38] sm:$0xff]
    %v1437 = vld [vmem:[%s4 + $0x40] sm:$0xff]
    %v1438 = vld [vmem:[%s4 + $0x48] sm:$0xff]
    %v1439 = vld [vmem:[%s4 + $0x50] sm:$0xff]
    %v1440 = vld [vmem:[%s4 + $0x58] sm:$0xff]
    %v1441 = vld [vmem:[%s4 + $0x60] sm:$0xff]
    %v1442 = vld [vmem:[%s4 + $0x68] sm:$0xff]
    %v1443 = vld [vmem:[%s4 + $0x70] sm:$0xff]
    %v1444 = vld [vmem:[%s4 + $0x78] sm:$0xff]
    %vm1445 = vcmask 261120
    %v1446 = vsel %vm1445, %v1374, 0.0
    %1447 = vadd.xlane.f32.xlu0 %v1446
    %v1448 = vpop.xlane.xlu0 %1447
    %v1449 = vsel %vm1445, %v1376, 0.0
    %1450 = vadd.xlane.f32.xlu0 %v1449
    %v1451 = vpop.xlane.xlu0 %1450
    %v1452 = vsel %vm1445, %v1379, 0.0
    %1453 = vadd.xlane.f32.xlu0 %v1452
    %v1454 = vpop.xlane.xlu0 %1453
    %v1455 = vsel %vm1445, %v1381, 0.0
    %1456 = vadd.xlane.f32.xlu0 %v1455
    %v1457 = vpop.xlane.xlu0 %1456
    %v1458 = vsel %vm1445, %v1384, 0.0
    %1459 = vadd.xlane.f32.xlu0 %v1458
    %v1460 = vpop.xlane.xlu0 %1459
    %v1461 = vsel %vm1445, %v1386, 0.0
    %1462 = vadd.xlane.f32.xlu0 %v1461
    %v1463 = vpop.xlane.xlu0 %1462
    %v1464 = vsel %vm1445, %v1389, 0.0
    %1465 = vadd.xlane.f32.xlu0 %v1464
    %v1466 = vpop.xlane.xlu0 %1465
    %v1467 = vsel %vm1445, %v1391, 0.0
    %1468 = vadd.xlane.f32.xlu0 %v1467
    %v1469 = vpop.xlane.xlu0 %1468
    %v1470 = vsel %vm1445, %v1394, 0.0
    %1471 = vadd.xlane.f32.xlu0 %v1470
    %v1472 = vpop.xlane.xlu0 %1471
    %v1473 = vsel %vm1445, %v1396, 0.0
    %1474 = vadd.xlane.f32.xlu0 %v1473
    %v1475 = vpop.xlane.xlu0 %1474
    %v1476 = vsel %vm1445, %v1399, 0.0
    %1477 = vadd.xlane.f32.xlu0 %v1476
    %v1478 = vpop.xlane.xlu0 %1477
    %v1479 = vsel %vm1445, %v1401, 0.0
    %1480 = vadd.xlane.f32.xlu0 %v1479
    %v1481 = vpop.xlane.xlu0 %1480
    %v1482 = vsel %vm1445, %v1404, 0.0
    %1483 = vadd.xlane.f32.xlu0 %v1482
    %v1484 = vpop.xlane.xlu0 %1483
    %v1485 = vsel %vm1445, %v1406, 0.0
    %1486 = vadd.xlane.f32.xlu0 %v1485
    %v1487 = vpop.xlane.xlu0 %1486
    %v1488 = vsel %vm1445, %v1409, 0.0
    %1489 = vadd.xlane.f32.xlu0 %v1488
    %v1490 = vpop.xlane.xlu0 %1489
    %v1491 = vsel %vm1445, %v1411, 0.0
    %1492 = vadd.xlane.f32.xlu0 %v1491
    %v1493 = vpop.xlane.xlu0 %1492
    %v1494 = vmul.f32 %v1374, %v1374
    %v1495 = vmul.f32 %v1376, %v1376
    %v1496 = vmul.f32 %v1379, %v1379
    %v1497 = vmul.f32 %v1381, %v1381
    %v1498 = vmul.f32 %v1384, %v1384
    %v1499 = vmul.f32 %v1386, %v1386
    %v1500 = vmul.f32 %v1389, %v1389
    %v1501 = vmul.f32 %v1391, %v1391
    %v1502 = vmul.f32 %v1394, %v1394
    %v1503 = vmul.f32 %v1396, %v1396
    %v1504 = vmul.f32 %v1399, %v1399
    %v1505 = vmul.f32 %v1401, %v1401
    %v1506 = vmul.f32 %v1404, %v1404
    %v1507 = vmul.f32 %v1406, %v1406
    %v1508 = vmul.f32 %v1409, %v1409
    %v1509 = vmul.f32 %v1411, %v1411
    %v1510 = vsel %vm1445, %v1494, 0.0
    %1511 = vadd.xlane.f32.xlu0 %v1510
    %v1512 = vpop.xlane.xlu0 %1511
    %v1513 = vsel %vm1445, %v1495, 0.0
    %1514 = vadd.xlane.f32.xlu0 %v1513
    %v1515 = vpop.xlane.xlu0 %1514
    %v1516 = vsel %vm1445, %v1496, 0.0
    %1517 = vadd.xlane.f32.xlu0 %v1516
    %v1518 = vpop.xlane.xlu0 %1517
    %v1519 = vsel %vm1445, %v1497, 0.0
    %1520 = vadd.xlane.f32.xlu0 %v1519
    %v1521 = vpop.xlane.xlu0 %1520
    %v1522 = vsel %vm1445, %v1498, 0.0
    %1523 = vadd.xlane.f32.xlu0 %v1522
    %v1524 = vpop.xlane.xlu0 %1523
    %v1525 = vsel %vm1445, %v1499, 0.0
    %1526 = vadd.xlane.f32.xlu0 %v1525
    %v1527 = vpop.xlane.xlu0 %1526
    %v1528 = vsel %vm1445, %v1500, 0.0
    %1529 = vadd.xlane.f32.xlu0 %v1528
    %v1530 = vpop.xlane.xlu0 %1529
    %v1531 = vsel %vm1445, %v1501, 0.0
    %1532 = vadd.xlane.f32.xlu0 %v1531
    %v1533 = vpop.xlane.xlu0 %1532
    %v1534 = vsel %vm1445, %v1502, 0.0
    %1535 = vadd.xlane.f32.xlu0 %v1534
    %v1536 = vpop.xlane.xlu0 %1535
    %v1537 = vsel %vm1445, %v1503, 0.0
    %1538 = vadd.xlane.f32.xlu0 %v1537
    %v1539 = vpop.xlane.xlu0 %1538
    %v1540 = vsel %vm1445, %v1504, 0.0
    %1541 = vadd.xlane.f32.xlu0 %v1540
    %v1542 = vpop.xlane.xlu0 %1541
    %v1543 = vsel %vm1445, %v1505, 0.0
    %1544 = vadd.xlane.f32.xlu0 %v1543
    %v1545 = vpop.xlane.xlu0 %1544
    %v1546 = vsel %vm1445, %v1506, 0.0
    %1547 = vadd.xlane.f32.xlu0 %v1546
    %v1548 = vpop.xlane.xlu0 %1547
    %v1549 = vsel %vm1445, %v1507, 0.0
    %1550 = vadd.xlane.f32.xlu0 %v1549
    %v1551 = vpop.xlane.xlu0 %1550
    %v1552 = vsel %vm1445, %v1508, 0.0
    %1553 = vadd.xlane.f32.xlu0 %v1552
    %v1554 = vpop.xlane.xlu0 %1553
    %v1555 = vsel %vm1445, %v1509, 0.0
    %1556 = vadd.xlane.f32.xlu0 %v1555
    %v1557 = vpop.xlane.xlu0 %1556
    %v1558 = vmul.f32 %v1448, 0.03125
    %v1559 = vmul.f32 %v1451, 0.03125
    %v1560 = vmul.f32 %v1454, 0.03125
    %v1561 = vmul.f32 %v1457, 0.03125
    %v1562 = vmul.f32 %v1460, 0.03125
    %v1563 = vmul.f32 %v1463, 0.03125
    %v1564 = vmul.f32 %v1466, 0.03125
    %v1565 = vmul.f32 %v1469, 0.03125
    %v1566 = vmul.f32 %v1472, 0.03125
    %v1567 = vmul.f32 %v1475, 0.03125
    %v1568 = vmul.f32 %v1478, 0.03125
    %v1569 = vmul.f32 %v1481, 0.03125
    %v1570 = vmul.f32 %v1484, 0.03125
    %v1571 = vmul.f32 %v1487, 0.03125
    %v1572 = vmul.f32 %v1490, 0.03125
    %v1573 = vmul.f32 %v1493, 0.03125
    %v1574 = vmul.f32 %v1512, 0.03125
    %v1575 = vmul.f32 %v1515, 0.03125
    %v1576 = vmul.f32 %v1518, 0.03125
    %v1577 = vmul.f32 %v1521, 0.03125
    %v1578 = vmul.f32 %v1524, 0.03125
    %v1579 = vmul.f32 %v1527, 0.03125
    %v1580 = vmul.f32 %v1530, 0.03125
    %v1581 = vmul.f32 %v1533, 0.03125
    %v1582 = vmul.f32 %v1536, 0.03125
    %v1583 = vmul.f32 %v1539, 0.03125
    %v1584 = vmul.f32 %v1542, 0.03125
    %v1585 = vmul.f32 %v1545, 0.03125
    %v1586 = vmul.f32 %v1548, 0.03125
    %v1587 = vmul.f32 %v1551, 0.03125
    %v1588 = vmul.f32 %v1554, 0.03125
    %v1589 = vmul.f32 %v1557, 0.03125
    %v1590 = vmul.f32 %v1558, %v1558
    %v1591 = vmul.f32 %v1559, %v1559
    %v1592 = vmul.f32 %v1560, %v1560
    %v1593 = vmul.f32 %v1561, %v1561
    %v1594 = vmul.f32 %v1562, %v1562
    %v1595 = vmul.f32 %v1563, %v1563
    %v1596 = vmul.f32 %v1564, %v1564
    %v1597 = vmul.f32 %v1565, %v1565
    %v1598 = vmul.f32 %v1566, %v1566
    %v1599 = vmul.f32 %v1567, %v1567
    %v1600 = vmul.f32 %v1568, %v1568
    %v1601 = vmul.f32 %v1569, %v1569
    %v1602 = vmul.f32 %v1570, %v1570
    %v1603 = vmul.f32 %v1571, %v1571
    %v1604 = vmul.f32 %v1572, %v1572
    %v1605 = vmul.f32 %v1573, %v1573
    %v1606 = vsub.f32 %v1574, %v1590
    %v1607 = vsub.f32 %v1575, %v1591
    %v1608 = vsub.f32 %v1576, %v1592
    %v1609 = vsub.f32 %v1577, %v1593
    %v1610 = vsub.f32 %v1578, %v1594
    %v1611 = vsub.f32 %v1579, %v1595
    %v1612 = vsub.f32 %v1580, %v1596
    %v1613 = vsub.f32 %v1581, %v1597
    %v1614 = vsub.f32 %v1582, %v1598
    %v1615 = vsub.f32 %v1583, %v1599
    %v1616 = vsub.f32 %v1584, %v1600
    %v1617 = vsub.f32 %v1585, %v1601
    %v1618 = vsub.f32 %v1586, %v1602
    %v1619 = vsub.f32 %v1587, %v1603
    %v1620 = vsub.f32 %v1588, %v1604
    %v1621 = vsub.f32 %v1589, %v1605
    %v1622 = vadd.f32 %v1606, 1e-05
    %v1623 = vadd.f32 %v1607, 1e-05
    %v1624 = vadd.f32 %v1608, 1e-05
    %v1625 = vadd.f32 %v1609, 1e-05
    %v1626 = vadd.f32 %v1610, 1e-05
    %v1627 = vadd.f32 %v1611, 1e-05
    %v1628 = vadd.f32 %v1612, 1e-05
    %v1629 = vadd.f32 %v1613, 1e-05
    %v1630 = vadd.f32 %v1614, 1e-05
    %v1631 = vadd.f32 %v1615, 1e-05
    %v1632 = vadd.f32 %v1616, 1e-05
    %v1633 = vadd.f32 %v1617, 1e-05
    %v1634 = vadd.f32 %v1618, 1e-05
    %v1635 = vadd.f32 %v1619, 1e-05
    %v1636 = vadd.f32 %v1620, 1e-05
    %v1637 = vadd.f32 %v1621, 1e-05
    %v1638 = vrsqrt.pop %v1622
    %v1639 = vmul.f32 %v1638, %v1622
    %v1640 = vmul.f32 %v1639, %v1638
    %v1641 = vmul.f32 0.5, %v1640
    %v1642 = vsub.f32 1.5, %v1641
    %v1643 = vmul.f32 %v1638, %v1642
    %vm1644 = vweird.f32 %v1622
    %vm1645 = vweird.f32 %v1638
    %vm1646 = vmor %vm1644, %vm1645
    %v1647 = vsel %vm1646, %v1638, %v1643
    %v1648 = vrsqrt.pop %v1623
    %v1649 = vmul.f32 %v1648, %v1623
    %v1650 = vmul.f32 %v1649, %v1648
    %v1651 = vmul.f32 0.5, %v1650
    %v1652 = vsub.f32 1.5, %v1651
    %v1653 = vmul.f32 %v1648, %v1652
    %vm1654 = vweird.f32 %v1623
    %vm1655 = vweird.f32 %v1648
    %vm1656 = vmor %vm1654, %vm1655
    %v1657 = vsel %vm1656, %v1648, %v1653
    %v1658 = vrsqrt.pop %v1624
    %v1659 = vmul.f32 %v1658, %v1624
    %v1660 = vmul.f32 %v1659, %v1658
    %v1661 = vmul.f32 0.5, %v1660
    %v1662 = vsub.f32 1.5, %v1661
    %v1663 = vmul.f32 %v1658, %v1662
    %vm1664 = vweird.f32 %v1624
    %vm1665 = vweird.f32 %v1658
    %vm1666 = vmor %vm1664, %vm1665
    %v1667 = vsel %vm1666, %v1658, %v1663
    %v1668 = vrsqrt.pop %v1625
    %v1669 = vmul.f32 %v1668, %v1625
    %v1670 = vmul.f32 %v1669, %v1668
    %v1671 = vmul.f32 0.5, %v1670
    %v1672 = vsub.f32 1.5, %v1671
    %v1673 = vmul.f32 %v1668, %v1672
    %vm1674 = vweird.f32 %v1625
    %vm1675 = vweird.f32 %v1668
    %vm1676 = vmor %vm1674, %vm1675
    %v1677 = vsel %vm1676, %v1668, %v1673
    %v1678 = vrsqrt.pop %v1626
    %v1679 = vmul.f32 %v1678, %v1626
    %v1680 = vmul.f32 %v1679, %v1678
    %v1681 = vmul.f32 0.5, %v1680
    %v1682 = vsub.f32 1.5, %v1681
    %v1683 = vmul.f32 %v1678, %v1682
    %vm1684 = vweird.f32 %v1626
    %vm1685 = vweird.f32 %v1678
    %vm1686 = vmor %vm1684, %vm1685
    %v1687 = vsel %vm1686, %v1678, %v1683
    %v1688 = vrsqrt.pop %v1627
    %v1689 = vmul.f32 %v1688, %v1627
    %v1690 = vmul.f32 %v1689, %v1688
    %v1691 = vmul.f32 0.5, %v1690
    %v1692 = vsub.f32 1.5, %v1691
    %v1693 = vmul.f32 %v1688, %v1692
    %vm1694 = vweird.f32 %v1627
    %vm1695 = vweird.f32 %v1688
    %vm1696 = vmor %vm1694, %vm1695
    %v1697 = vsel %vm1696, %v1688, %v1693
    %v1698 = vrsqrt.pop %v1628
    %v1699 = vmul.f32 %v1698, %v1628
    %v1700 = vmul.f32 %v1699, %v1698
    %v1701 = vmul.f32 0.5, %v1700
    %v1702 = vsub.f32 1.5, %v1701
    %v1703 = vmul.f32 %v1698, %v1702
    %vm1704 = vweird.f32 %v1628
    %vm1705 = vweird.f32 %v1698
    %vm1706 = vmor %vm1704, %vm1705
    %v1707 = vsel %vm1706, %v1698, %v1703
    %v1708 = vrsqrt.pop %v1629
    %v1709 = vmul.f32 %v1708, %v1629
    %v1710 = vmul.f32 %v1709, %v1708
    %v1711 = vmul.f32 0.5, %v1710
    %v1712 = vsub.f32 1.5, %v1711
    %v1713 = vmul.f32 %v1708, %v1712
    %vm1714 = vweird.f32 %v1629
    %vm1715 = vweird.f32 %v1708
    %vm1716 = vmor %vm1714, %vm1715
    %v1717 = vsel %vm1716, %v1708, %v1713
    %v1718 = vrsqrt.pop %v1630
    %v1719 = vmul.f32 %v1718, %v1630
    %v1720 = vmul.f32 %v1719, %v1718
    %v1721 = vmul.f32 0.5, %v1720
    %v1722 = vsub.f32 1.5, %v1721
    %v1723 = vmul.f32 %v1718, %v1722
    %vm1724 = vweird.f32 %v1630
    %vm1725 = vweird.f32 %v1718
    %vm1726 = vmor %vm1724, %vm1725
    %v1727 = vsel %vm1726, %v1718, %v1723
    %v1728 = vrsqrt.pop %v1631
    %v1729 = vmul.f32 %v1728, %v1631
    %v1730 = vmul.f32 %v1729, %v1728
    %v1731 = vmul.f32 0.5, %v1730
    %v1732 = vsub.f32 1.5, %v1731
    %v1733 = vmul.f32 %v1728, %v1732
    %vm1734 = vweird.f32 %v1631
    %vm1735 = vweird.f32 %v1728
    %vm1736 = vmor %vm1734, %vm1735
    %v1737 = vsel %vm1736, %v1728, %v1733
    %v1738 = vrsqrt.pop %v1632
    %v1739 = vmul.f32 %v1738, %v1632
    %v1740 = vmul.f32 %v1739, %v1738
    %v1741 = vmul.f32 0.5, %v1740
    %v1742 = vsub.f32 1.5, %v1741
    %v1743 = vmul.f32 %v1738, %v1742
    %vm1744 = vweird.f32 %v1632
    %vm1745 = vweird.f32 %v1738
    %vm1746 = vmor %vm1744, %vm1745
    %v1747 = vsel %vm1746, %v1738, %v1743
    %v1748 = vrsqrt.pop %v1633
    %v1749 = vmul.f32 %v1748, %v1633
    %v1750 = vmul.f32 %v1749, %v1748
    %v1751 = vmul.f32 0.5, %v1750
    %v1752 = vsub.f32 1.5, %v1751
    %v1753 = vmul.f32 %v1748, %v1752
    %vm1754 = vweird.f32 %v1633
    %vm1755 = vweird.f32 %v1748
    %vm1756 = vmor %vm1754, %vm1755
    %v1757 = vsel %vm1756, %v1748, %v1753
    %v1758 = vrsqrt.pop %v1634
    %v1759 = vmul.f32 %v1758, %v1634
    %v1760 = vmul.f32 %v1759, %v1758
    %v1761 = vmul.f32 0.5, %v1760
    %v1762 = vsub.f32 1.5, %v1761
    %v1763 = vmul.f32 %v1758, %v1762
    %vm1764 = vweird.f32 %v1634
    %vm1765 = vweird.f32 %v1758
    %vm1766 = vmor %vm1764, %vm1765
    %v1767 = vsel %vm1766, %v1758, %v1763
    %v1768 = vrsqrt.pop %v1635
    %v1769 = vmul.f32 %v1768, %v1635
    %v1770 = vmul.f32 %v1769, %v1768
    %v1771 = vmul.f32 0.5, %v1770
    %v1772 = vsub.f32 1.5, %v1771
    %v1773 = vmul.f32 %v1768, %v1772
    %vm1774 = vweird.f32 %v1635
    %vm1775 = vweird.f32 %v1768
    %vm1776 = vmor %vm1774, %vm1775
    %v1777 = vsel %vm1776, %v1768, %v1773
    %v1778 = vrsqrt.pop %v1636
    %v1779 = vmul.f32 %v1778, %v1636
    %v1780 = vmul.f32 %v1779, %v1778
    %v1781 = vmul.f32 0.5, %v1780
    %v1782 = vsub.f32 1.5, %v1781
    %v1783 = vmul.f32 %v1778, %v1782
    %vm1784 = vweird.f32 %v1636
    %vm1785 = vweird.f32 %v1778
    %vm1786 = vmor %vm1784, %vm1785
    %v1787 = vsel %vm1786, %v1778, %v1783
    %v1788 = vrsqrt.pop %v1637
    %v1789 = vmul.f32 %v1788, %v1637
    %v1790 = vmul.f32 %v1789, %v1788
    %v1791 = vmul.f32 0.5, %v1790
    %v1792 = vsub.f32 1.5, %v1791
    %v1793 = vmul.f32 %v1788, %v1792
    %vm1794 = vweird.f32 %v1637
    %vm1795 = vweird.f32 %v1788
    %vm1796 = vmor %vm1794, %vm1795
    %v1797 = vsel %vm1796, %v1788, %v1793
    %v1798 = vmul.f32 %v1647, %v1413
    %v1799 = vmul.f32 %v1657, %v1414
    %v1800 = vmul.f32 %v1667, %v1415
    %v1801 = vmul.f32 %v1677, %v1416
    %v1802 = vmul.f32 %v1687, %v1417
    %v1803 = vmul.f32 %v1697, %v1418
    %v1804 = vmul.f32 %v1707, %v1419
    %v1805 = vmul.f32 %v1717, %v1420
    %v1806 = vmul.f32 %v1727, %v1421
    %v1807 = vmul.f32 %v1737, %v1422
    %v1808 = vmul.f32 %v1747, %v1423
    %v1809 = vmul.f32 %v1757, %v1424
    %v1810 = vmul.f32 %v1767, %v1425
    %v1811 = vmul.f32 %v1777, %v1426
    %v1812 = vmul.f32 %v1787, %v1427
    %v1813 = vmul.f32 %v1797, %v1428
    %v1814 = vsub.f32 %v1374, %v1558
    %v1815 = vsub.f32 %v1376, %v1559
    %v1816 = vsub.f32 %v1379, %v1560
    %v1817 = vsub.f32 %v1381, %v1561
    %v1818 = vsub.f32 %v1384, %v1562
    %v1819 = vsub.f32 %v1386, %v1563
    %v1820 = vsub.f32 %v1389, %v1564
    %v1821 = vsub.f32 %v1391, %v1565
    %v1822 = vsub.f32 %v1394, %v1566
    %v1823 = vsub.f32 %v1396, %v1567
    %v1824 = vsub.f32 %v1399, %v1568
    %v1825 = vsub.f32 %v1401, %v1569
    %v1826 = vsub.f32 %v1404, %v1570
    %v1827 = vsub.f32 %v1406, %v1571
    %v1828 = vsub.f32 %v1409, %v1572
    %v1829 = vsub.f32 %v1411, %v1573
    %1831 = vset.pattern.permute.xlu0 0
    %1832 = vperm.xlu0 %1831, %v1798
    %v1833 = vpop.permute.xlu0 %1832
    %1836 = vset.pattern.permute.xlu0 0
    %1837 = vperm.xlu0 %1836, %v1799
    %v1838 = vpop.permute.xlu0 %1837
    %1841 = vset.pattern.permute.xlu0 0
    %1842 = vperm.xlu0 %1841, %v1800
    %v1843 = vpop.permute.xlu0 %1842
    %1846 = vset.pattern.permute.xlu0 0
    %1847 = vperm.xlu0 %1846, %v1801
    %v1848 = vpop.permute.xlu0 %1847
    %1851 = vset.pattern.permute.xlu0 0
    %1852 = vperm.xlu0 %1851, %v1802
    %v1853 = vpop.permute.xlu0 %1852
    %1856 = vset.pattern.permute.xlu0 0
    %1857 = vperm.xlu0 %1856, %v1803
    %v1858 = vpop.permute.xlu0 %1857
    %1861 = vset.pattern.permute.xlu0 0
    %1862 = vperm.xlu0 %1861, %v1804
    %v1863 = vpop.permute.xlu0 %1862
    %1866 = vset.pattern.permute.xlu0 0
    %1867 = vperm.xlu0 %1866, %v1805
    %v1868 = vpop.permute.xlu0 %1867
    %1871 = vset.pattern.permute.xlu0 0
    %1872 = vperm.xlu0 %1871, %v1806
    %v1873 = vpop.permute.xlu0 %1872
    %1876 = vset.pattern.permute.xlu0 0
    %1877 = vperm.xlu0 %1876, %v1807
    %v1878 = vpop.permute.xlu0 %1877
    %1881 = vset.pattern.permute.xlu0 0
    %1882 = vperm.xlu0 %1881, %v1808
    %v1883 = vpop.permute.xlu0 %1882
    %1886 = vset.pattern.permute.xlu0 0
    %1887 = vperm.xlu0 %1886, %v1809
    %v1888 = vpop.permute.xlu0 %1887
    %1891 = vset.pattern.permute.xlu0 0
    %1892 = vperm.xlu0 %1891, %v1810
    %v1893 = vpop.permute.xlu0 %1892
    %1896 = vset.pattern.permute.xlu0 0
    %1897 = vperm.xlu0 %1896, %v1811
    %v1898 = vpop.permute.xlu0 %1897
    %1901 = vset.pattern.permute.xlu0 0
    %1902 = vperm.xlu0 %1901, %v1812
    %v1903 = vpop.permute.xlu0 %1902
    %1906 = vset.pattern.permute.xlu0 0
    %1907 = vperm.xlu0 %1906, %v1813
    %v1908 = vpop.permute.xlu0 %1907
    %v1910 = vmul.f32 %v1814, %v1833
    %v1911 = vmul.f32 %v1815, %v1838
    %v1912 = vmul.f32 %v1816, %v1843
    %v1913 = vmul.f32 %v1817, %v1848
    %v1914 = vmul.f32 %v1818, %v1853
    %v1915 = vmul.f32 %v1819, %v1858
    %v1916 = vmul.f32 %v1820, %v1863
    %v1917 = vmul.f32 %v1821, %v1868
    %v1918 = vmul.f32 %v1822, %v1873
    %v1919 = vmul.f32 %v1823, %v1878
    %v1920 = vmul.f32 %v1824, %v1883
    %v1921 = vmul.f32 %v1825, %v1888
    %v1922 = vmul.f32 %v1826, %v1893
    %v1923 = vmul.f32 %v1827, %v1898
    %v1924 = vmul.f32 %v1828, %v1903
    %v1925 = vmul.f32 %v1829, %v1908
    %1927 = vset.pattern.permute.xlu0 0
    %1928 = vperm.xlu0 %1927, %v1429
    %v1929 = vpop.permute.xlu0 %1928
    %1932 = vset.pattern.permute.xlu0 0
    %1933 = vperm.xlu0 %1932, %v1430
    %v1934 = vpop.permute.xlu0 %1933
    %1937 = vset.pattern.permute.xlu0 0
    %1938 = vperm.xlu0 %1937, %v1431
    %v1939 = vpop.permute.xlu0 %1938
    %1942 = vset.pattern.permute.xlu0 0
    %1943 = vperm.xlu0 %1942, %v1432
    %v1944 = vpop.permute.xlu0 %1943
    %1947 = vset.pattern.permute.xlu0 0
    %1948 = vperm.xlu0 %1947, %v1433
    %v1949 = vpop.permute.xlu0 %1948
    %1952 = vset.pattern.permute.xlu0 0
    %1953 = vperm.xlu0 %1952, %v1434
    %v1954 = vpop.permute.xlu0 %1953
    %1957 = vset.pattern.permute.xlu0 0
    %1958 = vperm.xlu0 %1957, %v1435
    %v1959 = vpop.permute.xlu0 %1958
    %1962 = vset.pattern.permute.xlu0 0
    %1963 = vperm.xlu0 %1962, %v1436
    %v1964 = vpop.permute.xlu0 %1963
    %1967 = vset.pattern.permute.xlu0 0
    %1968 = vperm.xlu0 %1967, %v1437
    %v1969 = vpop.permute.xlu0 %1968
    %1972 = vset.pattern.permute.xlu0 0
    %1973 = vperm.xlu0 %1972, %v1438
    %v1974 = vpop.permute.xlu0 %1973
    %1977 = vset.pattern.permute.xlu0 0
    %1978 = vperm.xlu0 %1977, %v1439
    %v1979 = vpop.permute.xlu0 %1978
    %1982 = vset.pattern.permute.xlu0 0
    %1983 = vperm.xlu0 %1982, %v1440
    %v1984 = vpop.permute.xlu0 %1983
    %1987 = vset.pattern.permute.xlu0 0
    %1988 = vperm.xlu0 %1987, %v1441
    %v1989 = vpop.permute.xlu0 %1988
    %1992 = vset.pattern.permute.xlu0 0
    %1993 = vperm.xlu0 %1992, %v1442
    %v1994 = vpop.permute.xlu0 %1993
    %1997 = vset.pattern.permute.xlu0 0
    %1998 = vperm.xlu0 %1997, %v1443
    %v1999 = vpop.permute.xlu0 %1998
    %2002 = vset.pattern.permute.xlu0 0
    %2003 = vperm.xlu0 %2002, %v1444
    %v2004 = vpop.permute.xlu0 %2003
    %v2006 = vadd.f32 %v1910, %v1929
    %v2007 = vadd.f32 %v1911, %v1934
    %v2008 = vadd.f32 %v1912, %v1939
    %v2009 = vadd.f32 %v1913, %v1944
    %v2010 = vadd.f32 %v1914, %v1949
    %v2011 = vadd.f32 %v1915, %v1954
    %v2012 = vadd.f32 %v1916, %v1959
    %v2013 = vadd.f32 %v1917, %v1964
    %v2014 = vadd.f32 %v1918, %v1969
    %v2015 = vadd.f32 %v1919, %v1974
    %v2016 = vadd.f32 %v1920, %v1979
    %v2017 = vadd.f32 %v1921, %v1984
    %v2018 = vadd.f32 %v1922, %v1989
    %v2019 = vadd.f32 %v1923, %v1994
    %v2020 = vadd.f32 %v1924, %v1999
    %v2021 = vadd.f32 %v1925, %v2004
    %v2022 = vmul.f32 %v2006, 0.2
    %v2023 = vmul.f32 %v2007, 0.2
    %v2024 = vmul.f32 %v2008, 0.2
    %v2025 = vmul.f32 %v2009, 0.2
    %v2026 = vmul.f32 %v2010, 0.2
    %v2027 = vmul.f32 %v2011, 0.2
    %v2028 = vmul.f32 %v2012, 0.2
    %v2029 = vmul.f32 %v2013, 0.2
    %v2030 = vmul.f32 %v2014, 0.2
    %v2031 = vmul.f32 %v2015, 0.2
    %v2032 = vmul.f32 %v2016, 0.2
    %v2033 = vmul.f32 %v2017, 0.2
    %v2034 = vmul.f32 %v2018, 0.2
    %v2035 = vmul.f32 %v2019, 0.2
    %v2036 = vmul.f32 %v2020, 0.2
    %v2037 = vmul.f32 %v2021, 0.2
    %v2038 = vmax.f32 %v2006, %v2022
    %v2039 = vmax.f32 %v2007, %v2023
    %v2040 = vmax.f32 %v2008, %v2024
    %v2041 = vmax.f32 %v2009, %v2025
    %v2042 = vmax.f32 %v2010, %v2026
    %v2043 = vmax.f32 %v2011, %v2027
    %v2044 = vmax.f32 %v2012, %v2028
    %v2045 = vmax.f32 %v2013, %v2029
    %v2046 = vmax.f32 %v2014, %v2030
    %v2047 = vmax.f32 %v2015, %v2031
    %v2048 = vmax.f32 %v2016, %v2032
    %v2049 = vmax.f32 %v2017, %v2033
    %v2050 = vmax.f32 %v2018, %v2034
    %v2051 = vmax.f32 %v2019, %v2035
    %v2052 = vmax.f32 %v2020, %v2036
    %v2053 = vmax.f32 %v2021, %v2037
    %v2054 = vpack.c.bf16 %v2038, %v2038
    %v2055 = vpack.c.bf16 %v2039, %v2039
    %v2056 = vpack.c.bf16 %v2040, %v2040
    %v2057 = vpack.c.bf16 %v2041, %v2041
    %v2058 = vpack.c.bf16 %v2042, %v2042
    %v2059 = vpack.c.bf16 %v2043, %v2043
    %v2060 = vpack.c.bf16 %v2044, %v2044
    %v2061 = vpack.c.bf16 %v2045, %v2045
    %v2062 = vpack.c.bf16 %v2046, %v2046
    %v2063 = vpack.c.bf16 %v2047, %v2047
    %v2064 = vpack.c.bf16 %v2048, %v2048
    %v2065 = vpack.c.bf16 %v2049, %v2049
    %v2066 = vpack.c.bf16 %v2050, %v2050
    %v2067 = vpack.c.bf16 %v2051, %v2051
    %v2068 = vpack.c.bf16 %v2052, %v2052
    %v2069 = vpack.c.bf16 %v2053, %v2053
    %v2070 = vunpack.c.l.bf16 %v2054
    %v2071 = vunpack.c.l.bf16 %v2055
    %v2072 = vunpack.c.l.bf16 %v2056
    %v2073 = vunpack.c.l.bf16 %v2057
    %v2074 = vunpack.c.l.bf16 %v2058
    %v2075 = vunpack.c.l.bf16 %v2059
    %v2076 = vunpack.c.l.bf16 %v2060
    %v2077 = vunpack.c.l.bf16 %v2061
    %v2078 = vunpack.c.l.bf16 %v2062
    %v2079 = vunpack.c.l.bf16 %v2063
    %v2080 = vunpack.c.l.bf16 %v2064
    %v2081 = vunpack.c.l.bf16 %v2065
    %v2082 = vunpack.c.l.bf16 %v2066
    %v2083 = vunpack.c.l.bf16 %v2067
    %v2084 = vunpack.c.l.bf16 %v2068
    %v2085 = vunpack.c.l.bf16 %v2069
    %v2086 = vld [vmem:[%s5] sm:$0xf]
    %v2087 = vld [vmem:[%s5 + $0x4] sm:$0xf]
    %v2088 = vld [vmem:[%s5 + $0x8] sm:$0xf]
    %v2089 = vld [vmem:[%s5 + $0xc] sm:$0xf]
    %v2090 = vld [vmem:[%s5 + $0x10] sm:$0xf]
    %v2091 = vld [vmem:[%s5 + $0x14] sm:$0xf]
    %v2092 = vld [vmem:[%s5 + $0x18] sm:$0xf]
    %v2093 = vld [vmem:[%s5 + $0x1c] sm:$0xf]
    %v2094 = vld [vmem:[%s5 + $0x20] sm:$0xf]
    %v2095 = vld [vmem:[%s5 + $0x24] sm:$0xf]
    %v2096 = vld [vmem:[%s5 + $0x28] sm:$0xf]
    %v2097 = vld [vmem:[%s5 + $0x2c] sm:$0xf]
    %v2098 = vld [vmem:[%s5 + $0x30] sm:$0xf]
    %v2099 = vld [vmem:[%s5 + $0x34] sm:$0xf]
    %v2100 = vld [vmem:[%s5 + $0x38] sm:$0xf]
    %v2101 = vld [vmem:[%s5 + $0x3c] sm:$0xf]
    %v2102 = vunpack.c.l.bf16 %v2086
    %v2103 = vunpack.c.l.bf16 %v2087
    %v2104 = vunpack.c.l.bf16 %v2088
    %v2105 = vunpack.c.l.bf16 %v2089
    %v2106 = vunpack.c.l.bf16 %v2090
    %v2107 = vunpack.c.l.bf16 %v2091
    %v2108 = vunpack.c.l.bf16 %v2092
    %v2109 = vunpack.c.l.bf16 %v2093
    %v2110 = vunpack.c.l.bf16 %v2094
    %v2111 = vunpack.c.l.bf16 %v2095
    %v2112 = vunpack.c.l.bf16 %v2096
    %v2113 = vunpack.c.l.bf16 %v2097
    %v2114 = vunpack.c.l.bf16 %v2098
    %v2115 = vunpack.c.l.bf16 %v2099
    %v2116 = vunpack.c.l.bf16 %v2100
    %v2117 = vunpack.c.l.bf16 %v2101
    %v2118 = vmul.f32 %v2070, %v2102
    %v2119 = vmul.f32 %v2071, %v2103
    %v2120 = vmul.f32 %v2072, %v2104
    %v2121 = vmul.f32 %v2073, %v2105
    %v2122 = vmul.f32 %v2074, %v2106
    %v2123 = vmul.f32 %v2075, %v2107
    %v2124 = vmul.f32 %v2076, %v2108
    %v2125 = vmul.f32 %v2077, %v2109
    %v2126 = vmul.f32 %v2078, %v2110
    %v2127 = vmul.f32 %v2079, %v2111
    %v2128 = vmul.f32 %v2080, %v2112
    %v2129 = vmul.f32 %v2081, %v2113
    %v2130 = vmul.f32 %v2082, %v2114
    %v2131 = vmul.f32 %v2083, %v2115
    %v2132 = vmul.f32 %v2084, %v2116
    %v2133 = vmul.f32 %v2085, %v2117
    %vm2134 = vcmask 130048
    %v2135 = vsel %vm2134, %v2118, 0.0
    %v2136 = vsel %vm2134, %v2119, 0.0
    %v2137 = vadd.f32 %v2135, %v2136
    %v2138 = vsel %vm2134, %v2120, 0.0
    %v2139 = vadd.f32 %v2137, %v2138
    %v2140 = vsel %vm2134, %v2121, 0.0
    %v2141 = vadd.f32 %v2139, %v2140
    %v2142 = vsel %vm2134, %v2122, 0.0
    %v2143 = vadd.f32 %v2141, %v2142
    %v2144 = vsel %vm2134, %v2123, 0.0
    %v2145 = vadd.f32 %v2143, %v2144
    %v2146 = vsel %vm2134, %v2124, 0.0
    %v2147 = vadd.f32 %v2145, %v2146
    %v2148 = vsel %vm2134, %v2125, 0.0
    %v2149 = vadd.f32 %v2147, %v2148
    %v2150 = vsel %vm2134, %v2126, 0.0
    %v2151 = vadd.f32 %v2149, %v2150
    %v2152 = vsel %vm2134, %v2127, 0.0
    %v2153 = vadd.f32 %v2151, %v2152
    %v2154 = vsel %vm2134, %v2128, 0.0
    %v2155 = vadd.f32 %v2153, %v2154
    %v2156 = vsel %vm2134, %v2129, 0.0
    %v2157 = vadd.f32 %v2155, %v2156
    %v2158 = vsel %vm2134, %v2130, 0.0
    %v2159 = vadd.f32 %v2157, %v2158
    %v2160 = vsel %vm2134, %v2131, 0.0
    %v2161 = vadd.f32 %v2159, %v2160
    %v2162 = vsel %vm2134, %v2132, 0.0
    %v2163 = vadd.f32 %v2161, %v2162
    %v2164 = vsel %vm2134, %v2133, 0.0
    %v2165 = vadd.f32 %v2163, %v2164
    %v2166 = vrot.slane %v2165, 4
    %v2167 = vadd.f32 %v2165, %v2166
    %v2168 = vrot.slane %v2167, 2
    %v2169 = vadd.f32 %v2167, %v2168
    %v2170 = vrot.slane %v2169, 1
    %v2171 = vadd.f32 %v2169, %v2170
    %v2172 = vsel %vm2134, %v2171, 0.0
    %2173 = vadd.xlane.f32.xlu0 %v2172
    %v2174 = vpop.xlane.xlu0 %2173
    %2191 = vrot.lane.b32.xlu0 %v2102, 16
    %v2192 = vpop.permute.xlu0 %2191
    %2193 = vrot.lane.b32.xlu0 %v2103, 16
    %v2194 = vpop.permute.xlu0 %2193
    %2195 = vrot.lane.b32.xlu0 %v2104, 16
    %v2196 = vpop.permute.xlu0 %2195
    %2197 = vrot.lane.b32.xlu0 %v2105, 16
    %v2198 = vpop.permute.xlu0 %2197
    %2199 = vrot.lane.b32.xlu0 %v2106, 16
    %v2200 = vpop.permute.xlu0 %2199
    %2201 = vrot.lane.b32.xlu0 %v2107, 16
    %v2202 = vpop.permute.xlu0 %2201
    %2203 = vrot.lane.b32.xlu0 %v2108, 16
    %v2204 = vpop.permute.xlu0 %2203
    %2205 = vrot.lane.b32.xlu0 %v2109, 16
    %v2206 = vpop.permute.xlu0 %2205
    %2207 = vrot.lane.b32.xlu0 %v2110, 16
    %v2208 = vpop.permute.xlu0 %2207
    %2209 = vrot.lane.b32.xlu0 %v2111, 16
    %v2210 = vpop.permute.xlu0 %2209
    %2211 = vrot.lane.b32.xlu0 %v2112, 16
    %v2212 = vpop.permute.xlu0 %2211
    %2213 = vrot.lane.b32.xlu0 %v2113, 16
    %v2214 = vpop.permute.xlu0 %2213
    %2215 = vrot.lane.b32.xlu0 %v2114, 16
    %v2216 = vpop.permute.xlu0 %2215
    %2217 = vrot.lane.b32.xlu0 %v2115, 16
    %v2218 = vpop.permute.xlu0 %2217
    %2219 = vrot.lane.b32.xlu0 %v2116, 16
    %v2220 = vpop.permute.xlu0 %2219
    %2221 = vrot.lane.b32.xlu0 %v2117, 16
    %v2222 = vpop.permute.xlu0 %2221
    %v2239 = vmul.f32 %v2070, %v2192
    %v2240 = vmul.f32 %v2071, %v2194
    %v2241 = vmul.f32 %v2072, %v2196
    %v2242 = vmul.f32 %v2073, %v2198
    %v2243 = vmul.f32 %v2074, %v2200
    %v2244 = vmul.f32 %v2075, %v2202
    %v2245 = vmul.f32 %v2076, %v2204
    %v2246 = vmul.f32 %v2077, %v2206
    %v2247 = vmul.f32 %v2078, %v2208
    %v2248 = vmul.f32 %v2079, %v2210
    %v2249 = vmul.f32 %v2080, %v2212
    %v2250 = vmul.f32 %v2081, %v2214
    %v2251 = vmul.f32 %v2082, %v2216
    %v2252 = vmul.f32 %v2083, %v2218
    %v2253 = vmul.f32 %v2084, %v2220
    %v2254 = vmul.f32 %v2085, %v2222
    %vm2255 = vcmask 261248
    %v2256 = vsel %vm2255, %v2239, 0.0
    %v2257 = vsel %vm2255, %v2240, 0.0
    %v2258 = vadd.f32 %v2256, %v2257
    %v2259 = vsel %vm2255, %v2241, 0.0
    %v2260 = vadd.f32 %v2258, %v2259
    %v2261 = vsel %vm2255, %v2242, 0.0
    %v2262 = vadd.f32 %v2260, %v2261
    %v2263 = vsel %vm2255, %v2243, 0.0
    %v2264 = vadd.f32 %v2262, %v2263
    %v2265 = vsel %vm2255, %v2244, 0.0
    %v2266 = vadd.f32 %v2264, %v2265
    %v2267 = vsel %vm2255, %v2245, 0.0
    %v2268 = vadd.f32 %v2266, %v2267
    %v2269 = vsel %vm2255, %v2246, 0.0
    %v2270 = vadd.f32 %v2268, %v2269
    %v2271 = vsel %vm2255, %v2247, 0.0
    %v2272 = vadd.f32 %v2270, %v2271
    %v2273 = vsel %vm2255, %v2248, 0.0
    %v2274 = vadd.f32 %v2272, %v2273
    %v2275 = vsel %vm2255, %v2249, 0.0
    %v2276 = vadd.f32 %v2274, %v2275
    %v2277 = vsel %vm2255, %v2250, 0.0
    %v2278 = vadd.f32 %v2276, %v2277
    %v2279 = vsel %vm2255, %v2251, 0.0
    %v2280 = vadd.f32 %v2278, %v2279
    %v2281 = vsel %vm2255, %v2252, 0.0
    %v2282 = vadd.f32 %v2280, %v2281
    %v2283 = vsel %vm2255, %v2253, 0.0
    %v2284 = vadd.f32 %v2282, %v2283
    %v2285 = vsel %vm2255, %v2254, 0.0
    %v2286 = vadd.f32 %v2284, %v2285
    %v2287 = vrot.slane %v2286, 4
    %v2288 = vadd.f32 %v2286, %v2287
    %v2289 = vrot.slane %v2288, 2
    %v2290 = vadd.f32 %v2288, %v2289
    %v2291 = vrot.slane %v2290, 1
    %v2292 = vadd.f32 %v2290, %v2291
    %2294 = vrot.lane.b32.xlu0 %v2292, 112
    %v2295 = vpop.permute.xlu0 %2294
    %v2297 = vsel %vm2134, %v2295, 0.0
    %2298 = vadd.xlane.f32.xlu0 %v2297
    %v2299 = vpop.xlane.xlu0 %2298
    %vm2300 = vcmask 7168
    %v2301 = vsel %vm2300, %v2174, %v2299
    %v2302 = vld [vmem:[#allocation2] sm:$0x1]
    %2304 = vset.pattern.permute.xlu0 0
    %2305 = vperm.xlu0 %2304, %v2302
    %v2306 = vpop.permute.xlu0 %2305
    %v2308 = vperm.slane %v2306, 0
    %v2309 = vadd.f32 %v2301, %v2308
    %vm2310 = vcmask 8192
    %2311 = vst.msk [vmem:[#allocation3] sm:$0x1] %vm2310, %v2309
    // Predicated region
    $region30: #{discriminator_forward.9} parent=1 // pred_check
      _
    $region31: #{discriminator_forward.9} parent=1 // pred_check_branch
      %2313 = sbr.rel (0) target = $region33
    $region32: #{discriminator_forward.9} parent=1 // pred_region
      %2315 = vsyncadd [#allocation4], 0
      %s2317 = sshll.u32 [#allocation3], 4
      %s2318 = int_to_ptr.vmem [resolvable:$true] %s2317
      %s2319 = sshll.u32 %s7, 4
      %s2320 = int_to_ptr.hbm [resolvable:$true] %s2319
      %2322 = dma.vmem_to_hbm [thread:$0]  %s2318, 16, %s2320, [#allocation4]
    $region33: #{discriminator_forward.9} parent=1 // pred_fallthru
      _
    // Predicated region
    $region34: #{discriminator_forward.9} parent=1 // pred_check
      _
    $region35: #{discriminator_forward.9} parent=1 // pred_check_branch
      %2324 = sbr.rel (0) target = $region37
    $region36: #{discriminator_forward.9} parent=1 // pred_region
      %2326 = dma.done [#allocation4], 16
    $region37: #{discriminator_forward.9} parent=1 // pred_fallthru
      _
    %2327 = vsyncpa [#allocation4], 1

</llo_original>
